<compile_context>
chip_gen: v7x
topology: tpu7x:2x2x1
jax: 0.10.0
libtpu: 0.0.40
codegen_flags: <defaults>
</compile_context>

<pallas_src>
from functools import partial

import numpy as np
import jax
import jax.numpy as jnp
from jax import lax
from jax.experimental import pallas as pl
from jax.experimental.pallas import tpu as pltpu


# ----------------------------------------------------------------------------
# Host-side weight packing: block-banded, lane-dense matmul operands.
# Lane layout of an activation super-row: (f, w, c) with f in [0,F).
# ----------------------------------------------------------------------------
def _pack_band_3x3(w_hwio, F, W):
    """3x3 'same' conv -> 3 banded (F*W*Ci, F*W*Co) matrices (delta=-1,0,+1)."""
    Ci, Co = int(w_hwio.shape[2]), int(w_hwio.shape[3])
    B = np.zeros((3, F, W, Ci, F, W, Co), np.float32)
    for di, delta in enumerate((-1, 0, 1)):
        for f in range(F):                      # output fold index
            for dy in (-1, 0, 1):
                fp = f + dy - delta * F         # input fold index
                if not 0 <= fp < F:
                    continue
                for w in range(W):              # output column
                    for dx in (-1, 0, 1):
                        wp = w + dx             # input column ('same' padding)
                        if not 0 <= wp < W:
                            continue
                        B[di, fp, wp, :, f, w, :] = w_hwio[dy + 1, dx + 1]
    return B.reshape(3, F * W * Ci, F * W * Co)


def _pack_band_tconv(wt, F, W):
    """ConvTranspose2d(k=8,s=4,p=2) as 16-phase banded matrices.

    wt: (Ci, Co, 8, 8) PyTorch layout.  Output lane layout: (f, w, py, px, co).
    out[n, 4h+py, 4w+px, co] = sum_{dy,dx,ci} x[n,h+dy,w+dx,ci]*wt[ci,co,py+2-4dy,px+2-4dx]
    """
    Ci, Co = int(wt.shape[0]), int(wt.shape[1])
    P = 4
    T = np.zeros((3, F, W, Ci, F, W, P, P, Co), np.float32)
    for di, delta in enumerate((-1, 0, 1)):
        for f in range(F):
            for dy in (-1, 0, 1):
                fp = f + dy - delta * F
                if not 0 <= fp < F:
                    continue
                for py in range(P):
                    ky = py + 2 - 4 * dy
                    if not 0 <= ky < 8:
                        continue
                    for w in range(W):
                        for dx in (-1, 0, 1):
                            wp = w + dx
                            if not 0 <= wp < W:
                                continue
                            for px in range(P):
                                kx = px + 2 - 4 * dx
                                if not 0 <= kx < 8:
                                    continue
                                T[di, fp, wp, :, f, w, py, px, :] = wt[:, :, ky, kx]
    return T.reshape(3, F * W * Ci, F * W * P * P * Co)


def _pack_params(params, F, W):
    w3_np = np.stack(
        [_pack_band_3x3(np.asarray(blk[k], np.float32), F, W)
         for blk in params["resblocks"] for k in ("w1", "w2")])          # (10,3,L,L)
    b3_np = np.stack(
        [np.tile(np.asarray(blk[k], np.float32), F * W)[None, :]
         for blk in params["resblocks"] for k in ("b1", "b2")])          # (10,1,L)
    alphas_np = np.array(
        [float(blk["alpha"]) for blk in params["resblocks"]]
        + [float(params["alpha_out"])], np.float32)                      # (6,)
    wt_np = _pack_band_tconv(np.asarray(params["wt"], np.float32), F, W)  # (3,L,Lt)
    bt_np = np.tile(np.asarray(params["bt"], np.float32), F * W * 16)[None, :]
    return (jnp.asarray(w3_np, jnp.bfloat16), jnp.asarray(b3_np, jnp.float32),
            jnp.asarray(alphas_np, jnp.float32), jnp.asarray(wt_np, jnp.bfloat16),
            jnp.asarray(bt_np, jnp.float32))


# ----------------------------------------------------------------------------
# Fused kernel: one image per grid step.  5 ResBlocks (banded 3x3 convs,
# PReLU, residual) + 16-phase transpose conv, activations resident in VMEM.
# ----------------------------------------------------------------------------
def _misr_kernel(x_ref, w3_ref, b3_ref, alpha_ref, wt_ref, bt_ref,
                 out_ref, xp_ref, yp_ref):
    _, S, L = x_ref.shape
    n_res = w3_ref.shape[0] // 2

    # Zero only the 1-super-row top/bottom halos (interiors are always
    # overwritten before being read), then place this image's activations.
    zrow = jnp.zeros((1, L), jnp.float32)
    xp_ref[0:1, :] = zrow
    xp_ref[S + 1:S + 2, :] = zrow
    yp_ref[0:1, :] = zrow
    yp_ref[S + 1:S + 2, :] = zrow
    xp_ref[1:S + 1, :] = x_ref[0]

    def band_conv(src_ref, load_w):
        # 3x3 conv as 3 accumulating (S, L) @ (L, Lo) MXU matmuls (one per dy
        # band); dx shift + channel mix live in the block-banded bf16 weights.
        acc = jnp.dot(src_ref[0:S, :].astype(jnp.bfloat16), load_w(0),
                      preferred_element_type=jnp.float32)
        for d in (1, 2):
            acc = acc + jnp.dot(src_ref[d:d + S, :].astype(jnp.bfloat16),
                                load_w(d), preferred_element_type=jnp.float32)
        return acc

    def prelu(v, a):
        return jnp.where(v >= 0.0, v, a * v)

    for r in range(n_res):
        a = alpha_ref[r]                                         # SMEM scalar
        y = band_conv(xp_ref, lambda d: w3_ref[2 * r, d]) + b3_ref[2 * r]
        yp_ref[1:S + 1, :] = prelu(y, a)
        z = band_conv(yp_ref, lambda d: w3_ref[2 * r + 1, d]) + b3_ref[2 * r + 1]
        skip = xp_ref[1:S + 1, :]                # read late: short live range
        xp_ref[1:S + 1, :] = prelu(z + skip, a)

    # ConvTranspose2d(k=8, s=4, p=2): 16-phase sub-pixel decomposition, also
    # as 3 banded matmuls with a lane-dense (S, F*W*16*ch) output.
    yt = band_conv(xp_ref, lambda d: wt_ref[d]) + bt_ref[...]
    out_ref[0] = prelu(yt, alpha_ref[n_res])


def _misr_pallas(x, w3, b3, alphas, wt, bt):
    N, S, L = x.shape
    Lt = wt.shape[-1]
    nc = w3.shape[0]
    grid_spec = pltpu.PrefetchScalarGridSpec(
        num_scalar_prefetch=0,
        grid=(N,),
        in_specs=[
            pl.BlockSpec((1, S, L), lambda n: (n, 0, 0)),           # x (one image)
            pl.BlockSpec((nc, 3, L, L), lambda n: (0, 0, 0, 0)),    # banded conv w (bf16)
            pl.BlockSpec((nc, 1, L), lambda n: (0, 0, 0)),          # conv biases (f32)
            pl.BlockSpec(memory_space=pltpu.MemorySpace.SMEM),      # PReLU alphas
            pl.BlockSpec((3, L, Lt), lambda n: (0, 0, 0)),          # banded tconv w (bf16)
            pl.BlockSpec((1, Lt), lambda n: (0, 0)),                # tconv bias (f32)
        ],
        out_specs=pl.BlockSpec((1, S, Lt), lambda n: (n, 0, 0)),
        scratch_shapes=[pltpu.VMEM((S + 2, L), jnp.float32),        # xp (row halo)
                        pltpu.VMEM((S + 2, L), jnp.float32)],       # yp (row halo)
    )
    return pl.pallas_call(
        _misr_kernel,
        out_shape=jax.ShapeDtypeStruct((N, S, Lt), jnp.float32),
        grid_spec=grid_spec,
        compiler_params=pltpu.CompilerParams(
            dimension_semantics=("parallel",),
            vmem_limit_bytes=32 * 1024 * 1024),
    )(x, w3, b3, alphas, wt, bt)


# ----------------------------------------------------------------------------
# MISR_Block forward (NCHW in / NCHW out, like the PyTorch module).
# ----------------------------------------------------------------------------
@partial(jax.jit, static_argnames=("F",))
def _forward_packed(x_nchw, w3, b3, alphas, wt, bt, *, F):
    N, cm, H, W = x_nchw.shape
    S = H // F
    L = F * W * cm
    Lt = wt.shape[-1]
    ch = Lt // (F * W * 16)
    x = jnp.transpose(x_nchw, (0, 2, 3, 1)).astype(jnp.float32)    # NHWC
    x = x.reshape(N, S, F, W, cm).reshape(N, S, L)                 # lane = (f,w,c)
    out = _misr_pallas(x, w3, b3, alphas, wt, bt)                  # (N, S, Lt)
    out = out.reshape(N, S, F, W, 4, 4, ch)                        # (n,s,f,w,py,px,co)
    out = out.transpose(0, 1, 2, 4, 3, 5, 6).reshape(N, 4 * H, 4 * W, ch)
    return jnp.transpose(out, (0, 3, 1, 2))                        # NCHW


def misr_block_forward(x_nchw, params):
    _, cm, H, W = x_nchw.shape
    wc = W * cm
    F = 128 // wc if (wc <= 128 and 128 % wc == 0) else 1          # lane width -> 128
    while F > 1 and H % F != 0:
        F //= 2
    w3, b3, alphas, wt, bt = _pack_params(params, F, W)            # host-side (numpy)
    return _forward_packed(jnp.asarray(x_nchw), w3, b3, alphas, wt, bt, F=F)


# ----------------------------------------------------------------------------
# Pure-JAX reference (lax.conv, f32) for a correctness check.
# ----------------------------------------------------------------------------
def misr_block_reference(x_nchw, params):
    dn = ("NHWC", "HWIO", "NHWC")
    prec = lax.Precision.HIGHEST

    def prelu(v, a):
        return jnp.where(v >= 0, v, a * v)

    x = jnp.transpose(x_nchw, (0, 2, 3, 1))
    for blk in params["resblocks"]:
        y = lax.conv_general_dilated(x, blk["w1"], (1, 1), "SAME",
                                     dimension_numbers=dn, precision=prec) + blk["b1"]
        y = prelu(y, blk["alpha"])
        y = lax.conv_general_dilated(y, blk["w2"], (1, 1), "SAME",
                                     dimension_numbers=dn, precision=prec) + blk["b2"]
        x = prelu(y + x, blk["alpha"])
    w_eq = jnp.transpose(params["wt"][:, :, ::-1, ::-1], (2, 3, 0, 1))
    y = lax.conv_general_dilated(x, w_eq, (1, 1), [(5, 5), (5, 5)],
                                 lhs_dilation=(4, 4),
                                 dimension_numbers=dn, precision=prec) + params["bt"]
    y = prelu(y, params["alpha_out"])
    return jnp.transpose(y, (0, 3, 1, 2))


# ----------------------------------------------------------------------------
# Deterministic parameter init (shapes from the PyTorch __init__).
# ----------------------------------------------------------------------------
def init_params(key, cm, ch, num_blocks=5):
    params = {"resblocks": []}
    keys = jax.random.split(key, 4 * num_blocks + 2)
    idx = 0
    for _ in range(num_blocks):
        w1 = 0.1 * jax.random.normal(keys[idx], (3, 3, cm, cm), jnp.float32); idx += 1
        b1 = 0.05 * jax.random.normal(keys[idx], (cm,), jnp.float32); idx += 1
        w2 = 0.1 * jax.random.normal(keys[idx], (3, 3, cm, cm), jnp.float32); idx += 1
        b2 = 0.05 * jax.random.normal(keys[idx], (cm,), jnp.float32); idx += 1
        params["resblocks"].append(
            {"w1": w1, "b1": b1, "w2": w2, "b2": b2,
             "alpha": jnp.float32(0.25)})  # nn.PReLU() default; shared inside a block
    params["wt"] = 0.1 * jax.random.normal(keys[idx], (cm, ch, 8, 8), jnp.float32); idx += 1
    params["bt"] = 0.05 * jax.random.normal(keys[idx], (ch,), jnp.float32)
    params["alpha_out"] = jnp.float32(0.25)
    return params


if __name__ == "__main__":
    cm, ch = 4, 8              # MISR_Block(cm, ch)
    N, H, W = 2, 16, 16
    key = jax.random.PRNGKey(0)
    kx, kp = jax.random.split(key)
    x = jax.random.normal(kx, (N, cm, H, W), jnp.float32)   # NCHW like PyTorch
    params = init_params(kp, cm, ch)

    out = misr_block_forward(x, params)
    out = jax.block_until_ready(out)
    assert out.shape == (N, ch, 4 * H, 4 * W), out.shape

    ref = misr_block_reference(x, params)
    abs_err = jnp.abs(out - ref)
    tol = 5e-2 + 5e-2 * jnp.abs(ref)      # bf16 MXU operands vs f32 reference
    assert bool(jnp.all(abs_err <= tol)), float(jnp.max(abs_err))

    print("KERNEL_OK")
</pallas_src>

<mosaic_0001>
module attributes {stable_mosaic.version = 11 : i64} {
  func.func @_misr_kernel(%arg0: i32, %arg1: memref<1x8x128xf32, #tpu.memory_space<vmem>>, %arg2: memref<10x3x128x128xbf16, #tpu.memory_space<vmem>>, %arg3: memref<10x1x128xf32, #tpu.memory_space<vmem>>, %arg4: memref<6xf32, #tpu.memory_space<smem>>, %arg5: memref<3x128x4096xbf16, #tpu.memory_space<vmem>>, %arg6: memref<1x4096xf32, #tpu.memory_space<vmem>>, %arg7: memref<1x8x4096xf32, #tpu.memory_space<vmem>>, %arg8: memref<10x128xf32, #tpu.memory_space<vmem>>, %arg9: memref<10x128xf32, #tpu.memory_space<vmem>>) attributes {dimension_semantics = [#tpu.dimension_semantics<parallel>], iteration_bounds = array<i64: 2>, scalar_prefetch = 0 : i64, scratch_operands = 2 : i64, tpu.core_type = #tpu.core_type<tc>, window_params = [{transform_indices = @transform_0, window_bounds = array<i64: 1, 8, 128>}, {pipeline_mode = #tpu.pipeline_mode<synchronous>, transform_indices = @transform_1, window_bounds = array<i64: 10, 3, 128, 128>}, {pipeline_mode = #tpu.pipeline_mode<synchronous>, transform_indices = @transform_2, window_bounds = array<i64: 10, 1, 128>}, {transform_indices = @transform_3, window_bounds = array<i64: 6>}, {pipeline_mode = #tpu.pipeline_mode<synchronous>, transform_indices = @transform_4, window_bounds = array<i64: 3, 128, 4096>}, {pipeline_mode = #tpu.pipeline_mode<synchronous>, transform_indices = @transform_5, window_bounds = array<i64: 1, 4096>}, {transform_indices = @transform_6, window_bounds = array<i64: 1, 8, 4096>}]} {
    %cst = arith.constant 0.000000e+00 : f32
    %0 = vector.broadcast %cst : f32 to vector<1x128xf32>
    %c0 = arith.constant 0 : index
    %c0_0 = arith.constant 0 : index
    %1 = vector.load %arg8[%c0, %c0_0] : memref<10x128xf32, #tpu.memory_space<vmem>>, vector<1x128xf32>
    tpu.vector_store %arg8[%c0, %c0_0], %0 {strides = array<i32>} : memref<10x128xf32, #tpu.memory_space<vmem>>, vector<1x128xf32>,
    %c9 = arith.constant 9 : index
    %c0_1 = arith.constant 0 : index
    %2 = vector.load %arg8[%c9, %c0_1] : memref<10x128xf32, #tpu.memory_space<vmem>>, vector<1x128xf32>
    tpu.vector_store %arg8[%c9, %c0_1], %0 {strides = array<i32>} : memref<10x128xf32, #tpu.memory_space<vmem>>, vector<1x128xf32>,
    %c0_2 = arith.constant 0 : index
    %c0_3 = arith.constant 0 : index
    %3 = vector.load %arg9[%c0_2, %c0_3] : memref<10x128xf32, #tpu.memory_space<vmem>>, vector<1x128xf32>
    tpu.vector_store %arg9[%c0_2, %c0_3], %0 {strides = array<i32>} : memref<10x128xf32, #tpu.memory_space<vmem>>, vector<1x128xf32>,
    %c9_4 = arith.constant 9 : index
    %c0_5 = arith.constant 0 : index
    %4 = vector.load %arg9[%c9_4, %c0_5] : memref<10x128xf32, #tpu.memory_space<vmem>>, vector<1x128xf32>
    tpu.vector_store %arg9[%c9_4, %c0_5], %0 {strides = array<i32>} : memref<10x128xf32, #tpu.memory_space<vmem>>, vector<1x128xf32>,
    %c0_6 = arith.constant 0 : index
    %c0_7 = arith.constant 0 : index
    %c0_8 = arith.constant 0 : index
    %5 = vector.load %arg1[%c0_6, %c0_7, %c0_8] : memref<1x8x128xf32, #tpu.memory_space<vmem>>, vector<1x8x128xf32>
    %6 = vector.shape_cast %5 : vector<1x8x128xf32> to vector<8x128xf32>
    %c1 = arith.constant 1 : index
    %c0_9 = arith.constant 0 : index
    %7 = vector.load %arg8[%c1, %c0_9] : memref<10x128xf32, #tpu.memory_space<vmem>>, vector<8x128xf32>
    tpu.vector_store %arg8[%c1, %c0_9], %6 {strides = array<i32>} : memref<10x128xf32, #tpu.memory_space<vmem>>, vector<8x128xf32>,
    %c0_10 = arith.constant 0 : index
    %8 = memref.load %arg4[%c0_10] : memref<6xf32, #tpu.memory_space<smem>>
    %c0_11 = arith.constant 0 : index
    %c0_12 = arith.constant 0 : index
    %9 = vector.load %arg8[%c0_11, %c0_12] : memref<10x128xf32, #tpu.memory_space<vmem>>, vector<8x128xf32>
    %10 = arith.truncf %9 : vector<8x128xf32> to vector<8x128xbf16>
    %c0_13 = arith.constant 0 : index
    %c0_14 = arith.constant 0 : index
    %c0_15 = arith.constant 0 : index
    %c0_16 = arith.constant 0 : index
    %11 = vector.load %arg2[%c0_13, %c0_14, %c0_15, %c0_16] : memref<10x3x128x128xbf16, #tpu.memory_space<vmem>>, vector<1x1x128x128xbf16>
    %12 = vector.shape_cast %11 : vector<1x1x128x128xbf16> to vector<128x128xbf16>
    %cst_17 = arith.constant dense<0.000000e+00> : vector<8x128xf32>
    %13 = tpu.matmul %10, %12, %cst_17 {dimension_numbers = #tpu.dot_dimension_numbers<[1], [0], [0], [1], [0, 0, 1, 1], [], []>} : vector<8x128xbf16>, vector<128x128xbf16>, vector<8x128xf32> -> vector<8x128xf32>
    %c1_18 = arith.constant 1 : index
    %c0_19 = arith.constant 0 : index
    %14 = vector.load %arg8[%c1_18, %c0_19] : memref<10x128xf32, #tpu.memory_space<vmem>>, vector<8x128xf32>
    %15 = arith.truncf %14 : vector<8x128xf32> to vector<8x128xbf16>
    %c0_20 = arith.constant 0 : index
    %c1_21 = arith.constant 1 : index
    %c0_22 = arith.constant 0 : index
    %c0_23 = arith.constant 0 : index
    %16 = vector.load %arg2[%c0_20, %c1_21, %c0_22, %c0_23] : memref<10x3x128x128xbf16, #tpu.memory_space<vmem>>, vector<1x1x128x128xbf16>
    %17 = vector.shape_cast %16 : vector<1x1x128x128xbf16> to vector<128x128xbf16>
    %cst_24 = arith.constant dense<0.000000e+00> : vector<8x128xf32>
    %18 = tpu.matmul %15, %17, %cst_24 {dimension_numbers = #tpu.dot_dimension_numbers<[1], [0], [0], [1], [0, 0, 1, 1], [], []>} : vector<8x128xbf16>, vector<128x128xbf16>, vector<8x128xf32> -> vector<8x128xf32>
    %19 = arith.addf %13, %18 : vector<8x128xf32>
    %c2 = arith.constant 2 : index
    %c0_25 = arith.constant 0 : index
    %20 = vector.load %arg8[%c2, %c0_25] : memref<10x128xf32, #tpu.memory_space<vmem>>, vector<8x128xf32>
    %21 = arith.truncf %20 : vector<8x128xf32> to vector<8x128xbf16>
    %c0_26 = arith.constant 0 : index
    %c2_27 = arith.constant 2 : index
    %c0_28 = arith.constant 0 : index
    %c0_29 = arith.constant 0 : index
    %22 = vector.load %arg2[%c0_26, %c2_27, %c0_28, %c0_29] : memref<10x3x128x128xbf16, #tpu.memory_space<vmem>>, vector<1x1x128x128xbf16>
    %23 = vector.shape_cast %22 : vector<1x1x128x128xbf16> to vector<128x128xbf16>
    %cst_30 = arith.constant dense<0.000000e+00> : vector<8x128xf32>
    %24 = tpu.matmul %21, %23, %cst_30 {dimension_numbers = #tpu.dot_dimension_numbers<[1], [0], [0], [1], [0, 0, 1, 1], [], []>} : vector<8x128xbf16>, vector<128x128xbf16>, vector<8x128xf32> -> vector<8x128xf32>
    %25 = arith.addf %19, %24 : vector<8x128xf32>
    %c0_31 = arith.constant 0 : index
    %c0_32 = arith.constant 0 : index
    %c0_33 = arith.constant 0 : index
    %26 = vector.load %arg3[%c0_31, %c0_32, %c0_33] : memref<10x1x128xf32, #tpu.memory_space<vmem>>, vector<1x1x128xf32>
    %27 = vector.shape_cast %26 : vector<1x1x128xf32> to vector<1x128xf32>
    %28 = vector.broadcast %27 : vector<1x128xf32> to vector<8x128xf32>
    %29 = arith.addf %25, %28 : vector<8x128xf32>
    %cst_34 = arith.constant 0.000000e+00 : f32
    %30 = vector.broadcast %cst_34 : f32 to vector<8x128xf32>
    %31 = arith.cmpf oge, %29, %30 : vector<8x128xf32>
    %32 = vector.broadcast %8 : f32 to vector<8x128xf32>
    %33 = arith.mulf %32, %29 : vector<8x128xf32>
    %34 = arith.select %31, %29, %33 : vector<8x128xi1>, vector<8x128xf32>
    %c1_35 = arith.constant 1 : index
    %c0_36 = arith.constant 0 : index
    %35 = vector.load %arg9[%c1_35, %c0_36] : memref<10x128xf32, #tpu.memory_space<vmem>>, vector<8x128xf32>
    tpu.vector_store %arg9[%c1_35, %c0_36], %34 {strides = array<i32>} : memref<10x128xf32, #tpu.memory_space<vmem>>, vector<8x128xf32>,
    %c0_37 = arith.constant 0 : index
    %c0_38 = arith.constant 0 : index
    %36 = vector.load %arg9[%c0_37, %c0_38] : memref<10x128xf32, #tpu.memory_space<vmem>>, vector<8x128xf32>
    %37 = arith.truncf %36 : vector<8x128xf32> to vector<8x128xbf16>
    %c1_39 = arith.constant 1 : index
    %c0_40 = arith.constant 0 : index
    %c0_41 = arith.constant 0 : index
    %c0_42 = arith.constant 0 : index
    %38 = vector.load %arg2[%c1_39, %c0_40, %c0_41, %c0_42] : memref<10x3x128x128xbf16, #tpu.memory_space<vmem>>, vector<1x1x128x128xbf16>
    %39 = vector.shape_cast %38 : vector<1x1x128x128xbf16> to vector<128x128xbf16>
    %cst_43 = arith.constant dense<0.000000e+00> : vector<8x128xf32>
    %40 = tpu.matmul %37, %39, %cst_43 {dimension_numbers = #tpu.dot_dimension_numbers<[1], [0], [0], [1], [0, 0, 1, 1], [], []>} : vector<8x128xbf16>, vector<128x128xbf16>, vector<8x128xf32> -> vector<8x128xf32>
    %c1_44 = arith.constant 1 : index
    %c0_45 = arith.constant 0 : index
    %41 = vector.load %arg9[%c1_44, %c0_45] : memref<10x128xf32, #tpu.memory_space<vmem>>, vector<8x128xf32>
    %42 = arith.truncf %41 : vector<8x128xf32> to vector<8x128xbf16>
    %c1_46 = arith.constant 1 : index
    %c1_47 = arith.constant 1 : index
    %c0_48 = arith.constant 0 : index
    %c0_49 = arith.constant 0 : index
    %43 = vector.load %arg2[%c1_46, %c1_47, %c0_48, %c0_49] : memref<10x3x128x128xbf16, #tpu.memory_space<vmem>>, vector<1x1x128x128xbf16>
    %44 = vector.shape_cast %43 : vector<1x1x128x128xbf16> to vector<128x128xbf16>
    %cst_50 = arith.constant dense<0.000000e+00> : vector<8x128xf32>
    %45 = tpu.matmul %42, %44, %cst_50 {dimension_numbers = #tpu.dot_dimension_numbers<[1], [0], [0], [1], [0, 0, 1, 1], [], []>} : vector<8x128xbf16>, vector<128x128xbf16>, vector<8x128xf32> -> vector<8x128xf32>
    %46 = arith.addf %40, %45 : vector<8x128xf32>
    %c2_51 = arith.constant 2 : index
    %c0_52 = arith.constant 0 : index
    %47 = vector.load %arg9[%c2_51, %c0_52] : memref<10x128xf32, #tpu.memory_space<vmem>>, vector<8x128xf32>
    %48 = arith.truncf %47 : vector<8x128xf32> to vector<8x128xbf16>
    %c1_53 = arith.constant 1 : index
    %c2_54 = arith.constant 2 : index
    %c0_55 = arith.constant 0 : index
    %c0_56 = arith.constant 0 : index
    %49 = vector.load %arg2[%c1_53, %c2_54, %c0_55, %c0_56] : memref<10x3x128x128xbf16, #tpu.memory_space<vmem>>, vector<1x1x128x128xbf16>
    %50 = vector.shape_cast %49 : vector<1x1x128x128xbf16> to vector<128x128xbf16>
    %cst_57 = arith.constant dense<0.000000e+00> : vector<8x128xf32>
    %51 = tpu.matmul %48, %50, %cst_57 {dimension_numbers = #tpu.dot_dimension_numbers<[1], [0], [0], [1], [0, 0, 1, 1], [], []>} : vector<8x128xbf16>, vector<128x128xbf16>, vector<8x128xf32> -> vector<8x128xf32>
    %52 = arith.addf %46, %51 : vector<8x128xf32>
    %c1_58 = arith.constant 1 : index
    %c0_59 = arith.constant 0 : index
    %c0_60 = arith.constant 0 : index
    %53 = vector.load %arg3[%c1_58, %c0_59, %c0_60] : memref<10x1x128xf32, #tpu.memory_space<vmem>>, vector<1x1x128xf32>
    %54 = vector.shape_cast %53 : vector<1x1x128xf32> to vector<1x128xf32>
    %55 = vector.broadcast %54 : vector<1x128xf32> to vector<8x128xf32>
    %56 = arith.addf %52, %55 : vector<8x128xf32>
    %c1_61 = arith.constant 1 : index
    %c0_62 = arith.constant 0 : index
    %57 = vector.load %arg8[%c1_61, %c0_62] : memref<10x128xf32, #tpu.memory_space<vmem>>, vector<8x128xf32>
    %58 = arith.addf %56, %57 : vector<8x128xf32>
    %cst_63 = arith.constant 0.000000e+00 : f32
    %59 = vector.broadcast %cst_63 : f32 to vector<8x128xf32>
    %60 = arith.cmpf oge, %58, %59 : vector<8x128xf32>
    %61 = vector.broadcast %8 : f32 to vector<8x128xf32>
    %62 = arith.mulf %61, %58 : vector<8x128xf32>
    %63 = arith.select %60, %58, %62 : vector<8x128xi1>, vector<8x128xf32>
    %c1_64 = arith.constant 1 : index
    %c0_65 = arith.constant 0 : index
    %64 = vector.load %arg8[%c1_64, %c0_65] : memref<10x128xf32, #tpu.memory_space<vmem>>, vector<8x128xf32>
    tpu.vector_store %arg8[%c1_64, %c0_65], %63 {strides = array<i32>} : memref<10x128xf32, #tpu.memory_space<vmem>>, vector<8x128xf32>,
    %c1_66 = arith.constant 1 : index
    %65 = memref.load %arg4[%c1_66] : memref<6xf32, #tpu.memory_space<smem>>
    %c0_67 = arith.constant 0 : index
    %c0_68 = arith.constant 0 : index
    %66 = vector.load %arg8[%c0_67, %c0_68] : memref<10x128xf32, #tpu.memory_space<vmem>>, vector<8x128xf32>
    %67 = arith.truncf %66 : vector<8x128xf32> to vector<8x128xbf16>
    %c2_69 = arith.constant 2 : index
    %c0_70 = arith.constant 0 : index
    %c0_71 = arith.constant 0 : index
    %c0_72 = arith.constant 0 : index
    %68 = vector.load %arg2[%c2_69, %c0_70, %c0_71, %c0_72] : memref<10x3x128x128xbf16, #tpu.memory_space<vmem>>, vector<1x1x128x128xbf16>
    %69 = vector.shape_cast %68 : vector<1x1x128x128xbf16> to vector<128x128xbf16>
    %cst_73 = arith.constant dense<0.000000e+00> : vector<8x128xf32>
    %70 = tpu.matmul %67, %69, %cst_73 {dimension_numbers = #tpu.dot_dimension_numbers<[1], [0], [0], [1], [0, 0, 1, 1], [], []>} : vector<8x128xbf16>, vector<128x128xbf16>, vector<8x128xf32> -> vector<8x128xf32>
    %c1_74 = arith.constant 1 : index
    %c0_75 = arith.constant 0 : index
    %71 = vector.load %arg8[%c1_74, %c0_75] : memref<10x128xf32, #tpu.memory_space<vmem>>, vector<8x128xf32>
    %72 = arith.truncf %71 : vector<8x128xf32> to vector<8x128xbf16>
    %c2_76 = arith.constant 2 : index
    %c1_77 = arith.constant 1 : index
    %c0_78 = arith.constant 0 : index
    %c0_79 = arith.constant 0 : index
    %73 = vector.load %arg2[%c2_76, %c1_77, %c0_78, %c0_79] : memref<10x3x128x128xbf16, #tpu.memory_space<vmem>>, vector<1x1x128x128xbf16>
    %74 = vector.shape_cast %73 : vector<1x1x128x128xbf16> to vector<128x128xbf16>
    %cst_80 = arith.constant dense<0.000000e+00> : vector<8x128xf32>
    %75 = tpu.matmul %72, %74, %cst_80 {dimension_numbers = #tpu.dot_dimension_numbers<[1], [0], [0], [1], [0, 0, 1, 1], [], []>} : vector<8x128xbf16>, vector<128x128xbf16>, vector<8x128xf32> -> vector<8x128xf32>
    %76 = arith.addf %70, %75 : vector<8x128xf32>
    %c2_81 = arith.constant 2 : index
    %c0_82 = arith.constant 0 : index
    %77 = vector.load %arg8[%c2_81, %c0_82] : memref<10x128xf32, #tpu.memory_space<vmem>>, vector<8x128xf32>
    %78 = arith.truncf %77 : vector<8x128xf32> to vector<8x128xbf16>
    %c2_83 = arith.constant 2 : index
    %c2_84 = arith.constant 2 : index
    %c0_85 = arith.constant 0 : index
    %c0_86 = arith.constant 0 : index
    %79 = vector.load %arg2[%c2_83, %c2_84, %c0_85, %c0_86] : memref<10x3x128x128xbf16, #tpu.memory_space<vmem>>, vector<1x1x128x128xbf16>
    %80 = vector.shape_cast %79 : vector<1x1x128x128xbf16> to vector<128x128xbf16>
    %cst_87 = arith.constant dense<0.000000e+00> : vector<8x128xf32>
    %81 = tpu.matmul %78, %80, %cst_87 {dimension_numbers = #tpu.dot_dimension_numbers<[1], [0], [0], [1], [0, 0, 1, 1], [], []>} : vector<8x128xbf16>, vector<128x128xbf16>, vector<8x128xf32> -> vector<8x128xf32>
    %82 = arith.addf %76, %81 : vector<8x128xf32>
    %c2_88 = arith.constant 2 : index
    %c0_89 = arith.constant 0 : index
    %c0_90 = arith.constant 0 : index
    %83 = vector.load %arg3[%c2_88, %c0_89, %c0_90] : memref<10x1x128xf32, #tpu.memory_space<vmem>>, vector<1x1x128xf32>
    %84 = vector.shape_cast %83 : vector<1x1x128xf32> to vector<1x128xf32>
    %85 = vector.broadcast %84 : vector<1x128xf32> to vector<8x128xf32>
    %86 = arith.addf %82, %85 : vector<8x128xf32>
    %cst_91 = arith.constant 0.000000e+00 : f32
    %87 = vector.broadcast %cst_91 : f32 to vector<8x128xf32>
    %88 = arith.cmpf oge, %86, %87 : vector<8x128xf32>
    %89 = vector.broadcast %65 : f32 to vector<8x128xf32>
    %90 = arith.mulf %89, %86 : vector<8x128xf32>
    %91 = arith.select %88, %86, %90 : vector<8x128xi1>, vector<8x128xf32>
    %c1_92 = arith.constant 1 : index
    %c0_93 = arith.constant 0 : index
    %92 = vector.load %arg9[%c1_92, %c0_93] : memref<10x128xf32, #tpu.memory_space<vmem>>, vector<8x128xf32>
    tpu.vector_store %arg9[%c1_92, %c0_93], %91 {strides = array<i32>} : memref<10x128xf32, #tpu.memory_space<vmem>>, vector<8x128xf32>,
    %c0_94 = arith.constant 0 : index
    %c0_95 = arith.constant 0 : index
    %93 = vector.load %arg9[%c0_94, %c0_95] : memref<10x128xf32, #tpu.memory_space<vmem>>, vector<8x128xf32>
    %94 = arith.truncf %93 : vector<8x128xf32> to vector<8x128xbf16>
    %c3 = arith.constant 3 : index
    %c0_96 = arith.constant 0 : index
    %c0_97 = arith.constant 0 : index
    %c0_98 = arith.constant 0 : index
    %95 = vector.load %arg2[%c3, %c0_96, %c0_97, %c0_98] : memref<10x3x128x128xbf16, #tpu.memory_space<vmem>>, vector<1x1x128x128xbf16>
    %96 = vector.shape_cast %95 : vector<1x1x128x128xbf16> to vector<128x128xbf16>
    %cst_99 = arith.constant dense<0.000000e+00> : vector<8x128xf32>
    %97 = tpu.matmul %94, %96, %cst_99 {dimension_numbers = #tpu.dot_dimension_numbers<[1], [0], [0], [1], [0, 0, 1, 1], [], []>} : vector<8x128xbf16>, vector<128x128xbf16>, vector<8x128xf32> -> vector<8x128xf32>
    %c1_100 = arith.constant 1 : index
    %c0_101 = arith.constant 0 : index
    %98 = vector.load %arg9[%c1_100, %c0_101] : memref<10x128xf32, #tpu.memory_space<vmem>>, vector<8x128xf32>
    %99 = arith.truncf %98 : vector<8x128xf32> to vector<8x128xbf16>
    %c3_102 = arith.constant 3 : index
    %c1_103 = arith.constant 1 : index
    %c0_104 = arith.constant 0 : index
    %c0_105 = arith.constant 0 : index
    %100 = vector.load %arg2[%c3_102, %c1_103, %c0_104, %c0_105] : memref<10x3x128x128xbf16, #tpu.memory_space<vmem>>, vector<1x1x128x128xbf16>
    %101 = vector.shape_cast %100 : vector<1x1x128x128xbf16> to vector<128x128xbf16>
    %cst_106 = arith.constant dense<0.000000e+00> : vector<8x128xf32>
    %102 = tpu.matmul %99, %101, %cst_106 {dimension_numbers = #tpu.dot_dimension_numbers<[1], [0], [0], [1], [0, 0, 1, 1], [], []>} : vector<8x128xbf16>, vector<128x128xbf16>, vector<8x128xf32> -> vector<8x128xf32>
    %103 = arith.addf %97, %102 : vector<8x128xf32>
    %c2_107 = arith.constant 2 : index
    %c0_108 = arith.constant 0 : index
    %104 = vector.load %arg9[%c2_107, %c0_108] : memref<10x128xf32, #tpu.memory_space<vmem>>, vector<8x128xf32>
    %105 = arith.truncf %104 : vector<8x128xf32> to vector<8x128xbf16>
    %c3_109 = arith.constant 3 : index
    %c2_110 = arith.constant 2 : index
    %c0_111 = arith.constant 0 : index
    %c0_112 = arith.constant 0 : index
    %106 = vector.load %arg2[%c3_109, %c2_110, %c0_111, %c0_112] : memref<10x3x128x128xbf16, #tpu.memory_space<vmem>>, vector<1x1x128x128xbf16>
    %107 = vector.shape_cast %106 : vector<1x1x128x128xbf16> to vector<128x128xbf16>
    %cst_113 = arith.constant dense<0.000000e+00> : vector<8x128xf32>
    %108 = tpu.matmul %105, %107, %cst_113 {dimension_numbers = #tpu.dot_dimension_numbers<[1], [0], [0], [1], [0, 0, 1, 1], [], []>} : vector<8x128xbf16>, vector<128x128xbf16>, vector<8x128xf32> -> vector<8x128xf32>
    %109 = arith.addf %103, %108 : vector<8x128xf32>
    %c3_114 = arith.constant 3 : index
    %c0_115 = arith.constant 0 : index
    %c0_116 = arith.constant 0 : index
    %110 = vector.load %arg3[%c3_114, %c0_115, %c0_116] : memref<10x1x128xf32, #tpu.memory_space<vmem>>, vector<1x1x128xf32>
    %111 = vector.shape_cast %110 : vector<1x1x128xf32> to vector<1x128xf32>
    %112 = vector.broadcast %111 : vector<1x128xf32> to vector<8x128xf32>
    %113 = arith.addf %109, %112 : vector<8x128xf32>
    %c1_117 = arith.constant 1 : index
    %c0_118 = arith.constant 0 : index
    %114 = vector.load %arg8[%c1_117, %c0_118] : memref<10x128xf32, #tpu.memory_space<vmem>>, vector<8x128xf32>
    %115 = arith.addf %113, %114 : vector<8x128xf32>
    %cst_119 = arith.constant 0.000000e+00 : f32
    %116 = vector.broadcast %cst_119 : f32 to vector<8x128xf32>
    %117 = arith.cmpf oge, %115, %116 : vector<8x128xf32>
    %118 = vector.broadcast %65 : f32 to vector<8x128xf32>
    %119 = arith.mulf %118, %115 : vector<8x128xf32>
    %120 = arith.select %117, %115, %119 : vector<8x128xi1>, vector<8x128xf32>
    %c1_120 = arith.constant 1 : index
    %c0_121 = arith.constant 0 : index
    %121 = vector.load %arg8[%c1_120, %c0_121] : memref<10x128xf32, #tpu.memory_space<vmem>>, vector<8x128xf32>
    tpu.vector_store %arg8[%c1_120, %c0_121], %120 {strides = array<i32>} : memref<10x128xf32, #tpu.memory_space<vmem>>, vector<8x128xf32>,
    %c2_122 = arith.constant 2 : index
    %122 = memref.load %arg4[%c2_122] : memref<6xf32, #tpu.memory_space<smem>>
    %c0_123 = arith.constant 0 : index
    %c0_124 = arith.constant 0 : index
    %123 = vector.load %arg8[%c0_123, %c0_124] : memref<10x128xf32, #tpu.memory_space<vmem>>, vector<8x128xf32>
    %124 = arith.truncf %123 : vector<8x128xf32> to vector<8x128xbf16>
    %c4 = arith.constant 4 : index
    %c0_125 = arith.constant 0 : index
    %c0_126 = arith.constant 0 : index
    %c0_127 = arith.constant 0 : index
    %125 = vector.load %arg2[%c4, %c0_125, %c0_126, %c0_127] : memref<10x3x128x128xbf16, #tpu.memory_space<vmem>>, vector<1x1x128x128xbf16>
    %126 = vector.shape_cast %125 : vector<1x1x128x128xbf16> to vector<128x128xbf16>
    %cst_128 = arith.constant dense<0.000000e+00> : vector<8x128xf32>
    %127 = tpu.matmul %124, %126, %cst_128 {dimension_numbers = #tpu.dot_dimension_numbers<[1], [0], [0], [1], [0, 0, 1, 1], [], []>} : vector<8x128xbf16>, vector<128x128xbf16>, vector<8x128xf32> -> vector<8x128xf32>
    %c1_129 = arith.constant 1 : index
    %c0_130 = arith.constant 0 : index
    %128 = vector.load %arg8[%c1_129, %c0_130] : memref<10x128xf32, #tpu.memory_space<vmem>>, vector<8x128xf32>
    %129 = arith.truncf %128 : vector<8x128xf32> to vector<8x128xbf16>
    %c4_131 = arith.constant 4 : index
    %c1_132 = arith.constant 1 : index
    %c0_133 = arith.constant 0 : index
    %c0_134 = arith.constant 0 : index
    %130 = vector.load %arg2[%c4_131, %c1_132, %c0_133, %c0_134] : memref<10x3x128x128xbf16, #tpu.memory_space<vmem>>, vector<1x1x128x128xbf16>
    %131 = vector.shape_cast %130 : vector<1x1x128x128xbf16> to vector<128x128xbf16>
    %cst_135 = arith.constant dense<0.000000e+00> : vector<8x128xf32>
    %132 = tpu.matmul %129, %131, %cst_135 {dimension_numbers = #tpu.dot_dimension_numbers<[1], [0], [0], [1], [0, 0, 1, 1], [], []>} : vector<8x128xbf16>, vector<128x128xbf16>, vector<8x128xf32> -> vector<8x128xf32>
    %133 = arith.addf %127, %132 : vector<8x128xf32>
    %c2_136 = arith.constant 2 : index
    %c0_137 = arith.constant 0 : index
    %134 = vector.load %arg8[%c2_136, %c0_137] : memref<10x128xf32, #tpu.memory_space<vmem>>, vector<8x128xf32>
    %135 = arith.truncf %134 : vector<8x128xf32> to vector<8x128xbf16>
    %c4_138 = arith.constant 4 : index
    %c2_139 = arith.constant 2 : index
    %c0_140 = arith.constant 0 : index
    %c0_141 = arith.constant 0 : index
    %136 = vector.load %arg2[%c4_138, %c2_139, %c0_140, %c0_141] : memref<10x3x128x128xbf16, #tpu.memory_space<vmem>>, vector<1x1x128x128xbf16>
    %137 = vector.shape_cast %136 : vector<1x1x128x128xbf16> to vector<128x128xbf16>
    %cst_142 = arith.constant dense<0.000000e+00> : vector<8x128xf32>
    %138 = tpu.matmul %135, %137, %cst_142 {dimension_numbers = #tpu.dot_dimension_numbers<[1], [0], [0], [1], [0, 0, 1, 1], [], []>} : vector<8x128xbf16>, vector<128x128xbf16>, vector<8x128xf32> -> vector<8x128xf32>
    %139 = arith.addf %133, %138 : vector<8x128xf32>
    %c4_143 = arith.constant 4 : index
    %c0_144 = arith.constant 0 : index
    %c0_145 = arith.constant 0 : index
    %140 = vector.load %arg3[%c4_143, %c0_144, %c0_145] : memref<10x1x128xf32, #tpu.memory_space<vmem>>, vector<1x1x128xf32>
    %141 = vector.shape_cast %140 : vector<1x1x128xf32> to vector<1x128xf32>
    %142 = vector.broadcast %141 : vector<1x128xf32> to vector<8x128xf32>
    %143 = arith.addf %139, %142 : vector<8x128xf32>
    %cst_146 = arith.constant 0.000000e+00 : f32
    %144 = vector.broadcast %cst_146 : f32 to vector<8x128xf32>
    %145 = arith.cmpf oge, %143, %144 : vector<8x128xf32>
    %146 = vector.broadcast %122 : f32 to vector<8x128xf32>
    %147 = arith.mulf %146, %143 : vector<8x128xf32>
    %148 = arith.select %145, %143, %147 : vector<8x128xi1>, vector<8x128xf32>
    %c1_147 = arith.constant 1 : index
    %c0_148 = arith.constant 0 : index
    %149 = vector.load %arg9[%c1_147, %c0_148] : memref<10x128xf32, #tpu.memory_space<vmem>>, vector<8x128xf32>
    tpu.vector_store %arg9[%c1_147, %c0_148], %148 {strides = array<i32>} : memref<10x128xf32, #tpu.memory_space<vmem>>, vector<8x128xf32>,
    %c0_149 = arith.constant 0 : index
    %c0_150 = arith.constant 0 : index
    %150 = vector.load %arg9[%c0_149, %c0_150] : memref<10x128xf32, #tpu.memory_space<vmem>>, vector<8x128xf32>
    %151 = arith.truncf %150 : vector<8x128xf32> to vector<8x128xbf16>
    %c5 = arith.constant 5 : index
    %c0_151 = arith.constant 0 : index
    %c0_152 = arith.constant 0 : index
    %c0_153 = arith.constant 0 : index
    %152 = vector.load %arg2[%c5, %c0_151, %c0_152, %c0_153] : memref<10x3x128x128xbf16, #tpu.memory_space<vmem>>, vector<1x1x128x128xbf16>
    %153 = vector.shape_cast %152 : vector<1x1x128x128xbf16> to vector<128x128xbf16>
    %cst_154 = arith.constant dense<0.000000e+00> : vector<8x128xf32>
    %154 = tpu.matmul %151, %153, %cst_154 {dimension_numbers = #tpu.dot_dimension_numbers<[1], [0], [0], [1], [0, 0, 1, 1], [], []>} : vector<8x128xbf16>, vector<128x128xbf16>, vector<8x128xf32> -> vector<8x128xf32>
    %c1_155 = arith.constant 1 : index
    %c0_156 = arith.constant 0 : index
    %155 = vector.load %arg9[%c1_155, %c0_156] : memref<10x128xf32, #tpu.memory_space<vmem>>, vector<8x128xf32>
    %156 = arith.truncf %155 : vector<8x128xf32> to vector<8x128xbf16>
    %c5_157 = arith.constant 5 : index
    %c1_158 = arith.constant 1 : index
    %c0_159 = arith.constant 0 : index
    %c0_160 = arith.constant 0 : index
    %157 = vector.load %arg2[%c5_157, %c1_158, %c0_159, %c0_160] : memref<10x3x128x128xbf16, #tpu.memory_space<vmem>>, vector<1x1x128x128xbf16>
    %158 = vector.shape_cast %157 : vector<1x1x128x128xbf16> to vector<128x128xbf16>
    %cst_161 = arith.constant dense<0.000000e+00> : vector<8x128xf32>
    %159 = tpu.matmul %156, %158, %cst_161 {dimension_numbers = #tpu.dot_dimension_numbers<[1], [0], [0], [1], [0, 0, 1, 1], [], []>} : vector<8x128xbf16>, vector<128x128xbf16>, vector<8x128xf32> -> vector<8x128xf32>
    %160 = arith.addf %154, %159 : vector<8x128xf32>
    %c2_162 = arith.constant 2 : index
    %c0_163 = arith.constant 0 : index
    %161 = vector.load %arg9[%c2_162, %c0_163] : memref<10x128xf32, #tpu.memory_space<vmem>>, vector<8x128xf32>
    %162 = arith.truncf %161 : vector<8x128xf32> to vector<8x128xbf16>
    %c5_164 = arith.constant 5 : index
    %c2_165 = arith.constant 2 : index
    %c0_166 = arith.constant 0 : index
    %c0_167 = arith.constant 0 : index
    %163 = vector.load %arg2[%c5_164, %c2_165, %c0_166, %c0_167] : memref<10x3x128x128xbf16, #tpu.memory_space<vmem>>, vector<1x1x128x128xbf16>
    %164 = vector.shape_cast %163 : vector<1x1x128x128xbf16> to vector<128x128xbf16>
    %cst_168 = arith.constant dense<0.000000e+00> : vector<8x128xf32>
    %165 = tpu.matmul %162, %164, %cst_168 {dimension_numbers = #tpu.dot_dimension_numbers<[1], [0], [0], [1], [0, 0, 1, 1], [], []>} : vector<8x128xbf16>, vector<128x128xbf16>, vector<8x128xf32> -> vector<8x128xf32>
    %166 = arith.addf %160, %165 : vector<8x128xf32>
    %c5_169 = arith.constant 5 : index
    %c0_170 = arith.constant 0 : index
    %c0_171 = arith.constant 0 : index
    %167 = vector.load %arg3[%c5_169, %c0_170, %c0_171] : memref<10x1x128xf32, #tpu.memory_space<vmem>>, vector<1x1x128xf32>
    %168 = vector.shape_cast %167 : vector<1x1x128xf32> to vector<1x128xf32>
    %169 = vector.broadcast %168 : vector<1x128xf32> to vector<8x128xf32>
    %170 = arith.addf %166, %169 : vector<8x128xf32>
    %c1_172 = arith.constant 1 : index
    %c0_173 = arith.constant 0 : index
    %171 = vector.load %arg8[%c1_172, %c0_173] : memref<10x128xf32, #tpu.memory_space<vmem>>, vector<8x128xf32>
    %172 = arith.addf %170, %171 : vector<8x128xf32>
    %cst_174 = arith.constant 0.000000e+00 : f32
    %173 = vector.broadcast %cst_174 : f32 to vector<8x128xf32>
    %174 = arith.cmpf oge, %172, %173 : vector<8x128xf32>
    %175 = vector.broadcast %122 : f32 to vector<8x128xf32>
    %176 = arith.mulf %175, %172 : vector<8x128xf32>
    %177 = arith.select %174, %172, %176 : vector<8x128xi1>, vector<8x128xf32>
    %c1_175 = arith.constant 1 : index
    %c0_176 = arith.constant 0 : index
    %178 = vector.load %arg8[%c1_175, %c0_176] : memref<10x128xf32, #tpu.memory_space<vmem>>, vector<8x128xf32>
    tpu.vector_store %arg8[%c1_175, %c0_176], %177 {strides = array<i32>} : memref<10x128xf32, #tpu.memory_space<vmem>>, vector<8x128xf32>,
    %c3_177 = arith.constant 3 : index
    %179 = memref.load %arg4[%c3_177] : memref<6xf32, #tpu.memory_space<smem>>
    %c0_178 = arith.constant 0 : index
    %c0_179 = arith.constant 0 : index
    %180 = vector.load %arg8[%c0_178, %c0_179] : memref<10x128xf32, #tpu.memory_space<vmem>>, vector<8x128xf32>
    %181 = arith.truncf %180 : vector<8x128xf32> to vector<8x128xbf16>
    %c6 = arith.constant 6 : index
    %c0_180 = arith.constant 0 : index
    %c0_181 = arith.constant 0 : index
    %c0_182 = arith.constant 0 : index
    %182 = vector.load %arg2[%c6, %c0_180, %c0_181, %c0_182] : memref<10x3x128x128xbf16, #tpu.memory_space<vmem>>, vector<1x1x128x128xbf16>
    %183 = vector.shape_cast %182 : vector<1x1x128x128xbf16> to vector<128x128xbf16>
    %cst_183 = arith.constant dense<0.000000e+00> : vector<8x128xf32>
    %184 = tpu.matmul %181, %183, %cst_183 {dimension_numbers = #tpu.dot_dimension_numbers<[1], [0], [0], [1], [0, 0, 1, 1], [], []>} : vector<8x128xbf16>, vector<128x128xbf16>, vector<8x128xf32> -> vector<8x128xf32>
    %c1_184 = arith.constant 1 : index
    %c0_185 = arith.constant 0 : index
    %185 = vector.load %arg8[%c1_184, %c0_185] : memref<10x128xf32, #tpu.memory_space<vmem>>, vector<8x128xf32>
    %186 = arith.truncf %185 : vector<8x128xf32> to vector<8x128xbf16>
    %c6_186 = arith.constant 6 : index
    %c1_187 = arith.constant 1 : index
    %c0_188 = arith.constant 0 : index
    %c0_189 = arith.constant 0 : index
    %187 = vector.load %arg2[%c6_186, %c1_187, %c0_188, %c0_189] : memref<10x3x128x128xbf16, #tpu.memory_space<vmem>>, vector<1x1x128x128xbf16>
    %188 = vector.shape_cast %187 : vector<1x1x128x128xbf16> to vector<128x128xbf16>
    %cst_190 = arith.constant dense<0.000000e+00> : vector<8x128xf32>
    %189 = tpu.matmul %186, %188, %cst_190 {dimension_numbers = #tpu.dot_dimension_numbers<[1], [0], [0], [1], [0, 0, 1, 1], [], []>} : vector<8x128xbf16>, vector<128x128xbf16>, vector<8x128xf32> -> vector<8x128xf32>
    %190 = arith.addf %184, %189 : vector<8x128xf32>
    %c2_191 = arith.constant 2 : index
    %c0_192 = arith.constant 0 : index
    %191 = vector.load %arg8[%c2_191, %c0_192] : memref<10x128xf32, #tpu.memory_space<vmem>>, vector<8x128xf32>
    %192 = arith.truncf %191 : vector<8x128xf32> to vector<8x128xbf16>
    %c6_193 = arith.constant 6 : index
    %c2_194 = arith.constant 2 : index
    %c0_195 = arith.constant 0 : index
    %c0_196 = arith.constant 0 : index
    %193 = vector.load %arg2[%c6_193, %c2_194, %c0_195, %c0_196] : memref<10x3x128x128xbf16, #tpu.memory_space<vmem>>, vector<1x1x128x128xbf16>
    %194 = vector.shape_cast %193 : vector<1x1x128x128xbf16> to vector<128x128xbf16>
    %cst_197 = arith.constant dense<0.000000e+00> : vector<8x128xf32>
    %195 = tpu.matmul %192, %194, %cst_197 {dimension_numbers = #tpu.dot_dimension_numbers<[1], [0], [0], [1], [0, 0, 1, 1], [], []>} : vector<8x128xbf16>, vector<128x128xbf16>, vector<8x128xf32> -> vector<8x128xf32>
    %196 = arith.addf %190, %195 : vector<8x128xf32>
    %c6_198 = arith.constant 6 : index
    %c0_199 = arith.constant 0 : index
    %c0_200 = arith.constant 0 : index
    %197 = vector.load %arg3[%c6_198, %c0_199, %c0_200] : memref<10x1x128xf32, #tpu.memory_space<vmem>>, vector<1x1x128xf32>
    %198 = vector.shape_cast %197 : vector<1x1x128xf32> to vector<1x128xf32>
    %199 = vector.broadcast %198 : vector<1x128xf32> to vector<8x128xf32>
    %200 = arith.addf %196, %199 : vector<8x128xf32>
    %cst_201 = arith.constant 0.000000e+00 : f32
    %201 = vector.broadcast %cst_201 : f32 to vector<8x128xf32>
    %202 = arith.cmpf oge, %200, %201 : vector<8x128xf32>
    %203 = vector.broadcast %179 : f32 to vector<8x128xf32>
    %204 = arith.mulf %203, %200 : vector<8x128xf32>
    %205 = arith.select %202, %200, %204 : vector<8x128xi1>, vector<8x128xf32>
    %c1_202 = arith.constant 1 : index
    %c0_203 = arith.constant 0 : index
    %206 = vector.load %arg9[%c1_202, %c0_203] : memref<10x128xf32, #tpu.memory_space<vmem>>, vector<8x128xf32>
    tpu.vector_store %arg9[%c1_202, %c0_203], %205 {strides = array<i32>} : memref<10x128xf32, #tpu.memory_space<vmem>>, vector<8x128xf32>,
    %c0_204 = arith.constant 0 : index
    %c0_205 = arith.constant 0 : index
    %207 = vector.load %arg9[%c0_204, %c0_205] : memref<10x128xf32, #tpu.memory_space<vmem>>, vector<8x128xf32>
    %208 = arith.truncf %207 : vector<8x128xf32> to vector<8x128xbf16>
    %c7 = arith.constant 7 : index
    %c0_206 = arith.constant 0 : index
    %c0_207 = arith.constant 0 : index
    %c0_208 = arith.constant 0 : index
    %209 = vector.load %arg2[%c7, %c0_206, %c0_207, %c0_208] : memref<10x3x128x128xbf16, #tpu.memory_space<vmem>>, vector<1x1x128x128xbf16>
    %210 = vector.shape_cast %209 : vector<1x1x128x128xbf16> to vector<128x128xbf16>
    %cst_209 = arith.constant dense<0.000000e+00> : vector<8x128xf32>
    %211 = tpu.matmul %208, %210, %cst_209 {dimension_numbers = #tpu.dot_dimension_numbers<[1], [0], [0], [1], [0, 0, 1, 1], [], []>} : vector<8x128xbf16>, vector<128x128xbf16>, vector<8x128xf32> -> vector<8x128xf32>
    %c1_210 = arith.constant 1 : index
    %c0_211 = arith.constant 0 : index
    %212 = vector.load %arg9[%c1_210, %c0_211] : memref<10x128xf32, #tpu.memory_space<vmem>>, vector<8x128xf32>
    %213 = arith.truncf %212 : vector<8x128xf32> to vector<8x128xbf16>
    %c7_212 = arith.constant 7 : index
    %c1_213 = arith.constant 1 : index
    %c0_214 = arith.constant 0 : index
    %c0_215 = arith.constant 0 : index
    %214 = vector.load %arg2[%c7_212, %c1_213, %c0_214, %c0_215] : memref<10x3x128x128xbf16, #tpu.memory_space<vmem>>, vector<1x1x128x128xbf16>
    %215 = vector.shape_cast %214 : vector<1x1x128x128xbf16> to vector<128x128xbf16>
    %cst_216 = arith.constant dense<0.000000e+00> : vector<8x128xf32>
    %216 = tpu.matmul %213, %215, %cst_216 {dimension_numbers = #tpu.dot_dimension_numbers<[1], [0], [0], [1], [0, 0, 1, 1], [], []>} : vector<8x128xbf16>, vector<128x128xbf16>, vector<8x128xf32> -> vector<8x128xf32>
    %217 = arith.addf %211, %216 : vector<8x128xf32>
    %c2_217 = arith.constant 2 : index
    %c0_218 = arith.constant 0 : index
    %218 = vector.load %arg9[%c2_217, %c0_218] : memref<10x128xf32, #tpu.memory_space<vmem>>, vector<8x128xf32>
    %219 = arith.truncf %218 : vector<8x128xf32> to vector<8x128xbf16>
    %c7_219 = arith.constant 7 : index
    %c2_220 = arith.constant 2 : index
    %c0_221 = arith.constant 0 : index
    %c0_222 = arith.constant 0 : index
    %220 = vector.load %arg2[%c7_219, %c2_220, %c0_221, %c0_222] : memref<10x3x128x128xbf16, #tpu.memory_space<vmem>>, vector<1x1x128x128xbf16>
    %221 = vector.shape_cast %220 : vector<1x1x128x128xbf16> to vector<128x128xbf16>
    %cst_223 = arith.constant dense<0.000000e+00> : vector<8x128xf32>
    %222 = tpu.matmul %219, %221, %cst_223 {dimension_numbers = #tpu.dot_dimension_numbers<[1], [0], [0], [1], [0, 0, 1, 1], [], []>} : vector<8x128xbf16>, vector<128x128xbf16>, vector<8x128xf32> -> vector<8x128xf32>
    %223 = arith.addf %217, %222 : vector<8x128xf32>
    %c7_224 = arith.constant 7 : index
    %c0_225 = arith.constant 0 : index
    %c0_226 = arith.constant 0 : index
    %224 = vector.load %arg3[%c7_224, %c0_225, %c0_226] : memref<10x1x128xf32, #tpu.memory_space<vmem>>, vector<1x1x128xf32>
    %225 = vector.shape_cast %224 : vector<1x1x128xf32> to vector<1x128xf32>
    %226 = vector.broadcast %225 : vector<1x128xf32> to vector<8x128xf32>
    %227 = arith.addf %223, %226 : vector<8x128xf32>
    %c1_227 = arith.constant 1 : index
    %c0_228 = arith.constant 0 : index
    %228 = vector.load %arg8[%c1_227, %c0_228] : memref<10x128xf32, #tpu.memory_space<vmem>>, vector<8x128xf32>
    %229 = arith.addf %227, %228 : vector<8x128xf32>
    %cst_229 = arith.constant 0.000000e+00 : f32
    %230 = vector.broadcast %cst_229 : f32 to vector<8x128xf32>
    %231 = arith.cmpf oge, %229, %230 : vector<8x128xf32>
    %232 = vector.broadcast %179 : f32 to vector<8x128xf32>
    %233 = arith.mulf %232, %229 : vector<8x128xf32>
    %234 = arith.select %231, %229, %233 : vector<8x128xi1>, vector<8x128xf32>
    %c1_230 = arith.constant 1 : index
    %c0_231 = arith.constant 0 : index
    %235 = vector.load %arg8[%c1_230, %c0_231] : memref<10x128xf32, #tpu.memory_space<vmem>>, vector<8x128xf32>
    tpu.vector_store %arg8[%c1_230, %c0_231], %234 {strides = array<i32>} : memref<10x128xf32, #tpu.memory_space<vmem>>, vector<8x128xf32>,
    %c4_232 = arith.constant 4 : index
    %236 = memref.load %arg4[%c4_232] : memref<6xf32, #tpu.memory_space<smem>>
    %c0_233 = arith.constant 0 : index
    %c0_234 = arith.constant 0 : index
    %237 = vector.load %arg8[%c0_233, %c0_234] : memref<10x128xf32, #tpu.memory_space<vmem>>, vector<8x128xf32>
    %238 = arith.truncf %237 : vector<8x128xf32> to vector<8x128xbf16>
    %c8 = arith.constant 8 : index
    %c0_235 = arith.constant 0 : index
    %c0_236 = arith.constant 0 : index
    %c0_237 = arith.constant 0 : index
    %239 = vector.load %arg2[%c8, %c0_235, %c0_236, %c0_237] : memref<10x3x128x128xbf16, #tpu.memory_space<vmem>>, vector<1x1x128x128xbf16>
    %240 = vector.shape_cast %239 : vector<1x1x128x128xbf16> to vector<128x128xbf16>
    %cst_238 = arith.constant dense<0.000000e+00> : vector<8x128xf32>
    %241 = tpu.matmul %238, %240, %cst_238 {dimension_numbers = #tpu.dot_dimension_numbers<[1], [0], [0], [1], [0, 0, 1, 1], [], []>} : vector<8x128xbf16>, vector<128x128xbf16>, vector<8x128xf32> -> vector<8x128xf32>
    %c1_239 = arith.constant 1 : index
    %c0_240 = arith.constant 0 : index
    %242 = vector.load %arg8[%c1_239, %c0_240] : memref<10x128xf32, #tpu.memory_space<vmem>>, vector<8x128xf32>
    %243 = arith.truncf %242 : vector<8x128xf32> to vector<8x128xbf16>
    %c8_241 = arith.constant 8 : index
    %c1_242 = arith.constant 1 : index
    %c0_243 = arith.constant 0 : index
    %c0_244 = arith.constant 0 : index
    %244 = vector.load %arg2[%c8_241, %c1_242, %c0_243, %c0_244] : memref<10x3x128x128xbf16, #tpu.memory_space<vmem>>, vector<1x1x128x128xbf16>
    %245 = vector.shape_cast %244 : vector<1x1x128x128xbf16> to vector<128x128xbf16>
    %cst_245 = arith.constant dense<0.000000e+00> : vector<8x128xf32>
    %246 = tpu.matmul %243, %245, %cst_245 {dimension_numbers = #tpu.dot_dimension_numbers<[1], [0], [0], [1], [0, 0, 1, 1], [], []>} : vector<8x128xbf16>, vector<128x128xbf16>, vector<8x128xf32> -> vector<8x128xf32>
    %247 = arith.addf %241, %246 : vector<8x128xf32>
    %c2_246 = arith.constant 2 : index
    %c0_247 = arith.constant 0 : index
    %248 = vector.load %arg8[%c2_246, %c0_247] : memref<10x128xf32, #tpu.memory_space<vmem>>, vector<8x128xf32>
    %249 = arith.truncf %248 : vector<8x128xf32> to vector<8x128xbf16>
    %c8_248 = arith.constant 8 : index
    %c2_249 = arith.constant 2 : index
    %c0_250 = arith.constant 0 : index
    %c0_251 = arith.constant 0 : index
    %250 = vector.load %arg2[%c8_248, %c2_249, %c0_250, %c0_251] : memref<10x3x128x128xbf16, #tpu.memory_space<vmem>>, vector<1x1x128x128xbf16>
    %251 = vector.shape_cast %250 : vector<1x1x128x128xbf16> to vector<128x128xbf16>
    %cst_252 = arith.constant dense<0.000000e+00> : vector<8x128xf32>
    %252 = tpu.matmul %249, %251, %cst_252 {dimension_numbers = #tpu.dot_dimension_numbers<[1], [0], [0], [1], [0, 0, 1, 1], [], []>} : vector<8x128xbf16>, vector<128x128xbf16>, vector<8x128xf32> -> vector<8x128xf32>
    %253 = arith.addf %247, %252 : vector<8x128xf32>
    %c8_253 = arith.constant 8 : index
    %c0_254 = arith.constant 0 : index
    %c0_255 = arith.constant 0 : index
    %254 = vector.load %arg3[%c8_253, %c0_254, %c0_255] : memref<10x1x128xf32, #tpu.memory_space<vmem>>, vector<1x1x128xf32>
    %255 = vector.shape_cast %254 : vector<1x1x128xf32> to vector<1x128xf32>
    %256 = vector.broadcast %255 : vector<1x128xf32> to vector<8x128xf32>
    %257 = arith.addf %253, %256 : vector<8x128xf32>
    %cst_256 = arith.constant 0.000000e+00 : f32
    %258 = vector.broadcast %cst_256 : f32 to vector<8x128xf32>
    %259 = arith.cmpf oge, %257, %258 : vector<8x128xf32>
    %260 = vector.broadcast %236 : f32 to vector<8x128xf32>
    %261 = arith.mulf %260, %257 : vector<8x128xf32>
    %262 = arith.select %259, %257, %261 : vector<8x128xi1>, vector<8x128xf32>
    %c1_257 = arith.constant 1 : index
    %c0_258 = arith.constant 0 : index
    %263 = vector.load %arg9[%c1_257, %c0_258] : memref<10x128xf32, #tpu.memory_space<vmem>>, vector<8x128xf32>
    tpu.vector_store %arg9[%c1_257, %c0_258], %262 {strides = array<i32>} : memref<10x128xf32, #tpu.memory_space<vmem>>, vector<8x128xf32>,
    %c0_259 = arith.constant 0 : index
    %c0_260 = arith.constant 0 : index
    %264 = vector.load %arg9[%c0_259, %c0_260] : memref<10x128xf32, #tpu.memory_space<vmem>>, vector<8x128xf32>
    %265 = arith.truncf %264 : vector<8x128xf32> to vector<8x128xbf16>
    %c9_261 = arith.constant 9 : index
    %c0_262 = arith.constant 0 : index
    %c0_263 = arith.constant 0 : index
    %c0_264 = arith.constant 0 : index
    %266 = vector.load %arg2[%c9_261, %c0_262, %c0_263, %c0_264] : memref<10x3x128x128xbf16, #tpu.memory_space<vmem>>, vector<1x1x128x128xbf16>
    %267 = vector.shape_cast %266 : vector<1x1x128x128xbf16> to vector<128x128xbf16>
    %cst_265 = arith.constant dense<0.000000e+00> : vector<8x128xf32>
    %268 = tpu.matmul %265, %267, %cst_265 {dimension_numbers = #tpu.dot_dimension_numbers<[1], [0], [0], [1], [0, 0, 1, 1], [], []>} : vector<8x128xbf16>, vector<128x128xbf16>, vector<8x128xf32> -> vector<8x128xf32>
    %c1_266 = arith.constant 1 : index
    %c0_267 = arith.constant 0 : index
    %269 = vector.load %arg9[%c1_266, %c0_267] : memref<10x128xf32, #tpu.memory_space<vmem>>, vector<8x128xf32>
    %270 = arith.truncf %269 : vector<8x128xf32> to vector<8x128xbf16>
    %c9_268 = arith.constant 9 : index
    %c1_269 = arith.constant 1 : index
    %c0_270 = arith.constant 0 : index
    %c0_271 = arith.constant 0 : index
    %271 = vector.load %arg2[%c9_268, %c1_269, %c0_270, %c0_271] : memref<10x3x128x128xbf16, #tpu.memory_space<vmem>>, vector<1x1x128x128xbf16>
    %272 = vector.shape_cast %271 : vector<1x1x128x128xbf16> to vector<128x128xbf16>
    %cst_272 = arith.constant dense<0.000000e+00> : vector<8x128xf32>
    %273 = tpu.matmul %270, %272, %cst_272 {dimension_numbers = #tpu.dot_dimension_numbers<[1], [0], [0], [1], [0, 0, 1, 1], [], []>} : vector<8x128xbf16>, vector<128x128xbf16>, vector<8x128xf32> -> vector<8x128xf32>
    %274 = arith.addf %268, %273 : vector<8x128xf32>
    %c2_273 = arith.constant 2 : index
    %c0_274 = arith.constant 0 : index
    %275 = vector.load %arg9[%c2_273, %c0_274] : memref<10x128xf32, #tpu.memory_space<vmem>>, vector<8x128xf32>
    %276 = arith.truncf %275 : vector<8x128xf32> to vector<8x128xbf16>
    %c9_275 = arith.constant 9 : index
    %c2_276 = arith.constant 2 : index
    %c0_277 = arith.constant 0 : index
    %c0_278 = arith.constant 0 : index
    %277 = vector.load %arg2[%c9_275, %c2_276, %c0_277, %c0_278] : memref<10x3x128x128xbf16, #tpu.memory_space<vmem>>, vector<1x1x128x128xbf16>
    %278 = vector.shape_cast %277 : vector<1x1x128x128xbf16> to vector<128x128xbf16>
    %cst_279 = arith.constant dense<0.000000e+00> : vector<8x128xf32>
    %279 = tpu.matmul %276, %278, %cst_279 {dimension_numbers = #tpu.dot_dimension_numbers<[1], [0], [0], [1], [0, 0, 1, 1], [], []>} : vector<8x128xbf16>, vector<128x128xbf16>, vector<8x128xf32> -> vector<8x128xf32>
    %280 = arith.addf %274, %279 : vector<8x128xf32>
    %c9_280 = arith.constant 9 : index
    %c0_281 = arith.constant 0 : index
    %c0_282 = arith.constant 0 : index
    %281 = vector.load %arg3[%c9_280, %c0_281, %c0_282] : memref<10x1x128xf32, #tpu.memory_space<vmem>>, vector<1x1x128xf32>
    %282 = vector.shape_cast %281 : vector<1x1x128xf32> to vector<1x128xf32>
    %283 = vector.broadcast %282 : vector<1x128xf32> to vector<8x128xf32>
    %284 = arith.addf %280, %283 : vector<8x128xf32>
    %c1_283 = arith.constant 1 : index
    %c0_284 = arith.constant 0 : index
    %285 = vector.load %arg8[%c1_283, %c0_284] : memref<10x128xf32, #tpu.memory_space<vmem>>, vector<8x128xf32>
    %286 = arith.addf %284, %285 : vector<8x128xf32>
    %cst_285 = arith.constant 0.000000e+00 : f32
    %287 = vector.broadcast %cst_285 : f32 to vector<8x128xf32>
    %288 = arith.cmpf oge, %286, %287 : vector<8x128xf32>
    %289 = vector.broadcast %236 : f32 to vector<8x128xf32>
    %290 = arith.mulf %289, %286 : vector<8x128xf32>
    %291 = arith.select %288, %286, %290 : vector<8x128xi1>, vector<8x128xf32>
    %c1_286 = arith.constant 1 : index
    %c0_287 = arith.constant 0 : index
    %292 = vector.load %arg8[%c1_286, %c0_287] : memref<10x128xf32, #tpu.memory_space<vmem>>, vector<8x128xf32>
    tpu.vector_store %arg8[%c1_286, %c0_287], %291 {strides = array<i32>} : memref<10x128xf32, #tpu.memory_space<vmem>>, vector<8x128xf32>,
    %c0_288 = arith.constant 0 : index
    %c0_289 = arith.constant 0 : index
    %293 = vector.load %arg8[%c0_288, %c0_289] : memref<10x128xf32, #tpu.memory_space<vmem>>, vector<8x128xf32>
    %294 = arith.truncf %293 : vector<8x128xf32> to vector<8x128xbf16>
    %c0_290 = arith.constant 0 : index
    %c0_291 = arith.constant 0 : index
    %c0_292 = arith.constant 0 : index
    %295 = vector.load %arg5[%c0_290, %c0_291, %c0_292] : memref<3x128x4096xbf16, #tpu.memory_space<vmem>>, vector<1x128x4096xbf16>
    %296 = vector.shape_cast %295 : vector<1x128x4096xbf16> to vector<128x4096xbf16>
    %cst_293 = arith.constant dense<0.000000e+00> : vector<8x4096xf32>
    %297 = tpu.matmul %294, %296, %cst_293 {dimension_numbers = #tpu.dot_dimension_numbers<[1], [0], [0], [1], [0, 0, 1, 1], [], []>} : vector<8x128xbf16>, vector<128x4096xbf16>, vector<8x4096xf32> -> vector<8x4096xf32>
    %c1_294 = arith.constant 1 : index
    %c0_295 = arith.constant 0 : index
    %298 = vector.load %arg8[%c1_294, %c0_295] : memref<10x128xf32, #tpu.memory_space<vmem>>, vector<8x128xf32>
    %299 = arith.truncf %298 : vector<8x128xf32> to vector<8x128xbf16>
    %c1_296 = arith.constant 1 : index
    %c0_297 = arith.constant 0 : index
    %c0_298 = arith.constant 0 : index
    %300 = vector.load %arg5[%c1_296, %c0_297, %c0_298] : memref<3x128x4096xbf16, #tpu.memory_space<vmem>>, vector<1x128x4096xbf16>
    %301 = vector.shape_cast %300 : vector<1x128x4096xbf16> to vector<128x4096xbf16>
    %cst_299 = arith.constant dense<0.000000e+00> : vector<8x4096xf32>
    %302 = tpu.matmul %299, %301, %cst_299 {dimension_numbers = #tpu.dot_dimension_numbers<[1], [0], [0], [1], [0, 0, 1, 1], [], []>} : vector<8x128xbf16>, vector<128x4096xbf16>, vector<8x4096xf32> -> vector<8x4096xf32>
    %303 = arith.addf %297, %302 : vector<8x4096xf32>
    %c2_300 = arith.constant 2 : index
    %c0_301 = arith.constant 0 : index
    %304 = vector.load %arg8[%c2_300, %c0_301] : memref<10x128xf32, #tpu.memory_space<vmem>>, vector<8x128xf32>
    %305 = arith.truncf %304 : vector<8x128xf32> to vector<8x128xbf16>
    %c2_302 = arith.constant 2 : index
    %c0_303 = arith.constant 0 : index
    %c0_304 = arith.constant 0 : index
    %306 = vector.load %arg5[%c2_302, %c0_303, %c0_304] : memref<3x128x4096xbf16, #tpu.memory_space<vmem>>, vector<1x128x4096xbf16>
    %307 = vector.shape_cast %306 : vector<1x128x4096xbf16> to vector<128x4096xbf16>
    %cst_305 = arith.constant dense<0.000000e+00> : vector<8x4096xf32>
    %308 = tpu.matmul %305, %307, %cst_305 {dimension_numbers = #tpu.dot_dimension_numbers<[1], [0], [0], [1], [0, 0, 1, 1], [], []>} : vector<8x128xbf16>, vector<128x4096xbf16>, vector<8x4096xf32> -> vector<8x4096xf32>
    %309 = arith.addf %303, %308 : vector<8x4096xf32>
    %c0_306 = arith.constant 0 : index
    %c0_307 = arith.constant 0 : index
    %310 = vector.load %arg6[%c0_306, %c0_307] : memref<1x4096xf32, #tpu.memory_space<vmem>>, vector<1x4096xf32>
    %311 = vector.broadcast %310 : vector<1x4096xf32> to vector<8x4096xf32>
    %312 = arith.addf %309, %311 : vector<8x4096xf32>
    %c5_308 = arith.constant 5 : index
    %313 = memref.load %arg4[%c5_308] : memref<6xf32, #tpu.memory_space<smem>>
    %cst_309 = arith.constant 0.000000e+00 : f32
    %314 = vector.broadcast %cst_309 : f32 to vector<8x4096xf32>
    %315 = arith.cmpf oge, %312, %314 : vector<8x4096xf32>
    %316 = vector.broadcast %313 : f32 to vector<8x4096xf32>
    %317 = arith.mulf %316, %312 : vector<8x4096xf32>
    %318 = arith.select %315, %312, %317 : vector<8x4096xi1>, vector<8x4096xf32>
    %c0_310 = arith.constant 0 : index
    %c0_311 = arith.constant 0 : index
    %c0_312 = arith.constant 0 : index
    %319 = vector.load %arg7[%c0_310, %c0_311, %c0_312] : memref<1x8x4096xf32, #tpu.memory_space<vmem>>, vector<1x8x4096xf32>
    %320 = vector.shape_cast %319 : vector<1x8x4096xf32> to vector<8x4096xf32>
    %321 = vector.shape_cast %318 : vector<8x4096xf32> to vector<1x8x4096xf32>
    tpu.vector_store %arg7[%c0_310, %c0_311, %c0_312], %321 {strides = array<i32>} : memref<1x8x4096xf32, #tpu.memory_space<vmem>>, vector<1x8x4096xf32>,
    return
  }
  func.func @transform_0(%arg0: i32) -> (i32, i32, i32) {
    %c0_i32 = arith.constant 0 : i32
    %c0_i32_0 = arith.constant 0 : i32
    %c0_i32_1 = arith.constant 0 : i32
    return %arg0, %c0_i32, %c0_i32_0 : i32, i32, i32
  }
  func.func @transform_1(%arg0: i32) -> (i32, i32, i32, i32) {
    %c0_i32 = arith.constant 0 : i32
    %c0_i32_0 = arith.constant 0 : i32
    %c0_i32_1 = arith.constant 0 : i32
    %c0_i32_2 = arith.constant 0 : i32
    %c0_i32_3 = arith.constant 0 : i32
    return %c0_i32, %c0_i32_0, %c0_i32_1, %c0_i32_2 : i32, i32, i32, i32
  }
  func.func @transform_2(%arg0: i32) -> (i32, i32, i32) {
    %c0_i32 = arith.constant 0 : i32
    %c0_i32_0 = arith.constant 0 : i32
    %c0_i32_1 = arith.constant 0 : i32
    %c0_i32_2 = arith.constant 0 : i32
    return %c0_i32, %c0_i32_0, %c0_i32_1 : i32, i32, i32
  }
  func.func @transform_3(%arg0: i32) -> i32 {
    %c0_i32 = arith.constant 0 : i32
    %c0_i32_0 = arith.constant 0 : i32
    return %c0_i32 : i32
  }
  func.func @transform_4(%arg0: i32) -> (i32, i32, i32) {
    %c0_i32 = arith.constant 0 : i32
    %c0_i32_0 = arith.constant 0 : i32
    %c0_i32_1 = arith.constant 0 : i32
    %c0_i32_2 = arith.constant 0 : i32
    return %c0_i32, %c0_i32_0, %c0_i32_1 : i32, i32, i32
  }
  func.func @transform_5(%arg0: i32) -> (i32, i32) {
    %c0_i32 = arith.constant 0 : i32
    %c0_i32_0 = arith.constant 0 : i32
    %c0_i32_1 = arith.constant 0 : i32
    return %c0_i32, %c0_i32_0 : i32, i32
  }
  func.func @transform_6(%arg0: i32) -> (i32, i32, i32) {
    %c0_i32 = arith.constant 0 : i32
    %c0_i32_0 = arith.constant 0 : i32
    %c0_i32_1 = arith.constant 0 : i32
    return %arg0, %c0_i32, %c0_i32_0 : i32, i32, i32
  }
}

</mosaic_0001>

<llo_original>
// kernel: _forward_packed.1
$region0: #{_forward_packed.1}
  #allocation0 [shape = 'u32[]', space=smem, size = 0x4, offset = 0x4, fixed_abs, tag = 'smem constant byte address 0x4 - core index']
  #allocation1 [shape = 'u32[144,128]{1,0:T(1,128)}', space=vmem, size = 0x12000, scoped, tag = 'internal scratch']
  #allocation2 [shape = 'f32[10,128]{1,0:T(8,128)}', space=vmem, size = 0x2000, scoped, tag = 'scratch operand']
  #allocation3 [shape = 'f32[10,128]{1,0:T(8,128)}', space=vmem, size = 0x2000, scoped, tag = 'scratch operand']
  %s0 = inlined_call_operand.vmem [shape: f32[2,8,128], index: 0, kind: input, shape index: {}]
  %s1 = inlined_call_operand.hbm [shape: bf16[10,3,128,128], index: 1, kind: input, shape index: {}]
  %s2 = inlined_call_operand.hbm [shape: f32[10,1,128], index: 2, kind: input, shape index: {}]
  %s3 = inlined_call_operand.hbm [shape: f32[6], index: 3, kind: input, shape index: {}]
  %s4 = inlined_call_operand.hbm [shape: bf16[3,128,4096], index: 4, kind: input, shape index: {}]
  %s5 = inlined_call_operand.hbm [shape: f32[1,4096], index: 5, kind: input, shape index: {}]
  %s6 = inlined_call_operand.vmem [shape: f32[2,8,4096], index: 6, kind: output, shape index: {}]
  %s7 = sld [smem:[#allocation0]]
  $region77: #{_forward_packed.1} parent=0
    _
  %s9 = ssub.s32 1, %s7
  %s10 = scalar_select 0, %s9, %s7
  $region1: #{_forward_packed.1} parent=0
    #allocation4 [shape = 'u8[983040]{0}', space=vmem, size = 0xf0000, scoped, tag = 'input window, operand 1, single buffered']
    #allocation5 [shape = 's32[2]{0}', space=sflag, size = 0x8, scoped, tag = 'scoped memory for _forward_packed.1']
    #allocation6 [shape = 's32[2]{0}', space=sflag, size = 0x8, scoped, tag = 'scoped memory for _forward_packed.1']
    #allocation7 [shape = 'u8[5120]{0}', space=vmem, size = 0x1400, scoped, tag = 'input window, operand 2, single buffered']
    #allocation8 [shape = 's32[1]{0}', space=sflag, size = 0x4, scoped, tag = 'scoped memory for _forward_packed.1']
    #allocation9 [shape = 'u8[512]{0}', space=smem, size = 0x200, scoped, tag = 'input window, operand 3, single buffered']
    #allocation10 [shape = 'u8[3145728]{0}', space=vmem, size = 0x300000, scoped, tag = 'input window, operand 4, single buffered']
    #allocation11 [shape = 'u8[16384]{0}', space=vmem, size = 0x4000, scoped, tag = 'input window, operand 5, single buffered']
    #allocation12 [shape = 's32[1]{0}', space=sflag, size = 0x4, scoped, tag = 'scoped memory for _forward_packed.1']
    %11 = vsyncpa [#allocation5], 0
    %12 = vsyncpa [#allocation8], 0
    %13 = vsyncpa [#allocation6], 0
    %14 = vsyncpa [#allocation12], 0
    loop: start=0, step=1, limit=4
    $region2: #{_forward_packed.1} parent=1 // loop_pre_header
      _
    $region3: #{_forward_packed.1} parent=1 // loop_header
      %s16 = sphi 0, %s20
      %p17 = scmp.ge.s32.totalorder %s16, 4
      %s26 = sphi 0, %s28
      %s29 = sphi 0, %s26
      %s30 = sphi 0, %s29
      %s46 = sphi 0, %s30
      %s50 = sphi 0, %s50
      %s52 = sphi 0, %s50
      %s53 = sphi 0, %s52
      %s67 = sphi 0, %s53
      %s71 = sphi 0, %s71
      %s73 = sphi 0, %s71
      %s74 = sphi 0, %s73
      %s88 = sphi 0, %s74
      %s92 = sphi 0, %s92
      %s94 = sphi 0, %s92
      %s95 = sphi 0, %s94
      %s109 = sphi 0, %s95
      %s113 = sphi 0, %s113
      %s115 = sphi 0, %s113
      %s116 = sphi 0, %s115
      %s130 = sphi 0, %s116
      %s134 = sphi 0, %s134
      %s136 = sphi 0, %s134
      %s137 = sphi 0, %s136
      %s151 = sphi 0, %s137
      %s157 = sphi 0, %s159
      %s160 = sphi 0, %s157
      %s161 = sphi 0, %s160
      %s177 = sphi 0, %s161
    $region4: #{_forward_packed.1} parent=1 // loop_header_branch
      %19 = sbr.rel (%p17) target = $region8
    $region5: #{_forward_packed.1} parent=1 // loop_body
      %s21 = ssub.s32 %s16, 1
      %s22 = ssub.s32 %s16, 2
      %s23 = sadd.s32 %s16, 1
      %s24 = ssub.s32 %s16, %s23
      %p25 = scmp.eq.s32.totalorder %s24, 0
      %s27 = sadd.s32 %s26, 1
      %s28 = scalar_select %p25, %s26, %s27
      %p31 = pneg %p25
      %p32 = scmp.eq.s32.totalorder %s16, 1
      %p33 = por %p31, %p32
      %p34 = scmp.ne.s32.totalorder %s26, %s29
      %p35 = scmp.eq.s32.totalorder %s16, 0
      %p36 = por %p34, %p35
      %p37 = scmp.ne.s32.totalorder %s26, %s29
      %p38 = scmp.eq.s32.totalorder %s21, 1
      %p39 = por %p37, %p38
      %p40 = scmp.ne.s32.totalorder %s29, %s30
      %p41 = scmp.eq.s32.totalorder %s21, 0
      %p42 = por %p40, %p41
      %p43 = scmp.ne.s32.totalorder %s29, %s30
      %p44 = scmp.eq.s32.totalorder %s22, 1
      %p45 = por %p43, %p44
      %p47 = scmp.ne.s32.totalorder %s30, %s46
      %p48 = scmp.eq.s32.totalorder %s22, 0
      %p49 = por %p47, %p48
      %s51 = sadd.s32 %s50, 1
      %p54 = scmp.eq.s32.totalorder %s16, 1
      %p55 = scmp.ne.s32.totalorder %s50, %s52
      %p56 = scmp.eq.s32.totalorder %s16, 0
      %p57 = por %p55, %p56
      %p58 = scmp.ne.s32.totalorder %s50, %s52
      %p59 = scmp.eq.s32.totalorder %s21, 1
      %p60 = por %p58, %p59
      %p61 = scmp.ne.s32.totalorder %s52, %s53
      %p62 = scmp.eq.s32.totalorder %s21, 0
      %p63 = por %p61, %p62
      %p64 = scmp.ne.s32.totalorder %s52, %s53
      %p65 = scmp.eq.s32.totalorder %s22, 1
      %p66 = por %p64, %p65
      %p68 = scmp.ne.s32.totalorder %s53, %s67
      %p69 = scmp.eq.s32.totalorder %s22, 0
      %p70 = por %p68, %p69
      %s72 = sadd.s32 %s71, 1
      %p75 = scmp.eq.s32.totalorder %s16, 1
      %p76 = scmp.ne.s32.totalorder %s71, %s73
      %p77 = scmp.eq.s32.totalorder %s16, 0
      %p78 = por %p76, %p77
      %p79 = scmp.ne.s32.totalorder %s71, %s73
      %p80 = scmp.eq.s32.totalorder %s21, 1
      %p81 = por %p79, %p80
      %p82 = scmp.ne.s32.totalorder %s73, %s74
      %p83 = scmp.eq.s32.totalorder %s21, 0
      %p84 = por %p82, %p83
      %p85 = scmp.ne.s32.totalorder %s73, %s74
      %p86 = scmp.eq.s32.totalorder %s22, 1
      %p87 = por %p85, %p86
      %p89 = scmp.ne.s32.totalorder %s74, %s88
      %p90 = scmp.eq.s32.totalorder %s22, 0
      %p91 = por %p89, %p90
      %s93 = sadd.s32 %s92, 1
      %p96 = scmp.eq.s32.totalorder %s16, 1
      %p97 = scmp.ne.s32.totalorder %s92, %s94
      %p98 = scmp.eq.s32.totalorder %s16, 0
      %p99 = por %p97, %p98
      %p100 = scmp.ne.s32.totalorder %s92, %s94
      %p101 = scmp.eq.s32.totalorder %s21, 1
      %p102 = por %p100, %p101
      %p103 = scmp.ne.s32.totalorder %s94, %s95
      %p104 = scmp.eq.s32.totalorder %s21, 0
      %p105 = por %p103, %p104
      %p106 = scmp.ne.s32.totalorder %s94, %s95
      %p107 = scmp.eq.s32.totalorder %s22, 1
      %p108 = por %p106, %p107
      %p110 = scmp.ne.s32.totalorder %s95, %s109
      %p111 = scmp.eq.s32.totalorder %s22, 0
      %p112 = por %p110, %p111
      %s114 = sadd.s32 %s113, 1
      %p117 = scmp.eq.s32.totalorder %s16, 1
      %p118 = scmp.ne.s32.totalorder %s113, %s115
      %p119 = scmp.eq.s32.totalorder %s16, 0
      %p120 = por %p118, %p119
      %p121 = scmp.ne.s32.totalorder %s113, %s115
      %p122 = scmp.eq.s32.totalorder %s21, 1
      %p123 = por %p121, %p122
      %p124 = scmp.ne.s32.totalorder %s115, %s116
      %p125 = scmp.eq.s32.totalorder %s21, 0
      %p126 = por %p124, %p125
      %p127 = scmp.ne.s32.totalorder %s115, %s116
      %p128 = scmp.eq.s32.totalorder %s22, 1
      %p129 = por %p127, %p128
      %p131 = scmp.ne.s32.totalorder %s116, %s130
      %p132 = scmp.eq.s32.totalorder %s22, 0
      %p133 = por %p131, %p132
      %s135 = sadd.s32 %s134, 1
      %p138 = scmp.eq.s32.totalorder %s16, 1
      %p139 = scmp.ne.s32.totalorder %s134, %s136
      %p140 = scmp.eq.s32.totalorder %s16, 0
      %p141 = por %p139, %p140
      %p142 = scmp.ne.s32.totalorder %s134, %s136
      %p143 = scmp.eq.s32.totalorder %s21, 1
      %p144 = por %p142, %p143
      %p145 = scmp.ne.s32.totalorder %s136, %s137
      %p146 = scmp.eq.s32.totalorder %s21, 0
      %p147 = por %p145, %p146
      %p148 = scmp.ne.s32.totalorder %s136, %s137
      %p149 = scmp.eq.s32.totalorder %s22, 1
      %p150 = por %p148, %p149
      %p152 = scmp.ne.s32.totalorder %s137, %s151
      %p153 = scmp.eq.s32.totalorder %s22, 0
      %p154 = por %p152, %p153
      %s155 = ssub.s32 %s16, %s23
      %p156 = scmp.eq.s32.totalorder %s155, 0
      %s158 = sadd.s32 %s157, 1
      %s159 = scalar_select %p156, %s157, %s158
      %p162 = pneg %p156
      %p163 = scmp.eq.s32.totalorder %s16, 1
      %p164 = por %p162, %p163
      %p165 = scmp.ne.s32.totalorder %s157, %s160
      %p166 = scmp.eq.s32.totalorder %s16, 0
      %p167 = por %p165, %p166
      %p168 = scmp.ne.s32.totalorder %s157, %s160
      %p169 = scmp.eq.s32.totalorder %s21, 1
      %p170 = por %p168, %p169
      %p171 = scmp.ne.s32.totalorder %s160, %s161
      %p172 = scmp.eq.s32.totalorder %s21, 0
      %p173 = por %p171, %p172
      %p174 = scmp.ne.s32.totalorder %s160, %s161
      %p175 = scmp.eq.s32.totalorder %s22, 1
      %p176 = por %p174, %p175
      %p178 = scmp.ne.s32.totalorder %s161, %s177
      %p179 = scmp.eq.s32.totalorder %s22, 0
      %p180 = por %p178, %p179
      %p181 = scmp.le.s32.totalorder 1, %s16
      %p182 = scmp.lt.s32.totalorder %s16, 3
      %p183 = pnand %p181, %p182
      %p184 = pneg %p183
      // Predicated region
      $region9: #{_forward_packed.1} parent=5 // pred_check
        _
      $region10: #{_forward_packed.1} parent=5 // pred_check_branch
        %186 = sbr.rel (%p183) target = $region12
      $region11: #{_forward_packed.1} parent=5 // pred_region
        %s187 = ssub.s32 %s16, 1
        // Predicated region
        $region13: #{_forward_packed.1} parent=11 // pred_check
          %p188 = pneg %p63
        $region14: #{_forward_packed.1} parent=11 // pred_check_branch
          %190 = sbr.rel (%p188) target = $region16
        $region15: #{_forward_packed.1} parent=11 // pred_region
          %s192 = ssub.s32 30720, 30720
          %193 = vsyncadd [#allocation5], %s192
          %s194 = sshll.u32 [#allocation4], 4
          %s195 = int_to_ptr.vmem [resolvable:$true] %s194
          %200 = dma.hbm_to_vmem [thread:$0]  %s1, 30720, %s195, [#allocation5], 64, 64, 4
        $region16: #{_forward_packed.1} parent=11 // pred_fallthru
          _
        // Predicated region
        $region17: #{_forward_packed.1} parent=11 // pred_check
          %p201 = pneg %p84
        $region18: #{_forward_packed.1} parent=11 // pred_check_branch
          %203 = sbr.rel (%p201) target = $region20
        $region19: #{_forward_packed.1} parent=11 // pred_region
          %s205 = ssub.s32 160, 160
          %206 = vsyncadd [#allocation8], %s205
          %s207 = sshll.u32 [#allocation7], 4
          %s208 = int_to_ptr.vmem [resolvable:$true] %s207
          %213 = dma.hbm_to_vmem [thread:$0]  %s2, 160, %s208, [#allocation8], 16, 16, 1
        $region20: #{_forward_packed.1} parent=11 // pred_fallthru
          _
        // Predicated region
        $region21: #{_forward_packed.1} parent=11 // pred_check
          %p214 = pneg %p105
        $region22: #{_forward_packed.1} parent=11 // pred_check_branch
          %216 = sbr.rel (%p214) target = $region24
        $region23: #{_forward_packed.1} parent=11 // pred_region
          %s218 = ssub.s32 16, 16
          %219 = vsyncadd [#allocation6], %s218
          %222 = dma.hbm_to_smem %s3, 16, [#allocation9], [#allocation6]
        $region24: #{_forward_packed.1} parent=11 // pred_fallthru
          _
        // Predicated region
        $region25: #{_forward_packed.1} parent=11 // pred_check
          %p223 = pneg %p126
        $region26: #{_forward_packed.1} parent=11 // pred_check_branch
          %225 = sbr.rel (%p223) target = $region28
        $region27: #{_forward_packed.1} parent=11 // pred_region
          %s227 = ssub.s32 98304, 98304
          %228 = vsyncadd [#allocation8], %s227
          %s229 = sshll.u32 [#allocation10], 4
          %s230 = int_to_ptr.vmem [resolvable:$true] %s229
          %235 = dma.hbm_to_vmem [thread:$0]  %s4, 98304, %s230, [#allocation8], 2048, 2048, 128
        $region28: #{_forward_packed.1} parent=11 // pred_fallthru
          _
        // Predicated region
        $region29: #{_forward_packed.1} parent=11 // pred_check
          %p236 = pneg %p147
        $region30: #{_forward_packed.1} parent=11 // pred_check_branch
          %238 = sbr.rel (%p236) target = $region32
        $region31: #{_forward_packed.1} parent=11 // pred_region
          %s240 = ssub.s32 512, 512
          %241 = vsyncadd [#allocation12], %s240
          %s243 = sshll.u32 [#allocation11], 4
          %s244 = int_to_ptr.vmem [resolvable:$true] %s243
          %246 = dma.hbm_to_vmem [thread:$0]  %s5, 512, %s244, [#allocation12]
        $region32: #{_forward_packed.1} parent=11 // pred_fallthru
          _
      $region12: #{_forward_packed.1} parent=5 // pred_fallthru
        _
      %p247 = scmp.lt.s32.totalorder %s16, 2
      // Predicated region
      $region33: #{_forward_packed.1} parent=5 // pred_check
        %p248 = pneg %p247
      $region34: #{_forward_packed.1} parent=5 // pred_check_branch
        %250 = sbr.rel (%p248) target = $region36
      $region35: #{_forward_packed.1} parent=5 // pred_region
        // Predicated region
        $region37: #{_forward_packed.1} parent=35 // pred_check
          %p251 = pneg %p36
        $region38: #{_forward_packed.1} parent=35 // pred_check_branch
          %253 = sbr.rel (%p251) target = $region40
        $region39: #{_forward_packed.1} parent=35 // pred_region
          %p254 = scmp.lt.s32.totalorder %s16, 1
          %s255 = scalar_select %p254, %s16, 1
          %s256 = smul.addr %s255, 8
          %s257 = scalar_lea.vmem %s0, %s256
        $region40: #{_forward_packed.1} parent=35 // pred_fallthru
          _
      $region36: #{_forward_packed.1} parent=5 // pred_fallthru
        _
      %p258 = scmp.le.s32.totalorder 1, %s16
      %p259 = scmp.lt.s32.totalorder %s16, 3
      %p260 = pnand %p258, %p259
      %p261 = pneg %p260
      // Predicated region
      $region41: #{_forward_packed.1} parent=5 // pred_check
        _
      $region42: #{_forward_packed.1} parent=5 // pred_check_branch
        %263 = sbr.rel (%p260) target = $region44
      $region43: #{_forward_packed.1} parent=5 // pred_region
        %s264 = ssub.s32 %s16, 1
        // Predicated region
        $region45: #{_forward_packed.1} parent=43 // pred_check
          %p265 = pneg %p63
        $region46: #{_forward_packed.1} parent=43 // pred_check_branch
          %267 = sbr.rel (%p265) target = $region48
        $region47: #{_forward_packed.1} parent=43 // pred_region
          %268 = dma.done [#allocation5], 30720
        $region48: #{_forward_packed.1} parent=43 // pred_fallthru
          _
        // Predicated region
        $region49: #{_forward_packed.1} parent=43 // pred_check
          %p269 = pneg %p84
        $region50: #{_forward_packed.1} parent=43 // pred_check_branch
          %271 = sbr.rel (%p269) target = $region52
        $region51: #{_forward_packed.1} parent=43 // pred_region
          %272 = dma.done [#allocation8], 160
        $region52: #{_forward_packed.1} parent=43 // pred_fallthru
          _
        // Predicated region
        $region53: #{_forward_packed.1} parent=43 // pred_check
          %p273 = pneg %p105
        $region54: #{_forward_packed.1} parent=43 // pred_check_branch
          %275 = sbr.rel (%p273) target = $region56
        $region55: #{_forward_packed.1} parent=43 // pred_region
          %276 = dma.done [#allocation6], 16
        $region56: #{_forward_packed.1} parent=43 // pred_fallthru
          _
        // Predicated region
        $region57: #{_forward_packed.1} parent=43 // pred_check
          %p277 = pneg %p126
        $region58: #{_forward_packed.1} parent=43 // pred_check_branch
          %279 = sbr.rel (%p277) target = $region60
        $region59: #{_forward_packed.1} parent=43 // pred_region
          %280 = dma.done [#allocation8], 98304
        $region60: #{_forward_packed.1} parent=43 // pred_fallthru
          _
        // Predicated region
        $region61: #{_forward_packed.1} parent=43 // pred_check
          %p281 = pneg %p147
        $region62: #{_forward_packed.1} parent=43 // pred_check_branch
          %283 = sbr.rel (%p281) target = $region64
        $region63: #{_forward_packed.1} parent=43 // pred_region
          %284 = dma.done [#allocation12], 512
        $region64: #{_forward_packed.1} parent=43 // pred_fallthru
          _
        %285 = sfence
        %p286 = scmp.lt.s32.totalorder %s21, 1
        %s287 = scalar_select %p286, %s21, 1
        %s288 = smul.addr %s287, 8
        %s289 = scalar_lea.vmem %s0, %s288
        %p290 = pneg %p42
        %p291 = pneg %p39
        %p292 = pneg %p63
        %p293 = pneg %p60
        %p294 = pneg %p84
        %p295 = pneg %p81
        %p296 = pneg %p105
        %p297 = pneg %p102
        %p298 = pneg %p126
        %p299 = pneg %p123
        %p300 = pneg %p147
        %p301 = pneg %p144
        %p302 = pneg %p173
        %p303 = pneg %p170
        %p304 = scmp.lt.s32.totalorder %s21, 1
        %s305 = scalar_select %p304, %s21, 1
        %s306 = smul.addr %s305, 32
        %s307 = smul.addr %s306, 8
        %s308 = scalar_lea.vmem %s6, %s307
        %p309 = scmp.lt.s32.totalorder %s21, 1
        %s310 = scalar_select %p309, %s21, 1
        %s311 = smul.addr %s310, 8
        %s312 = scalar_lea.vmem %s0, %s311
        %p313 = scmp.lt.s32.totalorder %s21, 1
        %s314 = scalar_select %p313, %s21, 1
        %s315 = smul.addr %s314, 32
        %s316 = smul.addr %s315, 8
        %s317 = scalar_lea.vmem %s6, %s316
        %319 = vst [vmem:[#allocation2] sm:$0x1] 0.0
        %320 = vst [vmem:[#allocation2 + $0x9] sm:$0x1] 0.0
        %321 = vst [vmem:[#allocation3] sm:$0x1] 0.0
        %322 = vst [vmem:[#allocation3 + $0x9] sm:$0x1] 0.0
        %v323 = vld [vmem:[%s312] sm:$0xff]
        %324 = vst [vmem:[#allocation2 + $0x1] sm:$0xff] %v323
        %s325 = sld [smem:[#allocation9]]
        %v326 = vld [vmem:[#allocation2] sm:$0xff]
        %v327 = vpack.c.bf16 %v326, %v326
        %v328 = vld [vmem:[#allocation4] sm:$0xf]
        %v329 = vld [vmem:[#allocation4 + $0x4] sm:$0xf]
        %v330 = vld [vmem:[#allocation4 + $0x8] sm:$0xf]
        %v331 = vld [vmem:[#allocation4 + $0xc] sm:$0xf]
        %v332 = vld [vmem:[#allocation4 + $0x10] sm:$0xf]
        %v333 = vld [vmem:[#allocation4 + $0x14] sm:$0xf]
        %v334 = vld [vmem:[#allocation4 + $0x18] sm:$0xf]
        %v335 = vld [vmem:[#allocation4 + $0x1c] sm:$0xf]
        %v336 = vld [vmem:[#allocation4 + $0x20] sm:$0xf]
        %v337 = vld [vmem:[#allocation4 + $0x24] sm:$0xf]
        %v338 = vld [vmem:[#allocation4 + $0x28] sm:$0xf]
        %v339 = vld [vmem:[#allocation4 + $0x2c] sm:$0xf]
        %v340 = vld [vmem:[#allocation4 + $0x30] sm:$0xf]
        %v341 = vld [vmem:[#allocation4 + $0x34] sm:$0xf]
        %v342 = vld [vmem:[#allocation4 + $0x38] sm:$0xf]
        %v343 = vld [vmem:[#allocation4 + $0x3c] sm:$0xf]
        %v344 = vld [vmem:[#allocation2 + $0x1] sm:$0xff]
        %v345 = vpack.c.bf16 %v344, %v344
        %s346 = scalar_lea.vmem [#allocation4], 64
        %v347 = vld [vmem:[%s346] sm:$0xf]
        %v348 = vld [vmem:[%s346 + $0x4] sm:$0xf]
        %v349 = vld [vmem:[%s346 + $0x8] sm:$0xf]
        %v350 = vld [vmem:[%s346 + $0xc] sm:$0xf]
        %v351 = vld [vmem:[%s346 + $0x10] sm:$0xf]
        %v352 = vld [vmem:[%s346 + $0x14] sm:$0xf]
        %v353 = vld [vmem:[%s346 + $0x18] sm:$0xf]
        %v354 = vld [vmem:[%s346 + $0x1c] sm:$0xf]
        %v355 = vld [vmem:[%s346 + $0x20] sm:$0xf]
        %v356 = vld [vmem:[%s346 + $0x24] sm:$0xf]
        %v357 = vld [vmem:[%s346 + $0x28] sm:$0xf]
        %v358 = vld [vmem:[%s346 + $0x2c] sm:$0xf]
        %v359 = vld [vmem:[%s346 + $0x30] sm:$0xf]
        %v360 = vld [vmem:[%s346 + $0x34] sm:$0xf]
        %v361 = vld [vmem:[%s346 + $0x38] sm:$0xf]
        %v362 = vld [vmem:[%s346 + $0x3c] sm:$0xf]
        %v379 = vunpack.c.l.b16 %v347
        %v380 = vunpack.c.l.b16 %v348
        %v381 = vunpack.c.l.b16 %v349
        %v382 = vunpack.c.l.b16 %v350
        %v383 = vunpack.c.l.b16 %v351
        %v384 = vunpack.c.l.b16 %v352
        %v385 = vunpack.c.l.b16 %v353
        %v386 = vunpack.c.l.b16 %v354
        %v387 = vunpack.c.l.b16 %v355
        %v388 = vunpack.c.l.b16 %v356
        %v389 = vunpack.c.l.b16 %v357
        %v390 = vunpack.c.l.b16 %v358
        %v391 = vunpack.c.l.b16 %v359
        %v392 = vunpack.c.l.b16 %v360
        %v393 = vunpack.c.l.b16 %v361
        %v394 = vunpack.c.l.b16 %v362
        %v395 = vpack.c.b16 %v380, %v379
        %v396 = vpack.c.b16 %v382, %v381
        %v397 = vpack.c.b16 %v384, %v383
        %v398 = vpack.c.b16 %v386, %v385
        %v399 = vpack.c.b16 %v388, %v387
        %v400 = vpack.c.b16 %v390, %v389
        %v401 = vpack.c.b16 %v392, %v391
        %v402 = vpack.c.b16 %v394, %v393
        %411 = vmatprep.subr.bf16.mxu0 0
        %412 = vmatpush1.bf16.msra.mxu0 %v395
        %413 = vmatprep.subr.bf16.mxu0 0
        %414 = vmatpush1.bf16.msra.mxu0 %v396
        %415 = vmatprep.subr.bf16.mxu0 0
        %416 = vmatpush1.bf16.msra.mxu0 %v397
        %417 = vmatprep.subr.bf16.mxu0 0
        %418 = vmatpush1.bf16.msra.mxu0 %v398
        %419 = vmatprep.subr.bf16.mxu0 0
        %420 = vmatpush1.bf16.msra.mxu0 %v399
        %421 = vmatprep.subr.bf16.mxu0 0
        %422 = vmatpush1.bf16.msra.mxu0 %v400
        %423 = vmatprep.subr.bf16.mxu0 0
        %424 = vmatpush1.bf16.msra.mxu0 %v401
        %425 = vmatprep.subr.bf16.mxu0 0
        %426 = vmatpush1.bf16.msra.mxu0 %v402
        %427 = vmatprep.subr.bf16.mxu0 0
        %428 = vmatpush1.bf16.msra.mxu0 0
        %429 = vmatprep.subr.bf16.mxu0 0
        %430 = vmatpush1.bf16.msra.mxu0 0
        %431 = vmatprep.subr.bf16.mxu0 0
        %432 = vmatpush1.bf16.msra.mxu0 0
        %433 = vmatprep.subr.bf16.mxu0 0
        %434 = vmatpush1.bf16.msra.mxu0 0
        %435 = vmatprep.subr.bf16.mxu0 0
        %436 = vmatpush1.bf16.msra.mxu0 0
        %437 = vmatprep.subr.bf16.mxu0 0
        %438 = vmatpush1.bf16.msra.mxu0 0
        %439 = vmatprep.subr.bf16.mxu0 0
        %440 = vmatpush1.bf16.msra.mxu0 0
        %441 = vmatprep.subr.bf16.mxu0 0
        %442 = vmatpush1.bf16.msra.mxu0 0
        %443 = vmatprep.mubr.bf16.mxu0 0
        %444 = vmatmul.mubr.bf16.gmra.mrb[0].mxu0 %v345
        %v445 = vpop.f32.mrb[0].mxu0
        %v446 = vadd.f32 0.0, %v445
        %v447 = vpop.f32.mrb[0].mxu0
        %v448 = vpop.f32.mrb[0].mxu0
        %v449 = vpop.f32.mrb[0].mxu0
        %450 = vdwg.mxu0
        %v467 = vunpack.c.l.b16 %v328
        %v468 = vunpack.c.l.b16 %v329
        %v469 = vunpack.c.l.b16 %v330
        %v470 = vunpack.c.l.b16 %v331
        %v471 = vunpack.c.l.b16 %v332
        %v472 = vunpack.c.l.b16 %v333
        %v473 = vunpack.c.l.b16 %v334
        %v474 = vunpack.c.l.b16 %v335
        %v475 = vunpack.c.l.b16 %v336
        %v476 = vunpack.c.l.b16 %v337
        %v477 = vunpack.c.l.b16 %v338
        %v478 = vunpack.c.l.b16 %v339
        %v479 = vunpack.c.l.b16 %v340
        %v480 = vunpack.c.l.b16 %v341
        %v481 = vunpack.c.l.b16 %v342
        %v482 = vunpack.c.l.b16 %v343
        %v483 = vpack.c.b16 %v468, %v467
        %v484 = vpack.c.b16 %v470, %v469
        %v485 = vpack.c.b16 %v472, %v471
        %v486 = vpack.c.b16 %v474, %v473
        %v487 = vpack.c.b16 %v476, %v475
        %v488 = vpack.c.b16 %v478, %v477
        %v489 = vpack.c.b16 %v480, %v479
        %v490 = vpack.c.b16 %v482, %v481
        %499 = vmatprep.subr.bf16.mxu0 0
        %500 = vmatpush1.bf16.msra.mxu0 %v483
        %501 = vmatprep.subr.bf16.mxu0 0
        %502 = vmatpush1.bf16.msra.mxu0 %v484
        %503 = vmatprep.subr.bf16.mxu0 0
        %504 = vmatpush1.bf16.msra.mxu0 %v485
        %505 = vmatprep.subr.bf16.mxu0 0
        %506 = vmatpush1.bf16.msra.mxu0 %v486
        %507 = vmatprep.subr.bf16.mxu0 0
        %508 = vmatpush1.bf16.msra.mxu0 %v487
        %509 = vmatprep.subr.bf16.mxu0 0
        %510 = vmatpush1.bf16.msra.mxu0 %v488
        %511 = vmatprep.subr.bf16.mxu0 0
        %512 = vmatpush1.bf16.msra.mxu0 %v489
        %513 = vmatprep.subr.bf16.mxu0 0
        %514 = vmatpush1.bf16.msra.mxu0 %v490
        %515 = vmatprep.subr.bf16.mxu0 0
        %516 = vmatpush1.bf16.msra.mxu0 0
        %517 = vmatprep.subr.bf16.mxu0 0
        %518 = vmatpush1.bf16.msra.mxu0 0
        %519 = vmatprep.subr.bf16.mxu0 0
        %520 = vmatpush1.bf16.msra.mxu0 0
        %521 = vmatprep.subr.bf16.mxu0 0
        %522 = vmatpush1.bf16.msra.mxu0 0
        %523 = vmatprep.subr.bf16.mxu0 0
        %524 = vmatpush1.bf16.msra.mxu0 0
        %525 = vmatprep.subr.bf16.mxu0 0
        %526 = vmatpush1.bf16.msra.mxu0 0
        %527 = vmatprep.subr.bf16.mxu0 0
        %528 = vmatpush1.bf16.msra.mxu0 0
        %529 = vmatprep.subr.bf16.mxu0 0
        %530 = vmatpush1.bf16.msra.mxu0 0
        %531 = vmatprep.mubr.bf16.mxu0 0
        %532 = vmatmul.mubr.bf16.gmra.mrb[0].mxu0 %v327
        %v533 = vpop.f32.mrb[0].mxu0
        %v534 = vadd.f32 %v446, %v533
        %v535 = vpop.f32.mrb[0].mxu0
        %v536 = vpop.f32.mrb[0].mxu0
        %v537 = vpop.f32.mrb[0].mxu0
        %538 = vdwg.mxu0
        %v539 = vld [vmem:[#allocation2 + $0x2] sm:$0xff]
        %v540 = vpack.c.bf16 %v539, %v539
        %s541 = scalar_lea.vmem [#allocation4], 128
        %v542 = vld [vmem:[%s541] sm:$0xf]
        %v543 = vld [vmem:[%s541 + $0x4] sm:$0xf]
        %v544 = vld [vmem:[%s541 + $0x8] sm:$0xf]
        %v545 = vld [vmem:[%s541 + $0xc] sm:$0xf]
        %v546 = vld [vmem:[%s541 + $0x10] sm:$0xf]
        %v547 = vld [vmem:[%s541 + $0x14] sm:$0xf]
        %v548 = vld [vmem:[%s541 + $0x18] sm:$0xf]
        %v549 = vld [vmem:[%s541 + $0x1c] sm:$0xf]
        %v550 = vld [vmem:[%s541 + $0x20] sm:$0xf]
        %v551 = vld [vmem:[%s541 + $0x24] sm:$0xf]
        %v552 = vld [vmem:[%s541 + $0x28] sm:$0xf]
        %v553 = vld [vmem:[%s541 + $0x2c] sm:$0xf]
        %v554 = vld [vmem:[%s541 + $0x30] sm:$0xf]
        %v555 = vld [vmem:[%s541 + $0x34] sm:$0xf]
        %v556 = vld [vmem:[%s541 + $0x38] sm:$0xf]
        %v557 = vld [vmem:[%s541 + $0x3c] sm:$0xf]
        %v574 = vunpack.c.l.b16 %v542
        %v575 = vunpack.c.l.b16 %v543
        %v576 = vunpack.c.l.b16 %v544
        %v577 = vunpack.c.l.b16 %v545
        %v578 = vunpack.c.l.b16 %v546
        %v579 = vunpack.c.l.b16 %v547
        %v580 = vunpack.c.l.b16 %v548
        %v581 = vunpack.c.l.b16 %v549
        %v582 = vunpack.c.l.b16 %v550
        %v583 = vunpack.c.l.b16 %v551
        %v584 = vunpack.c.l.b16 %v552
        %v585 = vunpack.c.l.b16 %v553
        %v586 = vunpack.c.l.b16 %v554
        %v587 = vunpack.c.l.b16 %v555
        %v588 = vunpack.c.l.b16 %v556
        %v589 = vunpack.c.l.b16 %v557
        %v590 = vpack.c.b16 %v575, %v574
        %v591 = vpack.c.b16 %v577, %v576
        %v592 = vpack.c.b16 %v579, %v578
        %v593 = vpack.c.b16 %v581, %v580
        %v594 = vpack.c.b16 %v583, %v582
        %v595 = vpack.c.b16 %v585, %v584
        %v596 = vpack.c.b16 %v587, %v586
        %v597 = vpack.c.b16 %v589, %v588
        %606 = vmatprep.subr.bf16.mxu0 0
        %607 = vmatpush1.bf16.msra.mxu0 %v590
        %608 = vmatprep.subr.bf16.mxu0 0
        %609 = vmatpush1.bf16.msra.mxu0 %v591
        %610 = vmatprep.subr.bf16.mxu0 0
        %611 = vmatpush1.bf16.msra.mxu0 %v592
        %612 = vmatprep.subr.bf16.mxu0 0
        %613 = vmatpush1.bf16.msra.mxu0 %v593
        %614 = vmatprep.subr.bf16.mxu0 0
        %615 = vmatpush1.bf16.msra.mxu0 %v594
        %616 = vmatprep.subr.bf16.mxu0 0
        %617 = vmatpush1.bf16.msra.mxu0 %v595
        %618 = vmatprep.subr.bf16.mxu0 0
        %619 = vmatpush1.bf16.msra.mxu0 %v596
        %620 = vmatprep.subr.bf16.mxu0 0
        %621 = vmatpush1.bf16.msra.mxu0 %v597
        %622 = vmatprep.subr.bf16.mxu0 0
        %623 = vmatpush1.bf16.msra.mxu0 0
        %624 = vmatprep.subr.bf16.mxu0 0
        %625 = vmatpush1.bf16.msra.mxu0 0
        %626 = vmatprep.subr.bf16.mxu0 0
        %627 = vmatpush1.bf16.msra.mxu0 0
        %628 = vmatprep.subr.bf16.mxu0 0
        %629 = vmatpush1.bf16.msra.mxu0 0
        %630 = vmatprep.subr.bf16.mxu0 0
        %631 = vmatpush1.bf16.msra.mxu0 0
        %632 = vmatprep.subr.bf16.mxu0 0
        %633 = vmatpush1.bf16.msra.mxu0 0
        %634 = vmatprep.subr.bf16.mxu0 0
        %635 = vmatpush1.bf16.msra.mxu0 0
        %636 = vmatprep.subr.bf16.mxu0 0
        %637 = vmatpush1.bf16.msra.mxu0 0
        %638 = vmatprep.mubr.bf16.mxu0 0
        %639 = vmatmul.mubr.bf16.gmra.mrb[0].mxu0 %v540
        %v640 = vpop.f32.mrb[0].mxu0
        %v641 = vadd.f32 0.0, %v640
        %v642 = vpop.f32.mrb[0].mxu0
        %v643 = vpop.f32.mrb[0].mxu0
        %v644 = vpop.f32.mrb[0].mxu0
        %645 = vdwg.mxu0
        %v646 = vadd.f32 %v534, %v641
        %v647 = vld [vmem:[#allocation7] sm:$0x1]
        %v649 = vlaneseq
        %v650 = vshrl.u32 %v649, 7
        %v651 = vsub.s32 0, %v650
        %v652 = vrot.slane %v647, %v651
        %v654 = vadd.f32 %v646, %v652
        %vm655 = vcmp.ge.f32.partialorder %v654, 0.0
        %v656 = vstv %s325
        %v657 = vmul.f32 %v656, %v654
        %v658 = vsel %vm655, %v654, %v657
        %659 = vst [vmem:[#allocation3 + $0x1] sm:$0xff] %v658
        %v660 = vld [vmem:[#allocation3] sm:$0xff]
        %v661 = vpack.c.bf16 %v660, %v660
        %s662 = scalar_lea.vmem [#allocation4], 192
        %v663 = vld [vmem:[%s662] sm:$0xf]
        %v664 = vld [vmem:[%s662 + $0x4] sm:$0xf]
        %v665 = vld [vmem:[%s662 + $0x8] sm:$0xf]
        %v666 = vld [vmem:[%s662 + $0xc] sm:$0xf]
        %v667 = vld [vmem:[%s662 + $0x10] sm:$0xf]
        %v668 = vld [vmem:[%s662 + $0x14] sm:$0xf]
        %v669 = vld [vmem:[%s662 + $0x18] sm:$0xf]
        %v670 = vld [vmem:[%s662 + $0x1c] sm:$0xf]
        %v671 = vld [vmem:[%s662 + $0x20] sm:$0xf]
        %v672 = vld [vmem:[%s662 + $0x24] sm:$0xf]
        %v673 = vld [vmem:[%s662 + $0x28] sm:$0xf]
        %v674 = vld [vmem:[%s662 + $0x2c] sm:$0xf]
        %v675 = vld [vmem:[%s662 + $0x30] sm:$0xf]
        %v676 = vld [vmem:[%s662 + $0x34] sm:$0xf]
        %v677 = vld [vmem:[%s662 + $0x38] sm:$0xf]
        %v678 = vld [vmem:[%s662 + $0x3c] sm:$0xf]
        %v679 = vld [vmem:[#allocation3 + $0x1] sm:$0xff]
        %v680 = vpack.c.bf16 %v679, %v679
        %s681 = scalar_lea.vmem [#allocation4], 256
        %v682 = vld [vmem:[%s681] sm:$0xf]
        %v683 = vld [vmem:[%s681 + $0x4] sm:$0xf]
        %v684 = vld [vmem:[%s681 + $0x8] sm:$0xf]
        %v685 = vld [vmem:[%s681 + $0xc] sm:$0xf]
        %v686 = vld [vmem:[%s681 + $0x10] sm:$0xf]
        %v687 = vld [vmem:[%s681 + $0x14] sm:$0xf]
        %v688 = vld [vmem:[%s681 + $0x18] sm:$0xf]
        %v689 = vld [vmem:[%s681 + $0x1c] sm:$0xf]
        %v690 = vld [vmem:[%s681 + $0x20] sm:$0xf]
        %v691 = vld [vmem:[%s681 + $0x24] sm:$0xf]
        %v692 = vld [vmem:[%s681 + $0x28] sm:$0xf]
        %v693 = vld [vmem:[%s681 + $0x2c] sm:$0xf]
        %v694 = vld [vmem:[%s681 + $0x30] sm:$0xf]
        %v695 = vld [vmem:[%s681 + $0x34] sm:$0xf]
        %v696 = vld [vmem:[%s681 + $0x38] sm:$0xf]
        %v697 = vld [vmem:[%s681 + $0x3c] sm:$0xf]
        %v714 = vunpack.c.l.b16 %v682
        %v715 = vunpack.c.l.b16 %v683
        %v716 = vunpack.c.l.b16 %v684
        %v717 = vunpack.c.l.b16 %v685
        %v718 = vunpack.c.l.b16 %v686
        %v719 = vunpack.c.l.b16 %v687
        %v720 = vunpack.c.l.b16 %v688
        %v721 = vunpack.c.l.b16 %v689
        %v722 = vunpack.c.l.b16 %v690
        %v723 = vunpack.c.l.b16 %v691
        %v724 = vunpack.c.l.b16 %v692
        %v725 = vunpack.c.l.b16 %v693
        %v726 = vunpack.c.l.b16 %v694
        %v727 = vunpack.c.l.b16 %v695
        %v728 = vunpack.c.l.b16 %v696
        %v729 = vunpack.c.l.b16 %v697
        %v730 = vpack.c.b16 %v715, %v714
        %v731 = vpack.c.b16 %v717, %v716
        %v732 = vpack.c.b16 %v719, %v718
        %v733 = vpack.c.b16 %v721, %v720
        %v734 = vpack.c.b16 %v723, %v722
        %v735 = vpack.c.b16 %v725, %v724
        %v736 = vpack.c.b16 %v727, %v726
        %v737 = vpack.c.b16 %v729, %v728
        %746 = vmatprep.subr.bf16.mxu0 0
        %747 = vmatpush1.bf16.msra.mxu0 %v730
        %748 = vmatprep.subr.bf16.mxu0 0
        %749 = vmatpush1.bf16.msra.mxu0 %v731
        %750 = vmatprep.subr.bf16.mxu0 0
        %751 = vmatpush1.bf16.msra.mxu0 %v732
        %752 = vmatprep.subr.bf16.mxu0 0
        %753 = vmatpush1.bf16.msra.mxu0 %v733
        %754 = vmatprep.subr.bf16.mxu0 0
        %755 = vmatpush1.bf16.msra.mxu0 %v734
        %756 = vmatprep.subr.bf16.mxu0 0
        %757 = vmatpush1.bf16.msra.mxu0 %v735
        %758 = vmatprep.subr.bf16.mxu0 0
        %759 = vmatpush1.bf16.msra.mxu0 %v736
        %760 = vmatprep.subr.bf16.mxu0 0
        %761 = vmatpush1.bf16.msra.mxu0 %v737
        %762 = vmatprep.subr.bf16.mxu0 0
        %763 = vmatpush1.bf16.msra.mxu0 0
        %764 = vmatprep.subr.bf16.mxu0 0
        %765 = vmatpush1.bf16.msra.mxu0 0
        %766 = vmatprep.subr.bf16.mxu0 0
        %767 = vmatpush1.bf16.msra.mxu0 0
        %768 = vmatprep.subr.bf16.mxu0 0
        %769 = vmatpush1.bf16.msra.mxu0 0
        %770 = vmatprep.subr.bf16.mxu0 0
        %771 = vmatpush1.bf16.msra.mxu0 0
        %772 = vmatprep.subr.bf16.mxu0 0
        %773 = vmatpush1.bf16.msra.mxu0 0
        %774 = vmatprep.subr.bf16.mxu0 0
        %775 = vmatpush1.bf16.msra.mxu0 0
        %776 = vmatprep.subr.bf16.mxu0 0
        %777 = vmatpush1.bf16.msra.mxu0 0
        %778 = vmatprep.mubr.bf16.mxu0 0
        %779 = vmatmul.mubr.bf16.gmra.mrb[0].mxu0 %v680
        %v780 = vpop.f32.mrb[0].mxu0
        %v781 = vadd.f32 0.0, %v780
        %v782 = vpop.f32.mrb[0].mxu0
        %v783 = vpop.f32.mrb[0].mxu0
        %v784 = vpop.f32.mrb[0].mxu0
        %785 = vdwg.mxu0
        %v802 = vunpack.c.l.b16 %v663
        %v803 = vunpack.c.l.b16 %v664
        %v804 = vunpack.c.l.b16 %v665
        %v805 = vunpack.c.l.b16 %v666
        %v806 = vunpack.c.l.b16 %v667
        %v807 = vunpack.c.l.b16 %v668
        %v808 = vunpack.c.l.b16 %v669
        %v809 = vunpack.c.l.b16 %v670
        %v810 = vunpack.c.l.b16 %v671
        %v811 = vunpack.c.l.b16 %v672
        %v812 = vunpack.c.l.b16 %v673
        %v813 = vunpack.c.l.b16 %v674
        %v814 = vunpack.c.l.b16 %v675
        %v815 = vunpack.c.l.b16 %v676
        %v816 = vunpack.c.l.b16 %v677
        %v817 = vunpack.c.l.b16 %v678
        %v818 = vpack.c.b16 %v803, %v802
        %v819 = vpack.c.b16 %v805, %v804
        %v820 = vpack.c.b16 %v807, %v806
        %v821 = vpack.c.b16 %v809, %v808
        %v822 = vpack.c.b16 %v811, %v810
        %v823 = vpack.c.b16 %v813, %v812
        %v824 = vpack.c.b16 %v815, %v814
        %v825 = vpack.c.b16 %v817, %v816
        %834 = vmatprep.subr.bf16.mxu0 0
        %835 = vmatpush1.bf16.msra.mxu0 %v818
        %836 = vmatprep.subr.bf16.mxu0 0
        %837 = vmatpush1.bf16.msra.mxu0 %v819
        %838 = vmatprep.subr.bf16.mxu0 0
        %839 = vmatpush1.bf16.msra.mxu0 %v820
        %840 = vmatprep.subr.bf16.mxu0 0
        %841 = vmatpush1.bf16.msra.mxu0 %v821
        %842 = vmatprep.subr.bf16.mxu0 0
        %843 = vmatpush1.bf16.msra.mxu0 %v822
        %844 = vmatprep.subr.bf16.mxu0 0
        %845 = vmatpush1.bf16.msra.mxu0 %v823
        %846 = vmatprep.subr.bf16.mxu0 0
        %847 = vmatpush1.bf16.msra.mxu0 %v824
        %848 = vmatprep.subr.bf16.mxu0 0
        %849 = vmatpush1.bf16.msra.mxu0 %v825
        %850 = vmatprep.subr.bf16.mxu0 0
        %851 = vmatpush1.bf16.msra.mxu0 0
        %852 = vmatprep.subr.bf16.mxu0 0
        %853 = vmatpush1.bf16.msra.mxu0 0
        %854 = vmatprep.subr.bf16.mxu0 0
        %855 = vmatpush1.bf16.msra.mxu0 0
        %856 = vmatprep.subr.bf16.mxu0 0
        %857 = vmatpush1.bf16.msra.mxu0 0
        %858 = vmatprep.subr.bf16.mxu0 0
        %859 = vmatpush1.bf16.msra.mxu0 0
        %860 = vmatprep.subr.bf16.mxu0 0
        %861 = vmatpush1.bf16.msra.mxu0 0
        %862 = vmatprep.subr.bf16.mxu0 0
        %863 = vmatpush1.bf16.msra.mxu0 0
        %864 = vmatprep.subr.bf16.mxu0 0
        %865 = vmatpush1.bf16.msra.mxu0 0
        %866 = vmatprep.mubr.bf16.mxu0 0
        %867 = vmatmul.mubr.bf16.gmra.mrb[0].mxu0 %v661
        %v868 = vpop.f32.mrb[0].mxu0
        %v869 = vadd.f32 %v781, %v868
        %v870 = vpop.f32.mrb[0].mxu0
        %v871 = vpop.f32.mrb[0].mxu0
        %v872 = vpop.f32.mrb[0].mxu0
        %873 = vdwg.mxu0
        %v874 = vld [vmem:[#allocation3 + $0x2] sm:$0xff]
        %v875 = vpack.c.bf16 %v874, %v874
        %s876 = scalar_lea.vmem [#allocation4], 320
        %v877 = vld [vmem:[%s876] sm:$0xf]
        %v878 = vld [vmem:[%s876 + $0x4] sm:$0xf]
        %v879 = vld [vmem:[%s876 + $0x8] sm:$0xf]
        %v880 = vld [vmem:[%s876 + $0xc] sm:$0xf]
        %v881 = vld [vmem:[%s876 + $0x10] sm:$0xf]
        %v882 = vld [vmem:[%s876 + $0x14] sm:$0xf]
        %v883 = vld [vmem:[%s876 + $0x18] sm:$0xf]
        %v884 = vld [vmem:[%s876 + $0x1c] sm:$0xf]
        %v885 = vld [vmem:[%s876 + $0x20] sm:$0xf]
        %v886 = vld [vmem:[%s876 + $0x24] sm:$0xf]
        %v887 = vld [vmem:[%s876 + $0x28] sm:$0xf]
        %v888 = vld [vmem:[%s876 + $0x2c] sm:$0xf]
        %v889 = vld [vmem:[%s876 + $0x30] sm:$0xf]
        %v890 = vld [vmem:[%s876 + $0x34] sm:$0xf]
        %v891 = vld [vmem:[%s876 + $0x38] sm:$0xf]
        %v892 = vld [vmem:[%s876 + $0x3c] sm:$0xf]
        %v909 = vunpack.c.l.b16 %v877
        %v910 = vunpack.c.l.b16 %v878
        %v911 = vunpack.c.l.b16 %v879
        %v912 = vunpack.c.l.b16 %v880
        %v913 = vunpack.c.l.b16 %v881
        %v914 = vunpack.c.l.b16 %v882
        %v915 = vunpack.c.l.b16 %v883
        %v916 = vunpack.c.l.b16 %v884
        %v917 = vunpack.c.l.b16 %v885
        %v918 = vunpack.c.l.b16 %v886
        %v919 = vunpack.c.l.b16 %v887
        %v920 = vunpack.c.l.b16 %v888
        %v921 = vunpack.c.l.b16 %v889
        %v922 = vunpack.c.l.b16 %v890
        %v923 = vunpack.c.l.b16 %v891
        %v924 = vunpack.c.l.b16 %v892
        %v925 = vpack.c.b16 %v910, %v909
        %v926 = vpack.c.b16 %v912, %v911
        %v927 = vpack.c.b16 %v914, %v913
        %v928 = vpack.c.b16 %v916, %v915
        %v929 = vpack.c.b16 %v918, %v917
        %v930 = vpack.c.b16 %v920, %v919
        %v931 = vpack.c.b16 %v922, %v921
        %v932 = vpack.c.b16 %v924, %v923
        %941 = vmatprep.subr.bf16.mxu0 0
        %942 = vmatpush1.bf16.msra.mxu0 %v925
        %943 = vmatprep.subr.bf16.mxu0 0
        %944 = vmatpush1.bf16.msra.mxu0 %v926
        %945 = vmatprep.subr.bf16.mxu0 0
        %946 = vmatpush1.bf16.msra.mxu0 %v927
        %947 = vmatprep.subr.bf16.mxu0 0
        %948 = vmatpush1.bf16.msra.mxu0 %v928
        %949 = vmatprep.subr.bf16.mxu0 0
        %950 = vmatpush1.bf16.msra.mxu0 %v929
        %951 = vmatprep.subr.bf16.mxu0 0
        %952 = vmatpush1.bf16.msra.mxu0 %v930
        %953 = vmatprep.subr.bf16.mxu0 0
        %954 = vmatpush1.bf16.msra.mxu0 %v931
        %955 = vmatprep.subr.bf16.mxu0 0
        %956 = vmatpush1.bf16.msra.mxu0 %v932
        %957 = vmatprep.subr.bf16.mxu0 0
        %958 = vmatpush1.bf16.msra.mxu0 0
        %959 = vmatprep.subr.bf16.mxu0 0
        %960 = vmatpush1.bf16.msra.mxu0 0
        %961 = vmatprep.subr.bf16.mxu0 0
        %962 = vmatpush1.bf16.msra.mxu0 0
        %963 = vmatprep.subr.bf16.mxu0 0
        %964 = vmatpush1.bf16.msra.mxu0 0
        %965 = vmatprep.subr.bf16.mxu0 0
        %966 = vmatpush1.bf16.msra.mxu0 0
        %967 = vmatprep.subr.bf16.mxu0 0
        %968 = vmatpush1.bf16.msra.mxu0 0
        %969 = vmatprep.subr.bf16.mxu0 0
        %970 = vmatpush1.bf16.msra.mxu0 0
        %971 = vmatprep.subr.bf16.mxu0 0
        %972 = vmatpush1.bf16.msra.mxu0 0
        %973 = vmatprep.mubr.bf16.mxu0 0
        %974 = vmatmul.mubr.bf16.gmra.mrb[0].mxu0 %v875
        %v975 = vpop.f32.mrb[0].mxu0
        %v976 = vadd.f32 0.0, %v975
        %v977 = vpop.f32.mrb[0].mxu0
        %v978 = vpop.f32.mrb[0].mxu0
        %v979 = vpop.f32.mrb[0].mxu0
        %980 = vdwg.mxu0
        %v981 = vadd.f32 %v869, %v976
        %s982 = scalar_lea.vmem [#allocation7], 1
        %v983 = vld [vmem:[%s982] sm:$0x1]
        %v985 = vlaneseq
        %v986 = vshrl.u32 %v985, 7
        %v987 = vsub.s32 0, %v986
        %v988 = vrot.slane %v983, %v987
        %v990 = vadd.f32 %v981, %v988
        %v991 = vld [vmem:[#allocation2 + $0x1] sm:$0xff]
        %v992 = vadd.f32 %v990, %v991
        %vm993 = vcmp.ge.f32.partialorder %v992, 0.0
        %v994 = vmul.f32 %v656, %v992
        %v995 = vsel %vm993, %v992, %v994
        %996 = vst [vmem:[#allocation2 + $0x1] sm:$0xff] %v995
        %s997 = sld [smem:[#allocation9 + $0x1]]
        %v998 = vld [vmem:[#allocation2] sm:$0xff]
        %v999 = vpack.c.bf16 %v998, %v998
        %s1000 = scalar_lea.vmem [#allocation4], 384
        %v1001 = vld [vmem:[%s1000] sm:$0xf]
        %v1002 = vld [vmem:[%s1000 + $0x4] sm:$0xf]
        %v1003 = vld [vmem:[%s1000 + $0x8] sm:$0xf]
        %v1004 = vld [vmem:[%s1000 + $0xc] sm:$0xf]
        %v1005 = vld [vmem:[%s1000 + $0x10] sm:$0xf]
        %v1006 = vld [vmem:[%s1000 + $0x14] sm:$0xf]
        %v1007 = vld [vmem:[%s1000 + $0x18] sm:$0xf]
        %v1008 = vld [vmem:[%s1000 + $0x1c] sm:$0xf]
        %v1009 = vld [vmem:[%s1000 + $0x20] sm:$0xf]
        %v1010 = vld [vmem:[%s1000 + $0x24] sm:$0xf]
        %v1011 = vld [vmem:[%s1000 + $0x28] sm:$0xf]
        %v1012 = vld [vmem:[%s1000 + $0x2c] sm:$0xf]
        %v1013 = vld [vmem:[%s1000 + $0x30] sm:$0xf]
        %v1014 = vld [vmem:[%s1000 + $0x34] sm:$0xf]
        %v1015 = vld [vmem:[%s1000 + $0x38] sm:$0xf]
        %v1016 = vld [vmem:[%s1000 + $0x3c] sm:$0xf]
        %v1017 = vld [vmem:[#allocation2 + $0x1] sm:$0xff]
        %v1018 = vpack.c.bf16 %v1017, %v1017
        %s1019 = scalar_lea.vmem [#allocation4], 448
        %v1020 = vld [vmem:[%s1019] sm:$0xf]
        %v1021 = vld [vmem:[%s1019 + $0x4] sm:$0xf]
        %v1022 = vld [vmem:[%s1019 + $0x8] sm:$0xf]
        %v1023 = vld [vmem:[%s1019 + $0xc] sm:$0xf]
        %v1024 = vld [vmem:[%s1019 + $0x10] sm:$0xf]
        %v1025 = vld [vmem:[%s1019 + $0x14] sm:$0xf]
        %v1026 = vld [vmem:[%s1019 + $0x18] sm:$0xf]
        %v1027 = vld [vmem:[%s1019 + $0x1c] sm:$0xf]
        %v1028 = vld [vmem:[%s1019 + $0x20] sm:$0xf]
        %v1029 = vld [vmem:[%s1019 + $0x24] sm:$0xf]
        %v1030 = vld [vmem:[%s1019 + $0x28] sm:$0xf]
        %v1031 = vld [vmem:[%s1019 + $0x2c] sm:$0xf]
        %v1032 = vld [vmem:[%s1019 + $0x30] sm:$0xf]
        %v1033 = vld [vmem:[%s1019 + $0x34] sm:$0xf]
        %v1034 = vld [vmem:[%s1019 + $0x38] sm:$0xf]
        %v1035 = vld [vmem:[%s1019 + $0x3c] sm:$0xf]
        %v1052 = vunpack.c.l.b16 %v1020
        %v1053 = vunpack.c.l.b16 %v1021
        %v1054 = vunpack.c.l.b16 %v1022
        %v1055 = vunpack.c.l.b16 %v1023
        %v1056 = vunpack.c.l.b16 %v1024
        %v1057 = vunpack.c.l.b16 %v1025
        %v1058 = vunpack.c.l.b16 %v1026
        %v1059 = vunpack.c.l.b16 %v1027
        %v1060 = vunpack.c.l.b16 %v1028
        %v1061 = vunpack.c.l.b16 %v1029
        %v1062 = vunpack.c.l.b16 %v1030
        %v1063 = vunpack.c.l.b16 %v1031
        %v1064 = vunpack.c.l.b16 %v1032
        %v1065 = vunpack.c.l.b16 %v1033
        %v1066 = vunpack.c.l.b16 %v1034
        %v1067 = vunpack.c.l.b16 %v1035
        %v1068 = vpack.c.b16 %v1053, %v1052
        %v1069 = vpack.c.b16 %v1055, %v1054
        %v1070 = vpack.c.b16 %v1057, %v1056
        %v1071 = vpack.c.b16 %v1059, %v1058
        %v1072 = vpack.c.b16 %v1061, %v1060
        %v1073 = vpack.c.b16 %v1063, %v1062
        %v1074 = vpack.c.b16 %v1065, %v1064
        %v1075 = vpack.c.b16 %v1067, %v1066
        %1084 = vmatprep.subr.bf16.mxu0 0
        %1085 = vmatpush1.bf16.msra.mxu0 %v1068
        %1086 = vmatprep.subr.bf16.mxu0 0
        %1087 = vmatpush1.bf16.msra.mxu0 %v1069
        %1088 = vmatprep.subr.bf16.mxu0 0
        %1089 = vmatpush1.bf16.msra.mxu0 %v1070
        %1090 = vmatprep.subr.bf16.mxu0 0
        %1091 = vmatpush1.bf16.msra.mxu0 %v1071
        %1092 = vmatprep.subr.bf16.mxu0 0
        %1093 = vmatpush1.bf16.msra.mxu0 %v1072
        %1094 = vmatprep.subr.bf16.mxu0 0
        %1095 = vmatpush1.bf16.msra.mxu0 %v1073
        %1096 = vmatprep.subr.bf16.mxu0 0
        %1097 = vmatpush1.bf16.msra.mxu0 %v1074
        %1098 = vmatprep.subr.bf16.mxu0 0
        %1099 = vmatpush1.bf16.msra.mxu0 %v1075
        %1100 = vmatprep.subr.bf16.mxu0 0
        %1101 = vmatpush1.bf16.msra.mxu0 0
        %1102 = vmatprep.subr.bf16.mxu0 0
        %1103 = vmatpush1.bf16.msra.mxu0 0
        %1104 = vmatprep.subr.bf16.mxu0 0
        %1105 = vmatpush1.bf16.msra.mxu0 0
        %1106 = vmatprep.subr.bf16.mxu0 0
        %1107 = vmatpush1.bf16.msra.mxu0 0
        %1108 = vmatprep.subr.bf16.mxu0 0
        %1109 = vmatpush1.bf16.msra.mxu0 0
        %1110 = vmatprep.subr.bf16.mxu0 0
        %1111 = vmatpush1.bf16.msra.mxu0 0
        %1112 = vmatprep.subr.bf16.mxu0 0
        %1113 = vmatpush1.bf16.msra.mxu0 0
        %1114 = vmatprep.subr.bf16.mxu0 0
        %1115 = vmatpush1.bf16.msra.mxu0 0
        %1116 = vmatprep.mubr.bf16.mxu0 0
        %1117 = vmatmul.mubr.bf16.gmra.mrb[0].mxu0 %v1018
        %v1118 = vpop.f32.mrb[0].mxu0
        %v1119 = vadd.f32 0.0, %v1118
        %v1120 = vpop.f32.mrb[0].mxu0
        %v1121 = vpop.f32.mrb[0].mxu0
        %v1122 = vpop.f32.mrb[0].mxu0
        %1123 = vdwg.mxu0
        %v1140 = vunpack.c.l.b16 %v1001
        %v1141 = vunpack.c.l.b16 %v1002
        %v1142 = vunpack.c.l.b16 %v1003
        %v1143 = vunpack.c.l.b16 %v1004
        %v1144 = vunpack.c.l.b16 %v1005
        %v1145 = vunpack.c.l.b16 %v1006
        %v1146 = vunpack.c.l.b16 %v1007
        %v1147 = vunpack.c.l.b16 %v1008
        %v1148 = vunpack.c.l.b16 %v1009
        %v1149 = vunpack.c.l.b16 %v1010
        %v1150 = vunpack.c.l.b16 %v1011
        %v1151 = vunpack.c.l.b16 %v1012
        %v1152 = vunpack.c.l.b16 %v1013
        %v1153 = vunpack.c.l.b16 %v1014
        %v1154 = vunpack.c.l.b16 %v1015
        %v1155 = vunpack.c.l.b16 %v1016
        %v1156 = vpack.c.b16 %v1141, %v1140
        %v1157 = vpack.c.b16 %v1143, %v1142
        %v1158 = vpack.c.b16 %v1145, %v1144
        %v1159 = vpack.c.b16 %v1147, %v1146
        %v1160 = vpack.c.b16 %v1149, %v1148
        %v1161 = vpack.c.b16 %v1151, %v1150
        %v1162 = vpack.c.b16 %v1153, %v1152
        %v1163 = vpack.c.b16 %v1155, %v1154
        %1172 = vmatprep.subr.bf16.mxu0 0
        %1173 = vmatpush1.bf16.msra.mxu0 %v1156
        %1174 = vmatprep.subr.bf16.mxu0 0
        %1175 = vmatpush1.bf16.msra.mxu0 %v1157
        %1176 = vmatprep.subr.bf16.mxu0 0
        %1177 = vmatpush1.bf16.msra.mxu0 %v1158
        %1178 = vmatprep.subr.bf16.mxu0 0
        %1179 = vmatpush1.bf16.msra.mxu0 %v1159
        %1180 = vmatprep.subr.bf16.mxu0 0
        %1181 = vmatpush1.bf16.msra.mxu0 %v1160
        %1182 = vmatprep.subr.bf16.mxu0 0
        %1183 = vmatpush1.bf16.msra.mxu0 %v1161
        %1184 = vmatprep.subr.bf16.mxu0 0
        %1185 = vmatpush1.bf16.msra.mxu0 %v1162
        %1186 = vmatprep.subr.bf16.mxu0 0
        %1187 = vmatpush1.bf16.msra.mxu0 %v1163
        %1188 = vmatprep.subr.bf16.mxu0 0
        %1189 = vmatpush1.bf16.msra.mxu0 0
        %1190 = vmatprep.subr.bf16.mxu0 0
        %1191 = vmatpush1.bf16.msra.mxu0 0
        %1192 = vmatprep.subr.bf16.mxu0 0
        %1193 = vmatpush1.bf16.msra.mxu0 0
        %1194 = vmatprep.subr.bf16.mxu0 0
        %1195 = vmatpush1.bf16.msra.mxu0 0
        %1196 = vmatprep.subr.bf16.mxu0 0
        %1197 = vmatpush1.bf16.msra.mxu0 0
        %1198 = vmatprep.subr.bf16.mxu0 0
        %1199 = vmatpush1.bf16.msra.mxu0 0
        %1200 = vmatprep.subr.bf16.mxu0 0
        %1201 = vmatpush1.bf16.msra.mxu0 0
        %1202 = vmatprep.subr.bf16.mxu0 0
        %1203 = vmatpush1.bf16.msra.mxu0 0
        %1204 = vmatprep.mubr.bf16.mxu0 0
        %1205 = vmatmul.mubr.bf16.gmra.mrb[0].mxu0 %v999
        %v1206 = vpop.f32.mrb[0].mxu0
        %v1207 = vadd.f32 %v1119, %v1206
        %v1208 = vpop.f32.mrb[0].mxu0
        %v1209 = vpop.f32.mrb[0].mxu0
        %v1210 = vpop.f32.mrb[0].mxu0
        %1211 = vdwg.mxu0
        %v1212 = vld [vmem:[#allocation2 + $0x2] sm:$0xff]
        %v1213 = vpack.c.bf16 %v1212, %v1212
        %s1214 = scalar_lea.vmem [#allocation4], 512
        %v1215 = vld [vmem:[%s1214] sm:$0xf]
        %v1216 = vld [vmem:[%s1214 + $0x4] sm:$0xf]
        %v1217 = vld [vmem:[%s1214 + $0x8] sm:$0xf]
        %v1218 = vld [vmem:[%s1214 + $0xc] sm:$0xf]
        %v1219 = vld [vmem:[%s1214 + $0x10] sm:$0xf]
        %v1220 = vld [vmem:[%s1214 + $0x14] sm:$0xf]
        %v1221 = vld [vmem:[%s1214 + $0x18] sm:$0xf]
        %v1222 = vld [vmem:[%s1214 + $0x1c] sm:$0xf]
        %v1223 = vld [vmem:[%s1214 + $0x20] sm:$0xf]
        %v1224 = vld [vmem:[%s1214 + $0x24] sm:$0xf]
        %v1225 = vld [vmem:[%s1214 + $0x28] sm:$0xf]
        %v1226 = vld [vmem:[%s1214 + $0x2c] sm:$0xf]
        %v1227 = vld [vmem:[%s1214 + $0x30] sm:$0xf]
        %v1228 = vld [vmem:[%s1214 + $0x34] sm:$0xf]
        %v1229 = vld [vmem:[%s1214 + $0x38] sm:$0xf]
        %v1230 = vld [vmem:[%s1214 + $0x3c] sm:$0xf]
        %v1247 = vunpack.c.l.b16 %v1215
        %v1248 = vunpack.c.l.b16 %v1216
        %v1249 = vunpack.c.l.b16 %v1217
        %v1250 = vunpack.c.l.b16 %v1218
        %v1251 = vunpack.c.l.b16 %v1219
        %v1252 = vunpack.c.l.b16 %v1220
        %v1253 = vunpack.c.l.b16 %v1221
        %v1254 = vunpack.c.l.b16 %v1222
        %v1255 = vunpack.c.l.b16 %v1223
        %v1256 = vunpack.c.l.b16 %v1224
        %v1257 = vunpack.c.l.b16 %v1225
        %v1258 = vunpack.c.l.b16 %v1226
        %v1259 = vunpack.c.l.b16 %v1227
        %v1260 = vunpack.c.l.b16 %v1228
        %v1261 = vunpack.c.l.b16 %v1229
        %v1262 = vunpack.c.l.b16 %v1230
        %v1263 = vpack.c.b16 %v1248, %v1247
        %v1264 = vpack.c.b16 %v1250, %v1249
        %v1265 = vpack.c.b16 %v1252, %v1251
        %v1266 = vpack.c.b16 %v1254, %v1253
        %v1267 = vpack.c.b16 %v1256, %v1255
        %v1268 = vpack.c.b16 %v1258, %v1257
        %v1269 = vpack.c.b16 %v1260, %v1259
        %v1270 = vpack.c.b16 %v1262, %v1261
        %1279 = vmatprep.subr.bf16.mxu0 0
        %1280 = vmatpush1.bf16.msra.mxu0 %v1263
        %1281 = vmatprep.subr.bf16.mxu0 0
        %1282 = vmatpush1.bf16.msra.mxu0 %v1264
        %1283 = vmatprep.subr.bf16.mxu0 0
        %1284 = vmatpush1.bf16.msra.mxu0 %v1265
        %1285 = vmatprep.subr.bf16.mxu0 0
        %1286 = vmatpush1.bf16.msra.mxu0 %v1266
        %1287 = vmatprep.subr.bf16.mxu0 0
        %1288 = vmatpush1.bf16.msra.mxu0 %v1267
        %1289 = vmatprep.subr.bf16.mxu0 0
        %1290 = vmatpush1.bf16.msra.mxu0 %v1268
        %1291 = vmatprep.subr.bf16.mxu0 0
        %1292 = vmatpush1.bf16.msra.mxu0 %v1269
        %1293 = vmatprep.subr.bf16.mxu0 0
        %1294 = vmatpush1.bf16.msra.mxu0 %v1270
        %1295 = vmatprep.subr.bf16.mxu0 0
        %1296 = vmatpush1.bf16.msra.mxu0 0
        %1297 = vmatprep.subr.bf16.mxu0 0
        %1298 = vmatpush1.bf16.msra.mxu0 0
        %1299 = vmatprep.subr.bf16.mxu0 0
        %1300 = vmatpush1.bf16.msra.mxu0 0
        %1301 = vmatprep.subr.bf16.mxu0 0
        %1302 = vmatpush1.bf16.msra.mxu0 0
        %1303 = vmatprep.subr.bf16.mxu0 0
        %1304 = vmatpush1.bf16.msra.mxu0 0
        %1305 = vmatprep.subr.bf16.mxu0 0
        %1306 = vmatpush1.bf16.msra.mxu0 0
        %1307 = vmatprep.subr.bf16.mxu0 0
        %1308 = vmatpush1.bf16.msra.mxu0 0
        %1309 = vmatprep.subr.bf16.mxu0 0
        %1310 = vmatpush1.bf16.msra.mxu0 0
        %1311 = vmatprep.mubr.bf16.mxu0 0
        %1312 = vmatmul.mubr.bf16.gmra.mrb[0].mxu0 %v1213
        %v1313 = vpop.f32.mrb[0].mxu0
        %v1314 = vadd.f32 0.0, %v1313
        %v1315 = vpop.f32.mrb[0].mxu0
        %v1316 = vpop.f32.mrb[0].mxu0
        %v1317 = vpop.f32.mrb[0].mxu0
        %1318 = vdwg.mxu0
        %v1319 = vadd.f32 %v1207, %v1314
        %s1320 = scalar_lea.vmem [#allocation7], 2
        %v1321 = vld [vmem:[%s1320] sm:$0x1]
        %v1323 = vlaneseq
        %v1324 = vshrl.u32 %v1323, 7
        %v1325 = vsub.s32 0, %v1324
        %v1326 = vrot.slane %v1321, %v1325
        %v1328 = vadd.f32 %v1319, %v1326
        %vm1329 = vcmp.ge.f32.partialorder %v1328, 0.0
        %v1330 = vstv %s997
        %v1331 = vmul.f32 %v1330, %v1328
        %v1332 = vsel %vm1329, %v1328, %v1331
        %1333 = vst [vmem:[#allocation3 + $0x1] sm:$0xff] %v1332
        %v1334 = vld [vmem:[#allocation3] sm:$0xff]
        %v1335 = vpack.c.bf16 %v1334, %v1334
        %s1336 = scalar_lea.vmem [#allocation4], 576
        %v1337 = vld [vmem:[%s1336] sm:$0xf]
        %v1338 = vld [vmem:[%s1336 + $0x4] sm:$0xf]
        %v1339 = vld [vmem:[%s1336 + $0x8] sm:$0xf]
        %v1340 = vld [vmem:[%s1336 + $0xc] sm:$0xf]
        %v1341 = vld [vmem:[%s1336 + $0x10] sm:$0xf]
        %v1342 = vld [vmem:[%s1336 + $0x14] sm:$0xf]
        %v1343 = vld [vmem:[%s1336 + $0x18] sm:$0xf]
        %v1344 = vld [vmem:[%s1336 + $0x1c] sm:$0xf]
        %v1345 = vld [vmem:[%s1336 + $0x20] sm:$0xf]
        %v1346 = vld [vmem:[%s1336 + $0x24] sm:$0xf]
        %v1347 = vld [vmem:[%s1336 + $0x28] sm:$0xf]
        %v1348 = vld [vmem:[%s1336 + $0x2c] sm:$0xf]
        %v1349 = vld [vmem:[%s1336 + $0x30] sm:$0xf]
        %v1350 = vld [vmem:[%s1336 + $0x34] sm:$0xf]
        %v1351 = vld [vmem:[%s1336 + $0x38] sm:$0xf]
        %v1352 = vld [vmem:[%s1336 + $0x3c] sm:$0xf]
        %v1353 = vld [vmem:[#allocation3 + $0x1] sm:$0xff]
        %v1354 = vpack.c.bf16 %v1353, %v1353
        %s1355 = scalar_lea.vmem [#allocation4], 640
        %v1356 = vld [vmem:[%s1355] sm:$0xf]
        %v1357 = vld [vmem:[%s1355 + $0x4] sm:$0xf]
        %v1358 = vld [vmem:[%s1355 + $0x8] sm:$0xf]
        %v1359 = vld [vmem:[%s1355 + $0xc] sm:$0xf]
        %v1360 = vld [vmem:[%s1355 + $0x10] sm:$0xf]
        %v1361 = vld [vmem:[%s1355 + $0x14] sm:$0xf]
        %v1362 = vld [vmem:[%s1355 + $0x18] sm:$0xf]
        %v1363 = vld [vmem:[%s1355 + $0x1c] sm:$0xf]
        %v1364 = vld [vmem:[%s1355 + $0x20] sm:$0xf]
        %v1365 = vld [vmem:[%s1355 + $0x24] sm:$0xf]
        %v1366 = vld [vmem:[%s1355 + $0x28] sm:$0xf]
        %v1367 = vld [vmem:[%s1355 + $0x2c] sm:$0xf]
        %v1368 = vld [vmem:[%s1355 + $0x30] sm:$0xf]
        %v1369 = vld [vmem:[%s1355 + $0x34] sm:$0xf]
        %v1370 = vld [vmem:[%s1355 + $0x38] sm:$0xf]
        %v1371 = vld [vmem:[%s1355 + $0x3c] sm:$0xf]
        %v1388 = vunpack.c.l.b16 %v1356
        %v1389 = vunpack.c.l.b16 %v1357
        %v1390 = vunpack.c.l.b16 %v1358
        %v1391 = vunpack.c.l.b16 %v1359
        %v1392 = vunpack.c.l.b16 %v1360
        %v1393 = vunpack.c.l.b16 %v1361
        %v1394 = vunpack.c.l.b16 %v1362
        %v1395 = vunpack.c.l.b16 %v1363
        %v1396 = vunpack.c.l.b16 %v1364
        %v1397 = vunpack.c.l.b16 %v1365
        %v1398 = vunpack.c.l.b16 %v1366
        %v1399 = vunpack.c.l.b16 %v1367
        %v1400 = vunpack.c.l.b16 %v1368
        %v1401 = vunpack.c.l.b16 %v1369
        %v1402 = vunpack.c.l.b16 %v1370
        %v1403 = vunpack.c.l.b16 %v1371
        %v1404 = vpack.c.b16 %v1389, %v1388
        %v1405 = vpack.c.b16 %v1391, %v1390
        %v1406 = vpack.c.b16 %v1393, %v1392
        %v1407 = vpack.c.b16 %v1395, %v1394
        %v1408 = vpack.c.b16 %v1397, %v1396
        %v1409 = vpack.c.b16 %v1399, %v1398
        %v1410 = vpack.c.b16 %v1401, %v1400
        %v1411 = vpack.c.b16 %v1403, %v1402
        %1420 = vmatprep.subr.bf16.mxu0 0
        %1421 = vmatpush1.bf16.msra.mxu0 %v1404
        %1422 = vmatprep.subr.bf16.mxu0 0
        %1423 = vmatpush1.bf16.msra.mxu0 %v1405
        %1424 = vmatprep.subr.bf16.mxu0 0
        %1425 = vmatpush1.bf16.msra.mxu0 %v1406
        %1426 = vmatprep.subr.bf16.mxu0 0
        %1427 = vmatpush1.bf16.msra.mxu0 %v1407
        %1428 = vmatprep.subr.bf16.mxu0 0
        %1429 = vmatpush1.bf16.msra.mxu0 %v1408
        %1430 = vmatprep.subr.bf16.mxu0 0
        %1431 = vmatpush1.bf16.msra.mxu0 %v1409
        %1432 = vmatprep.subr.bf16.mxu0 0
        %1433 = vmatpush1.bf16.msra.mxu0 %v1410
        %1434 = vmatprep.subr.bf16.mxu0 0
        %1435 = vmatpush1.bf16.msra.mxu0 %v1411
        %1436 = vmatprep.subr.bf16.mxu0 0
        %1437 = vmatpush1.bf16.msra.mxu0 0
        %1438 = vmatprep.subr.bf16.mxu0 0
        %1439 = vmatpush1.bf16.msra.mxu0 0
        %1440 = vmatprep.subr.bf16.mxu0 0
        %1441 = vmatpush1.bf16.msra.mxu0 0
        %1442 = vmatprep.subr.bf16.mxu0 0
        %1443 = vmatpush1.bf16.msra.mxu0 0
        %1444 = vmatprep.subr.bf16.mxu0 0
        %1445 = vmatpush1.bf16.msra.mxu0 0
        %1446 = vmatprep.subr.bf16.mxu0 0
        %1447 = vmatpush1.bf16.msra.mxu0 0
        %1448 = vmatprep.subr.bf16.mxu0 0
        %1449 = vmatpush1.bf16.msra.mxu0 0
        %1450 = vmatprep.subr.bf16.mxu0 0
        %1451 = vmatpush1.bf16.msra.mxu0 0
        %1452 = vmatprep.mubr.bf16.mxu0 0
        %1453 = vmatmul.mubr.bf16.gmra.mrb[0].mxu0 %v1354
        %v1454 = vpop.f32.mrb[0].mxu0
        %v1455 = vadd.f32 0.0, %v1454
        %v1456 = vpop.f32.mrb[0].mxu0
        %v1457 = vpop.f32.mrb[0].mxu0
        %v1458 = vpop.f32.mrb[0].mxu0
        %1459 = vdwg.mxu0
        %v1476 = vunpack.c.l.b16 %v1337
        %v1477 = vunpack.c.l.b16 %v1338
        %v1478 = vunpack.c.l.b16 %v1339
        %v1479 = vunpack.c.l.b16 %v1340
        %v1480 = vunpack.c.l.b16 %v1341
        %v1481 = vunpack.c.l.b16 %v1342
        %v1482 = vunpack.c.l.b16 %v1343
        %v1483 = vunpack.c.l.b16 %v1344
        %v1484 = vunpack.c.l.b16 %v1345
        %v1485 = vunpack.c.l.b16 %v1346
        %v1486 = vunpack.c.l.b16 %v1347
        %v1487 = vunpack.c.l.b16 %v1348
        %v1488 = vunpack.c.l.b16 %v1349
        %v1489 = vunpack.c.l.b16 %v1350
        %v1490 = vunpack.c.l.b16 %v1351
        %v1491 = vunpack.c.l.b16 %v1352
        %v1492 = vpack.c.b16 %v1477, %v1476
        %v1493 = vpack.c.b16 %v1479, %v1478
        %v1494 = vpack.c.b16 %v1481, %v1480
        %v1495 = vpack.c.b16 %v1483, %v1482
        %v1496 = vpack.c.b16 %v1485, %v1484
        %v1497 = vpack.c.b16 %v1487, %v1486
        %v1498 = vpack.c.b16 %v1489, %v1488
        %v1499 = vpack.c.b16 %v1491, %v1490
        %1508 = vmatprep.subr.bf16.mxu0 0
        %1509 = vmatpush1.bf16.msra.mxu0 %v1492
        %1510 = vmatprep.subr.bf16.mxu0 0
        %1511 = vmatpush1.bf16.msra.mxu0 %v1493
        %1512 = vmatprep.subr.bf16.mxu0 0
        %1513 = vmatpush1.bf16.msra.mxu0 %v1494
        %1514 = vmatprep.subr.bf16.mxu0 0
        %1515 = vmatpush1.bf16.msra.mxu0 %v1495
        %1516 = vmatprep.subr.bf16.mxu0 0
        %1517 = vmatpush1.bf16.msra.mxu0 %v1496
        %1518 = vmatprep.subr.bf16.mxu0 0
        %1519 = vmatpush1.bf16.msra.mxu0 %v1497
        %1520 = vmatprep.subr.bf16.mxu0 0
        %1521 = vmatpush1.bf16.msra.mxu0 %v1498
        %1522 = vmatprep.subr.bf16.mxu0 0
        %1523 = vmatpush1.bf16.msra.mxu0 %v1499
        %1524 = vmatprep.subr.bf16.mxu0 0
        %1525 = vmatpush1.bf16.msra.mxu0 0
        %1526 = vmatprep.subr.bf16.mxu0 0
        %1527 = vmatpush1.bf16.msra.mxu0 0
        %1528 = vmatprep.subr.bf16.mxu0 0
        %1529 = vmatpush1.bf16.msra.mxu0 0
        %1530 = vmatprep.subr.bf16.mxu0 0
        %1531 = vmatpush1.bf16.msra.mxu0 0
        %1532 = vmatprep.subr.bf16.mxu0 0
        %1533 = vmatpush1.bf16.msra.mxu0 0
        %1534 = vmatprep.subr.bf16.mxu0 0
        %1535 = vmatpush1.bf16.msra.mxu0 0
        %1536 = vmatprep.subr.bf16.mxu0 0
        %1537 = vmatpush1.bf16.msra.mxu0 0
        %1538 = vmatprep.subr.bf16.mxu0 0
        %1539 = vmatpush1.bf16.msra.mxu0 0
        %1540 = vmatprep.mubr.bf16.mxu0 0
        %1541 = vmatmul.mubr.bf16.gmra.mrb[0].mxu0 %v1335
        %v1542 = vpop.f32.mrb[0].mxu0
        %v1543 = vadd.f32 %v1455, %v1542
        %v1544 = vpop.f32.mrb[0].mxu0
        %v1545 = vpop.f32.mrb[0].mxu0
        %v1546 = vpop.f32.mrb[0].mxu0
        %1547 = vdwg.mxu0
        %v1548 = vld [vmem:[#allocation3 + $0x2] sm:$0xff]
        %v1549 = vpack.c.bf16 %v1548, %v1548
        %s1550 = scalar_lea.vmem [#allocation4], 704
        %v1551 = vld [vmem:[%s1550] sm:$0xf]
        %v1552 = vld [vmem:[%s1550 + $0x4] sm:$0xf]
        %v1553 = vld [vmem:[%s1550 + $0x8] sm:$0xf]
        %v1554 = vld [vmem:[%s1550 + $0xc] sm:$0xf]
        %v1555 = vld [vmem:[%s1550 + $0x10] sm:$0xf]
        %v1556 = vld [vmem:[%s1550 + $0x14] sm:$0xf]
        %v1557 = vld [vmem:[%s1550 + $0x18] sm:$0xf]
        %v1558 = vld [vmem:[%s1550 + $0x1c] sm:$0xf]
        %v1559 = vld [vmem:[%s1550 + $0x20] sm:$0xf]
        %v1560 = vld [vmem:[%s1550 + $0x24] sm:$0xf]
        %v1561 = vld [vmem:[%s1550 + $0x28] sm:$0xf]
        %v1562 = vld [vmem:[%s1550 + $0x2c] sm:$0xf]
        %v1563 = vld [vmem:[%s1550 + $0x30] sm:$0xf]
        %v1564 = vld [vmem:[%s1550 + $0x34] sm:$0xf]
        %v1565 = vld [vmem:[%s1550 + $0x38] sm:$0xf]
        %v1566 = vld [vmem:[%s1550 + $0x3c] sm:$0xf]
        %v1583 = vunpack.c.l.b16 %v1551
        %v1584 = vunpack.c.l.b16 %v1552
        %v1585 = vunpack.c.l.b16 %v1553
        %v1586 = vunpack.c.l.b16 %v1554
        %v1587 = vunpack.c.l.b16 %v1555
        %v1588 = vunpack.c.l.b16 %v1556
        %v1589 = vunpack.c.l.b16 %v1557
        %v1590 = vunpack.c.l.b16 %v1558
        %v1591 = vunpack.c.l.b16 %v1559
        %v1592 = vunpack.c.l.b16 %v1560
        %v1593 = vunpack.c.l.b16 %v1561
        %v1594 = vunpack.c.l.b16 %v1562
        %v1595 = vunpack.c.l.b16 %v1563
        %v1596 = vunpack.c.l.b16 %v1564
        %v1597 = vunpack.c.l.b16 %v1565
        %v1598 = vunpack.c.l.b16 %v1566
        %v1599 = vpack.c.b16 %v1584, %v1583
        %v1600 = vpack.c.b16 %v1586, %v1585
        %v1601 = vpack.c.b16 %v1588, %v1587
        %v1602 = vpack.c.b16 %v1590, %v1589
        %v1603 = vpack.c.b16 %v1592, %v1591
        %v1604 = vpack.c.b16 %v1594, %v1593
        %v1605 = vpack.c.b16 %v1596, %v1595
        %v1606 = vpack.c.b16 %v1598, %v1597
        %1615 = vmatprep.subr.bf16.mxu0 0
        %1616 = vmatpush1.bf16.msra.mxu0 %v1599
        %1617 = vmatprep.subr.bf16.mxu0 0
        %1618 = vmatpush1.bf16.msra.mxu0 %v1600
        %1619 = vmatprep.subr.bf16.mxu0 0
        %1620 = vmatpush1.bf16.msra.mxu0 %v1601
        %1621 = vmatprep.subr.bf16.mxu0 0
        %1622 = vmatpush1.bf16.msra.mxu0 %v1602
        %1623 = vmatprep.subr.bf16.mxu0 0
        %1624 = vmatpush1.bf16.msra.mxu0 %v1603
        %1625 = vmatprep.subr.bf16.mxu0 0
        %1626 = vmatpush1.bf16.msra.mxu0 %v1604
        %1627 = vmatprep.subr.bf16.mxu0 0
        %1628 = vmatpush1.bf16.msra.mxu0 %v1605
        %1629 = vmatprep.subr.bf16.mxu0 0
        %1630 = vmatpush1.bf16.msra.mxu0 %v1606
        %1631 = vmatprep.subr.bf16.mxu0 0
        %1632 = vmatpush1.bf16.msra.mxu0 0
        %1633 = vmatprep.subr.bf16.mxu0 0
        %1634 = vmatpush1.bf16.msra.mxu0 0
        %1635 = vmatprep.subr.bf16.mxu0 0
        %1636 = vmatpush1.bf16.msra.mxu0 0
        %1637 = vmatprep.subr.bf16.mxu0 0
        %1638 = vmatpush1.bf16.msra.mxu0 0
        %1639 = vmatprep.subr.bf16.mxu0 0
        %1640 = vmatpush1.bf16.msra.mxu0 0
        %1641 = vmatprep.subr.bf16.mxu0 0
        %1642 = vmatpush1.bf16.msra.mxu0 0
        %1643 = vmatprep.subr.bf16.mxu0 0
        %1644 = vmatpush1.bf16.msra.mxu0 0
        %1645 = vmatprep.subr.bf16.mxu0 0
        %1646 = vmatpush1.bf16.msra.mxu0 0
        %1647 = vmatprep.mubr.bf16.mxu0 0
        %1648 = vmatmul.mubr.bf16.gmra.mrb[0].mxu0 %v1549
        %v1649 = vpop.f32.mrb[0].mxu0
        %v1650 = vadd.f32 0.0, %v1649
        %v1651 = vpop.f32.mrb[0].mxu0
        %v1652 = vpop.f32.mrb[0].mxu0
        %v1653 = vpop.f32.mrb[0].mxu0
        %1654 = vdwg.mxu0
        %v1655 = vadd.f32 %v1543, %v1650
        %s1656 = scalar_lea.vmem [#allocation7], 3
        %v1657 = vld [vmem:[%s1656] sm:$0x1]
        %v1659 = vlaneseq
        %v1660 = vshrl.u32 %v1659, 7
        %v1661 = vsub.s32 0, %v1660
        %v1662 = vrot.slane %v1657, %v1661
        %v1664 = vadd.f32 %v1655, %v1662
        %v1665 = vld [vmem:[#allocation2 + $0x1] sm:$0xff]
        %v1666 = vadd.f32 %v1664, %v1665
        %vm1667 = vcmp.ge.f32.partialorder %v1666, 0.0
        %v1668 = vmul.f32 %v1330, %v1666
        %v1669 = vsel %vm1667, %v1666, %v1668
        %1670 = vst [vmem:[#allocation2 + $0x1] sm:$0xff] %v1669
        %s1671 = sld [smem:[#allocation9 + $0x2]]
        %v1672 = vld [vmem:[#allocation2] sm:$0xff]
        %v1673 = vpack.c.bf16 %v1672, %v1672
        %s1674 = scalar_lea.vmem [#allocation4], 768
        %v1675 = vld [vmem:[%s1674] sm:$0xf]
        %v1676 = vld [vmem:[%s1674 + $0x4] sm:$0xf]
        %v1677 = vld [vmem:[%s1674 + $0x8] sm:$0xf]
        %v1678 = vld [vmem:[%s1674 + $0xc] sm:$0xf]
        %v1679 = vld [vmem:[%s1674 + $0x10] sm:$0xf]
        %v1680 = vld [vmem:[%s1674 + $0x14] sm:$0xf]
        %v1681 = vld [vmem:[%s1674 + $0x18] sm:$0xf]
        %v1682 = vld [vmem:[%s1674 + $0x1c] sm:$0xf]
        %v1683 = vld [vmem:[%s1674 + $0x20] sm:$0xf]
        %v1684 = vld [vmem:[%s1674 + $0x24] sm:$0xf]
        %v1685 = vld [vmem:[%s1674 + $0x28] sm:$0xf]
        %v1686 = vld [vmem:[%s1674 + $0x2c] sm:$0xf]
        %v1687 = vld [vmem:[%s1674 + $0x30] sm:$0xf]
        %v1688 = vld [vmem:[%s1674 + $0x34] sm:$0xf]
        %v1689 = vld [vmem:[%s1674 + $0x38] sm:$0xf]
        %v1690 = vld [vmem:[%s1674 + $0x3c] sm:$0xf]
        %v1691 = vld [vmem:[#allocation2 + $0x1] sm:$0xff]
        %v1692 = vpack.c.bf16 %v1691, %v1691
        %s1693 = scalar_lea.vmem [#allocation4], 832
        %v1694 = vld [vmem:[%s1693] sm:$0xf]
        %v1695 = vld [vmem:[%s1693 + $0x4] sm:$0xf]
        %v1696 = vld [vmem:[%s1693 + $0x8] sm:$0xf]
        %v1697 = vld [vmem:[%s1693 + $0xc] sm:$0xf]
        %v1698 = vld [vmem:[%s1693 + $0x10] sm:$0xf]
        %v1699 = vld [vmem:[%s1693 + $0x14] sm:$0xf]
        %v1700 = vld [vmem:[%s1693 + $0x18] sm:$0xf]
        %v1701 = vld [vmem:[%s1693 + $0x1c] sm:$0xf]
        %v1702 = vld [vmem:[%s1693 + $0x20] sm:$0xf]
        %v1703 = vld [vmem:[%s1693 + $0x24] sm:$0xf]
        %v1704 = vld [vmem:[%s1693 + $0x28] sm:$0xf]
        %v1705 = vld [vmem:[%s1693 + $0x2c] sm:$0xf]
        %v1706 = vld [vmem:[%s1693 + $0x30] sm:$0xf]
        %v1707 = vld [vmem:[%s1693 + $0x34] sm:$0xf]
        %v1708 = vld [vmem:[%s1693 + $0x38] sm:$0xf]
        %v1709 = vld [vmem:[%s1693 + $0x3c] sm:$0xf]
        %v1726 = vunpack.c.l.b16 %v1694
        %v1727 = vunpack.c.l.b16 %v1695
        %v1728 = vunpack.c.l.b16 %v1696
        %v1729 = vunpack.c.l.b16 %v1697
        %v1730 = vunpack.c.l.b16 %v1698
        %v1731 = vunpack.c.l.b16 %v1699
        %v1732 = vunpack.c.l.b16 %v1700
        %v1733 = vunpack.c.l.b16 %v1701
        %v1734 = vunpack.c.l.b16 %v1702
        %v1735 = vunpack.c.l.b16 %v1703
        %v1736 = vunpack.c.l.b16 %v1704
        %v1737 = vunpack.c.l.b16 %v1705
        %v1738 = vunpack.c.l.b16 %v1706
        %v1739 = vunpack.c.l.b16 %v1707
        %v1740 = vunpack.c.l.b16 %v1708
        %v1741 = vunpack.c.l.b16 %v1709
        %v1742 = vpack.c.b16 %v1727, %v1726
        %v1743 = vpack.c.b16 %v1729, %v1728
        %v1744 = vpack.c.b16 %v1731, %v1730
        %v1745 = vpack.c.b16 %v1733, %v1732
        %v1746 = vpack.c.b16 %v1735, %v1734
        %v1747 = vpack.c.b16 %v1737, %v1736
        %v1748 = vpack.c.b16 %v1739, %v1738
        %v1749 = vpack.c.b16 %v1741, %v1740
        %1758 = vmatprep.subr.bf16.mxu0 0
        %1759 = vmatpush1.bf16.msra.mxu0 %v1742
        %1760 = vmatprep.subr.bf16.mxu0 0
        %1761 = vmatpush1.bf16.msra.mxu0 %v1743
        %1762 = vmatprep.subr.bf16.mxu0 0
        %1763 = vmatpush1.bf16.msra.mxu0 %v1744
        %1764 = vmatprep.subr.bf16.mxu0 0
        %1765 = vmatpush1.bf16.msra.mxu0 %v1745
        %1766 = vmatprep.subr.bf16.mxu0 0
        %1767 = vmatpush1.bf16.msra.mxu0 %v1746
        %1768 = vmatprep.subr.bf16.mxu0 0
        %1769 = vmatpush1.bf16.msra.mxu0 %v1747
        %1770 = vmatprep.subr.bf16.mxu0 0
        %1771 = vmatpush1.bf16.msra.mxu0 %v1748
        %1772 = vmatprep.subr.bf16.mxu0 0
        %1773 = vmatpush1.bf16.msra.mxu0 %v1749
        %1774 = vmatprep.subr.bf16.mxu0 0
        %1775 = vmatpush1.bf16.msra.mxu0 0
        %1776 = vmatprep.subr.bf16.mxu0 0
        %1777 = vmatpush1.bf16.msra.mxu0 0
        %1778 = vmatprep.subr.bf16.mxu0 0
        %1779 = vmatpush1.bf16.msra.mxu0 0
        %1780 = vmatprep.subr.bf16.mxu0 0
        %1781 = vmatpush1.bf16.msra.mxu0 0
        %1782 = vmatprep.subr.bf16.mxu0 0
        %1783 = vmatpush1.bf16.msra.mxu0 0
        %1784 = vmatprep.subr.bf16.mxu0 0
        %1785 = vmatpush1.bf16.msra.mxu0 0
        %1786 = vmatprep.subr.bf16.mxu0 0
        %1787 = vmatpush1.bf16.msra.mxu0 0
        %1788 = vmatprep.subr.bf16.mxu0 0
        %1789 = vmatpush1.bf16.msra.mxu0 0
        %1790 = vmatprep.mubr.bf16.mxu0 0
        %1791 = vmatmul.mubr.bf16.gmra.mrb[0].mxu0 %v1692
        %v1792 = vpop.f32.mrb[0].mxu0
        %v1793 = vadd.f32 0.0, %v1792
        %v1794 = vpop.f32.mrb[0].mxu0
        %v1795 = vpop.f32.mrb[0].mxu0
        %v1796 = vpop.f32.mrb[0].mxu0
        %1797 = vdwg.mxu0
        %v1814 = vunpack.c.l.b16 %v1675
        %v1815 = vunpack.c.l.b16 %v1676
        %v1816 = vunpack.c.l.b16 %v1677
        %v1817 = vunpack.c.l.b16 %v1678
        %v1818 = vunpack.c.l.b16 %v1679
        %v1819 = vunpack.c.l.b16 %v1680
        %v1820 = vunpack.c.l.b16 %v1681
        %v1821 = vunpack.c.l.b16 %v1682
        %v1822 = vunpack.c.l.b16 %v1683
        %v1823 = vunpack.c.l.b16 %v1684
        %v1824 = vunpack.c.l.b16 %v1685
        %v1825 = vunpack.c.l.b16 %v1686
        %v1826 = vunpack.c.l.b16 %v1687
        %v1827 = vunpack.c.l.b16 %v1688
        %v1828 = vunpack.c.l.b16 %v1689
        %v1829 = vunpack.c.l.b16 %v1690
        %v1830 = vpack.c.b16 %v1815, %v1814
        %v1831 = vpack.c.b16 %v1817, %v1816
        %v1832 = vpack.c.b16 %v1819, %v1818
        %v1833 = vpack.c.b16 %v1821, %v1820
        %v1834 = vpack.c.b16 %v1823, %v1822
        %v1835 = vpack.c.b16 %v1825, %v1824
        %v1836 = vpack.c.b16 %v1827, %v1826
        %v1837 = vpack.c.b16 %v1829, %v1828
        %1846 = vmatprep.subr.bf16.mxu0 0
        %1847 = vmatpush1.bf16.msra.mxu0 %v1830
        %1848 = vmatprep.subr.bf16.mxu0 0
        %1849 = vmatpush1.bf16.msra.mxu0 %v1831
        %1850 = vmatprep.subr.bf16.mxu0 0
        %1851 = vmatpush1.bf16.msra.mxu0 %v1832
        %1852 = vmatprep.subr.bf16.mxu0 0
        %1853 = vmatpush1.bf16.msra.mxu0 %v1833
        %1854 = vmatprep.subr.bf16.mxu0 0
        %1855 = vmatpush1.bf16.msra.mxu0 %v1834
        %1856 = vmatprep.subr.bf16.mxu0 0
        %1857 = vmatpush1.bf16.msra.mxu0 %v1835
        %1858 = vmatprep.subr.bf16.mxu0 0
        %1859 = vmatpush1.bf16.msra.mxu0 %v1836
        %1860 = vmatprep.subr.bf16.mxu0 0
        %1861 = vmatpush1.bf16.msra.mxu0 %v1837
        %1862 = vmatprep.subr.bf16.mxu0 0
        %1863 = vmatpush1.bf16.msra.mxu0 0
        %1864 = vmatprep.subr.bf16.mxu0 0
        %1865 = vmatpush1.bf16.msra.mxu0 0
        %1866 = vmatprep.subr.bf16.mxu0 0
        %1867 = vmatpush1.bf16.msra.mxu0 0
        %1868 = vmatprep.subr.bf16.mxu0 0
        %1869 = vmatpush1.bf16.msra.mxu0 0
        %1870 = vmatprep.subr.bf16.mxu0 0
        %1871 = vmatpush1.bf16.msra.mxu0 0
        %1872 = vmatprep.subr.bf16.mxu0 0
        %1873 = vmatpush1.bf16.msra.mxu0 0
        %1874 = vmatprep.subr.bf16.mxu0 0
        %1875 = vmatpush1.bf16.msra.mxu0 0
        %1876 = vmatprep.subr.bf16.mxu0 0
        %1877 = vmatpush1.bf16.msra.mxu0 0
        %1878 = vmatprep.mubr.bf16.mxu0 0
        %1879 = vmatmul.mubr.bf16.gmra.mrb[0].mxu0 %v1673
        %v1880 = vpop.f32.mrb[0].mxu0
        %v1881 = vadd.f32 %v1793, %v1880
        %v1882 = vpop.f32.mrb[0].mxu0
        %v1883 = vpop.f32.mrb[0].mxu0
        %v1884 = vpop.f32.mrb[0].mxu0
        %1885 = vdwg.mxu0
        %v1886 = vld [vmem:[#allocation2 + $0x2] sm:$0xff]
        %v1887 = vpack.c.bf16 %v1886, %v1886
        %s1888 = scalar_lea.vmem [#allocation4], 896
        %v1889 = vld [vmem:[%s1888] sm:$0xf]
        %v1890 = vld [vmem:[%s1888 + $0x4] sm:$0xf]
        %v1891 = vld [vmem:[%s1888 + $0x8] sm:$0xf]
        %v1892 = vld [vmem:[%s1888 + $0xc] sm:$0xf]
        %v1893 = vld [vmem:[%s1888 + $0x10] sm:$0xf]
        %v1894 = vld [vmem:[%s1888 + $0x14] sm:$0xf]
        %v1895 = vld [vmem:[%s1888 + $0x18] sm:$0xf]
        %v1896 = vld [vmem:[%s1888 + $0x1c] sm:$0xf]
        %v1897 = vld [vmem:[%s1888 + $0x20] sm:$0xf]
        %v1898 = vld [vmem:[%s1888 + $0x24] sm:$0xf]
        %v1899 = vld [vmem:[%s1888 + $0x28] sm:$0xf]
        %v1900 = vld [vmem:[%s1888 + $0x2c] sm:$0xf]
        %v1901 = vld [vmem:[%s1888 + $0x30] sm:$0xf]
        %v1902 = vld [vmem:[%s1888 + $0x34] sm:$0xf]
        %v1903 = vld [vmem:[%s1888 + $0x38] sm:$0xf]
        %v1904 = vld [vmem:[%s1888 + $0x3c] sm:$0xf]
        %v1921 = vunpack.c.l.b16 %v1889
        %v1922 = vunpack.c.l.b16 %v1890
        %v1923 = vunpack.c.l.b16 %v1891
        %v1924 = vunpack.c.l.b16 %v1892
        %v1925 = vunpack.c.l.b16 %v1893
        %v1926 = vunpack.c.l.b16 %v1894
        %v1927 = vunpack.c.l.b16 %v1895
        %v1928 = vunpack.c.l.b16 %v1896
        %v1929 = vunpack.c.l.b16 %v1897
        %v1930 = vunpack.c.l.b16 %v1898
        %v1931 = vunpack.c.l.b16 %v1899
        %v1932 = vunpack.c.l.b16 %v1900
        %v1933 = vunpack.c.l.b16 %v1901
        %v1934 = vunpack.c.l.b16 %v1902
        %v1935 = vunpack.c.l.b16 %v1903
        %v1936 = vunpack.c.l.b16 %v1904
        %v1937 = vpack.c.b16 %v1922, %v1921
        %v1938 = vpack.c.b16 %v1924, %v1923
        %v1939 = vpack.c.b16 %v1926, %v1925
        %v1940 = vpack.c.b16 %v1928, %v1927
        %v1941 = vpack.c.b16 %v1930, %v1929
        %v1942 = vpack.c.b16 %v1932, %v1931
        %v1943 = vpack.c.b16 %v1934, %v1933
        %v1944 = vpack.c.b16 %v1936, %v1935
        %1953 = vmatprep.subr.bf16.mxu0 0
        %1954 = vmatpush1.bf16.msra.mxu0 %v1937
        %1955 = vmatprep.subr.bf16.mxu0 0
        %1956 = vmatpush1.bf16.msra.mxu0 %v1938
        %1957 = vmatprep.subr.bf16.mxu0 0
        %1958 = vmatpush1.bf16.msra.mxu0 %v1939
        %1959 = vmatprep.subr.bf16.mxu0 0
        %1960 = vmatpush1.bf16.msra.mxu0 %v1940
        %1961 = vmatprep.subr.bf16.mxu0 0
        %1962 = vmatpush1.bf16.msra.mxu0 %v1941
        %1963 = vmatprep.subr.bf16.mxu0 0
        %1964 = vmatpush1.bf16.msra.mxu0 %v1942
        %1965 = vmatprep.subr.bf16.mxu0 0
        %1966 = vmatpush1.bf16.msra.mxu0 %v1943
        %1967 = vmatprep.subr.bf16.mxu0 0
        %1968 = vmatpush1.bf16.msra.mxu0 %v1944
        %1969 = vmatprep.subr.bf16.mxu0 0
        %1970 = vmatpush1.bf16.msra.mxu0 0
        %1971 = vmatprep.subr.bf16.mxu0 0
        %1972 = vmatpush1.bf16.msra.mxu0 0
        %1973 = vmatprep.subr.bf16.mxu0 0
        %1974 = vmatpush1.bf16.msra.mxu0 0
        %1975 = vmatprep.subr.bf16.mxu0 0
        %1976 = vmatpush1.bf16.msra.mxu0 0
        %1977 = vmatprep.subr.bf16.mxu0 0
        %1978 = vmatpush1.bf16.msra.mxu0 0
        %1979 = vmatprep.subr.bf16.mxu0 0
        %1980 = vmatpush1.bf16.msra.mxu0 0
        %1981 = vmatprep.subr.bf16.mxu0 0
        %1982 = vmatpush1.bf16.msra.mxu0 0
        %1983 = vmatprep.subr.bf16.mxu0 0
        %1984 = vmatpush1.bf16.msra.mxu0 0
        %1985 = vmatprep.mubr.bf16.mxu0 0
        %1986 = vmatmul.mubr.bf16.gmra.mrb[0].mxu0 %v1887
        %v1987 = vpop.f32.mrb[0].mxu0
        %v1988 = vadd.f32 0.0, %v1987
        %v1989 = vpop.f32.mrb[0].mxu0
        %v1990 = vpop.f32.mrb[0].mxu0
        %v1991 = vpop.f32.mrb[0].mxu0
        %1992 = vdwg.mxu0
        %v1993 = vadd.f32 %v1881, %v1988
        %s1994 = scalar_lea.vmem [#allocation7], 4
        %v1995 = vld [vmem:[%s1994] sm:$0x1]
        %v1997 = vlaneseq
        %v1998 = vshrl.u32 %v1997, 7
        %v1999 = vsub.s32 0, %v1998
        %v2000 = vrot.slane %v1995, %v1999
        %v2002 = vadd.f32 %v1993, %v2000
        %vm2003 = vcmp.ge.f32.partialorder %v2002, 0.0
        %v2004 = vstv %s1671
        %v2005 = vmul.f32 %v2004, %v2002
        %v2006 = vsel %vm2003, %v2002, %v2005
        %2007 = vst [vmem:[#allocation3 + $0x1] sm:$0xff] %v2006
        %v2008 = vld [vmem:[#allocation3] sm:$0xff]
        %v2009 = vpack.c.bf16 %v2008, %v2008
        %s2010 = scalar_lea.vmem [#allocation4], 960
        %v2011 = vld [vmem:[%s2010] sm:$0xf]
        %v2012 = vld [vmem:[%s2010 + $0x4] sm:$0xf]
        %v2013 = vld [vmem:[%s2010 + $0x8] sm:$0xf]
        %v2014 = vld [vmem:[%s2010 + $0xc] sm:$0xf]
        %v2015 = vld [vmem:[%s2010 + $0x10] sm:$0xf]
        %v2016 = vld [vmem:[%s2010 + $0x14] sm:$0xf]
        %v2017 = vld [vmem:[%s2010 + $0x18] sm:$0xf]
        %v2018 = vld [vmem:[%s2010 + $0x1c] sm:$0xf]
        %v2019 = vld [vmem:[%s2010 + $0x20] sm:$0xf]
        %v2020 = vld [vmem:[%s2010 + $0x24] sm:$0xf]
        %v2021 = vld [vmem:[%s2010 + $0x28] sm:$0xf]
        %v2022 = vld [vmem:[%s2010 + $0x2c] sm:$0xf]
        %v2023 = vld [vmem:[%s2010 + $0x30] sm:$0xf]
        %v2024 = vld [vmem:[%s2010 + $0x34] sm:$0xf]
        %v2025 = vld [vmem:[%s2010 + $0x38] sm:$0xf]
        %v2026 = vld [vmem:[%s2010 + $0x3c] sm:$0xf]
        %v2027 = vld [vmem:[#allocation3 + $0x1] sm:$0xff]
        %v2028 = vpack.c.bf16 %v2027, %v2027
        %s2029 = scalar_lea.vmem [#allocation4], 1024
        %v2030 = vld [vmem:[%s2029] sm:$0xf]
        %v2031 = vld [vmem:[%s2029 + $0x4] sm:$0xf]
        %v2032 = vld [vmem:[%s2029 + $0x8] sm:$0xf]
        %v2033 = vld [vmem:[%s2029 + $0xc] sm:$0xf]
        %v2034 = vld [vmem:[%s2029 + $0x10] sm:$0xf]
        %v2035 = vld [vmem:[%s2029 + $0x14] sm:$0xf]
        %v2036 = vld [vmem:[%s2029 + $0x18] sm:$0xf]
        %v2037 = vld [vmem:[%s2029 + $0x1c] sm:$0xf]
        %v2038 = vld [vmem:[%s2029 + $0x20] sm:$0xf]
        %v2039 = vld [vmem:[%s2029 + $0x24] sm:$0xf]
        %v2040 = vld [vmem:[%s2029 + $0x28] sm:$0xf]
        %v2041 = vld [vmem:[%s2029 + $0x2c] sm:$0xf]
        %v2042 = vld [vmem:[%s2029 + $0x30] sm:$0xf]
        %v2043 = vld [vmem:[%s2029 + $0x34] sm:$0xf]
        %v2044 = vld [vmem:[%s2029 + $0x38] sm:$0xf]
        %v2045 = vld [vmem:[%s2029 + $0x3c] sm:$0xf]
        %v2062 = vunpack.c.l.b16 %v2030
        %v2063 = vunpack.c.l.b16 %v2031
        %v2064 = vunpack.c.l.b16 %v2032
        %v2065 = vunpack.c.l.b16 %v2033
        %v2066 = vunpack.c.l.b16 %v2034
        %v2067 = vunpack.c.l.b16 %v2035
        %v2068 = vunpack.c.l.b16 %v2036
        %v2069 = vunpack.c.l.b16 %v2037
        %v2070 = vunpack.c.l.b16 %v2038
        %v2071 = vunpack.c.l.b16 %v2039
        %v2072 = vunpack.c.l.b16 %v2040
        %v2073 = vunpack.c.l.b16 %v2041
        %v2074 = vunpack.c.l.b16 %v2042
        %v2075 = vunpack.c.l.b16 %v2043
        %v2076 = vunpack.c.l.b16 %v2044
        %v2077 = vunpack.c.l.b16 %v2045
        %v2078 = vpack.c.b16 %v2063, %v2062
        %v2079 = vpack.c.b16 %v2065, %v2064
        %v2080 = vpack.c.b16 %v2067, %v2066
        %v2081 = vpack.c.b16 %v2069, %v2068
        %v2082 = vpack.c.b16 %v2071, %v2070
        %v2083 = vpack.c.b16 %v2073, %v2072
        %v2084 = vpack.c.b16 %v2075, %v2074
        %v2085 = vpack.c.b16 %v2077, %v2076
        %2094 = vmatprep.subr.bf16.mxu0 0
        %2095 = vmatpush1.bf16.msra.mxu0 %v2078
        %2096 = vmatprep.subr.bf16.mxu0 0
        %2097 = vmatpush1.bf16.msra.mxu0 %v2079
        %2098 = vmatprep.subr.bf16.mxu0 0
        %2099 = vmatpush1.bf16.msra.mxu0 %v2080
        %2100 = vmatprep.subr.bf16.mxu0 0
        %2101 = vmatpush1.bf16.msra.mxu0 %v2081
        %2102 = vmatprep.subr.bf16.mxu0 0
        %2103 = vmatpush1.bf16.msra.mxu0 %v2082
        %2104 = vmatprep.subr.bf16.mxu0 0
        %2105 = vmatpush1.bf16.msra.mxu0 %v2083
        %2106 = vmatprep.subr.bf16.mxu0 0
        %2107 = vmatpush1.bf16.msra.mxu0 %v2084
        %2108 = vmatprep.subr.bf16.mxu0 0
        %2109 = vmatpush1.bf16.msra.mxu0 %v2085
        %2110 = vmatprep.subr.bf16.mxu0 0
        %2111 = vmatpush1.bf16.msra.mxu0 0
        %2112 = vmatprep.subr.bf16.mxu0 0
        %2113 = vmatpush1.bf16.msra.mxu0 0
        %2114 = vmatprep.subr.bf16.mxu0 0
        %2115 = vmatpush1.bf16.msra.mxu0 0
        %2116 = vmatprep.subr.bf16.mxu0 0
        %2117 = vmatpush1.bf16.msra.mxu0 0
        %2118 = vmatprep.subr.bf16.mxu0 0
        %2119 = vmatpush1.bf16.msra.mxu0 0
        %2120 = vmatprep.subr.bf16.mxu0 0
        %2121 = vmatpush1.bf16.msra.mxu0 0
        %2122 = vmatprep.subr.bf16.mxu0 0
        %2123 = vmatpush1.bf16.msra.mxu0 0
        %2124 = vmatprep.subr.bf16.mxu0 0
        %2125 = vmatpush1.bf16.msra.mxu0 0
        %2126 = vmatprep.mubr.bf16.mxu0 0
        %2127 = vmatmul.mubr.bf16.gmra.mrb[0].mxu0 %v2028
        %v2128 = vpop.f32.mrb[0].mxu0
        %v2129 = vadd.f32 0.0, %v2128
        %v2130 = vpop.f32.mrb[0].mxu0
        %v2131 = vpop.f32.mrb[0].mxu0
        %v2132 = vpop.f32.mrb[0].mxu0
        %2133 = vdwg.mxu0
        %v2150 = vunpack.c.l.b16 %v2011
        %v2151 = vunpack.c.l.b16 %v2012
        %v2152 = vunpack.c.l.b16 %v2013
        %v2153 = vunpack.c.l.b16 %v2014
        %v2154 = vunpack.c.l.b16 %v2015
        %v2155 = vunpack.c.l.b16 %v2016
        %v2156 = vunpack.c.l.b16 %v2017
        %v2157 = vunpack.c.l.b16 %v2018
        %v2158 = vunpack.c.l.b16 %v2019
        %v2159 = vunpack.c.l.b16 %v2020
        %v2160 = vunpack.c.l.b16 %v2021
        %v2161 = vunpack.c.l.b16 %v2022
        %v2162 = vunpack.c.l.b16 %v2023
        %v2163 = vunpack.c.l.b16 %v2024
        %v2164 = vunpack.c.l.b16 %v2025
        %v2165 = vunpack.c.l.b16 %v2026
        %v2166 = vpack.c.b16 %v2151, %v2150
        %v2167 = vpack.c.b16 %v2153, %v2152
        %v2168 = vpack.c.b16 %v2155, %v2154
        %v2169 = vpack.c.b16 %v2157, %v2156
        %v2170 = vpack.c.b16 %v2159, %v2158
        %v2171 = vpack.c.b16 %v2161, %v2160
        %v2172 = vpack.c.b16 %v2163, %v2162
        %v2173 = vpack.c.b16 %v2165, %v2164
        %2182 = vmatprep.subr.bf16.mxu0 0
        %2183 = vmatpush1.bf16.msra.mxu0 %v2166
        %2184 = vmatprep.subr.bf16.mxu0 0
        %2185 = vmatpush1.bf16.msra.mxu0 %v2167
        %2186 = vmatprep.subr.bf16.mxu0 0
        %2187 = vmatpush1.bf16.msra.mxu0 %v2168
        %2188 = vmatprep.subr.bf16.mxu0 0
        %2189 = vmatpush1.bf16.msra.mxu0 %v2169
        %2190 = vmatprep.subr.bf16.mxu0 0
        %2191 = vmatpush1.bf16.msra.mxu0 %v2170
        %2192 = vmatprep.subr.bf16.mxu0 0
        %2193 = vmatpush1.bf16.msra.mxu0 %v2171
        %2194 = vmatprep.subr.bf16.mxu0 0
        %2195 = vmatpush1.bf16.msra.mxu0 %v2172
        %2196 = vmatprep.subr.bf16.mxu0 0
        %2197 = vmatpush1.bf16.msra.mxu0 %v2173
        %2198 = vmatprep.subr.bf16.mxu0 0
        %2199 = vmatpush1.bf16.msra.mxu0 0
        %2200 = vmatprep.subr.bf16.mxu0 0
        %2201 = vmatpush1.bf16.msra.mxu0 0
        %2202 = vmatprep.subr.bf16.mxu0 0
        %2203 = vmatpush1.bf16.msra.mxu0 0
        %2204 = vmatprep.subr.bf16.mxu0 0
        %2205 = vmatpush1.bf16.msra.mxu0 0
        %2206 = vmatprep.subr.bf16.mxu0 0
        %2207 = vmatpush1.bf16.msra.mxu0 0
        %2208 = vmatprep.subr.bf16.mxu0 0
        %2209 = vmatpush1.bf16.msra.mxu0 0
        %2210 = vmatprep.subr.bf16.mxu0 0
        %2211 = vmatpush1.bf16.msra.mxu0 0
        %2212 = vmatprep.subr.bf16.mxu0 0
        %2213 = vmatpush1.bf16.msra.mxu0 0
        %2214 = vmatprep.mubr.bf16.mxu0 0
        %2215 = vmatmul.mubr.bf16.gmra.mrb[0].mxu0 %v2009
        %v2216 = vpop.f32.mrb[0].mxu0
        %v2217 = vadd.f32 %v2129, %v2216
        %v2218 = vpop.f32.mrb[0].mxu0
        %v2219 = vpop.f32.mrb[0].mxu0
        %v2220 = vpop.f32.mrb[0].mxu0
        %2221 = vdwg.mxu0
        %v2222 = vld [vmem:[#allocation3 + $0x2] sm:$0xff]
        %v2223 = vpack.c.bf16 %v2222, %v2222
        %s2224 = scalar_lea.vmem [#allocation4], 1088
        %v2225 = vld [vmem:[%s2224] sm:$0xf]
        %v2226 = vld [vmem:[%s2224 + $0x4] sm:$0xf]
        %v2227 = vld [vmem:[%s2224 + $0x8] sm:$0xf]
        %v2228 = vld [vmem:[%s2224 + $0xc] sm:$0xf]
        %v2229 = vld [vmem:[%s2224 + $0x10] sm:$0xf]
        %v2230 = vld [vmem:[%s2224 + $0x14] sm:$0xf]
        %v2231 = vld [vmem:[%s2224 + $0x18] sm:$0xf]
        %v2232 = vld [vmem:[%s2224 + $0x1c] sm:$0xf]
        %v2233 = vld [vmem:[%s2224 + $0x20] sm:$0xf]
        %v2234 = vld [vmem:[%s2224 + $0x24] sm:$0xf]
        %v2235 = vld [vmem:[%s2224 + $0x28] sm:$0xf]
        %v2236 = vld [vmem:[%s2224 + $0x2c] sm:$0xf]
        %v2237 = vld [vmem:[%s2224 + $0x30] sm:$0xf]
        %v2238 = vld [vmem:[%s2224 + $0x34] sm:$0xf]
        %v2239 = vld [vmem:[%s2224 + $0x38] sm:$0xf]
        %v2240 = vld [vmem:[%s2224 + $0x3c] sm:$0xf]
        %v2257 = vunpack.c.l.b16 %v2225
        %v2258 = vunpack.c.l.b16 %v2226
        %v2259 = vunpack.c.l.b16 %v2227
        %v2260 = vunpack.c.l.b16 %v2228
        %v2261 = vunpack.c.l.b16 %v2229
        %v2262 = vunpack.c.l.b16 %v2230
        %v2263 = vunpack.c.l.b16 %v2231
        %v2264 = vunpack.c.l.b16 %v2232
        %v2265 = vunpack.c.l.b16 %v2233
        %v2266 = vunpack.c.l.b16 %v2234
        %v2267 = vunpack.c.l.b16 %v2235
        %v2268 = vunpack.c.l.b16 %v2236
        %v2269 = vunpack.c.l.b16 %v2237
        %v2270 = vunpack.c.l.b16 %v2238
        %v2271 = vunpack.c.l.b16 %v2239
        %v2272 = vunpack.c.l.b16 %v2240
        %v2273 = vpack.c.b16 %v2258, %v2257
        %v2274 = vpack.c.b16 %v2260, %v2259
        %v2275 = vpack.c.b16 %v2262, %v2261
        %v2276 = vpack.c.b16 %v2264, %v2263
        %v2277 = vpack.c.b16 %v2266, %v2265
        %v2278 = vpack.c.b16 %v2268, %v2267
        %v2279 = vpack.c.b16 %v2270, %v2269
        %v2280 = vpack.c.b16 %v2272, %v2271
        %2289 = vmatprep.subr.bf16.mxu0 0
        %2290 = vmatpush1.bf16.msra.mxu0 %v2273
        %2291 = vmatprep.subr.bf16.mxu0 0
        %2292 = vmatpush1.bf16.msra.mxu0 %v2274
        %2293 = vmatprep.subr.bf16.mxu0 0
        %2294 = vmatpush1.bf16.msra.mxu0 %v2275
        %2295 = vmatprep.subr.bf16.mxu0 0
        %2296 = vmatpush1.bf16.msra.mxu0 %v2276
        %2297 = vmatprep.subr.bf16.mxu0 0
        %2298 = vmatpush1.bf16.msra.mxu0 %v2277
        %2299 = vmatprep.subr.bf16.mxu0 0
        %2300 = vmatpush1.bf16.msra.mxu0 %v2278
        %2301 = vmatprep.subr.bf16.mxu0 0
        %2302 = vmatpush1.bf16.msra.mxu0 %v2279
        %2303 = vmatprep.subr.bf16.mxu0 0
        %2304 = vmatpush1.bf16.msra.mxu0 %v2280
        %2305 = vmatprep.subr.bf16.mxu0 0
        %2306 = vmatpush1.bf16.msra.mxu0 0
        %2307 = vmatprep.subr.bf16.mxu0 0
        %2308 = vmatpush1.bf16.msra.mxu0 0
        %2309 = vmatprep.subr.bf16.mxu0 0
        %2310 = vmatpush1.bf16.msra.mxu0 0
        %2311 = vmatprep.subr.bf16.mxu0 0
        %2312 = vmatpush1.bf16.msra.mxu0 0
        %2313 = vmatprep.subr.bf16.mxu0 0
        %2314 = vmatpush1.bf16.msra.mxu0 0
        %2315 = vmatprep.subr.bf16.mxu0 0
        %2316 = vmatpush1.bf16.msra.mxu0 0
        %2317 = vmatprep.subr.bf16.mxu0 0
        %2318 = vmatpush1.bf16.msra.mxu0 0
        %2319 = vmatprep.subr.bf16.mxu0 0
        %2320 = vmatpush1.bf16.msra.mxu0 0
        %2321 = vmatprep.mubr.bf16.mxu0 0
        %2322 = vmatmul.mubr.bf16.gmra.mrb[0].mxu0 %v2223
        %v2323 = vpop.f32.mrb[0].mxu0
        %v2324 = vadd.f32 0.0, %v2323
        %v2325 = vpop.f32.mrb[0].mxu0
        %v2326 = vpop.f32.mrb[0].mxu0
        %v2327 = vpop.f32.mrb[0].mxu0
        %2328 = vdwg.mxu0
        %v2329 = vadd.f32 %v2217, %v2324
        %s2330 = scalar_lea.vmem [#allocation7], 5
        %v2331 = vld [vmem:[%s2330] sm:$0x1]
        %v2333 = vlaneseq
        %v2334 = vshrl.u32 %v2333, 7
        %v2335 = vsub.s32 0, %v2334
        %v2336 = vrot.slane %v2331, %v2335
        %v2338 = vadd.f32 %v2329, %v2336
        %v2339 = vld [vmem:[#allocation2 + $0x1] sm:$0xff]
        %v2340 = vadd.f32 %v2338, %v2339
        %vm2341 = vcmp.ge.f32.partialorder %v2340, 0.0
        %v2342 = vmul.f32 %v2004, %v2340
        %v2343 = vsel %vm2341, %v2340, %v2342
        %2344 = vst [vmem:[#allocation2 + $0x1] sm:$0xff] %v2343
        %s2345 = sld [smem:[#allocation9 + $0x3]]
        %v2346 = vld [vmem:[#allocation2] sm:$0xff]
        %v2347 = vpack.c.bf16 %v2346, %v2346
        %s2348 = scalar_lea.vmem [#allocation4], 1152
        %v2349 = vld [vmem:[%s2348] sm:$0xf]
        %v2350 = vld [vmem:[%s2348 + $0x4] sm:$0xf]
        %v2351 = vld [vmem:[%s2348 + $0x8] sm:$0xf]
        %v2352 = vld [vmem:[%s2348 + $0xc] sm:$0xf]
        %v2353 = vld [vmem:[%s2348 + $0x10] sm:$0xf]
        %v2354 = vld [vmem:[%s2348 + $0x14] sm:$0xf]
        %v2355 = vld [vmem:[%s2348 + $0x18] sm:$0xf]
        %v2356 = vld [vmem:[%s2348 + $0x1c] sm:$0xf]
        %v2357 = vld [vmem:[%s2348 + $0x20] sm:$0xf]
        %v2358 = vld [vmem:[%s2348 + $0x24] sm:$0xf]
        %v2359 = vld [vmem:[%s2348 + $0x28] sm:$0xf]
        %v2360 = vld [vmem:[%s2348 + $0x2c] sm:$0xf]
        %v2361 = vld [vmem:[%s2348 + $0x30] sm:$0xf]
        %v2362 = vld [vmem:[%s2348 + $0x34] sm:$0xf]
        %v2363 = vld [vmem:[%s2348 + $0x38] sm:$0xf]
        %v2364 = vld [vmem:[%s2348 + $0x3c] sm:$0xf]
        %v2365 = vld [vmem:[#allocation2 + $0x1] sm:$0xff]
        %v2366 = vpack.c.bf16 %v2365, %v2365
        %s2367 = scalar_lea.vmem [#allocation4], 1216
        %v2368 = vld [vmem:[%s2367] sm:$0xf]
        %v2369 = vld [vmem:[%s2367 + $0x4] sm:$0xf]
        %v2370 = vld [vmem:[%s2367 + $0x8] sm:$0xf]
        %v2371 = vld [vmem:[%s2367 + $0xc] sm:$0xf]
        %v2372 = vld [vmem:[%s2367 + $0x10] sm:$0xf]
        %v2373 = vld [vmem:[%s2367 + $0x14] sm:$0xf]
        %v2374 = vld [vmem:[%s2367 + $0x18] sm:$0xf]
        %v2375 = vld [vmem:[%s2367 + $0x1c] sm:$0xf]
        %v2376 = vld [vmem:[%s2367 + $0x20] sm:$0xf]
        %v2377 = vld [vmem:[%s2367 + $0x24] sm:$0xf]
        %v2378 = vld [vmem:[%s2367 + $0x28] sm:$0xf]
        %v2379 = vld [vmem:[%s2367 + $0x2c] sm:$0xf]
        %v2380 = vld [vmem:[%s2367 + $0x30] sm:$0xf]
        %v2381 = vld [vmem:[%s2367 + $0x34] sm:$0xf]
        %v2382 = vld [vmem:[%s2367 + $0x38] sm:$0xf]
        %v2383 = vld [vmem:[%s2367 + $0x3c] sm:$0xf]
        %v2400 = vunpack.c.l.b16 %v2368
        %v2401 = vunpack.c.l.b16 %v2369
        %v2402 = vunpack.c.l.b16 %v2370
        %v2403 = vunpack.c.l.b16 %v2371
        %v2404 = vunpack.c.l.b16 %v2372
        %v2405 = vunpack.c.l.b16 %v2373
        %v2406 = vunpack.c.l.b16 %v2374
        %v2407 = vunpack.c.l.b16 %v2375
        %v2408 = vunpack.c.l.b16 %v2376
        %v2409 = vunpack.c.l.b16 %v2377
        %v2410 = vunpack.c.l.b16 %v2378
        %v2411 = vunpack.c.l.b16 %v2379
        %v2412 = vunpack.c.l.b16 %v2380
        %v2413 = vunpack.c.l.b16 %v2381
        %v2414 = vunpack.c.l.b16 %v2382
        %v2415 = vunpack.c.l.b16 %v2383
        %v2416 = vpack.c.b16 %v2401, %v2400
        %v2417 = vpack.c.b16 %v2403, %v2402
        %v2418 = vpack.c.b16 %v2405, %v2404
        %v2419 = vpack.c.b16 %v2407, %v2406
        %v2420 = vpack.c.b16 %v2409, %v2408
        %v2421 = vpack.c.b16 %v2411, %v2410
        %v2422 = vpack.c.b16 %v2413, %v2412
        %v2423 = vpack.c.b16 %v2415, %v2414
        %2432 = vmatprep.subr.bf16.mxu0 0
        %2433 = vmatpush1.bf16.msra.mxu0 %v2416
        %2434 = vmatprep.subr.bf16.mxu0 0
        %2435 = vmatpush1.bf16.msra.mxu0 %v2417
        %2436 = vmatprep.subr.bf16.mxu0 0
        %2437 = vmatpush1.bf16.msra.mxu0 %v2418
        %2438 = vmatprep.subr.bf16.mxu0 0
        %2439 = vmatpush1.bf16.msra.mxu0 %v2419
        %2440 = vmatprep.subr.bf16.mxu0 0
        %2441 = vmatpush1.bf16.msra.mxu0 %v2420
        %2442 = vmatprep.subr.bf16.mxu0 0
        %2443 = vmatpush1.bf16.msra.mxu0 %v2421
        %2444 = vmatprep.subr.bf16.mxu0 0
        %2445 = vmatpush1.bf16.msra.mxu0 %v2422
        %2446 = vmatprep.subr.bf16.mxu0 0
        %2447 = vmatpush1.bf16.msra.mxu0 %v2423
        %2448 = vmatprep.subr.bf16.mxu0 0
        %2449 = vmatpush1.bf16.msra.mxu0 0
        %2450 = vmatprep.subr.bf16.mxu0 0
        %2451 = vmatpush1.bf16.msra.mxu0 0
        %2452 = vmatprep.subr.bf16.mxu0 0
        %2453 = vmatpush1.bf16.msra.mxu0 0
        %2454 = vmatprep.subr.bf16.mxu0 0
        %2455 = vmatpush1.bf16.msra.mxu0 0
        %2456 = vmatprep.subr.bf16.mxu0 0
        %2457 = vmatpush1.bf16.msra.mxu0 0
        %2458 = vmatprep.subr.bf16.mxu0 0
        %2459 = vmatpush1.bf16.msra.mxu0 0
        %2460 = vmatprep.subr.bf16.mxu0 0
        %2461 = vmatpush1.bf16.msra.mxu0 0
        %2462 = vmatprep.subr.bf16.mxu0 0
        %2463 = vmatpush1.bf16.msra.mxu0 0
        %2464 = vmatprep.mubr.bf16.mxu0 0
        %2465 = vmatmul.mubr.bf16.gmra.mrb[0].mxu0 %v2366
        %v2466 = vpop.f32.mrb[0].mxu0
        %v2467 = vadd.f32 0.0, %v2466
        %v2468 = vpop.f32.mrb[0].mxu0
        %v2469 = vpop.f32.mrb[0].mxu0
        %v2470 = vpop.f32.mrb[0].mxu0
        %2471 = vdwg.mxu0
        %v2488 = vunpack.c.l.b16 %v2349
        %v2489 = vunpack.c.l.b16 %v2350
        %v2490 = vunpack.c.l.b16 %v2351
        %v2491 = vunpack.c.l.b16 %v2352
        %v2492 = vunpack.c.l.b16 %v2353
        %v2493 = vunpack.c.l.b16 %v2354
        %v2494 = vunpack.c.l.b16 %v2355
        %v2495 = vunpack.c.l.b16 %v2356
        %v2496 = vunpack.c.l.b16 %v2357
        %v2497 = vunpack.c.l.b16 %v2358
        %v2498 = vunpack.c.l.b16 %v2359
        %v2499 = vunpack.c.l.b16 %v2360
        %v2500 = vunpack.c.l.b16 %v2361
        %v2501 = vunpack.c.l.b16 %v2362
        %v2502 = vunpack.c.l.b16 %v2363
        %v2503 = vunpack.c.l.b16 %v2364
        %v2504 = vpack.c.b16 %v2489, %v2488
        %v2505 = vpack.c.b16 %v2491, %v2490
        %v2506 = vpack.c.b16 %v2493, %v2492
        %v2507 = vpack.c.b16 %v2495, %v2494
        %v2508 = vpack.c.b16 %v2497, %v2496
        %v2509 = vpack.c.b16 %v2499, %v2498
        %v2510 = vpack.c.b16 %v2501, %v2500
        %v2511 = vpack.c.b16 %v2503, %v2502
        %2520 = vmatprep.subr.bf16.mxu0 0
        %2521 = vmatpush1.bf16.msra.mxu0 %v2504
        %2522 = vmatprep.subr.bf16.mxu0 0
        %2523 = vmatpush1.bf16.msra.mxu0 %v2505
        %2524 = vmatprep.subr.bf16.mxu0 0
        %2525 = vmatpush1.bf16.msra.mxu0 %v2506
        %2526 = vmatprep.subr.bf16.mxu0 0
        %2527 = vmatpush1.bf16.msra.mxu0 %v2507
        %2528 = vmatprep.subr.bf16.mxu0 0
        %2529 = vmatpush1.bf16.msra.mxu0 %v2508
        %2530 = vmatprep.subr.bf16.mxu0 0
        %2531 = vmatpush1.bf16.msra.mxu0 %v2509
        %2532 = vmatprep.subr.bf16.mxu0 0
        %2533 = vmatpush1.bf16.msra.mxu0 %v2510
        %2534 = vmatprep.subr.bf16.mxu0 0
        %2535 = vmatpush1.bf16.msra.mxu0 %v2511
        %2536 = vmatprep.subr.bf16.mxu0 0
        %2537 = vmatpush1.bf16.msra.mxu0 0
        %2538 = vmatprep.subr.bf16.mxu0 0
        %2539 = vmatpush1.bf16.msra.mxu0 0
        %2540 = vmatprep.subr.bf16.mxu0 0
        %2541 = vmatpush1.bf16.msra.mxu0 0
        %2542 = vmatprep.subr.bf16.mxu0 0
        %2543 = vmatpush1.bf16.msra.mxu0 0
        %2544 = vmatprep.subr.bf16.mxu0 0
        %2545 = vmatpush1.bf16.msra.mxu0 0
        %2546 = vmatprep.subr.bf16.mxu0 0
        %2547 = vmatpush1.bf16.msra.mxu0 0
        %2548 = vmatprep.subr.bf16.mxu0 0
        %2549 = vmatpush1.bf16.msra.mxu0 0
        %2550 = vmatprep.subr.bf16.mxu0 0
        %2551 = vmatpush1.bf16.msra.mxu0 0
        %2552 = vmatprep.mubr.bf16.mxu0 0
        %2553 = vmatmul.mubr.bf16.gmra.mrb[0].mxu0 %v2347
        %v2554 = vpop.f32.mrb[0].mxu0
        %v2555 = vadd.f32 %v2467, %v2554
        %v2556 = vpop.f32.mrb[0].mxu0
        %v2557 = vpop.f32.mrb[0].mxu0
        %v2558 = vpop.f32.mrb[0].mxu0
        %2559 = vdwg.mxu0
        %v2560 = vld [vmem:[#allocation2 + $0x2] sm:$0xff]
        %v2561 = vpack.c.bf16 %v2560, %v2560
        %s2562 = scalar_lea.vmem [#allocation4], 1280
        %v2563 = vld [vmem:[%s2562] sm:$0xf]
        %v2564 = vld [vmem:[%s2562 + $0x4] sm:$0xf]
        %v2565 = vld [vmem:[%s2562 + $0x8] sm:$0xf]
        %v2566 = vld [vmem:[%s2562 + $0xc] sm:$0xf]
        %v2567 = vld [vmem:[%s2562 + $0x10] sm:$0xf]
        %v2568 = vld [vmem:[%s2562 + $0x14] sm:$0xf]
        %v2569 = vld [vmem:[%s2562 + $0x18] sm:$0xf]
        %v2570 = vld [vmem:[%s2562 + $0x1c] sm:$0xf]
        %v2571 = vld [vmem:[%s2562 + $0x20] sm:$0xf]
        %v2572 = vld [vmem:[%s2562 + $0x24] sm:$0xf]
        %v2573 = vld [vmem:[%s2562 + $0x28] sm:$0xf]
        %v2574 = vld [vmem:[%s2562 + $0x2c] sm:$0xf]
        %v2575 = vld [vmem:[%s2562 + $0x30] sm:$0xf]
        %v2576 = vld [vmem:[%s2562 + $0x34] sm:$0xf]
        %v2577 = vld [vmem:[%s2562 + $0x38] sm:$0xf]
        %v2578 = vld [vmem:[%s2562 + $0x3c] sm:$0xf]
        %v2595 = vunpack.c.l.b16 %v2563
        %v2596 = vunpack.c.l.b16 %v2564
        %v2597 = vunpack.c.l.b16 %v2565
        %v2598 = vunpack.c.l.b16 %v2566
        %v2599 = vunpack.c.l.b16 %v2567
        %v2600 = vunpack.c.l.b16 %v2568
        %v2601 = vunpack.c.l.b16 %v2569
        %v2602 = vunpack.c.l.b16 %v2570
        %v2603 = vunpack.c.l.b16 %v2571
        %v2604 = vunpack.c.l.b16 %v2572
        %v2605 = vunpack.c.l.b16 %v2573
        %v2606 = vunpack.c.l.b16 %v2574
        %v2607 = vunpack.c.l.b16 %v2575
        %v2608 = vunpack.c.l.b16 %v2576
        %v2609 = vunpack.c.l.b16 %v2577
        %v2610 = vunpack.c.l.b16 %v2578
        %v2611 = vpack.c.b16 %v2596, %v2595
        %v2612 = vpack.c.b16 %v2598, %v2597
        %v2613 = vpack.c.b16 %v2600, %v2599
        %v2614 = vpack.c.b16 %v2602, %v2601
        %v2615 = vpack.c.b16 %v2604, %v2603
        %v2616 = vpack.c.b16 %v2606, %v2605
        %v2617 = vpack.c.b16 %v2608, %v2607
        %v2618 = vpack.c.b16 %v2610, %v2609
        %2627 = vmatprep.subr.bf16.mxu0 0
        %2628 = vmatpush1.bf16.msra.mxu0 %v2611
        %2629 = vmatprep.subr.bf16.mxu0 0
        %2630 = vmatpush1.bf16.msra.mxu0 %v2612
        %2631 = vmatprep.subr.bf16.mxu0 0
        %2632 = vmatpush1.bf16.msra.mxu0 %v2613
        %2633 = vmatprep.subr.bf16.mxu0 0
        %2634 = vmatpush1.bf16.msra.mxu0 %v2614
        %2635 = vmatprep.subr.bf16.mxu0 0
        %2636 = vmatpush1.bf16.msra.mxu0 %v2615
        %2637 = vmatprep.subr.bf16.mxu0 0
        %2638 = vmatpush1.bf16.msra.mxu0 %v2616
        %2639 = vmatprep.subr.bf16.mxu0 0
        %2640 = vmatpush1.bf16.msra.mxu0 %v2617
        %2641 = vmatprep.subr.bf16.mxu0 0
        %2642 = vmatpush1.bf16.msra.mxu0 %v2618
        %2643 = vmatprep.subr.bf16.mxu0 0
        %2644 = vmatpush1.bf16.msra.mxu0 0
        %2645 = vmatprep.subr.bf16.mxu0 0
        %2646 = vmatpush1.bf16.msra.mxu0 0
        %2647 = vmatprep.subr.bf16.mxu0 0
        %2648 = vmatpush1.bf16.msra.mxu0 0
        %2649 = vmatprep.subr.bf16.mxu0 0
        %2650 = vmatpush1.bf16.msra.mxu0 0
        %2651 = vmatprep.subr.bf16.mxu0 0
        %2652 = vmatpush1.bf16.msra.mxu0 0
        %2653 = vmatprep.subr.bf16.mxu0 0
        %2654 = vmatpush1.bf16.msra.mxu0 0
        %2655 = vmatprep.subr.bf16.mxu0 0
        %2656 = vmatpush1.bf16.msra.mxu0 0
        %2657 = vmatprep.subr.bf16.mxu0 0
        %2658 = vmatpush1.bf16.msra.mxu0 0
        %2659 = vmatprep.mubr.bf16.mxu0 0
        %2660 = vmatmul.mubr.bf16.gmra.mrb[0].mxu0 %v2561
        %v2661 = vpop.f32.mrb[0].mxu0
        %v2662 = vadd.f32 0.0, %v2661
        %v2663 = vpop.f32.mrb[0].mxu0
        %v2664 = vpop.f32.mrb[0].mxu0
        %v2665 = vpop.f32.mrb[0].mxu0
        %2666 = vdwg.mxu0
        %v2667 = vadd.f32 %v2555, %v2662
        %s2668 = scalar_lea.vmem [#allocation7], 6
        %v2669 = vld [vmem:[%s2668] sm:$0x1]
        %v2671 = vlaneseq
        %v2672 = vshrl.u32 %v2671, 7
        %v2673 = vsub.s32 0, %v2672
        %v2674 = vrot.slane %v2669, %v2673
        %v2676 = vadd.f32 %v2667, %v2674
        %vm2677 = vcmp.ge.f32.partialorder %v2676, 0.0
        %v2678 = vstv %s2345
        %v2679 = vmul.f32 %v2678, %v2676
        %v2680 = vsel %vm2677, %v2676, %v2679
        %2681 = vst [vmem:[#allocation3 + $0x1] sm:$0xff] %v2680
        %v2682 = vld [vmem:[#allocation3] sm:$0xff]
        %v2683 = vpack.c.bf16 %v2682, %v2682
        %s2684 = scalar_lea.vmem [#allocation4], 1344
        %v2685 = vld [vmem:[%s2684] sm:$0xf]
        %v2686 = vld [vmem:[%s2684 + $0x4] sm:$0xf]
        %v2687 = vld [vmem:[%s2684 + $0x8] sm:$0xf]
        %v2688 = vld [vmem:[%s2684 + $0xc] sm:$0xf]
        %v2689 = vld [vmem:[%s2684 + $0x10] sm:$0xf]
        %v2690 = vld [vmem:[%s2684 + $0x14] sm:$0xf]
        %v2691 = vld [vmem:[%s2684 + $0x18] sm:$0xf]
        %v2692 = vld [vmem:[%s2684 + $0x1c] sm:$0xf]
        %v2693 = vld [vmem:[%s2684 + $0x20] sm:$0xf]
        %v2694 = vld [vmem:[%s2684 + $0x24] sm:$0xf]
        %v2695 = vld [vmem:[%s2684 + $0x28] sm:$0xf]
        %v2696 = vld [vmem:[%s2684 + $0x2c] sm:$0xf]
        %v2697 = vld [vmem:[%s2684 + $0x30] sm:$0xf]
        %v2698 = vld [vmem:[%s2684 + $0x34] sm:$0xf]
        %v2699 = vld [vmem:[%s2684 + $0x38] sm:$0xf]
        %v2700 = vld [vmem:[%s2684 + $0x3c] sm:$0xf]
        %v2701 = vld [vmem:[#allocation3 + $0x1] sm:$0xff]
        %v2702 = vpack.c.bf16 %v2701, %v2701
        %s2703 = scalar_lea.vmem [#allocation4], 1408
        %v2704 = vld [vmem:[%s2703] sm:$0xf]
        %v2705 = vld [vmem:[%s2703 + $0x4] sm:$0xf]
        %v2706 = vld [vmem:[%s2703 + $0x8] sm:$0xf]
        %v2707 = vld [vmem:[%s2703 + $0xc] sm:$0xf]
        %v2708 = vld [vmem:[%s2703 + $0x10] sm:$0xf]
        %v2709 = vld [vmem:[%s2703 + $0x14] sm:$0xf]
        %v2710 = vld [vmem:[%s2703 + $0x18] sm:$0xf]
        %v2711 = vld [vmem:[%s2703 + $0x1c] sm:$0xf]
        %v2712 = vld [vmem:[%s2703 + $0x20] sm:$0xf]
        %v2713 = vld [vmem:[%s2703 + $0x24] sm:$0xf]
        %v2714 = vld [vmem:[%s2703 + $0x28] sm:$0xf]
        %v2715 = vld [vmem:[%s2703 + $0x2c] sm:$0xf]
        %v2716 = vld [vmem:[%s2703 + $0x30] sm:$0xf]
        %v2717 = vld [vmem:[%s2703 + $0x34] sm:$0xf]
        %v2718 = vld [vmem:[%s2703 + $0x38] sm:$0xf]
        %v2719 = vld [vmem:[%s2703 + $0x3c] sm:$0xf]
        %v2736 = vunpack.c.l.b16 %v2704
        %v2737 = vunpack.c.l.b16 %v2705
        %v2738 = vunpack.c.l.b16 %v2706
        %v2739 = vunpack.c.l.b16 %v2707
        %v2740 = vunpack.c.l.b16 %v2708
        %v2741 = vunpack.c.l.b16 %v2709
        %v2742 = vunpack.c.l.b16 %v2710
        %v2743 = vunpack.c.l.b16 %v2711
        %v2744 = vunpack.c.l.b16 %v2712
        %v2745 = vunpack.c.l.b16 %v2713
        %v2746 = vunpack.c.l.b16 %v2714
        %v2747 = vunpack.c.l.b16 %v2715
        %v2748 = vunpack.c.l.b16 %v2716
        %v2749 = vunpack.c.l.b16 %v2717
        %v2750 = vunpack.c.l.b16 %v2718
        %v2751 = vunpack.c.l.b16 %v2719
        %v2752 = vpack.c.b16 %v2737, %v2736
        %v2753 = vpack.c.b16 %v2739, %v2738
        %v2754 = vpack.c.b16 %v2741, %v2740
        %v2755 = vpack.c.b16 %v2743, %v2742
        %v2756 = vpack.c.b16 %v2745, %v2744
        %v2757 = vpack.c.b16 %v2747, %v2746
        %v2758 = vpack.c.b16 %v2749, %v2748
        %v2759 = vpack.c.b16 %v2751, %v2750
        %2768 = vmatprep.subr.bf16.mxu0 0
        %2769 = vmatpush1.bf16.msra.mxu0 %v2752
        %2770 = vmatprep.subr.bf16.mxu0 0
        %2771 = vmatpush1.bf16.msra.mxu0 %v2753
        %2772 = vmatprep.subr.bf16.mxu0 0
        %2773 = vmatpush1.bf16.msra.mxu0 %v2754
        %2774 = vmatprep.subr.bf16.mxu0 0
        %2775 = vmatpush1.bf16.msra.mxu0 %v2755
        %2776 = vmatprep.subr.bf16.mxu0 0
        %2777 = vmatpush1.bf16.msra.mxu0 %v2756
        %2778 = vmatprep.subr.bf16.mxu0 0
        %2779 = vmatpush1.bf16.msra.mxu0 %v2757
        %2780 = vmatprep.subr.bf16.mxu0 0
        %2781 = vmatpush1.bf16.msra.mxu0 %v2758
        %2782 = vmatprep.subr.bf16.mxu0 0
        %2783 = vmatpush1.bf16.msra.mxu0 %v2759
        %2784 = vmatprep.subr.bf16.mxu0 0
        %2785 = vmatpush1.bf16.msra.mxu0 0
        %2786 = vmatprep.subr.bf16.mxu0 0
        %2787 = vmatpush1.bf16.msra.mxu0 0
        %2788 = vmatprep.subr.bf16.mxu0 0
        %2789 = vmatpush1.bf16.msra.mxu0 0
        %2790 = vmatprep.subr.bf16.mxu0 0
        %2791 = vmatpush1.bf16.msra.mxu0 0
        %2792 = vmatprep.subr.bf16.mxu0 0
        %2793 = vmatpush1.bf16.msra.mxu0 0
        %2794 = vmatprep.subr.bf16.mxu0 0
        %2795 = vmatpush1.bf16.msra.mxu0 0
        %2796 = vmatprep.subr.bf16.mxu0 0
        %2797 = vmatpush1.bf16.msra.mxu0 0
        %2798 = vmatprep.subr.bf16.mxu0 0
        %2799 = vmatpush1.bf16.msra.mxu0 0
        %2800 = vmatprep.mubr.bf16.mxu0 0
        %2801 = vmatmul.mubr.bf16.gmra.mrb[0].mxu0 %v2702
        %v2802 = vpop.f32.mrb[0].mxu0
        %v2803 = vadd.f32 0.0, %v2802
        %v2804 = vpop.f32.mrb[0].mxu0
        %v2805 = vpop.f32.mrb[0].mxu0
        %v2806 = vpop.f32.mrb[0].mxu0
        %2807 = vdwg.mxu0
        %v2824 = vunpack.c.l.b16 %v2685
        %v2825 = vunpack.c.l.b16 %v2686
        %v2826 = vunpack.c.l.b16 %v2687
        %v2827 = vunpack.c.l.b16 %v2688
        %v2828 = vunpack.c.l.b16 %v2689
        %v2829 = vunpack.c.l.b16 %v2690
        %v2830 = vunpack.c.l.b16 %v2691
        %v2831 = vunpack.c.l.b16 %v2692
        %v2832 = vunpack.c.l.b16 %v2693
        %v2833 = vunpack.c.l.b16 %v2694
        %v2834 = vunpack.c.l.b16 %v2695
        %v2835 = vunpack.c.l.b16 %v2696
        %v2836 = vunpack.c.l.b16 %v2697
        %v2837 = vunpack.c.l.b16 %v2698
        %v2838 = vunpack.c.l.b16 %v2699
        %v2839 = vunpack.c.l.b16 %v2700
        %v2840 = vpack.c.b16 %v2825, %v2824
        %v2841 = vpack.c.b16 %v2827, %v2826
        %v2842 = vpack.c.b16 %v2829, %v2828
        %v2843 = vpack.c.b16 %v2831, %v2830
        %v2844 = vpack.c.b16 %v2833, %v2832
        %v2845 = vpack.c.b16 %v2835, %v2834
        %v2846 = vpack.c.b16 %v2837, %v2836
        %v2847 = vpack.c.b16 %v2839, %v2838
        %2856 = vmatprep.subr.bf16.mxu0 0
        %2857 = vmatpush1.bf16.msra.mxu0 %v2840
        %2858 = vmatprep.subr.bf16.mxu0 0
        %2859 = vmatpush1.bf16.msra.mxu0 %v2841
        %2860 = vmatprep.subr.bf16.mxu0 0
        %2861 = vmatpush1.bf16.msra.mxu0 %v2842
        %2862 = vmatprep.subr.bf16.mxu0 0
        %2863 = vmatpush1.bf16.msra.mxu0 %v2843
        %2864 = vmatprep.subr.bf16.mxu0 0
        %2865 = vmatpush1.bf16.msra.mxu0 %v2844
        %2866 = vmatprep.subr.bf16.mxu0 0
        %2867 = vmatpush1.bf16.msra.mxu0 %v2845
        %2868 = vmatprep.subr.bf16.mxu0 0
        %2869 = vmatpush1.bf16.msra.mxu0 %v2846
        %2870 = vmatprep.subr.bf16.mxu0 0
        %2871 = vmatpush1.bf16.msra.mxu0 %v2847
        %2872 = vmatprep.subr.bf16.mxu0 0
        %2873 = vmatpush1.bf16.msra.mxu0 0
        %2874 = vmatprep.subr.bf16.mxu0 0
        %2875 = vmatpush1.bf16.msra.mxu0 0
        %2876 = vmatprep.subr.bf16.mxu0 0
        %2877 = vmatpush1.bf16.msra.mxu0 0
        %2878 = vmatprep.subr.bf16.mxu0 0
        %2879 = vmatpush1.bf16.msra.mxu0 0
        %2880 = vmatprep.subr.bf16.mxu0 0
        %2881 = vmatpush1.bf16.msra.mxu0 0
        %2882 = vmatprep.subr.bf16.mxu0 0
        %2883 = vmatpush1.bf16.msra.mxu0 0
        %2884 = vmatprep.subr.bf16.mxu0 0
        %2885 = vmatpush1.bf16.msra.mxu0 0
        %2886 = vmatprep.subr.bf16.mxu0 0
        %2887 = vmatpush1.bf16.msra.mxu0 0
        %2888 = vmatprep.mubr.bf16.mxu0 0
        %2889 = vmatmul.mubr.bf16.gmra.mrb[0].mxu0 %v2683
        %v2890 = vpop.f32.mrb[0].mxu0
        %v2891 = vadd.f32 %v2803, %v2890
        %v2892 = vpop.f32.mrb[0].mxu0
        %v2893 = vpop.f32.mrb[0].mxu0
        %v2894 = vpop.f32.mrb[0].mxu0
        %2895 = vdwg.mxu0
        %v2896 = vld [vmem:[#allocation3 + $0x2] sm:$0xff]
        %v2897 = vpack.c.bf16 %v2896, %v2896
        %s2898 = scalar_lea.vmem [#allocation4], 1472
        %v2899 = vld [vmem:[%s2898] sm:$0xf]
        %v2900 = vld [vmem:[%s2898 + $0x4] sm:$0xf]
        %v2901 = vld [vmem:[%s2898 + $0x8] sm:$0xf]
        %v2902 = vld [vmem:[%s2898 + $0xc] sm:$0xf]
        %v2903 = vld [vmem:[%s2898 + $0x10] sm:$0xf]
        %v2904 = vld [vmem:[%s2898 + $0x14] sm:$0xf]
        %v2905 = vld [vmem:[%s2898 + $0x18] sm:$0xf]
        %v2906 = vld [vmem:[%s2898 + $0x1c] sm:$0xf]
        %v2907 = vld [vmem:[%s2898 + $0x20] sm:$0xf]
        %v2908 = vld [vmem:[%s2898 + $0x24] sm:$0xf]
        %v2909 = vld [vmem:[%s2898 + $0x28] sm:$0xf]
        %v2910 = vld [vmem:[%s2898 + $0x2c] sm:$0xf]
        %v2911 = vld [vmem:[%s2898 + $0x30] sm:$0xf]
        %v2912 = vld [vmem:[%s2898 + $0x34] sm:$0xf]
        %v2913 = vld [vmem:[%s2898 + $0x38] sm:$0xf]
        %v2914 = vld [vmem:[%s2898 + $0x3c] sm:$0xf]
        %v2931 = vunpack.c.l.b16 %v2899
        %v2932 = vunpack.c.l.b16 %v2900
        %v2933 = vunpack.c.l.b16 %v2901
        %v2934 = vunpack.c.l.b16 %v2902
        %v2935 = vunpack.c.l.b16 %v2903
        %v2936 = vunpack.c.l.b16 %v2904
        %v2937 = vunpack.c.l.b16 %v2905
        %v2938 = vunpack.c.l.b16 %v2906
        %v2939 = vunpack.c.l.b16 %v2907
        %v2940 = vunpack.c.l.b16 %v2908
        %v2941 = vunpack.c.l.b16 %v2909
        %v2942 = vunpack.c.l.b16 %v2910
        %v2943 = vunpack.c.l.b16 %v2911
        %v2944 = vunpack.c.l.b16 %v2912
        %v2945 = vunpack.c.l.b16 %v2913
        %v2946 = vunpack.c.l.b16 %v2914
        %v2947 = vpack.c.b16 %v2932, %v2931
        %v2948 = vpack.c.b16 %v2934, %v2933
        %v2949 = vpack.c.b16 %v2936, %v2935
        %v2950 = vpack.c.b16 %v2938, %v2937
        %v2951 = vpack.c.b16 %v2940, %v2939
        %v2952 = vpack.c.b16 %v2942, %v2941
        %v2953 = vpack.c.b16 %v2944, %v2943
        %v2954 = vpack.c.b16 %v2946, %v2945
        %2963 = vmatprep.subr.bf16.mxu0 0
        %2964 = vmatpush1.bf16.msra.mxu0 %v2947
        %2965 = vmatprep.subr.bf16.mxu0 0
        %2966 = vmatpush1.bf16.msra.mxu0 %v2948
        %2967 = vmatprep.subr.bf16.mxu0 0
        %2968 = vmatpush1.bf16.msra.mxu0 %v2949
        %2969 = vmatprep.subr.bf16.mxu0 0
        %2970 = vmatpush1.bf16.msra.mxu0 %v2950
        %2971 = vmatprep.subr.bf16.mxu0 0
        %2972 = vmatpush1.bf16.msra.mxu0 %v2951
        %2973 = vmatprep.subr.bf16.mxu0 0
        %2974 = vmatpush1.bf16.msra.mxu0 %v2952
        %2975 = vmatprep.subr.bf16.mxu0 0
        %2976 = vmatpush1.bf16.msra.mxu0 %v2953
        %2977 = vmatprep.subr.bf16.mxu0 0
        %2978 = vmatpush1.bf16.msra.mxu0 %v2954
        %2979 = vmatprep.subr.bf16.mxu0 0
        %2980 = vmatpush1.bf16.msra.mxu0 0
        %2981 = vmatprep.subr.bf16.mxu0 0
        %2982 = vmatpush1.bf16.msra.mxu0 0
        %2983 = vmatprep.subr.bf16.mxu0 0
        %2984 = vmatpush1.bf16.msra.mxu0 0
        %2985 = vmatprep.subr.bf16.mxu0 0
        %2986 = vmatpush1.bf16.msra.mxu0 0
        %2987 = vmatprep.subr.bf16.mxu0 0
        %2988 = vmatpush1.bf16.msra.mxu0 0
        %2989 = vmatprep.subr.bf16.mxu0 0
        %2990 = vmatpush1.bf16.msra.mxu0 0
        %2991 = vmatprep.subr.bf16.mxu0 0
        %2992 = vmatpush1.bf16.msra.mxu0 0
        %2993 = vmatprep.subr.bf16.mxu0 0
        %2994 = vmatpush1.bf16.msra.mxu0 0
        %2995 = vmatprep.mubr.bf16.mxu0 0
        %2996 = vmatmul.mubr.bf16.gmra.mrb[0].mxu0 %v2897
        %v2997 = vpop.f32.mrb[0].mxu0
        %v2998 = vadd.f32 0.0, %v2997
        %v2999 = vpop.f32.mrb[0].mxu0
        %v3000 = vpop.f32.mrb[0].mxu0
        %v3001 = vpop.f32.mrb[0].mxu0
        %3002 = vdwg.mxu0
        %v3003 = vadd.f32 %v2891, %v2998
        %s3004 = scalar_lea.vmem [#allocation7], 7
        %v3005 = vld [vmem:[%s3004] sm:$0x1]
        %v3007 = vlaneseq
        %v3008 = vshrl.u32 %v3007, 7
        %v3009 = vsub.s32 0, %v3008
        %v3010 = vrot.slane %v3005, %v3009
        %v3012 = vadd.f32 %v3003, %v3010
        %v3013 = vld [vmem:[#allocation2 + $0x1] sm:$0xff]
        %v3014 = vadd.f32 %v3012, %v3013
        %vm3015 = vcmp.ge.f32.partialorder %v3014, 0.0
        %v3016 = vmul.f32 %v2678, %v3014
        %v3017 = vsel %vm3015, %v3014, %v3016
        %3018 = vst [vmem:[#allocation2 + $0x1] sm:$0xff] %v3017
        %s3019 = sld [smem:[#allocation9 + $0x4]]
        %v3020 = vld [vmem:[#allocation2] sm:$0xff]
        %v3021 = vpack.c.bf16 %v3020, %v3020
        %s3022 = scalar_lea.vmem [#allocation4], 1536
        %v3023 = vld [vmem:[%s3022] sm:$0xf]
        %v3024 = vld [vmem:[%s3022 + $0x4] sm:$0xf]
        %v3025 = vld [vmem:[%s3022 + $0x8] sm:$0xf]
        %v3026 = vld [vmem:[%s3022 + $0xc] sm:$0xf]
        %v3027 = vld [vmem:[%s3022 + $0x10] sm:$0xf]
        %v3028 = vld [vmem:[%s3022 + $0x14] sm:$0xf]
        %v3029 = vld [vmem:[%s3022 + $0x18] sm:$0xf]
        %v3030 = vld [vmem:[%s3022 + $0x1c] sm:$0xf]
        %v3031 = vld [vmem:[%s3022 + $0x20] sm:$0xf]
        %v3032 = vld [vmem:[%s3022 + $0x24] sm:$0xf]
        %v3033 = vld [vmem:[%s3022 + $0x28] sm:$0xf]
        %v3034 = vld [vmem:[%s3022 + $0x2c] sm:$0xf]
        %v3035 = vld [vmem:[%s3022 + $0x30] sm:$0xf]
        %v3036 = vld [vmem:[%s3022 + $0x34] sm:$0xf]
        %v3037 = vld [vmem:[%s3022 + $0x38] sm:$0xf]
        %v3038 = vld [vmem:[%s3022 + $0x3c] sm:$0xf]
        %v3039 = vld [vmem:[#allocation2 + $0x1] sm:$0xff]
        %v3040 = vpack.c.bf16 %v3039, %v3039
        %s3041 = scalar_lea.vmem [#allocation4], 1600
        %v3042 = vld [vmem:[%s3041] sm:$0xf]
        %v3043 = vld [vmem:[%s3041 + $0x4] sm:$0xf]
        %v3044 = vld [vmem:[%s3041 + $0x8] sm:$0xf]
        %v3045 = vld [vmem:[%s3041 + $0xc] sm:$0xf]
        %v3046 = vld [vmem:[%s3041 + $0x10] sm:$0xf]
        %v3047 = vld [vmem:[%s3041 + $0x14] sm:$0xf]
        %v3048 = vld [vmem:[%s3041 + $0x18] sm:$0xf]
        %v3049 = vld [vmem:[%s3041 + $0x1c] sm:$0xf]
        %v3050 = vld [vmem:[%s3041 + $0x20] sm:$0xf]
        %v3051 = vld [vmem:[%s3041 + $0x24] sm:$0xf]
        %v3052 = vld [vmem:[%s3041 + $0x28] sm:$0xf]
        %v3053 = vld [vmem:[%s3041 + $0x2c] sm:$0xf]
        %v3054 = vld [vmem:[%s3041 + $0x30] sm:$0xf]
        %v3055 = vld [vmem:[%s3041 + $0x34] sm:$0xf]
        %v3056 = vld [vmem:[%s3041 + $0x38] sm:$0xf]
        %v3057 = vld [vmem:[%s3041 + $0x3c] sm:$0xf]
        %v3074 = vunpack.c.l.b16 %v3042
        %v3075 = vunpack.c.l.b16 %v3043
        %v3076 = vunpack.c.l.b16 %v3044
        %v3077 = vunpack.c.l.b16 %v3045
        %v3078 = vunpack.c.l.b16 %v3046
        %v3079 = vunpack.c.l.b16 %v3047
        %v3080 = vunpack.c.l.b16 %v3048
        %v3081 = vunpack.c.l.b16 %v3049
        %v3082 = vunpack.c.l.b16 %v3050
        %v3083 = vunpack.c.l.b16 %v3051
        %v3084 = vunpack.c.l.b16 %v3052
        %v3085 = vunpack.c.l.b16 %v3053
        %v3086 = vunpack.c.l.b16 %v3054
        %v3087 = vunpack.c.l.b16 %v3055
        %v3088 = vunpack.c.l.b16 %v3056
        %v3089 = vunpack.c.l.b16 %v3057
        %v3090 = vpack.c.b16 %v3075, %v3074
        %v3091 = vpack.c.b16 %v3077, %v3076
        %v3092 = vpack.c.b16 %v3079, %v3078
        %v3093 = vpack.c.b16 %v3081, %v3080
        %v3094 = vpack.c.b16 %v3083, %v3082
        %v3095 = vpack.c.b16 %v3085, %v3084
        %v3096 = vpack.c.b16 %v3087, %v3086
        %v3097 = vpack.c.b16 %v3089, %v3088
        %3106 = vmatprep.subr.bf16.mxu0 0
        %3107 = vmatpush1.bf16.msra.mxu0 %v3090
        %3108 = vmatprep.subr.bf16.mxu0 0
        %3109 = vmatpush1.bf16.msra.mxu0 %v3091
        %3110 = vmatprep.subr.bf16.mxu0 0
        %3111 = vmatpush1.bf16.msra.mxu0 %v3092
        %3112 = vmatprep.subr.bf16.mxu0 0
        %3113 = vmatpush1.bf16.msra.mxu0 %v3093
        %3114 = vmatprep.subr.bf16.mxu0 0
        %3115 = vmatpush1.bf16.msra.mxu0 %v3094
        %3116 = vmatprep.subr.bf16.mxu0 0
        %3117 = vmatpush1.bf16.msra.mxu0 %v3095
        %3118 = vmatprep.subr.bf16.mxu0 0
        %3119 = vmatpush1.bf16.msra.mxu0 %v3096
        %3120 = vmatprep.subr.bf16.mxu0 0
        %3121 = vmatpush1.bf16.msra.mxu0 %v3097
        %3122 = vmatprep.subr.bf16.mxu0 0
        %3123 = vmatpush1.bf16.msra.mxu0 0
        %3124 = vmatprep.subr.bf16.mxu0 0
        %3125 = vmatpush1.bf16.msra.mxu0 0
        %3126 = vmatprep.subr.bf16.mxu0 0
        %3127 = vmatpush1.bf16.msra.mxu0 0
        %3128 = vmatprep.subr.bf16.mxu0 0
        %3129 = vmatpush1.bf16.msra.mxu0 0
        %3130 = vmatprep.subr.bf16.mxu0 0
        %3131 = vmatpush1.bf16.msra.mxu0 0
        %3132 = vmatprep.subr.bf16.mxu0 0
        %3133 = vmatpush1.bf16.msra.mxu0 0
        %3134 = vmatprep.subr.bf16.mxu0 0
        %3135 = vmatpush1.bf16.msra.mxu0 0
        %3136 = vmatprep.subr.bf16.mxu0 0
        %3137 = vmatpush1.bf16.msra.mxu0 0
        %3138 = vmatprep.mubr.bf16.mxu0 0
        %3139 = vmatmul.mubr.bf16.gmra.mrb[0].mxu0 %v3040
        %v3140 = vpop.f32.mrb[0].mxu0
        %v3141 = vadd.f32 0.0, %v3140
        %v3142 = vpop.f32.mrb[0].mxu0
        %v3143 = vpop.f32.mrb[0].mxu0
        %v3144 = vpop.f32.mrb[0].mxu0
        %3145 = vdwg.mxu0
        %v3162 = vunpack.c.l.b16 %v3023
        %v3163 = vunpack.c.l.b16 %v3024
        %v3164 = vunpack.c.l.b16 %v3025
        %v3165 = vunpack.c.l.b16 %v3026
        %v3166 = vunpack.c.l.b16 %v3027
        %v3167 = vunpack.c.l.b16 %v3028
        %v3168 = vunpack.c.l.b16 %v3029
        %v3169 = vunpack.c.l.b16 %v3030
        %v3170 = vunpack.c.l.b16 %v3031
        %v3171 = vunpack.c.l.b16 %v3032
        %v3172 = vunpack.c.l.b16 %v3033
        %v3173 = vunpack.c.l.b16 %v3034
        %v3174 = vunpack.c.l.b16 %v3035
        %v3175 = vunpack.c.l.b16 %v3036
        %v3176 = vunpack.c.l.b16 %v3037
        %v3177 = vunpack.c.l.b16 %v3038
        %v3178 = vpack.c.b16 %v3163, %v3162
        %v3179 = vpack.c.b16 %v3165, %v3164
        %v3180 = vpack.c.b16 %v3167, %v3166
        %v3181 = vpack.c.b16 %v3169, %v3168
        %v3182 = vpack.c.b16 %v3171, %v3170
        %v3183 = vpack.c.b16 %v3173, %v3172
        %v3184 = vpack.c.b16 %v3175, %v3174
        %v3185 = vpack.c.b16 %v3177, %v3176
        %3194 = vmatprep.subr.bf16.mxu0 0
        %3195 = vmatpush1.bf16.msra.mxu0 %v3178
        %3196 = vmatprep.subr.bf16.mxu0 0
        %3197 = vmatpush1.bf16.msra.mxu0 %v3179
        %3198 = vmatprep.subr.bf16.mxu0 0
        %3199 = vmatpush1.bf16.msra.mxu0 %v3180
        %3200 = vmatprep.subr.bf16.mxu0 0
        %3201 = vmatpush1.bf16.msra.mxu0 %v3181
        %3202 = vmatprep.subr.bf16.mxu0 0
        %3203 = vmatpush1.bf16.msra.mxu0 %v3182
        %3204 = vmatprep.subr.bf16.mxu0 0
        %3205 = vmatpush1.bf16.msra.mxu0 %v3183
        %3206 = vmatprep.subr.bf16.mxu0 0
        %3207 = vmatpush1.bf16.msra.mxu0 %v3184
        %3208 = vmatprep.subr.bf16.mxu0 0
        %3209 = vmatpush1.bf16.msra.mxu0 %v3185
        %3210 = vmatprep.subr.bf16.mxu0 0
        %3211 = vmatpush1.bf16.msra.mxu0 0
        %3212 = vmatprep.subr.bf16.mxu0 0
        %3213 = vmatpush1.bf16.msra.mxu0 0
        %3214 = vmatprep.subr.bf16.mxu0 0
        %3215 = vmatpush1.bf16.msra.mxu0 0
        %3216 = vmatprep.subr.bf16.mxu0 0
        %3217 = vmatpush1.bf16.msra.mxu0 0
        %3218 = vmatprep.subr.bf16.mxu0 0
        %3219 = vmatpush1.bf16.msra.mxu0 0
        %3220 = vmatprep.subr.bf16.mxu0 0
        %3221 = vmatpush1.bf16.msra.mxu0 0
        %3222 = vmatprep.subr.bf16.mxu0 0
        %3223 = vmatpush1.bf16.msra.mxu0 0
        %3224 = vmatprep.subr.bf16.mxu0 0
        %3225 = vmatpush1.bf16.msra.mxu0 0
        %3226 = vmatprep.mubr.bf16.mxu0 0
        %3227 = vmatmul.mubr.bf16.gmra.mrb[0].mxu0 %v3021
        %v3228 = vpop.f32.mrb[0].mxu0
        %v3229 = vadd.f32 %v3141, %v3228
        %v3230 = vpop.f32.mrb[0].mxu0
        %v3231 = vpop.f32.mrb[0].mxu0
        %v3232 = vpop.f32.mrb[0].mxu0
        %3233 = vdwg.mxu0
        %v3234 = vld [vmem:[#allocation2 + $0x2] sm:$0xff]
        %v3235 = vpack.c.bf16 %v3234, %v3234
        %s3236 = scalar_lea.vmem [#allocation4], 1664
        %v3237 = vld [vmem:[%s3236] sm:$0xf]
        %v3238 = vld [vmem:[%s3236 + $0x4] sm:$0xf]
        %v3239 = vld [vmem:[%s3236 + $0x8] sm:$0xf]
        %v3240 = vld [vmem:[%s3236 + $0xc] sm:$0xf]
        %v3241 = vld [vmem:[%s3236 + $0x10] sm:$0xf]
        %v3242 = vld [vmem:[%s3236 + $0x14] sm:$0xf]
        %v3243 = vld [vmem:[%s3236 + $0x18] sm:$0xf]
        %v3244 = vld [vmem:[%s3236 + $0x1c] sm:$0xf]
        %v3245 = vld [vmem:[%s3236 + $0x20] sm:$0xf]
        %v3246 = vld [vmem:[%s3236 + $0x24] sm:$0xf]
        %v3247 = vld [vmem:[%s3236 + $0x28] sm:$0xf]
        %v3248 = vld [vmem:[%s3236 + $0x2c] sm:$0xf]
        %v3249 = vld [vmem:[%s3236 + $0x30] sm:$0xf]
        %v3250 = vld [vmem:[%s3236 + $0x34] sm:$0xf]
        %v3251 = vld [vmem:[%s3236 + $0x38] sm:$0xf]
        %v3252 = vld [vmem:[%s3236 + $0x3c] sm:$0xf]
        %v3269 = vunpack.c.l.b16 %v3237
        %v3270 = vunpack.c.l.b16 %v3238
        %v3271 = vunpack.c.l.b16 %v3239
        %v3272 = vunpack.c.l.b16 %v3240
        %v3273 = vunpack.c.l.b16 %v3241
        %v3274 = vunpack.c.l.b16 %v3242
        %v3275 = vunpack.c.l.b16 %v3243
        %v3276 = vunpack.c.l.b16 %v3244
        %v3277 = vunpack.c.l.b16 %v3245
        %v3278 = vunpack.c.l.b16 %v3246
        %v3279 = vunpack.c.l.b16 %v3247
        %v3280 = vunpack.c.l.b16 %v3248
        %v3281 = vunpack.c.l.b16 %v3249
        %v3282 = vunpack.c.l.b16 %v3250
        %v3283 = vunpack.c.l.b16 %v3251
        %v3284 = vunpack.c.l.b16 %v3252
        %v3285 = vpack.c.b16 %v3270, %v3269
        %v3286 = vpack.c.b16 %v3272, %v3271
        %v3287 = vpack.c.b16 %v3274, %v3273
        %v3288 = vpack.c.b16 %v3276, %v3275
        %v3289 = vpack.c.b16 %v3278, %v3277
        %v3290 = vpack.c.b16 %v3280, %v3279
        %v3291 = vpack.c.b16 %v3282, %v3281
        %v3292 = vpack.c.b16 %v3284, %v3283
        %3301 = vmatprep.subr.bf16.mxu0 0
        %3302 = vmatpush1.bf16.msra.mxu0 %v3285
        %3303 = vmatprep.subr.bf16.mxu0 0
        %3304 = vmatpush1.bf16.msra.mxu0 %v3286
        %3305 = vmatprep.subr.bf16.mxu0 0
        %3306 = vmatpush1.bf16.msra.mxu0 %v3287
        %3307 = vmatprep.subr.bf16.mxu0 0
        %3308 = vmatpush1.bf16.msra.mxu0 %v3288
        %3309 = vmatprep.subr.bf16.mxu0 0
        %3310 = vmatpush1.bf16.msra.mxu0 %v3289
        %3311 = vmatprep.subr.bf16.mxu0 0
        %3312 = vmatpush1.bf16.msra.mxu0 %v3290
        %3313 = vmatprep.subr.bf16.mxu0 0
        %3314 = vmatpush1.bf16.msra.mxu0 %v3291
        %3315 = vmatprep.subr.bf16.mxu0 0
        %3316 = vmatpush1.bf16.msra.mxu0 %v3292
        %3317 = vmatprep.subr.bf16.mxu0 0
        %3318 = vmatpush1.bf16.msra.mxu0 0
        %3319 = vmatprep.subr.bf16.mxu0 0
        %3320 = vmatpush1.bf16.msra.mxu0 0
        %3321 = vmatprep.subr.bf16.mxu0 0
        %3322 = vmatpush1.bf16.msra.mxu0 0
        %3323 = vmatprep.subr.bf16.mxu0 0
        %3324 = vmatpush1.bf16.msra.mxu0 0
        %3325 = vmatprep.subr.bf16.mxu0 0
        %3326 = vmatpush1.bf16.msra.mxu0 0
        %3327 = vmatprep.subr.bf16.mxu0 0
        %3328 = vmatpush1.bf16.msra.mxu0 0
        %3329 = vmatprep.subr.bf16.mxu0 0
        %3330 = vmatpush1.bf16.msra.mxu0 0
        %3331 = vmatprep.subr.bf16.mxu0 0
        %3332 = vmatpush1.bf16.msra.mxu0 0
        %3333 = vmatprep.mubr.bf16.mxu0 0
        %3334 = vmatmul.mubr.bf16.gmra.mrb[0].mxu0 %v3235
        %v3335 = vpop.f32.mrb[0].mxu0
        %v3336 = vadd.f32 0.0, %v3335
        %v3337 = vpop.f32.mrb[0].mxu0
        %v3338 = vpop.f32.mrb[0].mxu0
        %v3339 = vpop.f32.mrb[0].mxu0
        %3340 = vdwg.mxu0
        %v3341 = vadd.f32 %v3229, %v3336
        %s3342 = scalar_lea.vmem [#allocation7], 8
        %v3343 = vld [vmem:[%s3342] sm:$0x1]
        %v3345 = vlaneseq
        %v3346 = vshrl.u32 %v3345, 7
        %v3347 = vsub.s32 0, %v3346
        %v3348 = vrot.slane %v3343, %v3347
        %v3350 = vadd.f32 %v3341, %v3348
        %vm3351 = vcmp.ge.f32.partialorder %v3350, 0.0
        %v3352 = vstv %s3019
        %v3353 = vmul.f32 %v3352, %v3350
        %v3354 = vsel %vm3351, %v3350, %v3353
        %3355 = vst [vmem:[#allocation3 + $0x1] sm:$0xff] %v3354
        %v3356 = vld [vmem:[#allocation3] sm:$0xff]
        %v3357 = vpack.c.bf16 %v3356, %v3356
        %s3358 = scalar_lea.vmem [#allocation4], 1728
        %v3359 = vld [vmem:[%s3358] sm:$0xf]
        %v3360 = vld [vmem:[%s3358 + $0x4] sm:$0xf]
        %v3361 = vld [vmem:[%s3358 + $0x8] sm:$0xf]
        %v3362 = vld [vmem:[%s3358 + $0xc] sm:$0xf]
        %v3363 = vld [vmem:[%s3358 + $0x10] sm:$0xf]
        %v3364 = vld [vmem:[%s3358 + $0x14] sm:$0xf]
        %v3365 = vld [vmem:[%s3358 + $0x18] sm:$0xf]
        %v3366 = vld [vmem:[%s3358 + $0x1c] sm:$0xf]
        %v3367 = vld [vmem:[%s3358 + $0x20] sm:$0xf]
        %v3368 = vld [vmem:[%s3358 + $0x24] sm:$0xf]
        %v3369 = vld [vmem:[%s3358 + $0x28] sm:$0xf]
        %v3370 = vld [vmem:[%s3358 + $0x2c] sm:$0xf]
        %v3371 = vld [vmem:[%s3358 + $0x30] sm:$0xf]
        %v3372 = vld [vmem:[%s3358 + $0x34] sm:$0xf]
        %v3373 = vld [vmem:[%s3358 + $0x38] sm:$0xf]
        %v3374 = vld [vmem:[%s3358 + $0x3c] sm:$0xf]
        %v3375 = vld [vmem:[#allocation3 + $0x1] sm:$0xff]
        %v3376 = vpack.c.bf16 %v3375, %v3375
        %s3377 = scalar_lea.vmem [#allocation4], 1792
        %v3378 = vld [vmem:[%s3377] sm:$0xf]
        %v3379 = vld [vmem:[%s3377 + $0x4] sm:$0xf]
        %v3380 = vld [vmem:[%s3377 + $0x8] sm:$0xf]
        %v3381 = vld [vmem:[%s3377 + $0xc] sm:$0xf]
        %v3382 = vld [vmem:[%s3377 + $0x10] sm:$0xf]
        %v3383 = vld [vmem:[%s3377 + $0x14] sm:$0xf]
        %v3384 = vld [vmem:[%s3377 + $0x18] sm:$0xf]
        %v3385 = vld [vmem:[%s3377 + $0x1c] sm:$0xf]
        %v3386 = vld [vmem:[%s3377 + $0x20] sm:$0xf]
        %v3387 = vld [vmem:[%s3377 + $0x24] sm:$0xf]
        %v3388 = vld [vmem:[%s3377 + $0x28] sm:$0xf]
        %v3389 = vld [vmem:[%s3377 + $0x2c] sm:$0xf]
        %v3390 = vld [vmem:[%s3377 + $0x30] sm:$0xf]
        %v3391 = vld [vmem:[%s3377 + $0x34] sm:$0xf]
        %v3392 = vld [vmem:[%s3377 + $0x38] sm:$0xf]
        %v3393 = vld [vmem:[%s3377 + $0x3c] sm:$0xf]
        %v3410 = vunpack.c.l.b16 %v3378
        %v3411 = vunpack.c.l.b16 %v3379
        %v3412 = vunpack.c.l.b16 %v3380
        %v3413 = vunpack.c.l.b16 %v3381
        %v3414 = vunpack.c.l.b16 %v3382
        %v3415 = vunpack.c.l.b16 %v3383
        %v3416 = vunpack.c.l.b16 %v3384
        %v3417 = vunpack.c.l.b16 %v3385
        %v3418 = vunpack.c.l.b16 %v3386
        %v3419 = vunpack.c.l.b16 %v3387
        %v3420 = vunpack.c.l.b16 %v3388
        %v3421 = vunpack.c.l.b16 %v3389
        %v3422 = vunpack.c.l.b16 %v3390
        %v3423 = vunpack.c.l.b16 %v3391
        %v3424 = vunpack.c.l.b16 %v3392
        %v3425 = vunpack.c.l.b16 %v3393
        %v3426 = vpack.c.b16 %v3411, %v3410
        %v3427 = vpack.c.b16 %v3413, %v3412
        %v3428 = vpack.c.b16 %v3415, %v3414
        %v3429 = vpack.c.b16 %v3417, %v3416
        %v3430 = vpack.c.b16 %v3419, %v3418
        %v3431 = vpack.c.b16 %v3421, %v3420
        %v3432 = vpack.c.b16 %v3423, %v3422
        %v3433 = vpack.c.b16 %v3425, %v3424
        %3442 = vmatprep.subr.bf16.mxu0 0
        %3443 = vmatpush1.bf16.msra.mxu0 %v3426
        %3444 = vmatprep.subr.bf16.mxu0 0
        %3445 = vmatpush1.bf16.msra.mxu0 %v3427
        %3446 = vmatprep.subr.bf16.mxu0 0
        %3447 = vmatpush1.bf16.msra.mxu0 %v3428
        %3448 = vmatprep.subr.bf16.mxu0 0
        %3449 = vmatpush1.bf16.msra.mxu0 %v3429
        %3450 = vmatprep.subr.bf16.mxu0 0
        %3451 = vmatpush1.bf16.msra.mxu0 %v3430
        %3452 = vmatprep.subr.bf16.mxu0 0
        %3453 = vmatpush1.bf16.msra.mxu0 %v3431
        %3454 = vmatprep.subr.bf16.mxu0 0
        %3455 = vmatpush1.bf16.msra.mxu0 %v3432
        %3456 = vmatprep.subr.bf16.mxu0 0
        %3457 = vmatpush1.bf16.msra.mxu0 %v3433
        %3458 = vmatprep.subr.bf16.mxu0 0
        %3459 = vmatpush1.bf16.msra.mxu0 0
        %3460 = vmatprep.subr.bf16.mxu0 0
        %3461 = vmatpush1.bf16.msra.mxu0 0
        %3462 = vmatprep.subr.bf16.mxu0 0
        %3463 = vmatpush1.bf16.msra.mxu0 0
        %3464 = vmatprep.subr.bf16.mxu0 0
        %3465 = vmatpush1.bf16.msra.mxu0 0
        %3466 = vmatprep.subr.bf16.mxu0 0
        %3467 = vmatpush1.bf16.msra.mxu0 0
        %3468 = vmatprep.subr.bf16.mxu0 0
        %3469 = vmatpush1.bf16.msra.mxu0 0
        %3470 = vmatprep.subr.bf16.mxu0 0
        %3471 = vmatpush1.bf16.msra.mxu0 0
        %3472 = vmatprep.subr.bf16.mxu0 0
        %3473 = vmatpush1.bf16.msra.mxu0 0
        %3474 = vmatprep.mubr.bf16.mxu0 0
        %3475 = vmatmul.mubr.bf16.gmra.mrb[0].mxu0 %v3376
        %v3476 = vpop.f32.mrb[0].mxu0
        %v3477 = vadd.f32 0.0, %v3476
        %v3478 = vpop.f32.mrb[0].mxu0
        %v3479 = vpop.f32.mrb[0].mxu0
        %v3480 = vpop.f32.mrb[0].mxu0
        %3481 = vdwg.mxu0
        %v3498 = vunpack.c.l.b16 %v3359
        %v3499 = vunpack.c.l.b16 %v3360
        %v3500 = vunpack.c.l.b16 %v3361
        %v3501 = vunpack.c.l.b16 %v3362
        %v3502 = vunpack.c.l.b16 %v3363
        %v3503 = vunpack.c.l.b16 %v3364
        %v3504 = vunpack.c.l.b16 %v3365
        %v3505 = vunpack.c.l.b16 %v3366
        %v3506 = vunpack.c.l.b16 %v3367
        %v3507 = vunpack.c.l.b16 %v3368
        %v3508 = vunpack.c.l.b16 %v3369
        %v3509 = vunpack.c.l.b16 %v3370
        %v3510 = vunpack.c.l.b16 %v3371
        %v3511 = vunpack.c.l.b16 %v3372
        %v3512 = vunpack.c.l.b16 %v3373
        %v3513 = vunpack.c.l.b16 %v3374
        %v3514 = vpack.c.b16 %v3499, %v3498
        %v3515 = vpack.c.b16 %v3501, %v3500
        %v3516 = vpack.c.b16 %v3503, %v3502
        %v3517 = vpack.c.b16 %v3505, %v3504
        %v3518 = vpack.c.b16 %v3507, %v3506
        %v3519 = vpack.c.b16 %v3509, %v3508
        %v3520 = vpack.c.b16 %v3511, %v3510
        %v3521 = vpack.c.b16 %v3513, %v3512
        %3530 = vmatprep.subr.bf16.mxu0 0
        %3531 = vmatpush1.bf16.msra.mxu0 %v3514
        %3532 = vmatprep.subr.bf16.mxu0 0
        %3533 = vmatpush1.bf16.msra.mxu0 %v3515
        %3534 = vmatprep.subr.bf16.mxu0 0
        %3535 = vmatpush1.bf16.msra.mxu0 %v3516
        %3536 = vmatprep.subr.bf16.mxu0 0
        %3537 = vmatpush1.bf16.msra.mxu0 %v3517
        %3538 = vmatprep.subr.bf16.mxu0 0
        %3539 = vmatpush1.bf16.msra.mxu0 %v3518
        %3540 = vmatprep.subr.bf16.mxu0 0
        %3541 = vmatpush1.bf16.msra.mxu0 %v3519
        %3542 = vmatprep.subr.bf16.mxu0 0
        %3543 = vmatpush1.bf16.msra.mxu0 %v3520
        %3544 = vmatprep.subr.bf16.mxu0 0
        %3545 = vmatpush1.bf16.msra.mxu0 %v3521
        %3546 = vmatprep.subr.bf16.mxu0 0
        %3547 = vmatpush1.bf16.msra.mxu0 0
        %3548 = vmatprep.subr.bf16.mxu0 0
        %3549 = vmatpush1.bf16.msra.mxu0 0
        %3550 = vmatprep.subr.bf16.mxu0 0
        %3551 = vmatpush1.bf16.msra.mxu0 0
        %3552 = vmatprep.subr.bf16.mxu0 0
        %3553 = vmatpush1.bf16.msra.mxu0 0
        %3554 = vmatprep.subr.bf16.mxu0 0
        %3555 = vmatpush1.bf16.msra.mxu0 0
        %3556 = vmatprep.subr.bf16.mxu0 0
        %3557 = vmatpush1.bf16.msra.mxu0 0
        %3558 = vmatprep.subr.bf16.mxu0 0
        %3559 = vmatpush1.bf16.msra.mxu0 0
        %3560 = vmatprep.subr.bf16.mxu0 0
        %3561 = vmatpush1.bf16.msra.mxu0 0
        %3562 = vmatprep.mubr.bf16.mxu0 0
        %3563 = vmatmul.mubr.bf16.gmra.mrb[0].mxu0 %v3357
        %v3564 = vpop.f32.mrb[0].mxu0
        %v3565 = vadd.f32 %v3477, %v3564
        %v3566 = vpop.f32.mrb[0].mxu0
        %v3567 = vpop.f32.mrb[0].mxu0
        %v3568 = vpop.f32.mrb[0].mxu0
        %3569 = vdwg.mxu0
        %v3570 = vld [vmem:[#allocation3 + $0x2] sm:$0xff]
        %v3571 = vpack.c.bf16 %v3570, %v3570
        %s3572 = scalar_lea.vmem [#allocation4], 1856
        %v3573 = vld [vmem:[%s3572] sm:$0xf]
        %v3574 = vld [vmem:[%s3572 + $0x4] sm:$0xf]
        %v3575 = vld [vmem:[%s3572 + $0x8] sm:$0xf]
        %v3576 = vld [vmem:[%s3572 + $0xc] sm:$0xf]
        %v3577 = vld [vmem:[%s3572 + $0x10] sm:$0xf]
        %v3578 = vld [vmem:[%s3572 + $0x14] sm:$0xf]
        %v3579 = vld [vmem:[%s3572 + $0x18] sm:$0xf]
        %v3580 = vld [vmem:[%s3572 + $0x1c] sm:$0xf]
        %v3581 = vld [vmem:[%s3572 + $0x20] sm:$0xf]
        %v3582 = vld [vmem:[%s3572 + $0x24] sm:$0xf]
        %v3583 = vld [vmem:[%s3572 + $0x28] sm:$0xf]
        %v3584 = vld [vmem:[%s3572 + $0x2c] sm:$0xf]
        %v3585 = vld [vmem:[%s3572 + $0x30] sm:$0xf]
        %v3586 = vld [vmem:[%s3572 + $0x34] sm:$0xf]
        %v3587 = vld [vmem:[%s3572 + $0x38] sm:$0xf]
        %v3588 = vld [vmem:[%s3572 + $0x3c] sm:$0xf]
        %v3605 = vunpack.c.l.b16 %v3573
        %v3606 = vunpack.c.l.b16 %v3574
        %v3607 = vunpack.c.l.b16 %v3575
        %v3608 = vunpack.c.l.b16 %v3576
        %v3609 = vunpack.c.l.b16 %v3577
        %v3610 = vunpack.c.l.b16 %v3578
        %v3611 = vunpack.c.l.b16 %v3579
        %v3612 = vunpack.c.l.b16 %v3580
        %v3613 = vunpack.c.l.b16 %v3581
        %v3614 = vunpack.c.l.b16 %v3582
        %v3615 = vunpack.c.l.b16 %v3583
        %v3616 = vunpack.c.l.b16 %v3584
        %v3617 = vunpack.c.l.b16 %v3585
        %v3618 = vunpack.c.l.b16 %v3586
        %v3619 = vunpack.c.l.b16 %v3587
        %v3620 = vunpack.c.l.b16 %v3588
        %v3621 = vpack.c.b16 %v3606, %v3605
        %v3622 = vpack.c.b16 %v3608, %v3607
        %v3623 = vpack.c.b16 %v3610, %v3609
        %v3624 = vpack.c.b16 %v3612, %v3611
        %v3625 = vpack.c.b16 %v3614, %v3613
        %v3626 = vpack.c.b16 %v3616, %v3615
        %v3627 = vpack.c.b16 %v3618, %v3617
        %v3628 = vpack.c.b16 %v3620, %v3619
        %3637 = vmatprep.subr.bf16.mxu0 0
        %3638 = vmatpush1.bf16.msra.mxu0 %v3621
        %3639 = vmatprep.subr.bf16.mxu0 0
        %3640 = vmatpush1.bf16.msra.mxu0 %v3622
        %3641 = vmatprep.subr.bf16.mxu0 0
        %3642 = vmatpush1.bf16.msra.mxu0 %v3623
        %3643 = vmatprep.subr.bf16.mxu0 0
        %3644 = vmatpush1.bf16.msra.mxu0 %v3624
        %3645 = vmatprep.subr.bf16.mxu0 0
        %3646 = vmatpush1.bf16.msra.mxu0 %v3625
        %3647 = vmatprep.subr.bf16.mxu0 0
        %3648 = vmatpush1.bf16.msra.mxu0 %v3626
        %3649 = vmatprep.subr.bf16.mxu0 0
        %3650 = vmatpush1.bf16.msra.mxu0 %v3627
        %3651 = vmatprep.subr.bf16.mxu0 0
        %3652 = vmatpush1.bf16.msra.mxu0 %v3628
        %3653 = vmatprep.subr.bf16.mxu0 0
        %3654 = vmatpush1.bf16.msra.mxu0 0
        %3655 = vmatprep.subr.bf16.mxu0 0
        %3656 = vmatpush1.bf16.msra.mxu0 0
        %3657 = vmatprep.subr.bf16.mxu0 0
        %3658 = vmatpush1.bf16.msra.mxu0 0
        %3659 = vmatprep.subr.bf16.mxu0 0
        %3660 = vmatpush1.bf16.msra.mxu0 0
        %3661 = vmatprep.subr.bf16.mxu0 0
        %3662 = vmatpush1.bf16.msra.mxu0 0
        %3663 = vmatprep.subr.bf16.mxu0 0
        %3664 = vmatpush1.bf16.msra.mxu0 0
        %3665 = vmatprep.subr.bf16.mxu0 0
        %3666 = vmatpush1.bf16.msra.mxu0 0
        %3667 = vmatprep.subr.bf16.mxu0 0
        %3668 = vmatpush1.bf16.msra.mxu0 0
        %3669 = vmatprep.mubr.bf16.mxu0 0
        %3670 = vmatmul.mubr.bf16.gmra.mrb[0].mxu0 %v3571
        %v3671 = vpop.f32.mrb[0].mxu0
        %v3672 = vadd.f32 0.0, %v3671
        %v3673 = vpop.f32.mrb[0].mxu0
        %v3674 = vpop.f32.mrb[0].mxu0
        %v3675 = vpop.f32.mrb[0].mxu0
        %3676 = vdwg.mxu0
        %v3677 = vadd.f32 %v3565, %v3672
        %s3678 = scalar_lea.vmem [#allocation7], 9
        %v3679 = vld [vmem:[%s3678] sm:$0x1]
        %v3681 = vlaneseq
        %v3682 = vshrl.u32 %v3681, 7
        %v3683 = vsub.s32 0, %v3682
        %v3684 = vrot.slane %v3679, %v3683
        %v3686 = vadd.f32 %v3677, %v3684
        %v3687 = vld [vmem:[#allocation2 + $0x1] sm:$0xff]
        %v3688 = vadd.f32 %v3686, %v3687
        %vm3689 = vcmp.ge.f32.partialorder %v3688, 0.0
        %v3690 = vmul.f32 %v3352, %v3688
        %v3691 = vsel %vm3689, %v3688, %v3690
        %3692 = vst [vmem:[#allocation2 + $0x1] sm:$0xff] %v3691
        %v3693 = vld [vmem:[#allocation2] sm:$0xff]
        %v3694 = vpack.c.bf16 %v3693, %v3693
        %v3695 = vld [vmem:[#allocation10] sm:$0xff]
        %v3696 = vld [vmem:[#allocation10 + $0x8] sm:$0xff]
        %v3697 = vld [vmem:[#allocation10 + $0x10] sm:$0xff]
        %v3698 = vld [vmem:[#allocation10 + $0x18] sm:$0xff]
        %v3699 = vld [vmem:[#allocation10 + $0x20] sm:$0xff]
        %v3700 = vld [vmem:[#allocation10 + $0x28] sm:$0xff]
        %v3701 = vld [vmem:[#allocation10 + $0x30] sm:$0xff]
        %v3702 = vld [vmem:[#allocation10 + $0x38] sm:$0xff]
        %v3703 = vld [vmem:[#allocation10 + $0x40] sm:$0xff]
        %v3704 = vld [vmem:[#allocation10 + $0x48] sm:$0xff]
        %v3705 = vld [vmem:[#allocation10 + $0x50] sm:$0xff]
        %v3706 = vld [vmem:[#allocation10 + $0x58] sm:$0xff]
        %v3707 = vld [vmem:[#allocation10 + $0x60] sm:$0xff]
        %v3708 = vld [vmem:[#allocation10 + $0x68] sm:$0xff]
        %v3709 = vld [vmem:[#allocation10 + $0x70] sm:$0xff]
        %v3710 = vld [vmem:[#allocation10 + $0x78] sm:$0xff]
        %v3711 = vld [vmem:[#allocation10 + $0x80] sm:$0xff]
        %v3712 = vld [vmem:[#allocation10 + $0x88] sm:$0xff]
        %v3713 = vld [vmem:[#allocation10 + $0x90] sm:$0xff]
        %v3714 = vld [vmem:[#allocation10 + $0x98] sm:$0xff]
        %v3715 = vld [vmem:[#allocation10 + $0xa0] sm:$0xff]
        %v3716 = vld [vmem:[#allocation10 + $0xa8] sm:$0xff]
        %v3717 = vld [vmem:[#allocation10 + $0xb0] sm:$0xff]
        %v3718 = vld [vmem:[#allocation10 + $0xb8] sm:$0xff]
        %v3719 = vld [vmem:[#allocation10 + $0xc0] sm:$0xff]
        %v3720 = vld [vmem:[#allocation10 + $0xc8] sm:$0xff]
        %v3721 = vld [vmem:[#allocation10 + $0xd0] sm:$0xff]
        %v3722 = vld [vmem:[#allocation10 + $0xd8] sm:$0xff]
        %v3723 = vld [vmem:[#allocation10 + $0xe0] sm:$0xff]
        %v3724 = vld [vmem:[#allocation10 + $0xe8] sm:$0xff]
        %v3725 = vld [vmem:[#allocation10 + $0xf0] sm:$0xff]
        %v3726 = vld [vmem:[#allocation10 + $0xf8] sm:$0xff]
        %v3727 = vld [vmem:[#allocation10 + $0x100] sm:$0xff]
        %v3728 = vld [vmem:[#allocation10 + $0x108] sm:$0xff]
        %v3729 = vld [vmem:[#allocation10 + $0x110] sm:$0xff]
        %v3730 = vld [vmem:[#allocation10 + $0x118] sm:$0xff]
        %v3731 = vld [vmem:[#allocation10 + $0x120] sm:$0xff]
        %v3732 = vld [vmem:[#allocation10 + $0x128] sm:$0xff]
        %v3733 = vld [vmem:[#allocation10 + $0x130] sm:$0xff]
        %v3734 = vld [vmem:[#allocation10 + $0x138] sm:$0xff]
        %v3735 = vld [vmem:[#allocation10 + $0x140] sm:$0xff]
        %v3736 = vld [vmem:[#allocation10 + $0x148] sm:$0xff]
        %v3737 = vld [vmem:[#allocation10 + $0x150] sm:$0xff]
        %v3738 = vld [vmem:[#allocation10 + $0x158] sm:$0xff]
        %v3739 = vld [vmem:[#allocation10 + $0x160] sm:$0xff]
        %v3740 = vld [vmem:[#allocation10 + $0x168] sm:$0xff]
        %v3741 = vld [vmem:[#allocation10 + $0x170] sm:$0xff]
        %v3742 = vld [vmem:[#allocation10 + $0x178] sm:$0xff]
        %v3743 = vld [vmem:[#allocation10 + $0x180] sm:$0xff]
        %v3744 = vld [vmem:[#allocation10 + $0x188] sm:$0xff]
        %v3745 = vld [vmem:[#allocation10 + $0x190] sm:$0xff]
        %v3746 = vld [vmem:[#allocation10 + $0x198] sm:$0xff]
        %v3747 = vld [vmem:[#allocation10 + $0x1a0] sm:$0xff]
        %v3748 = vld [vmem:[#allocation10 + $0x1a8] sm:$0xff]
        %v3749 = vld [vmem:[#allocation10 + $0x1b0] sm:$0xff]
        %v3750 = vld [vmem:[#allocation10 + $0x1b8] sm:$0xff]
        %v3751 = vld [vmem:[#allocation10 + $0x1c0] sm:$0xff]
        %v3752 = vld [vmem:[#allocation10 + $0x1c8] sm:$0xff]
        %v3753 = vld [vmem:[#allocation10 + $0x1d0] sm:$0xff]
        %v3754 = vld [vmem:[#allocation10 + $0x1d8] sm:$0xff]
        %v3755 = vld [vmem:[#allocation10 + $0x1e0] sm:$0xff]
        %v3756 = vld [vmem:[#allocation10 + $0x1e8] sm:$0xff]
        %v3757 = vld [vmem:[#allocation10 + $0x1f0] sm:$0xff]
        %v3758 = vld [vmem:[#allocation10 + $0x1f8] sm:$0xff]
        %v3759 = vld [vmem:[#allocation10 + $0x200] sm:$0xff]
        %v3760 = vld [vmem:[#allocation10 + $0x208] sm:$0xff]
        %v3761 = vld [vmem:[#allocation10 + $0x210] sm:$0xff]
        %v3762 = vld [vmem:[#allocation10 + $0x218] sm:$0xff]
        %v3763 = vld [vmem:[#allocation10 + $0x220] sm:$0xff]
        %v3764 = vld [vmem:[#allocation10 + $0x228] sm:$0xff]
        %v3765 = vld [vmem:[#allocation10 + $0x230] sm:$0xff]
        %v3766 = vld [vmem:[#allocation10 + $0x238] sm:$0xff]
        %v3767 = vld [vmem:[#allocation10 + $0x240] sm:$0xff]
        %v3768 = vld [vmem:[#allocation10 + $0x248] sm:$0xff]
        %v3769 = vld [vmem:[#allocation10 + $0x250] sm:$0xff]
        %v3770 = vld [vmem:[#allocation10 + $0x258] sm:$0xff]
        %v3771 = vld [vmem:[#allocation10 + $0x260] sm:$0xff]
        %v3772 = vld [vmem:[#allocation10 + $0x268] sm:$0xff]
        %v3773 = vld [vmem:[#allocation10 + $0x270] sm:$0xff]
        %v3774 = vld [vmem:[#allocation10 + $0x278] sm:$0xff]
        %v3775 = vld [vmem:[#allocation10 + $0x280] sm:$0xff]
        %v3776 = vld [vmem:[#allocation10 + $0x288] sm:$0xff]
        %v3777 = vld [vmem:[#allocation10 + $0x290] sm:$0xff]
        %v3778 = vld [vmem:[#allocation10 + $0x298] sm:$0xff]
        %v3779 = vld [vmem:[#allocation10 + $0x2a0] sm:$0xff]
        %v3780 = vld [vmem:[#allocation10 + $0x2a8] sm:$0xff]
        %v3781 = vld [vmem:[#allocation10 + $0x2b0] sm:$0xff]
        %v3782 = vld [vmem:[#allocation10 + $0x2b8] sm:$0xff]
        %v3783 = vld [vmem:[#allocation10 + $0x2c0] sm:$0xff]
        %v3784 = vld [vmem:[#allocation10 + $0x2c8] sm:$0xff]
        %v3785 = vld [vmem:[#allocation10 + $0x2d0] sm:$0xff]
        %v3786 = vld [vmem:[#allocation10 + $0x2d8] sm:$0xff]
        %v3787 = vld [vmem:[#allocation10 + $0x2e0] sm:$0xff]
        %v3788 = vld [vmem:[#allocation10 + $0x2e8] sm:$0xff]
        %v3789 = vld [vmem:[#allocation10 + $0x2f0] sm:$0xff]
        %v3790 = vld [vmem:[#allocation10 + $0x2f8] sm:$0xff]
        %v3791 = vld [vmem:[#allocation10 + $0x300] sm:$0xff]
        %v3792 = vld [vmem:[#allocation10 + $0x308] sm:$0xff]
        %v3793 = vld [vmem:[#allocation10 + $0x310] sm:$0xff]
        %v3794 = vld [vmem:[#allocation10 + $0x318] sm:$0xff]
        %v3795 = vld [vmem:[#allocation10 + $0x320] sm:$0xff]
        %v3796 = vld [vmem:[#allocation10 + $0x328] sm:$0xff]
        %v3797 = vld [vmem:[#allocation10 + $0x330] sm:$0xff]
        %v3798 = vld [vmem:[#allocation10 + $0x338] sm:$0xff]
        %v3799 = vld [vmem:[#allocation10 + $0x340] sm:$0xff]
        %v3800 = vld [vmem:[#allocation10 + $0x348] sm:$0xff]
        %v3801 = vld [vmem:[#allocation10 + $0x350] sm:$0xff]
        %v3802 = vld [vmem:[#allocation10 + $0x358] sm:$0xff]
        %v3803 = vld [vmem:[#allocation10 + $0x360] sm:$0xff]
        %v3804 = vld [vmem:[#allocation10 + $0x368] sm:$0xff]
        %v3805 = vld [vmem:[#allocation10 + $0x370] sm:$0xff]
        %v3806 = vld [vmem:[#allocation10 + $0x378] sm:$0xff]
        %v3807 = vld [vmem:[#allocation10 + $0x380] sm:$0xff]
        %v3808 = vld [vmem:[#allocation10 + $0x388] sm:$0xff]
        %v3809 = vld [vmem:[#allocation10 + $0x390] sm:$0xff]
        %v3810 = vld [vmem:[#allocation10 + $0x398] sm:$0xff]
        %v3811 = vld [vmem:[#allocation10 + $0x3a0] sm:$0xff]
        %v3812 = vld [vmem:[#allocation10 + $0x3a8] sm:$0xff]
        %v3813 = vld [vmem:[#allocation10 + $0x3b0] sm:$0xff]
        %v3814 = vld [vmem:[#allocation10 + $0x3b8] sm:$0xff]
        %v3815 = vld [vmem:[#allocation10 + $0x3c0] sm:$0xff]
        %v3816 = vld [vmem:[#allocation10 + $0x3c8] sm:$0xff]
        %v3817 = vld [vmem:[#allocation10 + $0x3d0] sm:$0xff]
        %v3818 = vld [vmem:[#allocation10 + $0x3d8] sm:$0xff]
        %v3819 = vld [vmem:[#allocation10 + $0x3e0] sm:$0xff]
        %v3820 = vld [vmem:[#allocation10 + $0x3e8] sm:$0xff]
        %v3821 = vld [vmem:[#allocation10 + $0x3f0] sm:$0xff]
        %v3822 = vld [vmem:[#allocation10 + $0x3f8] sm:$0xff]
        %v3823 = vld [vmem:[#allocation10 + $0x400] sm:$0xff]
        %v3824 = vld [vmem:[#allocation10 + $0x408] sm:$0xff]
        %v3825 = vld [vmem:[#allocation10 + $0x410] sm:$0xff]
        %v3826 = vld [vmem:[#allocation10 + $0x418] sm:$0xff]
        %v3827 = vld [vmem:[#allocation10 + $0x420] sm:$0xff]
        %v3828 = vld [vmem:[#allocation10 + $0x428] sm:$0xff]
        %v3829 = vld [vmem:[#allocation10 + $0x430] sm:$0xff]
        %v3830 = vld [vmem:[#allocation10 + $0x438] sm:$0xff]
        %v3831 = vld [vmem:[#allocation10 + $0x440] sm:$0xff]
        %v3832 = vld [vmem:[#allocation10 + $0x448] sm:$0xff]
        %v3833 = vld [vmem:[#allocation10 + $0x450] sm:$0xff]
        %v3834 = vld [vmem:[#allocation10 + $0x458] sm:$0xff]
        %v3835 = vld [vmem:[#allocation10 + $0x460] sm:$0xff]
        %v3836 = vld [vmem:[#allocation10 + $0x468] sm:$0xff]
        %v3837 = vld [vmem:[#allocation10 + $0x470] sm:$0xff]
        %v3838 = vld [vmem:[#allocation10 + $0x478] sm:$0xff]
        %v3839 = vld [vmem:[#allocation10 + $0x480] sm:$0xff]
        %v3840 = vld [vmem:[#allocation10 + $0x488] sm:$0xff]
        %v3841 = vld [vmem:[#allocation10 + $0x490] sm:$0xff]
        %v3842 = vld [vmem:[#allocation10 + $0x498] sm:$0xff]
        %v3843 = vld [vmem:[#allocation10 + $0x4a0] sm:$0xff]
        %v3844 = vld [vmem:[#allocation10 + $0x4a8] sm:$0xff]
        %v3845 = vld [vmem:[#allocation10 + $0x4b0] sm:$0xff]
        %v3846 = vld [vmem:[#allocation10 + $0x4b8] sm:$0xff]
        %v3847 = vld [vmem:[#allocation10 + $0x4c0] sm:$0xff]
        %v3848 = vld [vmem:[#allocation10 + $0x4c8] sm:$0xff]
        %v3849 = vld [vmem:[#allocation10 + $0x4d0] sm:$0xff]
        %v3850 = vld [vmem:[#allocation10 + $0x4d8] sm:$0xff]
        %v3851 = vld [vmem:[#allocation10 + $0x4e0] sm:$0xff]
        %v3852 = vld [vmem:[#allocation10 + $0x4e8] sm:$0xff]
        %v3853 = vld [vmem:[#allocation10 + $0x4f0] sm:$0xff]
        %v3854 = vld [vmem:[#allocation10 + $0x4f8] sm:$0xff]
        %v3855 = vld [vmem:[#allocation10 + $0x500] sm:$0xff]
        %v3856 = vld [vmem:[#allocation10 + $0x508] sm:$0xff]
        %v3857 = vld [vmem:[#allocation10 + $0x510] sm:$0xff]
        %v3858 = vld [vmem:[#allocation10 + $0x518] sm:$0xff]
        %v3859 = vld [vmem:[#allocation10 + $0x520] sm:$0xff]
        %v3860 = vld [vmem:[#allocation10 + $0x528] sm:$0xff]
        %v3861 = vld [vmem:[#allocation10 + $0x530] sm:$0xff]
        %v3862 = vld [vmem:[#allocation10 + $0x538] sm:$0xff]
        %v3863 = vld [vmem:[#allocation10 + $0x540] sm:$0xff]
        %v3864 = vld [vmem:[#allocation10 + $0x548] sm:$0xff]
        %v3865 = vld [vmem:[#allocation10 + $0x550] sm:$0xff]
        %v3866 = vld [vmem:[#allocation10 + $0x558] sm:$0xff]
        %v3867 = vld [vmem:[#allocation10 + $0x560] sm:$0xff]
        %v3868 = vld [vmem:[#allocation10 + $0x568] sm:$0xff]
        %v3869 = vld [vmem:[#allocation10 + $0x570] sm:$0xff]
        %v3870 = vld [vmem:[#allocation10 + $0x578] sm:$0xff]
        %v3871 = vld [vmem:[#allocation10 + $0x580] sm:$0xff]
        %v3872 = vld [vmem:[#allocation10 + $0x588] sm:$0xff]
        %v3873 = vld [vmem:[#allocation10 + $0x590] sm:$0xff]
        %v3874 = vld [vmem:[#allocation10 + $0x598] sm:$0xff]
        %v3875 = vld [vmem:[#allocation10 + $0x5a0] sm:$0xff]
        %v3876 = vld [vmem:[#allocation10 + $0x5a8] sm:$0xff]
        %v3877 = vld [vmem:[#allocation10 + $0x5b0] sm:$0xff]
        %v3878 = vld [vmem:[#allocation10 + $0x5b8] sm:$0xff]
        %v3879 = vld [vmem:[#allocation10 + $0x5c0] sm:$0xff]
        %v3880 = vld [vmem:[#allocation10 + $0x5c8] sm:$0xff]
        %v3881 = vld [vmem:[#allocation10 + $0x5d0] sm:$0xff]
        %v3882 = vld [vmem:[#allocation10 + $0x5d8] sm:$0xff]
        %v3883 = vld [vmem:[#allocation10 + $0x5e0] sm:$0xff]
        %v3884 = vld [vmem:[#allocation10 + $0x5e8] sm:$0xff]
        %v3885 = vld [vmem:[#allocation10 + $0x5f0] sm:$0xff]
        %v3886 = vld [vmem:[#allocation10 + $0x5f8] sm:$0xff]
        %v3887 = vld [vmem:[#allocation10 + $0x600] sm:$0xff]
        %v3888 = vld [vmem:[#allocation10 + $0x608] sm:$0xff]
        %v3889 = vld [vmem:[#allocation10 + $0x610] sm:$0xff]
        %v3890 = vld [vmem:[#allocation10 + $0x618] sm:$0xff]
        %v3891 = vld [vmem:[#allocation10 + $0x620] sm:$0xff]
        %v3892 = vld [vmem:[#allocation10 + $0x628] sm:$0xff]
        %v3893 = vld [vmem:[#allocation10 + $0x630] sm:$0xff]
        %v3894 = vld [vmem:[#allocation10 + $0x638] sm:$0xff]
        %v3895 = vld [vmem:[#allocation10 + $0x640] sm:$0xff]
        %v3896 = vld [vmem:[#allocation10 + $0x648] sm:$0xff]
        %v3897 = vld [vmem:[#allocation10 + $0x650] sm:$0xff]
        %v3898 = vld [vmem:[#allocation10 + $0x658] sm:$0xff]
        %v3899 = vld [vmem:[#allocation10 + $0x660] sm:$0xff]
        %v3900 = vld [vmem:[#allocation10 + $0x668] sm:$0xff]
        %v3901 = vld [vmem:[#allocation10 + $0x670] sm:$0xff]
        %v3902 = vld [vmem:[#allocation10 + $0x678] sm:$0xff]
        %v3903 = vld [vmem:[#allocation10 + $0x680] sm:$0xff]
        %v3904 = vld [vmem:[#allocation10 + $0x688] sm:$0xff]
        %v3905 = vld [vmem:[#allocation10 + $0x690] sm:$0xff]
        %v3906 = vld [vmem:[#allocation10 + $0x698] sm:$0xff]
        %v3907 = vld [vmem:[#allocation10 + $0x6a0] sm:$0xff]
        %v3908 = vld [vmem:[#allocation10 + $0x6a8] sm:$0xff]
        %v3909 = vld [vmem:[#allocation10 + $0x6b0] sm:$0xff]
        %v3910 = vld [vmem:[#allocation10 + $0x6b8] sm:$0xff]
        %v3911 = vld [vmem:[#allocation10 + $0x6c0] sm:$0xff]
        %v3912 = vld [vmem:[#allocation10 + $0x6c8] sm:$0xff]
        %v3913 = vld [vmem:[#allocation10 + $0x6d0] sm:$0xff]
        %v3914 = vld [vmem:[#allocation10 + $0x6d8] sm:$0xff]
        %v3915 = vld [vmem:[#allocation10 + $0x6e0] sm:$0xff]
        %v3916 = vld [vmem:[#allocation10 + $0x6e8] sm:$0xff]
        %v3917 = vld [vmem:[#allocation10 + $0x6f0] sm:$0xff]
        %v3918 = vld [vmem:[#allocation10 + $0x6f8] sm:$0xff]
        %v3919 = vld [vmem:[#allocation10 + $0x700] sm:$0xff]
        %v3920 = vld [vmem:[#allocation10 + $0x708] sm:$0xff]
        %v3921 = vld [vmem:[#allocation10 + $0x710] sm:$0xff]
        %v3922 = vld [vmem:[#allocation10 + $0x718] sm:$0xff]
        %v3923 = vld [vmem:[#allocation10 + $0x720] sm:$0xff]
        %v3924 = vld [vmem:[#allocation10 + $0x728] sm:$0xff]
        %v3925 = vld [vmem:[#allocation10 + $0x730] sm:$0xff]
        %v3926 = vld [vmem:[#allocation10 + $0x738] sm:$0xff]
        %v3927 = vld [vmem:[#allocation10 + $0x740] sm:$0xff]
        %v3928 = vld [vmem:[#allocation10 + $0x748] sm:$0xff]
        %v3929 = vld [vmem:[#allocation10 + $0x750] sm:$0xff]
        %v3930 = vld [vmem:[#allocation10 + $0x758] sm:$0xff]
        %v3931 = vld [vmem:[#allocation10 + $0x760] sm:$0xff]
        %v3932 = vld [vmem:[#allocation10 + $0x768] sm:$0xff]
        %v3933 = vld [vmem:[#allocation10 + $0x770] sm:$0xff]
        %v3934 = vld [vmem:[#allocation10 + $0x778] sm:$0xff]
        %v3935 = vld [vmem:[#allocation10 + $0x780] sm:$0xff]
        %v3936 = vld [vmem:[#allocation10 + $0x788] sm:$0xff]
        %v3937 = vld [vmem:[#allocation10 + $0x790] sm:$0xff]
        %v3938 = vld [vmem:[#allocation10 + $0x798] sm:$0xff]
        %v3939 = vld [vmem:[#allocation10 + $0x7a0] sm:$0xff]
        %v3940 = vld [vmem:[#allocation10 + $0x7a8] sm:$0xff]
        %v3941 = vld [vmem:[#allocation10 + $0x7b0] sm:$0xff]
        %v3942 = vld [vmem:[#allocation10 + $0x7b8] sm:$0xff]
        %v3943 = vld [vmem:[#allocation10 + $0x7c0] sm:$0xff]
        %v3944 = vld [vmem:[#allocation10 + $0x7c8] sm:$0xff]
        %v3945 = vld [vmem:[#allocation10 + $0x7d0] sm:$0xff]
        %v3946 = vld [vmem:[#allocation10 + $0x7d8] sm:$0xff]
        %v3947 = vld [vmem:[#allocation10 + $0x7e0] sm:$0xff]
        %v3948 = vld [vmem:[#allocation10 + $0x7e8] sm:$0xff]
        %v3949 = vld [vmem:[#allocation10 + $0x7f0] sm:$0xff]
        %v3950 = vld [vmem:[#allocation10 + $0x7f8] sm:$0xff]
        %v3951 = vld [vmem:[#allocation2 + $0x1] sm:$0xff]
        %v3952 = vpack.c.bf16 %v3951, %v3951
        %s3953 = scalar_lea.vmem [#allocation10], 2048
        %v3954 = vld [vmem:[%s3953] sm:$0xff]
        %v3955 = vld [vmem:[%s3953 + $0x8] sm:$0xff]
        %v3956 = vld [vmem:[%s3953 + $0x10] sm:$0xff]
        %v3957 = vld [vmem:[%s3953 + $0x18] sm:$0xff]
        %v3958 = vld [vmem:[%s3953 + $0x20] sm:$0xff]
        %v3959 = vld [vmem:[%s3953 + $0x28] sm:$0xff]
        %v3960 = vld [vmem:[%s3953 + $0x30] sm:$0xff]
        %v3961 = vld [vmem:[%s3953 + $0x38] sm:$0xff]
        %v3962 = vld [vmem:[%s3953 + $0x40] sm:$0xff]
        %v3963 = vld [vmem:[%s3953 + $0x48] sm:$0xff]
        %v3964 = vld [vmem:[%s3953 + $0x50] sm:$0xff]
        %v3965 = vld [vmem:[%s3953 + $0x58] sm:$0xff]
        %v3966 = vld [vmem:[%s3953 + $0x60] sm:$0xff]
        %v3967 = vld [vmem:[%s3953 + $0x68] sm:$0xff]
        %v3968 = vld [vmem:[%s3953 + $0x70] sm:$0xff]
        %v3969 = vld [vmem:[%s3953 + $0x78] sm:$0xff]
        %v3970 = vld [vmem:[%s3953 + $0x80] sm:$0xff]
        %v3971 = vld [vmem:[%s3953 + $0x88] sm:$0xff]
        %v3972 = vld [vmem:[%s3953 + $0x90] sm:$0xff]
        %v3973 = vld [vmem:[%s3953 + $0x98] sm:$0xff]
        %v3974 = vld [vmem:[%s3953 + $0xa0] sm:$0xff]
        %v3975 = vld [vmem:[%s3953 + $0xa8] sm:$0xff]
        %v3976 = vld [vmem:[%s3953 + $0xb0] sm:$0xff]
        %v3977 = vld [vmem:[%s3953 + $0xb8] sm:$0xff]
        %v3978 = vld [vmem:[%s3953 + $0xc0] sm:$0xff]
        %v3979 = vld [vmem:[%s3953 + $0xc8] sm:$0xff]
        %v3980 = vld [vmem:[%s3953 + $0xd0] sm:$0xff]
        %v3981 = vld [vmem:[%s3953 + $0xd8] sm:$0xff]
        %v3982 = vld [vmem:[%s3953 + $0xe0] sm:$0xff]
        %v3983 = vld [vmem:[%s3953 + $0xe8] sm:$0xff]
        %v3984 = vld [vmem:[%s3953 + $0xf0] sm:$0xff]
        %v3985 = vld [vmem:[%s3953 + $0xf8] sm:$0xff]
        %v3986 = vld [vmem:[%s3953 + $0x100] sm:$0xff]
        %v3987 = vld [vmem:[%s3953 + $0x108] sm:$0xff]
        %v3988 = vld [vmem:[%s3953 + $0x110] sm:$0xff]
        %v3989 = vld [vmem:[%s3953 + $0x118] sm:$0xff]
        %v3990 = vld [vmem:[%s3953 + $0x120] sm:$0xff]
        %v3991 = vld [vmem:[%s3953 + $0x128] sm:$0xff]
        %v3992 = vld [vmem:[%s3953 + $0x130] sm:$0xff]
        %v3993 = vld [vmem:[%s3953 + $0x138] sm:$0xff]
        %v3994 = vld [vmem:[%s3953 + $0x140] sm:$0xff]
        %v3995 = vld [vmem:[%s3953 + $0x148] sm:$0xff]
        %v3996 = vld [vmem:[%s3953 + $0x150] sm:$0xff]
        %v3997 = vld [vmem:[%s3953 + $0x158] sm:$0xff]
        %v3998 = vld [vmem:[%s3953 + $0x160] sm:$0xff]
        %v3999 = vld [vmem:[%s3953 + $0x168] sm:$0xff]
        %v4000 = vld [vmem:[%s3953 + $0x170] sm:$0xff]
        %v4001 = vld [vmem:[%s3953 + $0x178] sm:$0xff]
        %v4002 = vld [vmem:[%s3953 + $0x180] sm:$0xff]
        %v4003 = vld [vmem:[%s3953 + $0x188] sm:$0xff]
        %v4004 = vld [vmem:[%s3953 + $0x190] sm:$0xff]
        %v4005 = vld [vmem:[%s3953 + $0x198] sm:$0xff]
        %v4006 = vld [vmem:[%s3953 + $0x1a0] sm:$0xff]
        %v4007 = vld [vmem:[%s3953 + $0x1a8] sm:$0xff]
        %v4008 = vld [vmem:[%s3953 + $0x1b0] sm:$0xff]
        %v4009 = vld [vmem:[%s3953 + $0x1b8] sm:$0xff]
        %v4010 = vld [vmem:[%s3953 + $0x1c0] sm:$0xff]
        %v4011 = vld [vmem:[%s3953 + $0x1c8] sm:$0xff]
        %v4012 = vld [vmem:[%s3953 + $0x1d0] sm:$0xff]
        %v4013 = vld [vmem:[%s3953 + $0x1d8] sm:$0xff]
        %v4014 = vld [vmem:[%s3953 + $0x1e0] sm:$0xff]
        %v4015 = vld [vmem:[%s3953 + $0x1e8] sm:$0xff]
        %v4016 = vld [vmem:[%s3953 + $0x1f0] sm:$0xff]
        %v4017 = vld [vmem:[%s3953 + $0x1f8] sm:$0xff]
        %v4018 = vld [vmem:[%s3953 + $0x200] sm:$0xff]
        %v4019 = vld [vmem:[%s3953 + $0x208] sm:$0xff]
        %v4020 = vld [vmem:[%s3953 + $0x210] sm:$0xff]
        %v4021 = vld [vmem:[%s3953 + $0x218] sm:$0xff]
        %v4022 = vld [vmem:[%s3953 + $0x220] sm:$0xff]
        %v4023 = vld [vmem:[%s3953 + $0x228] sm:$0xff]
        %v4024 = vld [vmem:[%s3953 + $0x230] sm:$0xff]
        %v4025 = vld [vmem:[%s3953 + $0x238] sm:$0xff]
        %v4026 = vld [vmem:[%s3953 + $0x240] sm:$0xff]
        %v4027 = vld [vmem:[%s3953 + $0x248] sm:$0xff]
        %v4028 = vld [vmem:[%s3953 + $0x250] sm:$0xff]
        %v4029 = vld [vmem:[%s3953 + $0x258] sm:$0xff]
        %v4030 = vld [vmem:[%s3953 + $0x260] sm:$0xff]
        %v4031 = vld [vmem:[%s3953 + $0x268] sm:$0xff]
        %v4032 = vld [vmem:[%s3953 + $0x270] sm:$0xff]
        %v4033 = vld [vmem:[%s3953 + $0x278] sm:$0xff]
        %v4034 = vld [vmem:[%s3953 + $0x280] sm:$0xff]
        %v4035 = vld [vmem:[%s3953 + $0x288] sm:$0xff]
        %v4036 = vld [vmem:[%s3953 + $0x290] sm:$0xff]
        %v4037 = vld [vmem:[%s3953 + $0x298] sm:$0xff]
        %v4038 = vld [vmem:[%s3953 + $0x2a0] sm:$0xff]
        %v4039 = vld [vmem:[%s3953 + $0x2a8] sm:$0xff]
        %v4040 = vld [vmem:[%s3953 + $0x2b0] sm:$0xff]
        %v4041 = vld [vmem:[%s3953 + $0x2b8] sm:$0xff]
        %v4042 = vld [vmem:[%s3953 + $0x2c0] sm:$0xff]
        %v4043 = vld [vmem:[%s3953 + $0x2c8] sm:$0xff]
        %v4044 = vld [vmem:[%s3953 + $0x2d0] sm:$0xff]
        %v4045 = vld [vmem:[%s3953 + $0x2d8] sm:$0xff]
        %v4046 = vld [vmem:[%s3953 + $0x2e0] sm:$0xff]
        %v4047 = vld [vmem:[%s3953 + $0x2e8] sm:$0xff]
        %v4048 = vld [vmem:[%s3953 + $0x2f0] sm:$0xff]
        %v4049 = vld [vmem:[%s3953 + $0x2f8] sm:$0xff]
        %v4050 = vld [vmem:[%s3953 + $0x300] sm:$0xff]
        %v4051 = vld [vmem:[%s3953 + $0x308] sm:$0xff]
        %v4052 = vld [vmem:[%s3953 + $0x310] sm:$0xff]
        %v4053 = vld [vmem:[%s3953 + $0x318] sm:$0xff]
        %v4054 = vld [vmem:[%s3953 + $0x320] sm:$0xff]
        %v4055 = vld [vmem:[%s3953 + $0x328] sm:$0xff]
        %v4056 = vld [vmem:[%s3953 + $0x330] sm:$0xff]
        %v4057 = vld [vmem:[%s3953 + $0x338] sm:$0xff]
        %v4058 = vld [vmem:[%s3953 + $0x340] sm:$0xff]
        %v4059 = vld [vmem:[%s3953 + $0x348] sm:$0xff]
        %v4060 = vld [vmem:[%s3953 + $0x350] sm:$0xff]
        %v4061 = vld [vmem:[%s3953 + $0x358] sm:$0xff]
        %v4062 = vld [vmem:[%s3953 + $0x360] sm:$0xff]
        %v4063 = vld [vmem:[%s3953 + $0x368] sm:$0xff]
        %v4064 = vld [vmem:[%s3953 + $0x370] sm:$0xff]
        %v4065 = vld [vmem:[%s3953 + $0x378] sm:$0xff]
        %v4066 = vld [vmem:[%s3953 + $0x380] sm:$0xff]
        %v4067 = vld [vmem:[%s3953 + $0x388] sm:$0xff]
        %v4068 = vld [vmem:[%s3953 + $0x390] sm:$0xff]
        %v4069 = vld [vmem:[%s3953 + $0x398] sm:$0xff]
        %v4070 = vld [vmem:[%s3953 + $0x3a0] sm:$0xff]
        %v4071 = vld [vmem:[%s3953 + $0x3a8] sm:$0xff]
        %v4072 = vld [vmem:[%s3953 + $0x3b0] sm:$0xff]
        %v4073 = vld [vmem:[%s3953 + $0x3b8] sm:$0xff]
        %v4074 = vld [vmem:[%s3953 + $0x3c0] sm:$0xff]
        %v4075 = vld [vmem:[%s3953 + $0x3c8] sm:$0xff]
        %v4076 = vld [vmem:[%s3953 + $0x3d0] sm:$0xff]
        %v4077 = vld [vmem:[%s3953 + $0x3d8] sm:$0xff]
        %v4078 = vld [vmem:[%s3953 + $0x3e0] sm:$0xff]
        %v4079 = vld [vmem:[%s3953 + $0x3e8] sm:$0xff]
        %v4080 = vld [vmem:[%s3953 + $0x3f0] sm:$0xff]
        %v4081 = vld [vmem:[%s3953 + $0x3f8] sm:$0xff]
        %v4082 = vld [vmem:[%s3953 + $0x400] sm:$0xff]
        %v4083 = vld [vmem:[%s3953 + $0x408] sm:$0xff]
        %v4084 = vld [vmem:[%s3953 + $0x410] sm:$0xff]
        %v4085 = vld [vmem:[%s3953 + $0x418] sm:$0xff]
        %v4086 = vld [vmem:[%s3953 + $0x420] sm:$0xff]
        %v4087 = vld [vmem:[%s3953 + $0x428] sm:$0xff]
        %v4088 = vld [vmem:[%s3953 + $0x430] sm:$0xff]
        %v4089 = vld [vmem:[%s3953 + $0x438] sm:$0xff]
        %v4090 = vld [vmem:[%s3953 + $0x440] sm:$0xff]
        %v4091 = vld [vmem:[%s3953 + $0x448] sm:$0xff]
        %v4092 = vld [vmem:[%s3953 + $0x450] sm:$0xff]
        %v4093 = vld [vmem:[%s3953 + $0x458] sm:$0xff]
        %v4094 = vld [vmem:[%s3953 + $0x460] sm:$0xff]
        %v4095 = vld [vmem:[%s3953 + $0x468] sm:$0xff]
        %v4096 = vld [vmem:[%s3953 + $0x470] sm:$0xff]
        %v4097 = vld [vmem:[%s3953 + $0x478] sm:$0xff]
        %v4098 = vld [vmem:[%s3953 + $0x480] sm:$0xff]
        %v4099 = vld [vmem:[%s3953 + $0x488] sm:$0xff]
        %v4100 = vld [vmem:[%s3953 + $0x490] sm:$0xff]
        %v4101 = vld [vmem:[%s3953 + $0x498] sm:$0xff]
        %v4102 = vld [vmem:[%s3953 + $0x4a0] sm:$0xff]
        %v4103 = vld [vmem:[%s3953 + $0x4a8] sm:$0xff]
        %v4104 = vld [vmem:[%s3953 + $0x4b0] sm:$0xff]
        %v4105 = vld [vmem:[%s3953 + $0x4b8] sm:$0xff]
        %v4106 = vld [vmem:[%s3953 + $0x4c0] sm:$0xff]
        %v4107 = vld [vmem:[%s3953 + $0x4c8] sm:$0xff]
        %v4108 = vld [vmem:[%s3953 + $0x4d0] sm:$0xff]
        %v4109 = vld [vmem:[%s3953 + $0x4d8] sm:$0xff]
        %v4110 = vld [vmem:[%s3953 + $0x4e0] sm:$0xff]
        %v4111 = vld [vmem:[%s3953 + $0x4e8] sm:$0xff]
        %v4112 = vld [vmem:[%s3953 + $0x4f0] sm:$0xff]
        %v4113 = vld [vmem:[%s3953 + $0x4f8] sm:$0xff]
        %v4114 = vld [vmem:[%s3953 + $0x500] sm:$0xff]
        %v4115 = vld [vmem:[%s3953 + $0x508] sm:$0xff]
        %v4116 = vld [vmem:[%s3953 + $0x510] sm:$0xff]
        %v4117 = vld [vmem:[%s3953 + $0x518] sm:$0xff]
        %v4118 = vld [vmem:[%s3953 + $0x520] sm:$0xff]
        %v4119 = vld [vmem:[%s3953 + $0x528] sm:$0xff]
        %v4120 = vld [vmem:[%s3953 + $0x530] sm:$0xff]
        %v4121 = vld [vmem:[%s3953 + $0x538] sm:$0xff]
        %v4122 = vld [vmem:[%s3953 + $0x540] sm:$0xff]
        %v4123 = vld [vmem:[%s3953 + $0x548] sm:$0xff]
        %v4124 = vld [vmem:[%s3953 + $0x550] sm:$0xff]
        %v4125 = vld [vmem:[%s3953 + $0x558] sm:$0xff]
        %v4126 = vld [vmem:[%s3953 + $0x560] sm:$0xff]
        %v4127 = vld [vmem:[%s3953 + $0x568] sm:$0xff]
        %v4128 = vld [vmem:[%s3953 + $0x570] sm:$0xff]
        %v4129 = vld [vmem:[%s3953 + $0x578] sm:$0xff]
        %v4130 = vld [vmem:[%s3953 + $0x580] sm:$0xff]
        %v4131 = vld [vmem:[%s3953 + $0x588] sm:$0xff]
        %v4132 = vld [vmem:[%s3953 + $0x590] sm:$0xff]
        %v4133 = vld [vmem:[%s3953 + $0x598] sm:$0xff]
        %v4134 = vld [vmem:[%s3953 + $0x5a0] sm:$0xff]
        %v4135 = vld [vmem:[%s3953 + $0x5a8] sm:$0xff]
        %v4136 = vld [vmem:[%s3953 + $0x5b0] sm:$0xff]
        %v4137 = vld [vmem:[%s3953 + $0x5b8] sm:$0xff]
        %v4138 = vld [vmem:[%s3953 + $0x5c0] sm:$0xff]
        %v4139 = vld [vmem:[%s3953 + $0x5c8] sm:$0xff]
        %v4140 = vld [vmem:[%s3953 + $0x5d0] sm:$0xff]
        %v4141 = vld [vmem:[%s3953 + $0x5d8] sm:$0xff]
        %v4142 = vld [vmem:[%s3953 + $0x5e0] sm:$0xff]
        %v4143 = vld [vmem:[%s3953 + $0x5e8] sm:$0xff]
        %v4144 = vld [vmem:[%s3953 + $0x5f0] sm:$0xff]
        %v4145 = vld [vmem:[%s3953 + $0x5f8] sm:$0xff]
        %v4146 = vld [vmem:[%s3953 + $0x600] sm:$0xff]
        %v4147 = vld [vmem:[%s3953 + $0x608] sm:$0xff]
        %v4148 = vld [vmem:[%s3953 + $0x610] sm:$0xff]
        %v4149 = vld [vmem:[%s3953 + $0x618] sm:$0xff]
        %v4150 = vld [vmem:[%s3953 + $0x620] sm:$0xff]
        %v4151 = vld [vmem:[%s3953 + $0x628] sm:$0xff]
        %v4152 = vld [vmem:[%s3953 + $0x630] sm:$0xff]
        %v4153 = vld [vmem:[%s3953 + $0x638] sm:$0xff]
        %v4154 = vld [vmem:[%s3953 + $0x640] sm:$0xff]
        %v4155 = vld [vmem:[%s3953 + $0x648] sm:$0xff]
        %v4156 = vld [vmem:[%s3953 + $0x650] sm:$0xff]
        %v4157 = vld [vmem:[%s3953 + $0x658] sm:$0xff]
        %v4158 = vld [vmem:[%s3953 + $0x660] sm:$0xff]
        %v4159 = vld [vmem:[%s3953 + $0x668] sm:$0xff]
        %v4160 = vld [vmem:[%s3953 + $0x670] sm:$0xff]
        %v4161 = vld [vmem:[%s3953 + $0x678] sm:$0xff]
        %v4162 = vld [vmem:[%s3953 + $0x680] sm:$0xff]
        %v4163 = vld [vmem:[%s3953 + $0x688] sm:$0xff]
        %v4164 = vld [vmem:[%s3953 + $0x690] sm:$0xff]
        %v4165 = vld [vmem:[%s3953 + $0x698] sm:$0xff]
        %v4166 = vld [vmem:[%s3953 + $0x6a0] sm:$0xff]
        %v4167 = vld [vmem:[%s3953 + $0x6a8] sm:$0xff]
        %v4168 = vld [vmem:[%s3953 + $0x6b0] sm:$0xff]
        %v4169 = vld [vmem:[%s3953 + $0x6b8] sm:$0xff]
        %v4170 = vld [vmem:[%s3953 + $0x6c0] sm:$0xff]
        %v4171 = vld [vmem:[%s3953 + $0x6c8] sm:$0xff]
        %v4172 = vld [vmem:[%s3953 + $0x6d0] sm:$0xff]
        %v4173 = vld [vmem:[%s3953 + $0x6d8] sm:$0xff]
        %v4174 = vld [vmem:[%s3953 + $0x6e0] sm:$0xff]
        %v4175 = vld [vmem:[%s3953 + $0x6e8] sm:$0xff]
        %v4176 = vld [vmem:[%s3953 + $0x6f0] sm:$0xff]
        %v4177 = vld [vmem:[%s3953 + $0x6f8] sm:$0xff]
        %v4178 = vld [vmem:[%s3953 + $0x700] sm:$0xff]
        %v4179 = vld [vmem:[%s3953 + $0x708] sm:$0xff]
        %v4180 = vld [vmem:[%s3953 + $0x710] sm:$0xff]
        %v4181 = vld [vmem:[%s3953 + $0x718] sm:$0xff]
        %v4182 = vld [vmem:[%s3953 + $0x720] sm:$0xff]
        %v4183 = vld [vmem:[%s3953 + $0x728] sm:$0xff]
        %v4184 = vld [vmem:[%s3953 + $0x730] sm:$0xff]
        %v4185 = vld [vmem:[%s3953 + $0x738] sm:$0xff]
        %v4186 = vld [vmem:[%s3953 + $0x740] sm:$0xff]
        %v4187 = vld [vmem:[%s3953 + $0x748] sm:$0xff]
        %v4188 = vld [vmem:[%s3953 + $0x750] sm:$0xff]
        %v4189 = vld [vmem:[%s3953 + $0x758] sm:$0xff]
        %v4190 = vld [vmem:[%s3953 + $0x760] sm:$0xff]
        %v4191 = vld [vmem:[%s3953 + $0x768] sm:$0xff]
        %v4192 = vld [vmem:[%s3953 + $0x770] sm:$0xff]
        %v4193 = vld [vmem:[%s3953 + $0x778] sm:$0xff]
        %v4194 = vld [vmem:[%s3953 + $0x780] sm:$0xff]
        %v4195 = vld [vmem:[%s3953 + $0x788] sm:$0xff]
        %v4196 = vld [vmem:[%s3953 + $0x790] sm:$0xff]
        %v4197 = vld [vmem:[%s3953 + $0x798] sm:$0xff]
        %v4198 = vld [vmem:[%s3953 + $0x7a0] sm:$0xff]
        %v4199 = vld [vmem:[%s3953 + $0x7a8] sm:$0xff]
        %v4200 = vld [vmem:[%s3953 + $0x7b0] sm:$0xff]
        %v4201 = vld [vmem:[%s3953 + $0x7b8] sm:$0xff]
        %v4202 = vld [vmem:[%s3953 + $0x7c0] sm:$0xff]
        %v4203 = vld [vmem:[%s3953 + $0x7c8] sm:$0xff]
        %v4204 = vld [vmem:[%s3953 + $0x7d0] sm:$0xff]
        %v4205 = vld [vmem:[%s3953 + $0x7d8] sm:$0xff]
        %v4206 = vld [vmem:[%s3953 + $0x7e0] sm:$0xff]
        %v4207 = vld [vmem:[%s3953 + $0x7e8] sm:$0xff]
        %v4208 = vld [vmem:[%s3953 + $0x7f0] sm:$0xff]
        %v4209 = vld [vmem:[%s3953 + $0x7f8] sm:$0xff]
        %v4466 = vunpack.c.l.b16 %v3954
        %v4467 = vunpack.c.h.b16 %v3954
        %v4468 = vunpack.c.l.b16 %v3955
        %v4469 = vunpack.c.h.b16 %v3955
        %v4470 = vunpack.c.l.b16 %v3956
        %v4471 = vunpack.c.h.b16 %v3956
        %v4472 = vunpack.c.l.b16 %v3957
        %v4473 = vunpack.c.h.b16 %v3957
        %v4474 = vunpack.c.l.b16 %v3958
        %v4475 = vunpack.c.h.b16 %v3958
        %v4476 = vunpack.c.l.b16 %v3959
        %v4477 = vunpack.c.h.b16 %v3959
        %v4478 = vunpack.c.l.b16 %v3960
        %v4479 = vunpack.c.h.b16 %v3960
        %v4480 = vunpack.c.l.b16 %v3961
        %v4481 = vunpack.c.h.b16 %v3961
        %v4482 = vunpack.c.l.b16 %v3962
        %v4483 = vunpack.c.h.b16 %v3962
        %v4484 = vunpack.c.l.b16 %v3963
        %v4485 = vunpack.c.h.b16 %v3963
        %v4486 = vunpack.c.l.b16 %v3964
        %v4487 = vunpack.c.h.b16 %v3964
        %v4488 = vunpack.c.l.b16 %v3965
        %v4489 = vunpack.c.h.b16 %v3965
        %v4490 = vunpack.c.l.b16 %v3966
        %v4491 = vunpack.c.h.b16 %v3966
        %v4492 = vunpack.c.l.b16 %v3967
        %v4493 = vunpack.c.h.b16 %v3967
        %v4494 = vunpack.c.l.b16 %v3968
        %v4495 = vunpack.c.h.b16 %v3968
        %v4496 = vunpack.c.l.b16 %v3969
        %v4497 = vunpack.c.h.b16 %v3969
        %v4498 = vunpack.c.l.b16 %v3970
        %v4499 = vunpack.c.h.b16 %v3970
        %v4500 = vunpack.c.l.b16 %v3971
        %v4501 = vunpack.c.h.b16 %v3971
        %v4502 = vunpack.c.l.b16 %v3972
        %v4503 = vunpack.c.h.b16 %v3972
        %v4504 = vunpack.c.l.b16 %v3973
        %v4505 = vunpack.c.h.b16 %v3973
        %v4506 = vunpack.c.l.b16 %v3974
        %v4507 = vunpack.c.h.b16 %v3974
        %v4508 = vunpack.c.l.b16 %v3975
        %v4509 = vunpack.c.h.b16 %v3975
        %v4510 = vunpack.c.l.b16 %v3976
        %v4511 = vunpack.c.h.b16 %v3976
        %v4512 = vunpack.c.l.b16 %v3977
        %v4513 = vunpack.c.h.b16 %v3977
        %v4514 = vunpack.c.l.b16 %v3978
        %v4515 = vunpack.c.h.b16 %v3978
        %v4516 = vunpack.c.l.b16 %v3979
        %v4517 = vunpack.c.h.b16 %v3979
        %v4518 = vunpack.c.l.b16 %v3980
        %v4519 = vunpack.c.h.b16 %v3980
        %v4520 = vunpack.c.l.b16 %v3981
        %v4521 = vunpack.c.h.b16 %v3981
        %v4522 = vunpack.c.l.b16 %v3982
        %v4523 = vunpack.c.h.b16 %v3982
        %v4524 = vunpack.c.l.b16 %v3983
        %v4525 = vunpack.c.h.b16 %v3983
        %v4526 = vunpack.c.l.b16 %v3984
        %v4527 = vunpack.c.h.b16 %v3984
        %v4528 = vunpack.c.l.b16 %v3985
        %v4529 = vunpack.c.h.b16 %v3985
        %v4530 = vunpack.c.l.b16 %v3986
        %v4531 = vunpack.c.h.b16 %v3986
        %v4532 = vunpack.c.l.b16 %v3987
        %v4533 = vunpack.c.h.b16 %v3987
        %v4534 = vunpack.c.l.b16 %v3988
        %v4535 = vunpack.c.h.b16 %v3988
        %v4536 = vunpack.c.l.b16 %v3989
        %v4537 = vunpack.c.h.b16 %v3989
        %v4538 = vunpack.c.l.b16 %v3990
        %v4539 = vunpack.c.h.b16 %v3990
        %v4540 = vunpack.c.l.b16 %v3991
        %v4541 = vunpack.c.h.b16 %v3991
        %v4542 = vunpack.c.l.b16 %v3992
        %v4543 = vunpack.c.h.b16 %v3992
        %v4544 = vunpack.c.l.b16 %v3993
        %v4545 = vunpack.c.h.b16 %v3993
        %v4546 = vunpack.c.l.b16 %v3994
        %v4547 = vunpack.c.h.b16 %v3994
        %v4548 = vunpack.c.l.b16 %v3995
        %v4549 = vunpack.c.h.b16 %v3995
        %v4550 = vunpack.c.l.b16 %v3996
        %v4551 = vunpack.c.h.b16 %v3996
        %v4552 = vunpack.c.l.b16 %v3997
        %v4553 = vunpack.c.h.b16 %v3997
        %v4554 = vunpack.c.l.b16 %v3998
        %v4555 = vunpack.c.h.b16 %v3998
        %v4556 = vunpack.c.l.b16 %v3999
        %v4557 = vunpack.c.h.b16 %v3999
        %v4558 = vunpack.c.l.b16 %v4000
        %v4559 = vunpack.c.h.b16 %v4000
        %v4560 = vunpack.c.l.b16 %v4001
        %v4561 = vunpack.c.h.b16 %v4001
        %v4562 = vunpack.c.l.b16 %v4002
        %v4563 = vunpack.c.h.b16 %v4002
        %v4564 = vunpack.c.l.b16 %v4003
        %v4565 = vunpack.c.h.b16 %v4003
        %v4566 = vunpack.c.l.b16 %v4004
        %v4567 = vunpack.c.h.b16 %v4004
        %v4568 = vunpack.c.l.b16 %v4005
        %v4569 = vunpack.c.h.b16 %v4005
        %v4570 = vunpack.c.l.b16 %v4006
        %v4571 = vunpack.c.h.b16 %v4006
        %v4572 = vunpack.c.l.b16 %v4007
        %v4573 = vunpack.c.h.b16 %v4007
        %v4574 = vunpack.c.l.b16 %v4008
        %v4575 = vunpack.c.h.b16 %v4008
        %v4576 = vunpack.c.l.b16 %v4009
        %v4577 = vunpack.c.h.b16 %v4009
        %v4578 = vunpack.c.l.b16 %v4010
        %v4579 = vunpack.c.h.b16 %v4010
        %v4580 = vunpack.c.l.b16 %v4011
        %v4581 = vunpack.c.h.b16 %v4011
        %v4582 = vunpack.c.l.b16 %v4012
        %v4583 = vunpack.c.h.b16 %v4012
        %v4584 = vunpack.c.l.b16 %v4013
        %v4585 = vunpack.c.h.b16 %v4013
        %v4586 = vunpack.c.l.b16 %v4014
        %v4587 = vunpack.c.h.b16 %v4014
        %v4588 = vunpack.c.l.b16 %v4015
        %v4589 = vunpack.c.h.b16 %v4015
        %v4590 = vunpack.c.l.b16 %v4016
        %v4591 = vunpack.c.h.b16 %v4016
        %v4592 = vunpack.c.l.b16 %v4017
        %v4593 = vunpack.c.h.b16 %v4017
        %v4594 = vunpack.c.l.b16 %v4018
        %v4595 = vunpack.c.h.b16 %v4018
        %v4596 = vunpack.c.l.b16 %v4019
        %v4597 = vunpack.c.h.b16 %v4019
        %v4598 = vunpack.c.l.b16 %v4020
        %v4599 = vunpack.c.h.b16 %v4020
        %v4600 = vunpack.c.l.b16 %v4021
        %v4601 = vunpack.c.h.b16 %v4021
        %v4602 = vunpack.c.l.b16 %v4022
        %v4603 = vunpack.c.h.b16 %v4022
        %v4604 = vunpack.c.l.b16 %v4023
        %v4605 = vunpack.c.h.b16 %v4023
        %v4606 = vunpack.c.l.b16 %v4024
        %v4607 = vunpack.c.h.b16 %v4024
        %v4608 = vunpack.c.l.b16 %v4025
        %v4609 = vunpack.c.h.b16 %v4025
        %v4610 = vunpack.c.l.b16 %v4026
        %v4611 = vunpack.c.h.b16 %v4026
        %v4612 = vunpack.c.l.b16 %v4027
        %v4613 = vunpack.c.h.b16 %v4027
        %v4614 = vunpack.c.l.b16 %v4028
        %v4615 = vunpack.c.h.b16 %v4028
        %v4616 = vunpack.c.l.b16 %v4029
        %v4617 = vunpack.c.h.b16 %v4029
        %v4618 = vunpack.c.l.b16 %v4030
        %v4619 = vunpack.c.h.b16 %v4030
        %v4620 = vunpack.c.l.b16 %v4031
        %v4621 = vunpack.c.h.b16 %v4031
        %v4622 = vunpack.c.l.b16 %v4032
        %v4623 = vunpack.c.h.b16 %v4032
        %v4624 = vunpack.c.l.b16 %v4033
        %v4625 = vunpack.c.h.b16 %v4033
        %v4626 = vunpack.c.l.b16 %v4034
        %v4627 = vunpack.c.h.b16 %v4034
        %v4628 = vunpack.c.l.b16 %v4035
        %v4629 = vunpack.c.h.b16 %v4035
        %v4630 = vunpack.c.l.b16 %v4036
        %v4631 = vunpack.c.h.b16 %v4036
        %v4632 = vunpack.c.l.b16 %v4037
        %v4633 = vunpack.c.h.b16 %v4037
        %v4634 = vunpack.c.l.b16 %v4038
        %v4635 = vunpack.c.h.b16 %v4038
        %v4636 = vunpack.c.l.b16 %v4039
        %v4637 = vunpack.c.h.b16 %v4039
        %v4638 = vunpack.c.l.b16 %v4040
        %v4639 = vunpack.c.h.b16 %v4040
        %v4640 = vunpack.c.l.b16 %v4041
        %v4641 = vunpack.c.h.b16 %v4041
        %v4642 = vunpack.c.l.b16 %v4042
        %v4643 = vunpack.c.h.b16 %v4042
        %v4644 = vunpack.c.l.b16 %v4043
        %v4645 = vunpack.c.h.b16 %v4043
        %v4646 = vunpack.c.l.b16 %v4044
        %v4647 = vunpack.c.h.b16 %v4044
        %v4648 = vunpack.c.l.b16 %v4045
        %v4649 = vunpack.c.h.b16 %v4045
        %v4650 = vunpack.c.l.b16 %v4046
        %v4651 = vunpack.c.h.b16 %v4046
        %v4652 = vunpack.c.l.b16 %v4047
        %v4653 = vunpack.c.h.b16 %v4047
        %v4654 = vunpack.c.l.b16 %v4048
        %v4655 = vunpack.c.h.b16 %v4048
        %v4656 = vunpack.c.l.b16 %v4049
        %v4657 = vunpack.c.h.b16 %v4049
        %v4658 = vunpack.c.l.b16 %v4050
        %v4659 = vunpack.c.h.b16 %v4050
        %v4660 = vunpack.c.l.b16 %v4051
        %v4661 = vunpack.c.h.b16 %v4051
        %v4662 = vunpack.c.l.b16 %v4052
        %v4663 = vunpack.c.h.b16 %v4052
        %v4664 = vunpack.c.l.b16 %v4053
        %v4665 = vunpack.c.h.b16 %v4053
        %v4666 = vunpack.c.l.b16 %v4054
        %v4667 = vunpack.c.h.b16 %v4054
        %v4668 = vunpack.c.l.b16 %v4055
        %v4669 = vunpack.c.h.b16 %v4055
        %v4670 = vunpack.c.l.b16 %v4056
        %v4671 = vunpack.c.h.b16 %v4056
        %v4672 = vunpack.c.l.b16 %v4057
        %v4673 = vunpack.c.h.b16 %v4057
        %v4674 = vunpack.c.l.b16 %v4058
        %v4675 = vunpack.c.h.b16 %v4058
        %v4676 = vunpack.c.l.b16 %v4059
        %v4677 = vunpack.c.h.b16 %v4059
        %v4678 = vunpack.c.l.b16 %v4060
        %v4679 = vunpack.c.h.b16 %v4060
        %v4680 = vunpack.c.l.b16 %v4061
        %v4681 = vunpack.c.h.b16 %v4061
        %v4682 = vunpack.c.l.b16 %v4062
        %v4683 = vunpack.c.h.b16 %v4062
        %v4684 = vunpack.c.l.b16 %v4063
        %v4685 = vunpack.c.h.b16 %v4063
        %v4686 = vunpack.c.l.b16 %v4064
        %v4687 = vunpack.c.h.b16 %v4064
        %v4688 = vunpack.c.l.b16 %v4065
        %v4689 = vunpack.c.h.b16 %v4065
        %v4690 = vunpack.c.l.b16 %v4066
        %v4691 = vunpack.c.h.b16 %v4066
        %v4692 = vunpack.c.l.b16 %v4067
        %v4693 = vunpack.c.h.b16 %v4067
        %v4694 = vunpack.c.l.b16 %v4068
        %v4695 = vunpack.c.h.b16 %v4068
        %v4696 = vunpack.c.l.b16 %v4069
        %v4697 = vunpack.c.h.b16 %v4069
        %v4698 = vunpack.c.l.b16 %v4070
        %v4699 = vunpack.c.h.b16 %v4070
        %v4700 = vunpack.c.l.b16 %v4071
        %v4701 = vunpack.c.h.b16 %v4071
        %v4702 = vunpack.c.l.b16 %v4072
        %v4703 = vunpack.c.h.b16 %v4072
        %v4704 = vunpack.c.l.b16 %v4073
        %v4705 = vunpack.c.h.b16 %v4073
        %v4706 = vunpack.c.l.b16 %v4074
        %v4707 = vunpack.c.h.b16 %v4074
        %v4708 = vunpack.c.l.b16 %v4075
        %v4709 = vunpack.c.h.b16 %v4075
        %v4710 = vunpack.c.l.b16 %v4076
        %v4711 = vunpack.c.h.b16 %v4076
        %v4712 = vunpack.c.l.b16 %v4077
        %v4713 = vunpack.c.h.b16 %v4077
        %v4714 = vunpack.c.l.b16 %v4078
        %v4715 = vunpack.c.h.b16 %v4078
        %v4716 = vunpack.c.l.b16 %v4079
        %v4717 = vunpack.c.h.b16 %v4079
        %v4718 = vunpack.c.l.b16 %v4080
        %v4719 = vunpack.c.h.b16 %v4080
        %v4720 = vunpack.c.l.b16 %v4081
        %v4721 = vunpack.c.h.b16 %v4081
        %v4722 = vunpack.c.l.b16 %v4082
        %v4723 = vunpack.c.h.b16 %v4082
        %v4724 = vunpack.c.l.b16 %v4083
        %v4725 = vunpack.c.h.b16 %v4083
        %v4726 = vunpack.c.l.b16 %v4084
        %v4727 = vunpack.c.h.b16 %v4084
        %v4728 = vunpack.c.l.b16 %v4085
        %v4729 = vunpack.c.h.b16 %v4085
        %v4730 = vunpack.c.l.b16 %v4086
        %v4731 = vunpack.c.h.b16 %v4086
        %v4732 = vunpack.c.l.b16 %v4087
        %v4733 = vunpack.c.h.b16 %v4087
        %v4734 = vunpack.c.l.b16 %v4088
        %v4735 = vunpack.c.h.b16 %v4088
        %v4736 = vunpack.c.l.b16 %v4089
        %v4737 = vunpack.c.h.b16 %v4089
        %v4738 = vunpack.c.l.b16 %v4090
        %v4739 = vunpack.c.h.b16 %v4090
        %v4740 = vunpack.c.l.b16 %v4091
        %v4741 = vunpack.c.h.b16 %v4091
        %v4742 = vunpack.c.l.b16 %v4092
        %v4743 = vunpack.c.h.b16 %v4092
        %v4744 = vunpack.c.l.b16 %v4093
        %v4745 = vunpack.c.h.b16 %v4093
        %v4746 = vunpack.c.l.b16 %v4094
        %v4747 = vunpack.c.h.b16 %v4094
        %v4748 = vunpack.c.l.b16 %v4095
        %v4749 = vunpack.c.h.b16 %v4095
        %v4750 = vunpack.c.l.b16 %v4096
        %v4751 = vunpack.c.h.b16 %v4096
        %v4752 = vunpack.c.l.b16 %v4097
        %v4753 = vunpack.c.h.b16 %v4097
        %v4754 = vunpack.c.l.b16 %v4098
        %v4755 = vunpack.c.h.b16 %v4098
        %v4756 = vunpack.c.l.b16 %v4099
        %v4757 = vunpack.c.h.b16 %v4099
        %v4758 = vunpack.c.l.b16 %v4100
        %v4759 = vunpack.c.h.b16 %v4100
        %v4760 = vunpack.c.l.b16 %v4101
        %v4761 = vunpack.c.h.b16 %v4101
        %v4762 = vunpack.c.l.b16 %v4102
        %v4763 = vunpack.c.h.b16 %v4102
        %v4764 = vunpack.c.l.b16 %v4103
        %v4765 = vunpack.c.h.b16 %v4103
        %v4766 = vunpack.c.l.b16 %v4104
        %v4767 = vunpack.c.h.b16 %v4104
        %v4768 = vunpack.c.l.b16 %v4105
        %v4769 = vunpack.c.h.b16 %v4105
        %v4770 = vunpack.c.l.b16 %v4106
        %v4771 = vunpack.c.h.b16 %v4106
        %v4772 = vunpack.c.l.b16 %v4107
        %v4773 = vunpack.c.h.b16 %v4107
        %v4774 = vunpack.c.l.b16 %v4108
        %v4775 = vunpack.c.h.b16 %v4108
        %v4776 = vunpack.c.l.b16 %v4109
        %v4777 = vunpack.c.h.b16 %v4109
        %v4778 = vunpack.c.l.b16 %v4110
        %v4779 = vunpack.c.h.b16 %v4110
        %v4780 = vunpack.c.l.b16 %v4111
        %v4781 = vunpack.c.h.b16 %v4111
        %v4782 = vunpack.c.l.b16 %v4112
        %v4783 = vunpack.c.h.b16 %v4112
        %v4784 = vunpack.c.l.b16 %v4113
        %v4785 = vunpack.c.h.b16 %v4113
        %v4786 = vunpack.c.l.b16 %v4114
        %v4787 = vunpack.c.h.b16 %v4114
        %v4788 = vunpack.c.l.b16 %v4115
        %v4789 = vunpack.c.h.b16 %v4115
        %v4790 = vunpack.c.l.b16 %v4116
        %v4791 = vunpack.c.h.b16 %v4116
        %v4792 = vunpack.c.l.b16 %v4117
        %v4793 = vunpack.c.h.b16 %v4117
        %v4794 = vunpack.c.l.b16 %v4118
        %v4795 = vunpack.c.h.b16 %v4118
        %v4796 = vunpack.c.l.b16 %v4119
        %v4797 = vunpack.c.h.b16 %v4119
        %v4798 = vunpack.c.l.b16 %v4120
        %v4799 = vunpack.c.h.b16 %v4120
        %v4800 = vunpack.c.l.b16 %v4121
        %v4801 = vunpack.c.h.b16 %v4121
        %v4802 = vunpack.c.l.b16 %v4122
        %v4803 = vunpack.c.h.b16 %v4122
        %v4804 = vunpack.c.l.b16 %v4123
        %v4805 = vunpack.c.h.b16 %v4123
        %v4806 = vunpack.c.l.b16 %v4124
        %v4807 = vunpack.c.h.b16 %v4124
        %v4808 = vunpack.c.l.b16 %v4125
        %v4809 = vunpack.c.h.b16 %v4125
        %v4810 = vunpack.c.l.b16 %v4126
        %v4811 = vunpack.c.h.b16 %v4126
        %v4812 = vunpack.c.l.b16 %v4127
        %v4813 = vunpack.c.h.b16 %v4127
        %v4814 = vunpack.c.l.b16 %v4128
        %v4815 = vunpack.c.h.b16 %v4128
        %v4816 = vunpack.c.l.b16 %v4129
        %v4817 = vunpack.c.h.b16 %v4129
        %v4818 = vunpack.c.l.b16 %v4130
        %v4819 = vunpack.c.h.b16 %v4130
        %v4820 = vunpack.c.l.b16 %v4131
        %v4821 = vunpack.c.h.b16 %v4131
        %v4822 = vunpack.c.l.b16 %v4132
        %v4823 = vunpack.c.h.b16 %v4132
        %v4824 = vunpack.c.l.b16 %v4133
        %v4825 = vunpack.c.h.b16 %v4133
        %v4826 = vunpack.c.l.b16 %v4134
        %v4827 = vunpack.c.h.b16 %v4134
        %v4828 = vunpack.c.l.b16 %v4135
        %v4829 = vunpack.c.h.b16 %v4135
        %v4830 = vunpack.c.l.b16 %v4136
        %v4831 = vunpack.c.h.b16 %v4136
        %v4832 = vunpack.c.l.b16 %v4137
        %v4833 = vunpack.c.h.b16 %v4137
        %v4834 = vunpack.c.l.b16 %v4138
        %v4835 = vunpack.c.h.b16 %v4138
        %v4836 = vunpack.c.l.b16 %v4139
        %v4837 = vunpack.c.h.b16 %v4139
        %v4838 = vunpack.c.l.b16 %v4140
        %v4839 = vunpack.c.h.b16 %v4140
        %v4840 = vunpack.c.l.b16 %v4141
        %v4841 = vunpack.c.h.b16 %v4141
        %v4842 = vunpack.c.l.b16 %v4142
        %v4843 = vunpack.c.h.b16 %v4142
        %v4844 = vunpack.c.l.b16 %v4143
        %v4845 = vunpack.c.h.b16 %v4143
        %v4846 = vunpack.c.l.b16 %v4144
        %v4847 = vunpack.c.h.b16 %v4144
        %v4848 = vunpack.c.l.b16 %v4145
        %v4849 = vunpack.c.h.b16 %v4145
        %v4850 = vunpack.c.l.b16 %v4146
        %v4851 = vunpack.c.h.b16 %v4146
        %v4852 = vunpack.c.l.b16 %v4147
        %v4853 = vunpack.c.h.b16 %v4147
        %v4854 = vunpack.c.l.b16 %v4148
        %v4855 = vunpack.c.h.b16 %v4148
        %v4856 = vunpack.c.l.b16 %v4149
        %v4857 = vunpack.c.h.b16 %v4149
        %v4858 = vunpack.c.l.b16 %v4150
        %v4859 = vunpack.c.h.b16 %v4150
        %v4860 = vunpack.c.l.b16 %v4151
        %v4861 = vunpack.c.h.b16 %v4151
        %v4862 = vunpack.c.l.b16 %v4152
        %v4863 = vunpack.c.h.b16 %v4152
        %v4864 = vunpack.c.l.b16 %v4153
        %v4865 = vunpack.c.h.b16 %v4153
        %v4866 = vunpack.c.l.b16 %v4154
        %v4867 = vunpack.c.h.b16 %v4154
        %v4868 = vunpack.c.l.b16 %v4155
        %v4869 = vunpack.c.h.b16 %v4155
        %v4870 = vunpack.c.l.b16 %v4156
        %v4871 = vunpack.c.h.b16 %v4156
        %v4872 = vunpack.c.l.b16 %v4157
        %v4873 = vunpack.c.h.b16 %v4157
        %v4874 = vunpack.c.l.b16 %v4158
        %v4875 = vunpack.c.h.b16 %v4158
        %v4876 = vunpack.c.l.b16 %v4159
        %v4877 = vunpack.c.h.b16 %v4159
        %v4878 = vunpack.c.l.b16 %v4160
        %v4879 = vunpack.c.h.b16 %v4160
        %v4880 = vunpack.c.l.b16 %v4161
        %v4881 = vunpack.c.h.b16 %v4161
        %v4882 = vunpack.c.l.b16 %v4162
        %v4883 = vunpack.c.h.b16 %v4162
        %v4884 = vunpack.c.l.b16 %v4163
        %v4885 = vunpack.c.h.b16 %v4163
        %v4886 = vunpack.c.l.b16 %v4164
        %v4887 = vunpack.c.h.b16 %v4164
        %v4888 = vunpack.c.l.b16 %v4165
        %v4889 = vunpack.c.h.b16 %v4165
        %v4890 = vunpack.c.l.b16 %v4166
        %v4891 = vunpack.c.h.b16 %v4166
        %v4892 = vunpack.c.l.b16 %v4167
        %v4893 = vunpack.c.h.b16 %v4167
        %v4894 = vunpack.c.l.b16 %v4168
        %v4895 = vunpack.c.h.b16 %v4168
        %v4896 = vunpack.c.l.b16 %v4169
        %v4897 = vunpack.c.h.b16 %v4169
        %v4898 = vunpack.c.l.b16 %v4170
        %v4899 = vunpack.c.h.b16 %v4170
        %v4900 = vunpack.c.l.b16 %v4171
        %v4901 = vunpack.c.h.b16 %v4171
        %v4902 = vunpack.c.l.b16 %v4172
        %v4903 = vunpack.c.h.b16 %v4172
        %v4904 = vunpack.c.l.b16 %v4173
        %v4905 = vunpack.c.h.b16 %v4173
        %v4906 = vunpack.c.l.b16 %v4174
        %v4907 = vunpack.c.h.b16 %v4174
        %v4908 = vunpack.c.l.b16 %v4175
        %v4909 = vunpack.c.h.b16 %v4175
        %v4910 = vunpack.c.l.b16 %v4176
        %v4911 = vunpack.c.h.b16 %v4176
        %v4912 = vunpack.c.l.b16 %v4177
        %v4913 = vunpack.c.h.b16 %v4177
        %v4914 = vunpack.c.l.b16 %v4178
        %v4915 = vunpack.c.h.b16 %v4178
        %v4916 = vunpack.c.l.b16 %v4179
        %v4917 = vunpack.c.h.b16 %v4179
        %v4918 = vunpack.c.l.b16 %v4180
        %v4919 = vunpack.c.h.b16 %v4180
        %v4920 = vunpack.c.l.b16 %v4181
        %v4921 = vunpack.c.h.b16 %v4181
        %v4922 = vunpack.c.l.b16 %v4182
        %v4923 = vunpack.c.h.b16 %v4182
        %v4924 = vunpack.c.l.b16 %v4183
        %v4925 = vunpack.c.h.b16 %v4183
        %v4926 = vunpack.c.l.b16 %v4184
        %v4927 = vunpack.c.h.b16 %v4184
        %v4928 = vunpack.c.l.b16 %v4185
        %v4929 = vunpack.c.h.b16 %v4185
        %v4930 = vunpack.c.l.b16 %v4186
        %v4931 = vunpack.c.h.b16 %v4186
        %v4932 = vunpack.c.l.b16 %v4187
        %v4933 = vunpack.c.h.b16 %v4187
        %v4934 = vunpack.c.l.b16 %v4188
        %v4935 = vunpack.c.h.b16 %v4188
        %v4936 = vunpack.c.l.b16 %v4189
        %v4937 = vunpack.c.h.b16 %v4189
        %v4938 = vunpack.c.l.b16 %v4190
        %v4939 = vunpack.c.h.b16 %v4190
        %v4940 = vunpack.c.l.b16 %v4191
        %v4941 = vunpack.c.h.b16 %v4191
        %v4942 = vunpack.c.l.b16 %v4192
        %v4943 = vunpack.c.h.b16 %v4192
        %v4944 = vunpack.c.l.b16 %v4193
        %v4945 = vunpack.c.h.b16 %v4193
        %v4946 = vunpack.c.l.b16 %v4194
        %v4947 = vunpack.c.h.b16 %v4194
        %v4948 = vunpack.c.l.b16 %v4195
        %v4949 = vunpack.c.h.b16 %v4195
        %v4950 = vunpack.c.l.b16 %v4196
        %v4951 = vunpack.c.h.b16 %v4196
        %v4952 = vunpack.c.l.b16 %v4197
        %v4953 = vunpack.c.h.b16 %v4197
        %v4954 = vunpack.c.l.b16 %v4198
        %v4955 = vunpack.c.h.b16 %v4198
        %v4956 = vunpack.c.l.b16 %v4199
        %v4957 = vunpack.c.h.b16 %v4199
        %v4958 = vunpack.c.l.b16 %v4200
        %v4959 = vunpack.c.h.b16 %v4200
        %v4960 = vunpack.c.l.b16 %v4201
        %v4961 = vunpack.c.h.b16 %v4201
        %v4962 = vunpack.c.l.b16 %v4202
        %v4963 = vunpack.c.h.b16 %v4202
        %v4964 = vunpack.c.l.b16 %v4203
        %v4965 = vunpack.c.h.b16 %v4203
        %v4966 = vunpack.c.l.b16 %v4204
        %v4967 = vunpack.c.h.b16 %v4204
        %v4968 = vunpack.c.l.b16 %v4205
        %v4969 = vunpack.c.h.b16 %v4205
        %v4970 = vunpack.c.l.b16 %v4206
        %v4971 = vunpack.c.h.b16 %v4206
        %v4972 = vunpack.c.l.b16 %v4207
        %v4973 = vunpack.c.h.b16 %v4207
        %v4974 = vunpack.c.l.b16 %v4208
        %v4975 = vunpack.c.h.b16 %v4208
        %v4976 = vunpack.c.l.b16 %v4209
        %v4977 = vunpack.c.h.b16 %v4209
        %v4978 = vpack.c.b16 %v4498, %v4466
        %v4979 = vpack.c.b16 %v4499, %v4467
        %v4980 = vpack.c.b16 %v4500, %v4468
        %v4981 = vpack.c.b16 %v4501, %v4469
        %v4982 = vpack.c.b16 %v4502, %v4470
        %v4983 = vpack.c.b16 %v4503, %v4471
        %v4984 = vpack.c.b16 %v4504, %v4472
        %v4985 = vpack.c.b16 %v4505, %v4473
        %v4986 = vpack.c.b16 %v4506, %v4474
        %v4987 = vpack.c.b16 %v4507, %v4475
        %v4988 = vpack.c.b16 %v4508, %v4476
        %v4989 = vpack.c.b16 %v4509, %v4477
        %v4990 = vpack.c.b16 %v4510, %v4478
        %v4991 = vpack.c.b16 %v4511, %v4479
        %v4992 = vpack.c.b16 %v4512, %v4480
        %v4993 = vpack.c.b16 %v4513, %v4481
        %v4994 = vpack.c.b16 %v4514, %v4482
        %v4995 = vpack.c.b16 %v4515, %v4483
        %v4996 = vpack.c.b16 %v4516, %v4484
        %v4997 = vpack.c.b16 %v4517, %v4485
        %v4998 = vpack.c.b16 %v4518, %v4486
        %v4999 = vpack.c.b16 %v4519, %v4487
        %v5000 = vpack.c.b16 %v4520, %v4488
        %v5001 = vpack.c.b16 %v4521, %v4489
        %v5002 = vpack.c.b16 %v4522, %v4490
        %v5003 = vpack.c.b16 %v4523, %v4491
        %v5004 = vpack.c.b16 %v4524, %v4492
        %v5005 = vpack.c.b16 %v4525, %v4493
        %v5006 = vpack.c.b16 %v4526, %v4494
        %v5007 = vpack.c.b16 %v4527, %v4495
        %v5008 = vpack.c.b16 %v4528, %v4496
        %v5009 = vpack.c.b16 %v4529, %v4497
        %v5010 = vpack.c.b16 %v4562, %v4530
        %v5011 = vpack.c.b16 %v4563, %v4531
        %v5012 = vpack.c.b16 %v4564, %v4532
        %v5013 = vpack.c.b16 %v4565, %v4533
        %v5014 = vpack.c.b16 %v4566, %v4534
        %v5015 = vpack.c.b16 %v4567, %v4535
        %v5016 = vpack.c.b16 %v4568, %v4536
        %v5017 = vpack.c.b16 %v4569, %v4537
        %v5018 = vpack.c.b16 %v4570, %v4538
        %v5019 = vpack.c.b16 %v4571, %v4539
        %v5020 = vpack.c.b16 %v4572, %v4540
        %v5021 = vpack.c.b16 %v4573, %v4541
        %v5022 = vpack.c.b16 %v4574, %v4542
        %v5023 = vpack.c.b16 %v4575, %v4543
        %v5024 = vpack.c.b16 %v4576, %v4544
        %v5025 = vpack.c.b16 %v4577, %v4545
        %v5026 = vpack.c.b16 %v4578, %v4546
        %v5027 = vpack.c.b16 %v4579, %v4547
        %v5028 = vpack.c.b16 %v4580, %v4548
        %v5029 = vpack.c.b16 %v4581, %v4549
        %v5030 = vpack.c.b16 %v4582, %v4550
        %v5031 = vpack.c.b16 %v4583, %v4551
        %v5032 = vpack.c.b16 %v4584, %v4552
        %v5033 = vpack.c.b16 %v4585, %v4553
        %v5034 = vpack.c.b16 %v4586, %v4554
        %v5035 = vpack.c.b16 %v4587, %v4555
        %v5036 = vpack.c.b16 %v4588, %v4556
        %v5037 = vpack.c.b16 %v4589, %v4557
        %v5038 = vpack.c.b16 %v4590, %v4558
        %v5039 = vpack.c.b16 %v4591, %v4559
        %v5040 = vpack.c.b16 %v4592, %v4560
        %v5041 = vpack.c.b16 %v4593, %v4561
        %v5042 = vpack.c.b16 %v4626, %v4594
        %v5043 = vpack.c.b16 %v4627, %v4595
        %v5044 = vpack.c.b16 %v4628, %v4596
        %v5045 = vpack.c.b16 %v4629, %v4597
        %v5046 = vpack.c.b16 %v4630, %v4598
        %v5047 = vpack.c.b16 %v4631, %v4599
        %v5048 = vpack.c.b16 %v4632, %v4600
        %v5049 = vpack.c.b16 %v4633, %v4601
        %v5050 = vpack.c.b16 %v4634, %v4602
        %v5051 = vpack.c.b16 %v4635, %v4603
        %v5052 = vpack.c.b16 %v4636, %v4604
        %v5053 = vpack.c.b16 %v4637, %v4605
        %v5054 = vpack.c.b16 %v4638, %v4606
        %v5055 = vpack.c.b16 %v4639, %v4607
        %v5056 = vpack.c.b16 %v4640, %v4608
        %v5057 = vpack.c.b16 %v4641, %v4609
        %v5058 = vpack.c.b16 %v4642, %v4610
        %v5059 = vpack.c.b16 %v4643, %v4611
        %v5060 = vpack.c.b16 %v4644, %v4612
        %v5061 = vpack.c.b16 %v4645, %v4613
        %v5062 = vpack.c.b16 %v4646, %v4614
        %v5063 = vpack.c.b16 %v4647, %v4615
        %v5064 = vpack.c.b16 %v4648, %v4616
        %v5065 = vpack.c.b16 %v4649, %v4617
        %v5066 = vpack.c.b16 %v4650, %v4618
        %v5067 = vpack.c.b16 %v4651, %v4619
        %v5068 = vpack.c.b16 %v4652, %v4620
        %v5069 = vpack.c.b16 %v4653, %v4621
        %v5070 = vpack.c.b16 %v4654, %v4622
        %v5071 = vpack.c.b16 %v4655, %v4623
        %v5072 = vpack.c.b16 %v4656, %v4624
        %v5073 = vpack.c.b16 %v4657, %v4625
        %v5074 = vpack.c.b16 %v4690, %v4658
        %v5075 = vpack.c.b16 %v4691, %v4659
        %v5076 = vpack.c.b16 %v4692, %v4660
        %v5077 = vpack.c.b16 %v4693, %v4661
        %v5078 = vpack.c.b16 %v4694, %v4662
        %v5079 = vpack.c.b16 %v4695, %v4663
        %v5080 = vpack.c.b16 %v4696, %v4664
        %v5081 = vpack.c.b16 %v4697, %v4665
        %v5082 = vpack.c.b16 %v4698, %v4666
        %v5083 = vpack.c.b16 %v4699, %v4667
        %v5084 = vpack.c.b16 %v4700, %v4668
        %v5085 = vpack.c.b16 %v4701, %v4669
        %v5086 = vpack.c.b16 %v4702, %v4670
        %v5087 = vpack.c.b16 %v4703, %v4671
        %v5088 = vpack.c.b16 %v4704, %v4672
        %v5089 = vpack.c.b16 %v4705, %v4673
        %v5090 = vpack.c.b16 %v4706, %v4674
        %v5091 = vpack.c.b16 %v4707, %v4675
        %v5092 = vpack.c.b16 %v4708, %v4676
        %v5093 = vpack.c.b16 %v4709, %v4677
        %v5094 = vpack.c.b16 %v4710, %v4678
        %v5095 = vpack.c.b16 %v4711, %v4679
        %v5096 = vpack.c.b16 %v4712, %v4680
        %v5097 = vpack.c.b16 %v4713, %v4681
        %v5098 = vpack.c.b16 %v4714, %v4682
        %v5099 = vpack.c.b16 %v4715, %v4683
        %v5100 = vpack.c.b16 %v4716, %v4684
        %v5101 = vpack.c.b16 %v4717, %v4685
        %v5102 = vpack.c.b16 %v4718, %v4686
        %v5103 = vpack.c.b16 %v4719, %v4687
        %v5104 = vpack.c.b16 %v4720, %v4688
        %v5105 = vpack.c.b16 %v4721, %v4689
        %v5106 = vpack.c.b16 %v4754, %v4722
        %v5107 = vpack.c.b16 %v4755, %v4723
        %v5108 = vpack.c.b16 %v4756, %v4724
        %v5109 = vpack.c.b16 %v4757, %v4725
        %v5110 = vpack.c.b16 %v4758, %v4726
        %v5111 = vpack.c.b16 %v4759, %v4727
        %v5112 = vpack.c.b16 %v4760, %v4728
        %v5113 = vpack.c.b16 %v4761, %v4729
        %v5114 = vpack.c.b16 %v4762, %v4730
        %v5115 = vpack.c.b16 %v4763, %v4731
        %v5116 = vpack.c.b16 %v4764, %v4732
        %v5117 = vpack.c.b16 %v4765, %v4733
        %v5118 = vpack.c.b16 %v4766, %v4734
        %v5119 = vpack.c.b16 %v4767, %v4735
        %v5120 = vpack.c.b16 %v4768, %v4736
        %v5121 = vpack.c.b16 %v4769, %v4737
        %v5122 = vpack.c.b16 %v4770, %v4738
        %v5123 = vpack.c.b16 %v4771, %v4739
        %v5124 = vpack.c.b16 %v4772, %v4740
        %v5125 = vpack.c.b16 %v4773, %v4741
        %v5126 = vpack.c.b16 %v4774, %v4742
        %v5127 = vpack.c.b16 %v4775, %v4743
        %v5128 = vpack.c.b16 %v4776, %v4744
        %v5129 = vpack.c.b16 %v4777, %v4745
        %v5130 = vpack.c.b16 %v4778, %v4746
        %v5131 = vpack.c.b16 %v4779, %v4747
        %v5132 = vpack.c.b16 %v4780, %v4748
        %v5133 = vpack.c.b16 %v4781, %v4749
        %v5134 = vpack.c.b16 %v4782, %v4750
        %v5135 = vpack.c.b16 %v4783, %v4751
        %v5136 = vpack.c.b16 %v4784, %v4752
        %v5137 = vpack.c.b16 %v4785, %v4753
        %v5138 = vpack.c.b16 %v4818, %v4786
        %v5139 = vpack.c.b16 %v4819, %v4787
        %v5140 = vpack.c.b16 %v4820, %v4788
        %v5141 = vpack.c.b16 %v4821, %v4789
        %v5142 = vpack.c.b16 %v4822, %v4790
        %v5143 = vpack.c.b16 %v4823, %v4791
        %v5144 = vpack.c.b16 %v4824, %v4792
        %v5145 = vpack.c.b16 %v4825, %v4793
        %v5146 = vpack.c.b16 %v4826, %v4794
        %v5147 = vpack.c.b16 %v4827, %v4795
        %v5148 = vpack.c.b16 %v4828, %v4796
        %v5149 = vpack.c.b16 %v4829, %v4797
        %v5150 = vpack.c.b16 %v4830, %v4798
        %v5151 = vpack.c.b16 %v4831, %v4799
        %v5152 = vpack.c.b16 %v4832, %v4800
        %v5153 = vpack.c.b16 %v4833, %v4801
        %v5154 = vpack.c.b16 %v4834, %v4802
        %v5155 = vpack.c.b16 %v4835, %v4803
        %v5156 = vpack.c.b16 %v4836, %v4804
        %v5157 = vpack.c.b16 %v4837, %v4805
        %v5158 = vpack.c.b16 %v4838, %v4806
        %v5159 = vpack.c.b16 %v4839, %v4807
        %v5160 = vpack.c.b16 %v4840, %v4808
        %v5161 = vpack.c.b16 %v4841, %v4809
        %v5162 = vpack.c.b16 %v4842, %v4810
        %v5163 = vpack.c.b16 %v4843, %v4811
        %v5164 = vpack.c.b16 %v4844, %v4812
        %v5165 = vpack.c.b16 %v4845, %v4813
        %v5166 = vpack.c.b16 %v4846, %v4814
        %v5167 = vpack.c.b16 %v4847, %v4815
        %v5168 = vpack.c.b16 %v4848, %v4816
        %v5169 = vpack.c.b16 %v4849, %v4817
        %v5170 = vpack.c.b16 %v4882, %v4850
        %v5171 = vpack.c.b16 %v4883, %v4851
        %v5172 = vpack.c.b16 %v4884, %v4852
        %v5173 = vpack.c.b16 %v4885, %v4853
        %v5174 = vpack.c.b16 %v4886, %v4854
        %v5175 = vpack.c.b16 %v4887, %v4855
        %v5176 = vpack.c.b16 %v4888, %v4856
        %v5177 = vpack.c.b16 %v4889, %v4857
        %v5178 = vpack.c.b16 %v4890, %v4858
        %v5179 = vpack.c.b16 %v4891, %v4859
        %v5180 = vpack.c.b16 %v4892, %v4860
        %v5181 = vpack.c.b16 %v4893, %v4861
        %v5182 = vpack.c.b16 %v4894, %v4862
        %v5183 = vpack.c.b16 %v4895, %v4863
        %v5184 = vpack.c.b16 %v4896, %v4864
        %v5185 = vpack.c.b16 %v4897, %v4865
        %v5186 = vpack.c.b16 %v4898, %v4866
        %v5187 = vpack.c.b16 %v4899, %v4867
        %v5188 = vpack.c.b16 %v4900, %v4868
        %v5189 = vpack.c.b16 %v4901, %v4869
        %v5190 = vpack.c.b16 %v4902, %v4870
        %v5191 = vpack.c.b16 %v4903, %v4871
        %v5192 = vpack.c.b16 %v4904, %v4872
        %v5193 = vpack.c.b16 %v4905, %v4873
        %v5194 = vpack.c.b16 %v4906, %v4874
        %v5195 = vpack.c.b16 %v4907, %v4875
        %v5196 = vpack.c.b16 %v4908, %v4876
        %v5197 = vpack.c.b16 %v4909, %v4877
        %v5198 = vpack.c.b16 %v4910, %v4878
        %v5199 = vpack.c.b16 %v4911, %v4879
        %v5200 = vpack.c.b16 %v4912, %v4880
        %v5201 = vpack.c.b16 %v4913, %v4881
        %v5202 = vpack.c.b16 %v4946, %v4914
        %v5203 = vpack.c.b16 %v4947, %v4915
        %v5204 = vpack.c.b16 %v4948, %v4916
        %v5205 = vpack.c.b16 %v4949, %v4917
        %v5206 = vpack.c.b16 %v4950, %v4918
        %v5207 = vpack.c.b16 %v4951, %v4919
        %v5208 = vpack.c.b16 %v4952, %v4920
        %v5209 = vpack.c.b16 %v4953, %v4921
        %v5210 = vpack.c.b16 %v4954, %v4922
        %v5211 = vpack.c.b16 %v4955, %v4923
        %v5212 = vpack.c.b16 %v4956, %v4924
        %v5213 = vpack.c.b16 %v4957, %v4925
        %v5214 = vpack.c.b16 %v4958, %v4926
        %v5215 = vpack.c.b16 %v4959, %v4927
        %v5216 = vpack.c.b16 %v4960, %v4928
        %v5217 = vpack.c.b16 %v4961, %v4929
        %v5218 = vpack.c.b16 %v4962, %v4930
        %v5219 = vpack.c.b16 %v4963, %v4931
        %v5220 = vpack.c.b16 %v4964, %v4932
        %v5221 = vpack.c.b16 %v4965, %v4933
        %v5222 = vpack.c.b16 %v4966, %v4934
        %v5223 = vpack.c.b16 %v4967, %v4935
        %v5224 = vpack.c.b16 %v4968, %v4936
        %v5225 = vpack.c.b16 %v4969, %v4937
        %v5226 = vpack.c.b16 %v4970, %v4938
        %v5227 = vpack.c.b16 %v4971, %v4939
        %v5228 = vpack.c.b16 %v4972, %v4940
        %v5229 = vpack.c.b16 %v4973, %v4941
        %v5230 = vpack.c.b16 %v4974, %v4942
        %v5231 = vpack.c.b16 %v4975, %v4943
        %v5232 = vpack.c.b16 %v4976, %v4944
        %v5233 = vpack.c.b16 %v4977, %v4945
        %5490 = vmatprep.subr.bf16.mxu0 %v4979
        %5491 = vmatpush1.bf16.msra.mxu0 %v4978
        %5492 = vmatprep.subr.bf16.mxu0 %v5011
        %5493 = vmatpush1.bf16.msra.mxu0 %v5010
        %5494 = vmatprep.subr.bf16.mxu0 %v5043
        %5495 = vmatpush1.bf16.msra.mxu0 %v5042
        %5496 = vmatprep.subr.bf16.mxu0 %v5075
        %5497 = vmatpush1.bf16.msra.mxu0 %v5074
        %5498 = vmatprep.subr.bf16.mxu0 %v5107
        %5499 = vmatpush1.bf16.msra.mxu0 %v5106
        %5500 = vmatprep.subr.bf16.mxu0 %v5139
        %5501 = vmatpush1.bf16.msra.mxu0 %v5138
        %5502 = vmatprep.subr.bf16.mxu0 %v5171
        %5503 = vmatpush1.bf16.msra.mxu0 %v5170
        %5504 = vmatprep.subr.bf16.mxu0 %v5203
        %5505 = vmatpush1.bf16.msra.mxu0 %v5202
        %5506 = vmatprep.subr.bf16.mxu0 0
        %5507 = vmatpush1.bf16.msra.mxu0 0
        %5508 = vmatprep.subr.bf16.mxu0 0
        %5509 = vmatpush1.bf16.msra.mxu0 0
        %5510 = vmatprep.subr.bf16.mxu0 0
        %5511 = vmatpush1.bf16.msra.mxu0 0
        %5512 = vmatprep.subr.bf16.mxu0 0
        %5513 = vmatpush1.bf16.msra.mxu0 0
        %5514 = vmatprep.subr.bf16.mxu0 0
        %5515 = vmatpush1.bf16.msra.mxu0 0
        %5516 = vmatprep.subr.bf16.mxu0 0
        %5517 = vmatpush1.bf16.msra.mxu0 0
        %5518 = vmatprep.subr.bf16.mxu0 0
        %5519 = vmatpush1.bf16.msra.mxu0 0
        %5520 = vmatprep.subr.bf16.mxu0 0
        %5521 = vmatpush1.bf16.msra.mxu0 0
        %5522 = vmatprep.mubr.bf16.mxu0 0
        %5523 = vmatmul.mubr.bf16.gmra.mrb[0].mxu0 %v3952
        %v5524 = vpop.f32.mrb[0].mxu0
        %v5525 = vadd.f32 0.0, %v5524
        %v5526 = vpop.f32.mrb[0].mxu0
        %v5527 = vadd.f32 0.0, %v5526
        %v5528 = vpop.f32.mrb[0].mxu0
        %v5529 = vpop.f32.mrb[0].mxu0
        %5530 = vdwg.mxu0
        %5531 = vmatprep.subr.bf16.mxu0 %v4981
        %5532 = vmatpush1.bf16.msra.mxu0 %v4980
        %5533 = vmatprep.subr.bf16.mxu0 %v5013
        %5534 = vmatpush1.bf16.msra.mxu0 %v5012
        %5535 = vmatprep.subr.bf16.mxu0 %v5045
        %5536 = vmatpush1.bf16.msra.mxu0 %v5044
        %5537 = vmatprep.subr.bf16.mxu0 %v5077
        %5538 = vmatpush1.bf16.msra.mxu0 %v5076
        %5539 = vmatprep.subr.bf16.mxu0 %v5109
        %5540 = vmatpush1.bf16.msra.mxu0 %v5108
        %5541 = vmatprep.subr.bf16.mxu0 %v5141
        %5542 = vmatpush1.bf16.msra.mxu0 %v5140
        %5543 = vmatprep.subr.bf16.mxu0 %v5173
        %5544 = vmatpush1.bf16.msra.mxu0 %v5172
        %5545 = vmatprep.subr.bf16.mxu0 %v5205
        %5546 = vmatpush1.bf16.msra.mxu0 %v5204
        %5547 = vmatprep.subr.bf16.mxu0 0
        %5548 = vmatpush1.bf16.msra.mxu0 0
        %5549 = vmatprep.subr.bf16.mxu0 0
        %5550 = vmatpush1.bf16.msra.mxu0 0
        %5551 = vmatprep.subr.bf16.mxu0 0
        %5552 = vmatpush1.bf16.msra.mxu0 0
        %5553 = vmatprep.subr.bf16.mxu0 0
        %5554 = vmatpush1.bf16.msra.mxu0 0
        %5555 = vmatprep.subr.bf16.mxu0 0
        %5556 = vmatpush1.bf16.msra.mxu0 0
        %5557 = vmatprep.subr.bf16.mxu0 0
        %5558 = vmatpush1.bf16.msra.mxu0 0
        %5559 = vmatprep.subr.bf16.mxu0 0
        %5560 = vmatpush1.bf16.msra.mxu0 0
        %5561 = vmatprep.subr.bf16.mxu0 0
        %5562 = vmatpush1.bf16.msra.mxu0 0
        %5563 = vmatprep.mubr.bf16.mxu0 0
        %5564 = vmatmul.mubr.bf16.gmra.mrb[0].mxu0 %v3952
        %v5565 = vpop.f32.mrb[0].mxu0
        %v5566 = vadd.f32 0.0, %v5565
        %v5567 = vpop.f32.mrb[0].mxu0
        %v5568 = vadd.f32 0.0, %v5567
        %v5569 = vpop.f32.mrb[0].mxu0
        %v5570 = vpop.f32.mrb[0].mxu0
        %5571 = vdwg.mxu0
        %5572 = vmatprep.subr.bf16.mxu0 %v4983
        %5573 = vmatpush1.bf16.msra.mxu0 %v4982
        %5574 = vmatprep.subr.bf16.mxu0 %v5015
        %5575 = vmatpush1.bf16.msra.mxu0 %v5014
        %5576 = vmatprep.subr.bf16.mxu0 %v5047
        %5577 = vmatpush1.bf16.msra.mxu0 %v5046
        %5578 = vmatprep.subr.bf16.mxu0 %v5079
        %5579 = vmatpush1.bf16.msra.mxu0 %v5078
        %5580 = vmatprep.subr.bf16.mxu0 %v5111
        %5581 = vmatpush1.bf16.msra.mxu0 %v5110
        %5582 = vmatprep.subr.bf16.mxu0 %v5143
        %5583 = vmatpush1.bf16.msra.mxu0 %v5142
        %5584 = vmatprep.subr.bf16.mxu0 %v5175
        %5585 = vmatpush1.bf16.msra.mxu0 %v5174
        %5586 = vmatprep.subr.bf16.mxu0 %v5207
        %5587 = vmatpush1.bf16.msra.mxu0 %v5206
        %5588 = vmatprep.subr.bf16.mxu0 0
        %5589 = vmatpush1.bf16.msra.mxu0 0
        %5590 = vmatprep.subr.bf16.mxu0 0
        %5591 = vmatpush1.bf16.msra.mxu0 0
        %5592 = vmatprep.subr.bf16.mxu0 0
        %5593 = vmatpush1.bf16.msra.mxu0 0
        %5594 = vmatprep.subr.bf16.mxu0 0
        %5595 = vmatpush1.bf16.msra.mxu0 0
        %5596 = vmatprep.subr.bf16.mxu0 0
        %5597 = vmatpush1.bf16.msra.mxu0 0
        %5598 = vmatprep.subr.bf16.mxu0 0
        %5599 = vmatpush1.bf16.msra.mxu0 0
        %5600 = vmatprep.subr.bf16.mxu0 0
        %5601 = vmatpush1.bf16.msra.mxu0 0
        %5602 = vmatprep.subr.bf16.mxu0 0
        %5603 = vmatpush1.bf16.msra.mxu0 0
        %5604 = vmatprep.mubr.bf16.mxu0 0
        %5605 = vmatmul.mubr.bf16.gmra.mrb[0].mxu0 %v3952
        %v5606 = vpop.f32.mrb[0].mxu0
        %v5607 = vadd.f32 0.0, %v5606
        %v5608 = vpop.f32.mrb[0].mxu0
        %v5609 = vadd.f32 0.0, %v5608
        %v5610 = vpop.f32.mrb[0].mxu0
        %v5611 = vpop.f32.mrb[0].mxu0
        %5612 = vdwg.mxu0
        %5613 = vmatprep.subr.bf16.mxu0 %v4985
        %5614 = vmatpush1.bf16.msra.mxu0 %v4984
        %5615 = vmatprep.subr.bf16.mxu0 %v5017
        %5616 = vmatpush1.bf16.msra.mxu0 %v5016
        %5617 = vmatprep.subr.bf16.mxu0 %v5049
        %5618 = vmatpush1.bf16.msra.mxu0 %v5048
        %5619 = vmatprep.subr.bf16.mxu0 %v5081
        %5620 = vmatpush1.bf16.msra.mxu0 %v5080
        %5621 = vmatprep.subr.bf16.mxu0 %v5113
        %5622 = vmatpush1.bf16.msra.mxu0 %v5112
        %5623 = vmatprep.subr.bf16.mxu0 %v5145
        %5624 = vmatpush1.bf16.msra.mxu0 %v5144
        %5625 = vmatprep.subr.bf16.mxu0 %v5177
        %5626 = vmatpush1.bf16.msra.mxu0 %v5176
        %5627 = vmatprep.subr.bf16.mxu0 %v5209
        %5628 = vmatpush1.bf16.msra.mxu0 %v5208
        %5629 = vmatprep.subr.bf16.mxu0 0
        %5630 = vmatpush1.bf16.msra.mxu0 0
        %5631 = vmatprep.subr.bf16.mxu0 0
        %5632 = vmatpush1.bf16.msra.mxu0 0
        %5633 = vmatprep.subr.bf16.mxu0 0
        %5634 = vmatpush1.bf16.msra.mxu0 0
        %5635 = vmatprep.subr.bf16.mxu0 0
        %5636 = vmatpush1.bf16.msra.mxu0 0
        %5637 = vmatprep.subr.bf16.mxu0 0
        %5638 = vmatpush1.bf16.msra.mxu0 0
        %5639 = vmatprep.subr.bf16.mxu0 0
        %5640 = vmatpush1.bf16.msra.mxu0 0
        %5641 = vmatprep.subr.bf16.mxu0 0
        %5642 = vmatpush1.bf16.msra.mxu0 0
        %5643 = vmatprep.subr.bf16.mxu0 0
        %5644 = vmatpush1.bf16.msra.mxu0 0
        %5645 = vmatprep.mubr.bf16.mxu0 0
        %5646 = vmatmul.mubr.bf16.gmra.mrb[0].mxu0 %v3952
        %v5647 = vpop.f32.mrb[0].mxu0
        %v5648 = vadd.f32 0.0, %v5647
        %v5649 = vpop.f32.mrb[0].mxu0
        %v5650 = vadd.f32 0.0, %v5649
        %v5651 = vpop.f32.mrb[0].mxu0
        %v5652 = vpop.f32.mrb[0].mxu0
        %5653 = vdwg.mxu0
        %5654 = vmatprep.subr.bf16.mxu0 %v4987
        %5655 = vmatpush1.bf16.msra.mxu0 %v4986
        %5656 = vmatprep.subr.bf16.mxu0 %v5019
        %5657 = vmatpush1.bf16.msra.mxu0 %v5018
        %5658 = vmatprep.subr.bf16.mxu0 %v5051
        %5659 = vmatpush1.bf16.msra.mxu0 %v5050
        %5660 = vmatprep.subr.bf16.mxu0 %v5083
        %5661 = vmatpush1.bf16.msra.mxu0 %v5082
        %5662 = vmatprep.subr.bf16.mxu0 %v5115
        %5663 = vmatpush1.bf16.msra.mxu0 %v5114
        %5664 = vmatprep.subr.bf16.mxu0 %v5147
        %5665 = vmatpush1.bf16.msra.mxu0 %v5146
        %5666 = vmatprep.subr.bf16.mxu0 %v5179
        %5667 = vmatpush1.bf16.msra.mxu0 %v5178
        %5668 = vmatprep.subr.bf16.mxu0 %v5211
        %5669 = vmatpush1.bf16.msra.mxu0 %v5210
        %5670 = vmatprep.subr.bf16.mxu0 0
        %5671 = vmatpush1.bf16.msra.mxu0 0
        %5672 = vmatprep.subr.bf16.mxu0 0
        %5673 = vmatpush1.bf16.msra.mxu0 0
        %5674 = vmatprep.subr.bf16.mxu0 0
        %5675 = vmatpush1.bf16.msra.mxu0 0
        %5676 = vmatprep.subr.bf16.mxu0 0
        %5677 = vmatpush1.bf16.msra.mxu0 0
        %5678 = vmatprep.subr.bf16.mxu0 0
        %5679 = vmatpush1.bf16.msra.mxu0 0
        %5680 = vmatprep.subr.bf16.mxu0 0
        %5681 = vmatpush1.bf16.msra.mxu0 0
        %5682 = vmatprep.subr.bf16.mxu0 0
        %5683 = vmatpush1.bf16.msra.mxu0 0
        %5684 = vmatprep.subr.bf16.mxu0 0
        %5685 = vmatpush1.bf16.msra.mxu0 0
        %5686 = vmatprep.mubr.bf16.mxu0 0
        %5687 = vmatmul.mubr.bf16.gmra.mrb[0].mxu0 %v3952
        %v5688 = vpop.f32.mrb[0].mxu0
        %v5689 = vadd.f32 0.0, %v5688
        %v5690 = vpop.f32.mrb[0].mxu0
        %v5691 = vadd.f32 0.0, %v5690
        %v5692 = vpop.f32.mrb[0].mxu0
        %v5693 = vpop.f32.mrb[0].mxu0
        %5694 = vdwg.mxu0
        %5695 = vmatprep.subr.bf16.mxu0 %v4989
        %5696 = vmatpush1.bf16.msra.mxu0 %v4988
        %5697 = vmatprep.subr.bf16.mxu0 %v5021
        %5698 = vmatpush1.bf16.msra.mxu0 %v5020
        %5699 = vmatprep.subr.bf16.mxu0 %v5053
        %5700 = vmatpush1.bf16.msra.mxu0 %v5052
        %5701 = vmatprep.subr.bf16.mxu0 %v5085
        %5702 = vmatpush1.bf16.msra.mxu0 %v5084
        %5703 = vmatprep.subr.bf16.mxu0 %v5117
        %5704 = vmatpush1.bf16.msra.mxu0 %v5116
        %5705 = vmatprep.subr.bf16.mxu0 %v5149
        %5706 = vmatpush1.bf16.msra.mxu0 %v5148
        %5707 = vmatprep.subr.bf16.mxu0 %v5181
        %5708 = vmatpush1.bf16.msra.mxu0 %v5180
        %5709 = vmatprep.subr.bf16.mxu0 %v5213
        %5710 = vmatpush1.bf16.msra.mxu0 %v5212
        %5711 = vmatprep.subr.bf16.mxu0 0
        %5712 = vmatpush1.bf16.msra.mxu0 0
        %5713 = vmatprep.subr.bf16.mxu0 0
        %5714 = vmatpush1.bf16.msra.mxu0 0
        %5715 = vmatprep.subr.bf16.mxu0 0
        %5716 = vmatpush1.bf16.msra.mxu0 0
        %5717 = vmatprep.subr.bf16.mxu0 0
        %5718 = vmatpush1.bf16.msra.mxu0 0
        %5719 = vmatprep.subr.bf16.mxu0 0
        %5720 = vmatpush1.bf16.msra.mxu0 0
        %5721 = vmatprep.subr.bf16.mxu0 0
        %5722 = vmatpush1.bf16.msra.mxu0 0
        %5723 = vmatprep.subr.bf16.mxu0 0
        %5724 = vmatpush1.bf16.msra.mxu0 0
        %5725 = vmatprep.subr.bf16.mxu0 0
        %5726 = vmatpush1.bf16.msra.mxu0 0
        %5727 = vmatprep.mubr.bf16.mxu0 0
        %5728 = vmatmul.mubr.bf16.gmra.mrb[0].mxu0 %v3952
        %v5729 = vpop.f32.mrb[0].mxu0
        %v5730 = vadd.f32 0.0, %v5729
        %v5731 = vpop.f32.mrb[0].mxu0
        %v5732 = vadd.f32 0.0, %v5731
        %v5733 = vpop.f32.mrb[0].mxu0
        %v5734 = vpop.f32.mrb[0].mxu0
        %5735 = vdwg.mxu0
        %5736 = vmatprep.subr.bf16.mxu0 %v4991
        %5737 = vmatpush1.bf16.msra.mxu0 %v4990
        %5738 = vmatprep.subr.bf16.mxu0 %v5023
        %5739 = vmatpush1.bf16.msra.mxu0 %v5022
        %5740 = vmatprep.subr.bf16.mxu0 %v5055
        %5741 = vmatpush1.bf16.msra.mxu0 %v5054
        %5742 = vmatprep.subr.bf16.mxu0 %v5087
        %5743 = vmatpush1.bf16.msra.mxu0 %v5086
        %5744 = vmatprep.subr.bf16.mxu0 %v5119
        %5745 = vmatpush1.bf16.msra.mxu0 %v5118
        %5746 = vmatprep.subr.bf16.mxu0 %v5151
        %5747 = vmatpush1.bf16.msra.mxu0 %v5150
        %5748 = vmatprep.subr.bf16.mxu0 %v5183
        %5749 = vmatpush1.bf16.msra.mxu0 %v5182
        %5750 = vmatprep.subr.bf16.mxu0 %v5215
        %5751 = vmatpush1.bf16.msra.mxu0 %v5214
        %5752 = vmatprep.subr.bf16.mxu0 0
        %5753 = vmatpush1.bf16.msra.mxu0 0
        %5754 = vmatprep.subr.bf16.mxu0 0
        %5755 = vmatpush1.bf16.msra.mxu0 0
        %5756 = vmatprep.subr.bf16.mxu0 0
        %5757 = vmatpush1.bf16.msra.mxu0 0
        %5758 = vmatprep.subr.bf16.mxu0 0
        %5759 = vmatpush1.bf16.msra.mxu0 0
        %5760 = vmatprep.subr.bf16.mxu0 0
        %5761 = vmatpush1.bf16.msra.mxu0 0
        %5762 = vmatprep.subr.bf16.mxu0 0
        %5763 = vmatpush1.bf16.msra.mxu0 0
        %5764 = vmatprep.subr.bf16.mxu0 0
        %5765 = vmatpush1.bf16.msra.mxu0 0
        %5766 = vmatprep.subr.bf16.mxu0 0
        %5767 = vmatpush1.bf16.msra.mxu0 0
        %5768 = vmatprep.mubr.bf16.mxu0 0
        %5769 = vmatmul.mubr.bf16.gmra.mrb[0].mxu0 %v3952
        %v5770 = vpop.f32.mrb[0].mxu0
        %v5771 = vadd.f32 0.0, %v5770
        %v5772 = vpop.f32.mrb[0].mxu0
        %v5773 = vadd.f32 0.0, %v5772
        %v5774 = vpop.f32.mrb[0].mxu0
        %v5775 = vpop.f32.mrb[0].mxu0
        %5776 = vdwg.mxu0
        %5777 = vmatprep.subr.bf16.mxu0 %v4993
        %5778 = vmatpush1.bf16.msra.mxu0 %v4992
        %5779 = vmatprep.subr.bf16.mxu0 %v5025
        %5780 = vmatpush1.bf16.msra.mxu0 %v5024
        %5781 = vmatprep.subr.bf16.mxu0 %v5057
        %5782 = vmatpush1.bf16.msra.mxu0 %v5056
        %5783 = vmatprep.subr.bf16.mxu0 %v5089
        %5784 = vmatpush1.bf16.msra.mxu0 %v5088
        %5785 = vmatprep.subr.bf16.mxu0 %v5121
        %5786 = vmatpush1.bf16.msra.mxu0 %v5120
        %5787 = vmatprep.subr.bf16.mxu0 %v5153
        %5788 = vmatpush1.bf16.msra.mxu0 %v5152
        %5789 = vmatprep.subr.bf16.mxu0 %v5185
        %5790 = vmatpush1.bf16.msra.mxu0 %v5184
        %5791 = vmatprep.subr.bf16.mxu0 %v5217
        %5792 = vmatpush1.bf16.msra.mxu0 %v5216
        %5793 = vmatprep.subr.bf16.mxu0 0
        %5794 = vmatpush1.bf16.msra.mxu0 0
        %5795 = vmatprep.subr.bf16.mxu0 0
        %5796 = vmatpush1.bf16.msra.mxu0 0
        %5797 = vmatprep.subr.bf16.mxu0 0
        %5798 = vmatpush1.bf16.msra.mxu0 0
        %5799 = vmatprep.subr.bf16.mxu0 0
        %5800 = vmatpush1.bf16.msra.mxu0 0
        %5801 = vmatprep.subr.bf16.mxu0 0
        %5802 = vmatpush1.bf16.msra.mxu0 0
        %5803 = vmatprep.subr.bf16.mxu0 0
        %5804 = vmatpush1.bf16.msra.mxu0 0
        %5805 = vmatprep.subr.bf16.mxu0 0
        %5806 = vmatpush1.bf16.msra.mxu0 0
        %5807 = vmatprep.subr.bf16.mxu0 0
        %5808 = vmatpush1.bf16.msra.mxu0 0
        %5809 = vmatprep.mubr.bf16.mxu0 0
        %5810 = vmatmul.mubr.bf16.gmra.mrb[0].mxu0 %v3952
        %v5811 = vpop.f32.mrb[0].mxu0
        %v5812 = vadd.f32 0.0, %v5811
        %v5813 = vpop.f32.mrb[0].mxu0
        %v5814 = vadd.f32 0.0, %v5813
        %v5815 = vpop.f32.mrb[0].mxu0
        %v5816 = vpop.f32.mrb[0].mxu0
        %5817 = vdwg.mxu0
        %5818 = vmatprep.subr.bf16.mxu0 %v4995
        %5819 = vmatpush1.bf16.msra.mxu0 %v4994
        %5820 = vmatprep.subr.bf16.mxu0 %v5027
        %5821 = vmatpush1.bf16.msra.mxu0 %v5026
        %5822 = vmatprep.subr.bf16.mxu0 %v5059
        %5823 = vmatpush1.bf16.msra.mxu0 %v5058
        %5824 = vmatprep.subr.bf16.mxu0 %v5091
        %5825 = vmatpush1.bf16.msra.mxu0 %v5090
        %5826 = vmatprep.subr.bf16.mxu0 %v5123
        %5827 = vmatpush1.bf16.msra.mxu0 %v5122
        %5828 = vmatprep.subr.bf16.mxu0 %v5155
        %5829 = vmatpush1.bf16.msra.mxu0 %v5154
        %5830 = vmatprep.subr.bf16.mxu0 %v5187
        %5831 = vmatpush1.bf16.msra.mxu0 %v5186
        %5832 = vmatprep.subr.bf16.mxu0 %v5219
        %5833 = vmatpush1.bf16.msra.mxu0 %v5218
        %5834 = vmatprep.subr.bf16.mxu0 0
        %5835 = vmatpush1.bf16.msra.mxu0 0
        %5836 = vmatprep.subr.bf16.mxu0 0
        %5837 = vmatpush1.bf16.msra.mxu0 0
        %5838 = vmatprep.subr.bf16.mxu0 0
        %5839 = vmatpush1.bf16.msra.mxu0 0
        %5840 = vmatprep.subr.bf16.mxu0 0
        %5841 = vmatpush1.bf16.msra.mxu0 0
        %5842 = vmatprep.subr.bf16.mxu0 0
        %5843 = vmatpush1.bf16.msra.mxu0 0
        %5844 = vmatprep.subr.bf16.mxu0 0
        %5845 = vmatpush1.bf16.msra.mxu0 0
        %5846 = vmatprep.subr.bf16.mxu0 0
        %5847 = vmatpush1.bf16.msra.mxu0 0
        %5848 = vmatprep.subr.bf16.mxu0 0
        %5849 = vmatpush1.bf16.msra.mxu0 0
        %5850 = vmatprep.mubr.bf16.mxu0 0
        %5851 = vmatmul.mubr.bf16.gmra.mrb[0].mxu0 %v3952
        %v5852 = vpop.f32.mrb[0].mxu0
        %v5853 = vadd.f32 0.0, %v5852
        %v5854 = vpop.f32.mrb[0].mxu0
        %v5855 = vadd.f32 0.0, %v5854
        %v5856 = vpop.f32.mrb[0].mxu0
        %v5857 = vpop.f32.mrb[0].mxu0
        %5858 = vdwg.mxu0
        %5859 = vmatprep.subr.bf16.mxu0 %v4997
        %5860 = vmatpush1.bf16.msra.mxu0 %v4996
        %5861 = vmatprep.subr.bf16.mxu0 %v5029
        %5862 = vmatpush1.bf16.msra.mxu0 %v5028
        %5863 = vmatprep.subr.bf16.mxu0 %v5061
        %5864 = vmatpush1.bf16.msra.mxu0 %v5060
        %5865 = vmatprep.subr.bf16.mxu0 %v5093
        %5866 = vmatpush1.bf16.msra.mxu0 %v5092
        %5867 = vmatprep.subr.bf16.mxu0 %v5125
        %5868 = vmatpush1.bf16.msra.mxu0 %v5124
        %5869 = vmatprep.subr.bf16.mxu0 %v5157
        %5870 = vmatpush1.bf16.msra.mxu0 %v5156
        %5871 = vmatprep.subr.bf16.mxu0 %v5189
        %5872 = vmatpush1.bf16.msra.mxu0 %v5188
        %5873 = vmatprep.subr.bf16.mxu0 %v5221
        %5874 = vmatpush1.bf16.msra.mxu0 %v5220
        %5875 = vmatprep.subr.bf16.mxu0 0
        %5876 = vmatpush1.bf16.msra.mxu0 0
        %5877 = vmatprep.subr.bf16.mxu0 0
        %5878 = vmatpush1.bf16.msra.mxu0 0
        %5879 = vmatprep.subr.bf16.mxu0 0
        %5880 = vmatpush1.bf16.msra.mxu0 0
        %5881 = vmatprep.subr.bf16.mxu0 0
        %5882 = vmatpush1.bf16.msra.mxu0 0
        %5883 = vmatprep.subr.bf16.mxu0 0
        %5884 = vmatpush1.bf16.msra.mxu0 0
        %5885 = vmatprep.subr.bf16.mxu0 0
        %5886 = vmatpush1.bf16.msra.mxu0 0
        %5887 = vmatprep.subr.bf16.mxu0 0
        %5888 = vmatpush1.bf16.msra.mxu0 0
        %5889 = vmatprep.subr.bf16.mxu0 0
        %5890 = vmatpush1.bf16.msra.mxu0 0
        %5891 = vmatprep.mubr.bf16.mxu0 0
        %5892 = vmatmul.mubr.bf16.gmra.mrb[0].mxu0 %v3952
        %v5893 = vpop.f32.mrb[0].mxu0
        %v5894 = vadd.f32 0.0, %v5893
        %v5895 = vpop.f32.mrb[0].mxu0
        %v5896 = vadd.f32 0.0, %v5895
        %v5897 = vpop.f32.mrb[0].mxu0
        %v5898 = vpop.f32.mrb[0].mxu0
        %5899 = vdwg.mxu0
        %5900 = vmatprep.subr.bf16.mxu0 %v4999
        %5901 = vmatpush1.bf16.msra.mxu0 %v4998
        %5902 = vmatprep.subr.bf16.mxu0 %v5031
        %5903 = vmatpush1.bf16.msra.mxu0 %v5030
        %5904 = vmatprep.subr.bf16.mxu0 %v5063
        %5905 = vmatpush1.bf16.msra.mxu0 %v5062
        %5906 = vmatprep.subr.bf16.mxu0 %v5095
        %5907 = vmatpush1.bf16.msra.mxu0 %v5094
        %5908 = vmatprep.subr.bf16.mxu0 %v5127
        %5909 = vmatpush1.bf16.msra.mxu0 %v5126
        %5910 = vmatprep.subr.bf16.mxu0 %v5159
        %5911 = vmatpush1.bf16.msra.mxu0 %v5158
        %5912 = vmatprep.subr.bf16.mxu0 %v5191
        %5913 = vmatpush1.bf16.msra.mxu0 %v5190
        %5914 = vmatprep.subr.bf16.mxu0 %v5223
        %5915 = vmatpush1.bf16.msra.mxu0 %v5222
        %5916 = vmatprep.subr.bf16.mxu0 0
        %5917 = vmatpush1.bf16.msra.mxu0 0
        %5918 = vmatprep.subr.bf16.mxu0 0
        %5919 = vmatpush1.bf16.msra.mxu0 0
        %5920 = vmatprep.subr.bf16.mxu0 0
        %5921 = vmatpush1.bf16.msra.mxu0 0
        %5922 = vmatprep.subr.bf16.mxu0 0
        %5923 = vmatpush1.bf16.msra.mxu0 0
        %5924 = vmatprep.subr.bf16.mxu0 0
        %5925 = vmatpush1.bf16.msra.mxu0 0
        %5926 = vmatprep.subr.bf16.mxu0 0
        %5927 = vmatpush1.bf16.msra.mxu0 0
        %5928 = vmatprep.subr.bf16.mxu0 0
        %5929 = vmatpush1.bf16.msra.mxu0 0
        %5930 = vmatprep.subr.bf16.mxu0 0
        %5931 = vmatpush1.bf16.msra.mxu0 0
        %5932 = vmatprep.mubr.bf16.mxu0 0
        %5933 = vmatmul.mubr.bf16.gmra.mrb[0].mxu0 %v3952
        %v5934 = vpop.f32.mrb[0].mxu0
        %v5935 = vadd.f32 0.0, %v5934
        %v5936 = vpop.f32.mrb[0].mxu0
        %v5937 = vadd.f32 0.0, %v5936
        %v5938 = vpop.f32.mrb[0].mxu0
        %v5939 = vpop.f32.mrb[0].mxu0
        %5940 = vdwg.mxu0
        %5941 = vmatprep.subr.bf16.mxu0 %v5001
        %5942 = vmatpush1.bf16.msra.mxu0 %v5000
        %5943 = vmatprep.subr.bf16.mxu0 %v5033
        %5944 = vmatpush1.bf16.msra.mxu0 %v5032
        %5945 = vmatprep.subr.bf16.mxu0 %v5065
        %5946 = vmatpush1.bf16.msra.mxu0 %v5064
        %5947 = vmatprep.subr.bf16.mxu0 %v5097
        %5948 = vmatpush1.bf16.msra.mxu0 %v5096
        %5949 = vmatprep.subr.bf16.mxu0 %v5129
        %5950 = vmatpush1.bf16.msra.mxu0 %v5128
        %5951 = vmatprep.subr.bf16.mxu0 %v5161
        %5952 = vmatpush1.bf16.msra.mxu0 %v5160
        %5953 = vmatprep.subr.bf16.mxu0 %v5193
        %5954 = vmatpush1.bf16.msra.mxu0 %v5192
        %5955 = vmatprep.subr.bf16.mxu0 %v5225
        %5956 = vmatpush1.bf16.msra.mxu0 %v5224
        %5957 = vmatprep.subr.bf16.mxu0 0
        %5958 = vmatpush1.bf16.msra.mxu0 0
        %5959 = vmatprep.subr.bf16.mxu0 0
        %5960 = vmatpush1.bf16.msra.mxu0 0
        %5961 = vmatprep.subr.bf16.mxu0 0
        %5962 = vmatpush1.bf16.msra.mxu0 0
        %5963 = vmatprep.subr.bf16.mxu0 0
        %5964 = vmatpush1.bf16.msra.mxu0 0
        %5965 = vmatprep.subr.bf16.mxu0 0
        %5966 = vmatpush1.bf16.msra.mxu0 0
        %5967 = vmatprep.subr.bf16.mxu0 0
        %5968 = vmatpush1.bf16.msra.mxu0 0
        %5969 = vmatprep.subr.bf16.mxu0 0
        %5970 = vmatpush1.bf16.msra.mxu0 0
        %5971 = vmatprep.subr.bf16.mxu0 0
        %5972 = vmatpush1.bf16.msra.mxu0 0
        %5973 = vmatprep.mubr.bf16.mxu0 0
        %5974 = vmatmul.mubr.bf16.gmra.mrb[0].mxu0 %v3952
        %v5975 = vpop.f32.mrb[0].mxu0
        %v5976 = vadd.f32 0.0, %v5975
        %v5977 = vpop.f32.mrb[0].mxu0
        %v5978 = vadd.f32 0.0, %v5977
        %v5979 = vpop.f32.mrb[0].mxu0
        %v5980 = vpop.f32.mrb[0].mxu0
        %5981 = vdwg.mxu0
        %5982 = vmatprep.subr.bf16.mxu0 %v5003
        %5983 = vmatpush1.bf16.msra.mxu0 %v5002
        %5984 = vmatprep.subr.bf16.mxu0 %v5035
        %5985 = vmatpush1.bf16.msra.mxu0 %v5034
        %5986 = vmatprep.subr.bf16.mxu0 %v5067
        %5987 = vmatpush1.bf16.msra.mxu0 %v5066
        %5988 = vmatprep.subr.bf16.mxu0 %v5099
        %5989 = vmatpush1.bf16.msra.mxu0 %v5098
        %5990 = vmatprep.subr.bf16.mxu0 %v5131
        %5991 = vmatpush1.bf16.msra.mxu0 %v5130
        %5992 = vmatprep.subr.bf16.mxu0 %v5163
        %5993 = vmatpush1.bf16.msra.mxu0 %v5162
        %5994 = vmatprep.subr.bf16.mxu0 %v5195
        %5995 = vmatpush1.bf16.msra.mxu0 %v5194
        %5996 = vmatprep.subr.bf16.mxu0 %v5227
        %5997 = vmatpush1.bf16.msra.mxu0 %v5226
        %5998 = vmatprep.subr.bf16.mxu0 0
        %5999 = vmatpush1.bf16.msra.mxu0 0
        %6000 = vmatprep.subr.bf16.mxu0 0
        %6001 = vmatpush1.bf16.msra.mxu0 0
        %6002 = vmatprep.subr.bf16.mxu0 0
        %6003 = vmatpush1.bf16.msra.mxu0 0
        %6004 = vmatprep.subr.bf16.mxu0 0
        %6005 = vmatpush1.bf16.msra.mxu0 0
        %6006 = vmatprep.subr.bf16.mxu0 0
        %6007 = vmatpush1.bf16.msra.mxu0 0
        %6008 = vmatprep.subr.bf16.mxu0 0
        %6009 = vmatpush1.bf16.msra.mxu0 0
        %6010 = vmatprep.subr.bf16.mxu0 0
        %6011 = vmatpush1.bf16.msra.mxu0 0
        %6012 = vmatprep.subr.bf16.mxu0 0
        %6013 = vmatpush1.bf16.msra.mxu0 0
        %6014 = vmatprep.mubr.bf16.mxu0 0
        %6015 = vmatmul.mubr.bf16.gmra.mrb[0].mxu0 %v3952
        %v6016 = vpop.f32.mrb[0].mxu0
        %v6017 = vadd.f32 0.0, %v6016
        %v6018 = vpop.f32.mrb[0].mxu0
        %v6019 = vadd.f32 0.0, %v6018
        %v6020 = vpop.f32.mrb[0].mxu0
        %v6021 = vpop.f32.mrb[0].mxu0
        %6022 = vdwg.mxu0
        %6023 = vmatprep.subr.bf16.mxu0 %v5005
        %6024 = vmatpush1.bf16.msra.mxu0 %v5004
        %6025 = vmatprep.subr.bf16.mxu0 %v5037
        %6026 = vmatpush1.bf16.msra.mxu0 %v5036
        %6027 = vmatprep.subr.bf16.mxu0 %v5069
        %6028 = vmatpush1.bf16.msra.mxu0 %v5068
        %6029 = vmatprep.subr.bf16.mxu0 %v5101
        %6030 = vmatpush1.bf16.msra.mxu0 %v5100
        %6031 = vmatprep.subr.bf16.mxu0 %v5133
        %6032 = vmatpush1.bf16.msra.mxu0 %v5132
        %6033 = vmatprep.subr.bf16.mxu0 %v5165
        %6034 = vmatpush1.bf16.msra.mxu0 %v5164
        %6035 = vmatprep.subr.bf16.mxu0 %v5197
        %6036 = vmatpush1.bf16.msra.mxu0 %v5196
        %6037 = vmatprep.subr.bf16.mxu0 %v5229
        %6038 = vmatpush1.bf16.msra.mxu0 %v5228
        %6039 = vmatprep.subr.bf16.mxu0 0
        %6040 = vmatpush1.bf16.msra.mxu0 0
        %6041 = vmatprep.subr.bf16.mxu0 0
        %6042 = vmatpush1.bf16.msra.mxu0 0
        %6043 = vmatprep.subr.bf16.mxu0 0
        %6044 = vmatpush1.bf16.msra.mxu0 0
        %6045 = vmatprep.subr.bf16.mxu0 0
        %6046 = vmatpush1.bf16.msra.mxu0 0
        %6047 = vmatprep.subr.bf16.mxu0 0
        %6048 = vmatpush1.bf16.msra.mxu0 0
        %6049 = vmatprep.subr.bf16.mxu0 0
        %6050 = vmatpush1.bf16.msra.mxu0 0
        %6051 = vmatprep.subr.bf16.mxu0 0
        %6052 = vmatpush1.bf16.msra.mxu0 0
        %6053 = vmatprep.subr.bf16.mxu0 0
        %6054 = vmatpush1.bf16.msra.mxu0 0
        %6055 = vmatprep.mubr.bf16.mxu0 0
        %6056 = vmatmul.mubr.bf16.gmra.mrb[0].mxu0 %v3952
        %v6057 = vpop.f32.mrb[0].mxu0
        %v6058 = vadd.f32 0.0, %v6057
        %v6059 = vpop.f32.mrb[0].mxu0
        %v6060 = vadd.f32 0.0, %v6059
        %v6061 = vpop.f32.mrb[0].mxu0
        %v6062 = vpop.f32.mrb[0].mxu0
        %6063 = vdwg.mxu0
        %6064 = vmatprep.subr.bf16.mxu0 %v5007
        %6065 = vmatpush1.bf16.msra.mxu0 %v5006
        %6066 = vmatprep.subr.bf16.mxu0 %v5039
        %6067 = vmatpush1.bf16.msra.mxu0 %v5038
        %6068 = vmatprep.subr.bf16.mxu0 %v5071
        %6069 = vmatpush1.bf16.msra.mxu0 %v5070
        %6070 = vmatprep.subr.bf16.mxu0 %v5103
        %6071 = vmatpush1.bf16.msra.mxu0 %v5102
        %6072 = vmatprep.subr.bf16.mxu0 %v5135
        %6073 = vmatpush1.bf16.msra.mxu0 %v5134
        %6074 = vmatprep.subr.bf16.mxu0 %v5167
        %6075 = vmatpush1.bf16.msra.mxu0 %v5166
        %6076 = vmatprep.subr.bf16.mxu0 %v5199
        %6077 = vmatpush1.bf16.msra.mxu0 %v5198
        %6078 = vmatprep.subr.bf16.mxu0 %v5231
        %6079 = vmatpush1.bf16.msra.mxu0 %v5230
        %6080 = vmatprep.subr.bf16.mxu0 0
        %6081 = vmatpush1.bf16.msra.mxu0 0
        %6082 = vmatprep.subr.bf16.mxu0 0
        %6083 = vmatpush1.bf16.msra.mxu0 0
        %6084 = vmatprep.subr.bf16.mxu0 0
        %6085 = vmatpush1.bf16.msra.mxu0 0
        %6086 = vmatprep.subr.bf16.mxu0 0
        %6087 = vmatpush1.bf16.msra.mxu0 0
        %6088 = vmatprep.subr.bf16.mxu0 0
        %6089 = vmatpush1.bf16.msra.mxu0 0
        %6090 = vmatprep.subr.bf16.mxu0 0
        %6091 = vmatpush1.bf16.msra.mxu0 0
        %6092 = vmatprep.subr.bf16.mxu0 0
        %6093 = vmatpush1.bf16.msra.mxu0 0
        %6094 = vmatprep.subr.bf16.mxu0 0
        %6095 = vmatpush1.bf16.msra.mxu0 0
        %6096 = vmatprep.mubr.bf16.mxu0 0
        %6097 = vmatmul.mubr.bf16.gmra.mrb[0].mxu0 %v3952
        %v6098 = vpop.f32.mrb[0].mxu0
        %v6099 = vadd.f32 0.0, %v6098
        %v6100 = vpop.f32.mrb[0].mxu0
        %v6101 = vadd.f32 0.0, %v6100
        %v6102 = vpop.f32.mrb[0].mxu0
        %v6103 = vpop.f32.mrb[0].mxu0
        %6104 = vdwg.mxu0
        %6105 = vmatprep.subr.bf16.mxu0 %v5009
        %6106 = vmatpush1.bf16.msra.mxu0 %v5008
        %6107 = vmatprep.subr.bf16.mxu0 %v5041
        %6108 = vmatpush1.bf16.msra.mxu0 %v5040
        %6109 = vmatprep.subr.bf16.mxu0 %v5073
        %6110 = vmatpush1.bf16.msra.mxu0 %v5072
        %6111 = vmatprep.subr.bf16.mxu0 %v5105
        %6112 = vmatpush1.bf16.msra.mxu0 %v5104
        %6113 = vmatprep.subr.bf16.mxu0 %v5137
        %6114 = vmatpush1.bf16.msra.mxu0 %v5136
        %6115 = vmatprep.subr.bf16.mxu0 %v5169
        %6116 = vmatpush1.bf16.msra.mxu0 %v5168
        %6117 = vmatprep.subr.bf16.mxu0 %v5201
        %6118 = vmatpush1.bf16.msra.mxu0 %v5200
        %6119 = vmatprep.subr.bf16.mxu0 %v5233
        %6120 = vmatpush1.bf16.msra.mxu0 %v5232
        %6121 = vmatprep.subr.bf16.mxu0 0
        %6122 = vmatpush1.bf16.msra.mxu0 0
        %6123 = vmatprep.subr.bf16.mxu0 0
        %6124 = vmatpush1.bf16.msra.mxu0 0
        %6125 = vmatprep.subr.bf16.mxu0 0
        %6126 = vmatpush1.bf16.msra.mxu0 0
        %6127 = vmatprep.subr.bf16.mxu0 0
        %6128 = vmatpush1.bf16.msra.mxu0 0
        %6129 = vmatprep.subr.bf16.mxu0 0
        %6130 = vmatpush1.bf16.msra.mxu0 0
        %6131 = vmatprep.subr.bf16.mxu0 0
        %6132 = vmatpush1.bf16.msra.mxu0 0
        %6133 = vmatprep.subr.bf16.mxu0 0
        %6134 = vmatpush1.bf16.msra.mxu0 0
        %6135 = vmatprep.subr.bf16.mxu0 0
        %6136 = vmatpush1.bf16.msra.mxu0 0
        %6137 = vmatprep.mubr.bf16.mxu0 0
        %6138 = vmatmul.mubr.bf16.gmra.mrb[0].mxu0 %v3952
        %v6139 = vpop.f32.mrb[0].mxu0
        %v6140 = vadd.f32 0.0, %v6139
        %v6141 = vpop.f32.mrb[0].mxu0
        %v6142 = vadd.f32 0.0, %v6141
        %v6143 = vpop.f32.mrb[0].mxu0
        %v6144 = vpop.f32.mrb[0].mxu0
        %6145 = vdwg.mxu0
        %v6402 = vunpack.c.l.b16 %v3695
        %v6403 = vunpack.c.h.b16 %v3695
        %v6404 = vunpack.c.l.b16 %v3696
        %v6405 = vunpack.c.h.b16 %v3696
        %v6406 = vunpack.c.l.b16 %v3697
        %v6407 = vunpack.c.h.b16 %v3697
        %v6408 = vunpack.c.l.b16 %v3698
        %v6409 = vunpack.c.h.b16 %v3698
        %v6410 = vunpack.c.l.b16 %v3699
        %v6411 = vunpack.c.h.b16 %v3699
        %v6412 = vunpack.c.l.b16 %v3700
        %v6413 = vunpack.c.h.b16 %v3700
        %v6414 = vunpack.c.l.b16 %v3701
        %v6415 = vunpack.c.h.b16 %v3701
        %v6416 = vunpack.c.l.b16 %v3702
        %v6417 = vunpack.c.h.b16 %v3702
        %v6418 = vunpack.c.l.b16 %v3703
        %v6419 = vunpack.c.h.b16 %v3703
        %v6420 = vunpack.c.l.b16 %v3704
        %v6421 = vunpack.c.h.b16 %v3704
        %v6422 = vunpack.c.l.b16 %v3705
        %v6423 = vunpack.c.h.b16 %v3705
        %v6424 = vunpack.c.l.b16 %v3706
        %v6425 = vunpack.c.h.b16 %v3706
        %v6426 = vunpack.c.l.b16 %v3707
        %v6427 = vunpack.c.h.b16 %v3707
        %v6428 = vunpack.c.l.b16 %v3708
        %v6429 = vunpack.c.h.b16 %v3708
        %v6430 = vunpack.c.l.b16 %v3709
        %v6431 = vunpack.c.h.b16 %v3709
        %v6432 = vunpack.c.l.b16 %v3710
        %v6433 = vunpack.c.h.b16 %v3710
        %v6434 = vunpack.c.l.b16 %v3711
        %v6435 = vunpack.c.h.b16 %v3711
        %v6436 = vunpack.c.l.b16 %v3712
        %v6437 = vunpack.c.h.b16 %v3712
        %v6438 = vunpack.c.l.b16 %v3713
        %v6439 = vunpack.c.h.b16 %v3713
        %v6440 = vunpack.c.l.b16 %v3714
        %v6441 = vunpack.c.h.b16 %v3714
        %v6442 = vunpack.c.l.b16 %v3715
        %v6443 = vunpack.c.h.b16 %v3715
        %v6444 = vunpack.c.l.b16 %v3716
        %v6445 = vunpack.c.h.b16 %v3716
        %v6446 = vunpack.c.l.b16 %v3717
        %v6447 = vunpack.c.h.b16 %v3717
        %v6448 = vunpack.c.l.b16 %v3718
        %v6449 = vunpack.c.h.b16 %v3718
        %v6450 = vunpack.c.l.b16 %v3719
        %v6451 = vunpack.c.h.b16 %v3719
        %v6452 = vunpack.c.l.b16 %v3720
        %v6453 = vunpack.c.h.b16 %v3720
        %v6454 = vunpack.c.l.b16 %v3721
        %v6455 = vunpack.c.h.b16 %v3721
        %v6456 = vunpack.c.l.b16 %v3722
        %v6457 = vunpack.c.h.b16 %v3722
        %v6458 = vunpack.c.l.b16 %v3723
        %v6459 = vunpack.c.h.b16 %v3723
        %v6460 = vunpack.c.l.b16 %v3724
        %v6461 = vunpack.c.h.b16 %v3724
        %v6462 = vunpack.c.l.b16 %v3725
        %v6463 = vunpack.c.h.b16 %v3725
        %v6464 = vunpack.c.l.b16 %v3726
        %v6465 = vunpack.c.h.b16 %v3726
        %v6466 = vunpack.c.l.b16 %v3727
        %v6467 = vunpack.c.h.b16 %v3727
        %v6468 = vunpack.c.l.b16 %v3728
        %v6469 = vunpack.c.h.b16 %v3728
        %v6470 = vunpack.c.l.b16 %v3729
        %v6471 = vunpack.c.h.b16 %v3729
        %v6472 = vunpack.c.l.b16 %v3730
        %v6473 = vunpack.c.h.b16 %v3730
        %v6474 = vunpack.c.l.b16 %v3731
        %v6475 = vunpack.c.h.b16 %v3731
        %v6476 = vunpack.c.l.b16 %v3732
        %v6477 = vunpack.c.h.b16 %v3732
        %v6478 = vunpack.c.l.b16 %v3733
        %v6479 = vunpack.c.h.b16 %v3733
        %v6480 = vunpack.c.l.b16 %v3734
        %v6481 = vunpack.c.h.b16 %v3734
        %v6482 = vunpack.c.l.b16 %v3735
        %v6483 = vunpack.c.h.b16 %v3735
        %v6484 = vunpack.c.l.b16 %v3736
        %v6485 = vunpack.c.h.b16 %v3736
        %v6486 = vunpack.c.l.b16 %v3737
        %v6487 = vunpack.c.h.b16 %v3737
        %v6488 = vunpack.c.l.b16 %v3738
        %v6489 = vunpack.c.h.b16 %v3738
        %v6490 = vunpack.c.l.b16 %v3739
        %v6491 = vunpack.c.h.b16 %v3739
        %v6492 = vunpack.c.l.b16 %v3740
        %v6493 = vunpack.c.h.b16 %v3740
        %v6494 = vunpack.c.l.b16 %v3741
        %v6495 = vunpack.c.h.b16 %v3741
        %v6496 = vunpack.c.l.b16 %v3742
        %v6497 = vunpack.c.h.b16 %v3742
        %v6498 = vunpack.c.l.b16 %v3743
        %v6499 = vunpack.c.h.b16 %v3743
        %v6500 = vunpack.c.l.b16 %v3744
        %v6501 = vunpack.c.h.b16 %v3744
        %v6502 = vunpack.c.l.b16 %v3745
        %v6503 = vunpack.c.h.b16 %v3745
        %v6504 = vunpack.c.l.b16 %v3746
        %v6505 = vunpack.c.h.b16 %v3746
        %v6506 = vunpack.c.l.b16 %v3747
        %v6507 = vunpack.c.h.b16 %v3747
        %v6508 = vunpack.c.l.b16 %v3748
        %v6509 = vunpack.c.h.b16 %v3748
        %v6510 = vunpack.c.l.b16 %v3749
        %v6511 = vunpack.c.h.b16 %v3749
        %v6512 = vunpack.c.l.b16 %v3750
        %v6513 = vunpack.c.h.b16 %v3750
        %v6514 = vunpack.c.l.b16 %v3751
        %v6515 = vunpack.c.h.b16 %v3751
        %v6516 = vunpack.c.l.b16 %v3752
        %v6517 = vunpack.c.h.b16 %v3752
        %v6518 = vunpack.c.l.b16 %v3753
        %v6519 = vunpack.c.h.b16 %v3753
        %v6520 = vunpack.c.l.b16 %v3754
        %v6521 = vunpack.c.h.b16 %v3754
        %v6522 = vunpack.c.l.b16 %v3755
        %v6523 = vunpack.c.h.b16 %v3755
        %v6524 = vunpack.c.l.b16 %v3756
        %v6525 = vunpack.c.h.b16 %v3756
        %v6526 = vunpack.c.l.b16 %v3757
        %v6527 = vunpack.c.h.b16 %v3757
        %v6528 = vunpack.c.l.b16 %v3758
        %v6529 = vunpack.c.h.b16 %v3758
        %v6530 = vunpack.c.l.b16 %v3759
        %v6531 = vunpack.c.h.b16 %v3759
        %v6532 = vunpack.c.l.b16 %v3760
        %v6533 = vunpack.c.h.b16 %v3760
        %v6534 = vunpack.c.l.b16 %v3761
        %v6535 = vunpack.c.h.b16 %v3761
        %v6536 = vunpack.c.l.b16 %v3762
        %v6537 = vunpack.c.h.b16 %v3762
        %v6538 = vunpack.c.l.b16 %v3763
        %v6539 = vunpack.c.h.b16 %v3763
        %v6540 = vunpack.c.l.b16 %v3764
        %v6541 = vunpack.c.h.b16 %v3764
        %v6542 = vunpack.c.l.b16 %v3765
        %v6543 = vunpack.c.h.b16 %v3765
        %v6544 = vunpack.c.l.b16 %v3766
        %v6545 = vunpack.c.h.b16 %v3766
        %v6546 = vunpack.c.l.b16 %v3767
        %v6547 = vunpack.c.h.b16 %v3767
        %v6548 = vunpack.c.l.b16 %v3768
        %v6549 = vunpack.c.h.b16 %v3768
        %v6550 = vunpack.c.l.b16 %v3769
        %v6551 = vunpack.c.h.b16 %v3769
        %v6552 = vunpack.c.l.b16 %v3770
        %v6553 = vunpack.c.h.b16 %v3770
        %v6554 = vunpack.c.l.b16 %v3771
        %v6555 = vunpack.c.h.b16 %v3771
        %v6556 = vunpack.c.l.b16 %v3772
        %v6557 = vunpack.c.h.b16 %v3772
        %v6558 = vunpack.c.l.b16 %v3773
        %v6559 = vunpack.c.h.b16 %v3773
        %v6560 = vunpack.c.l.b16 %v3774
        %v6561 = vunpack.c.h.b16 %v3774
        %v6562 = vunpack.c.l.b16 %v3775
        %v6563 = vunpack.c.h.b16 %v3775
        %v6564 = vunpack.c.l.b16 %v3776
        %v6565 = vunpack.c.h.b16 %v3776
        %v6566 = vunpack.c.l.b16 %v3777
        %v6567 = vunpack.c.h.b16 %v3777
        %v6568 = vunpack.c.l.b16 %v3778
        %v6569 = vunpack.c.h.b16 %v3778
        %v6570 = vunpack.c.l.b16 %v3779
        %v6571 = vunpack.c.h.b16 %v3779
        %v6572 = vunpack.c.l.b16 %v3780
        %v6573 = vunpack.c.h.b16 %v3780
        %v6574 = vunpack.c.l.b16 %v3781
        %v6575 = vunpack.c.h.b16 %v3781
        %v6576 = vunpack.c.l.b16 %v3782
        %v6577 = vunpack.c.h.b16 %v3782
        %v6578 = vunpack.c.l.b16 %v3783
        %v6579 = vunpack.c.h.b16 %v3783
        %v6580 = vunpack.c.l.b16 %v3784
        %v6581 = vunpack.c.h.b16 %v3784
        %v6582 = vunpack.c.l.b16 %v3785
        %v6583 = vunpack.c.h.b16 %v3785
        %v6584 = vunpack.c.l.b16 %v3786
        %v6585 = vunpack.c.h.b16 %v3786
        %v6586 = vunpack.c.l.b16 %v3787
        %v6587 = vunpack.c.h.b16 %v3787
        %v6588 = vunpack.c.l.b16 %v3788
        %v6589 = vunpack.c.h.b16 %v3788
        %v6590 = vunpack.c.l.b16 %v3789
        %v6591 = vunpack.c.h.b16 %v3789
        %v6592 = vunpack.c.l.b16 %v3790
        %v6593 = vunpack.c.h.b16 %v3790
        %v6594 = vunpack.c.l.b16 %v3791
        %v6595 = vunpack.c.h.b16 %v3791
        %v6596 = vunpack.c.l.b16 %v3792
        %v6597 = vunpack.c.h.b16 %v3792
        %v6598 = vunpack.c.l.b16 %v3793
        %v6599 = vunpack.c.h.b16 %v3793
        %v6600 = vunpack.c.l.b16 %v3794
        %v6601 = vunpack.c.h.b16 %v3794
        %v6602 = vunpack.c.l.b16 %v3795
        %v6603 = vunpack.c.h.b16 %v3795
        %v6604 = vunpack.c.l.b16 %v3796
        %v6605 = vunpack.c.h.b16 %v3796
        %v6606 = vunpack.c.l.b16 %v3797
        %v6607 = vunpack.c.h.b16 %v3797
        %v6608 = vunpack.c.l.b16 %v3798
        %v6609 = vunpack.c.h.b16 %v3798
        %v6610 = vunpack.c.l.b16 %v3799
        %v6611 = vunpack.c.h.b16 %v3799
        %v6612 = vunpack.c.l.b16 %v3800
        %v6613 = vunpack.c.h.b16 %v3800
        %v6614 = vunpack.c.l.b16 %v3801
        %v6615 = vunpack.c.h.b16 %v3801
        %v6616 = vunpack.c.l.b16 %v3802
        %v6617 = vunpack.c.h.b16 %v3802
        %v6618 = vunpack.c.l.b16 %v3803
        %v6619 = vunpack.c.h.b16 %v3803
        %v6620 = vunpack.c.l.b16 %v3804
        %v6621 = vunpack.c.h.b16 %v3804
        %v6622 = vunpack.c.l.b16 %v3805
        %v6623 = vunpack.c.h.b16 %v3805
        %v6624 = vunpack.c.l.b16 %v3806
        %v6625 = vunpack.c.h.b16 %v3806
        %v6626 = vunpack.c.l.b16 %v3807
        %v6627 = vunpack.c.h.b16 %v3807
        %v6628 = vunpack.c.l.b16 %v3808
        %v6629 = vunpack.c.h.b16 %v3808
        %v6630 = vunpack.c.l.b16 %v3809
        %v6631 = vunpack.c.h.b16 %v3809
        %v6632 = vunpack.c.l.b16 %v3810
        %v6633 = vunpack.c.h.b16 %v3810
        %v6634 = vunpack.c.l.b16 %v3811
        %v6635 = vunpack.c.h.b16 %v3811
        %v6636 = vunpack.c.l.b16 %v3812
        %v6637 = vunpack.c.h.b16 %v3812
        %v6638 = vunpack.c.l.b16 %v3813
        %v6639 = vunpack.c.h.b16 %v3813
        %v6640 = vunpack.c.l.b16 %v3814
        %v6641 = vunpack.c.h.b16 %v3814
        %v6642 = vunpack.c.l.b16 %v3815
        %v6643 = vunpack.c.h.b16 %v3815
        %v6644 = vunpack.c.l.b16 %v3816
        %v6645 = vunpack.c.h.b16 %v3816
        %v6646 = vunpack.c.l.b16 %v3817
        %v6647 = vunpack.c.h.b16 %v3817
        %v6648 = vunpack.c.l.b16 %v3818
        %v6649 = vunpack.c.h.b16 %v3818
        %v6650 = vunpack.c.l.b16 %v3819
        %v6651 = vunpack.c.h.b16 %v3819
        %v6652 = vunpack.c.l.b16 %v3820
        %v6653 = vunpack.c.h.b16 %v3820
        %v6654 = vunpack.c.l.b16 %v3821
        %v6655 = vunpack.c.h.b16 %v3821
        %v6656 = vunpack.c.l.b16 %v3822
        %v6657 = vunpack.c.h.b16 %v3822
        %v6658 = vunpack.c.l.b16 %v3823
        %v6659 = vunpack.c.h.b16 %v3823
        %v6660 = vunpack.c.l.b16 %v3824
        %v6661 = vunpack.c.h.b16 %v3824
        %v6662 = vunpack.c.l.b16 %v3825
        %v6663 = vunpack.c.h.b16 %v3825
        %v6664 = vunpack.c.l.b16 %v3826
        %v6665 = vunpack.c.h.b16 %v3826
        %v6666 = vunpack.c.l.b16 %v3827
        %v6667 = vunpack.c.h.b16 %v3827
        %v6668 = vunpack.c.l.b16 %v3828
        %v6669 = vunpack.c.h.b16 %v3828
        %v6670 = vunpack.c.l.b16 %v3829
        %v6671 = vunpack.c.h.b16 %v3829
        %v6672 = vunpack.c.l.b16 %v3830
        %v6673 = vunpack.c.h.b16 %v3830
        %v6674 = vunpack.c.l.b16 %v3831
        %v6675 = vunpack.c.h.b16 %v3831
        %v6676 = vunpack.c.l.b16 %v3832
        %v6677 = vunpack.c.h.b16 %v3832
        %v6678 = vunpack.c.l.b16 %v3833
        %v6679 = vunpack.c.h.b16 %v3833
        %v6680 = vunpack.c.l.b16 %v3834
        %v6681 = vunpack.c.h.b16 %v3834
        %v6682 = vunpack.c.l.b16 %v3835
        %v6683 = vunpack.c.h.b16 %v3835
        %v6684 = vunpack.c.l.b16 %v3836
        %v6685 = vunpack.c.h.b16 %v3836
        %v6686 = vunpack.c.l.b16 %v3837
        %v6687 = vunpack.c.h.b16 %v3837
        %v6688 = vunpack.c.l.b16 %v3838
        %v6689 = vunpack.c.h.b16 %v3838
        %v6690 = vunpack.c.l.b16 %v3839
        %v6691 = vunpack.c.h.b16 %v3839
        %v6692 = vunpack.c.l.b16 %v3840
        %v6693 = vunpack.c.h.b16 %v3840
        %v6694 = vunpack.c.l.b16 %v3841
        %v6695 = vunpack.c.h.b16 %v3841
        %v6696 = vunpack.c.l.b16 %v3842
        %v6697 = vunpack.c.h.b16 %v3842
        %v6698 = vunpack.c.l.b16 %v3843
        %v6699 = vunpack.c.h.b16 %v3843
        %v6700 = vunpack.c.l.b16 %v3844
        %v6701 = vunpack.c.h.b16 %v3844
        %v6702 = vunpack.c.l.b16 %v3845
        %v6703 = vunpack.c.h.b16 %v3845
        %v6704 = vunpack.c.l.b16 %v3846
        %v6705 = vunpack.c.h.b16 %v3846
        %v6706 = vunpack.c.l.b16 %v3847
        %v6707 = vunpack.c.h.b16 %v3847
        %v6708 = vunpack.c.l.b16 %v3848
        %v6709 = vunpack.c.h.b16 %v3848
        %v6710 = vunpack.c.l.b16 %v3849
        %v6711 = vunpack.c.h.b16 %v3849
        %v6712 = vunpack.c.l.b16 %v3850
        %v6713 = vunpack.c.h.b16 %v3850
        %v6714 = vunpack.c.l.b16 %v3851
        %v6715 = vunpack.c.h.b16 %v3851
        %v6716 = vunpack.c.l.b16 %v3852
        %v6717 = vunpack.c.h.b16 %v3852
        %v6718 = vunpack.c.l.b16 %v3853
        %v6719 = vunpack.c.h.b16 %v3853
        %v6720 = vunpack.c.l.b16 %v3854
        %v6721 = vunpack.c.h.b16 %v3854
        %v6722 = vunpack.c.l.b16 %v3855
        %v6723 = vunpack.c.h.b16 %v3855
        %v6724 = vunpack.c.l.b16 %v3856
        %v6725 = vunpack.c.h.b16 %v3856
        %v6726 = vunpack.c.l.b16 %v3857
        %v6727 = vunpack.c.h.b16 %v3857
        %v6728 = vunpack.c.l.b16 %v3858
        %v6729 = vunpack.c.h.b16 %v3858
        %v6730 = vunpack.c.l.b16 %v3859
        %v6731 = vunpack.c.h.b16 %v3859
        %v6732 = vunpack.c.l.b16 %v3860
        %v6733 = vunpack.c.h.b16 %v3860
        %v6734 = vunpack.c.l.b16 %v3861
        %v6735 = vunpack.c.h.b16 %v3861
        %v6736 = vunpack.c.l.b16 %v3862
        %v6737 = vunpack.c.h.b16 %v3862
        %v6738 = vunpack.c.l.b16 %v3863
        %v6739 = vunpack.c.h.b16 %v3863
        %v6740 = vunpack.c.l.b16 %v3864
        %v6741 = vunpack.c.h.b16 %v3864
        %v6742 = vunpack.c.l.b16 %v3865
        %v6743 = vunpack.c.h.b16 %v3865
        %v6744 = vunpack.c.l.b16 %v3866
        %v6745 = vunpack.c.h.b16 %v3866
        %v6746 = vunpack.c.l.b16 %v3867
        %v6747 = vunpack.c.h.b16 %v3867
        %v6748 = vunpack.c.l.b16 %v3868
        %v6749 = vunpack.c.h.b16 %v3868
        %v6750 = vunpack.c.l.b16 %v3869
        %v6751 = vunpack.c.h.b16 %v3869
        %v6752 = vunpack.c.l.b16 %v3870
        %v6753 = vunpack.c.h.b16 %v3870
        %v6754 = vunpack.c.l.b16 %v3871
        %v6755 = vunpack.c.h.b16 %v3871
        %v6756 = vunpack.c.l.b16 %v3872
        %v6757 = vunpack.c.h.b16 %v3872
        %v6758 = vunpack.c.l.b16 %v3873
        %v6759 = vunpack.c.h.b16 %v3873
        %v6760 = vunpack.c.l.b16 %v3874
        %v6761 = vunpack.c.h.b16 %v3874
        %v6762 = vunpack.c.l.b16 %v3875
        %v6763 = vunpack.c.h.b16 %v3875
        %v6764 = vunpack.c.l.b16 %v3876
        %v6765 = vunpack.c.h.b16 %v3876
        %v6766 = vunpack.c.l.b16 %v3877
        %v6767 = vunpack.c.h.b16 %v3877
        %v6768 = vunpack.c.l.b16 %v3878
        %v6769 = vunpack.c.h.b16 %v3878
        %v6770 = vunpack.c.l.b16 %v3879
        %v6771 = vunpack.c.h.b16 %v3879
        %v6772 = vunpack.c.l.b16 %v3880
        %v6773 = vunpack.c.h.b16 %v3880
        %v6774 = vunpack.c.l.b16 %v3881
        %v6775 = vunpack.c.h.b16 %v3881
        %v6776 = vunpack.c.l.b16 %v3882
        %v6777 = vunpack.c.h.b16 %v3882
        %v6778 = vunpack.c.l.b16 %v3883
        %v6779 = vunpack.c.h.b16 %v3883
        %v6780 = vunpack.c.l.b16 %v3884
        %v6781 = vunpack.c.h.b16 %v3884
        %v6782 = vunpack.c.l.b16 %v3885
        %v6783 = vunpack.c.h.b16 %v3885
        %v6784 = vunpack.c.l.b16 %v3886
        %v6785 = vunpack.c.h.b16 %v3886
        %v6786 = vunpack.c.l.b16 %v3887
        %v6787 = vunpack.c.h.b16 %v3887
        %v6788 = vunpack.c.l.b16 %v3888
        %v6789 = vunpack.c.h.b16 %v3888
        %v6790 = vunpack.c.l.b16 %v3889
        %v6791 = vunpack.c.h.b16 %v3889
        %v6792 = vunpack.c.l.b16 %v3890
        %v6793 = vunpack.c.h.b16 %v3890
        %v6794 = vunpack.c.l.b16 %v3891
        %v6795 = vunpack.c.h.b16 %v3891
        %v6796 = vunpack.c.l.b16 %v3892
        %v6797 = vunpack.c.h.b16 %v3892
        %v6798 = vunpack.c.l.b16 %v3893
        %v6799 = vunpack.c.h.b16 %v3893
        %v6800 = vunpack.c.l.b16 %v3894
        %v6801 = vunpack.c.h.b16 %v3894
        %v6802 = vunpack.c.l.b16 %v3895
        %v6803 = vunpack.c.h.b16 %v3895
        %v6804 = vunpack.c.l.b16 %v3896
        %v6805 = vunpack.c.h.b16 %v3896
        %v6806 = vunpack.c.l.b16 %v3897
        %v6807 = vunpack.c.h.b16 %v3897
        %v6808 = vunpack.c.l.b16 %v3898
        %v6809 = vunpack.c.h.b16 %v3898
        %v6810 = vunpack.c.l.b16 %v3899
        %v6811 = vunpack.c.h.b16 %v3899
        %v6812 = vunpack.c.l.b16 %v3900
        %v6813 = vunpack.c.h.b16 %v3900
        %v6814 = vunpack.c.l.b16 %v3901
        %v6815 = vunpack.c.h.b16 %v3901
        %v6816 = vunpack.c.l.b16 %v3902
        %v6817 = vunpack.c.h.b16 %v3902
        %v6818 = vunpack.c.l.b16 %v3903
        %v6819 = vunpack.c.h.b16 %v3903
        %v6820 = vunpack.c.l.b16 %v3904
        %v6821 = vunpack.c.h.b16 %v3904
        %v6822 = vunpack.c.l.b16 %v3905
        %v6823 = vunpack.c.h.b16 %v3905
        %v6824 = vunpack.c.l.b16 %v3906
        %v6825 = vunpack.c.h.b16 %v3906
        %v6826 = vunpack.c.l.b16 %v3907
        %v6827 = vunpack.c.h.b16 %v3907
        %v6828 = vunpack.c.l.b16 %v3908
        %v6829 = vunpack.c.h.b16 %v3908
        %v6830 = vunpack.c.l.b16 %v3909
        %v6831 = vunpack.c.h.b16 %v3909
        %v6832 = vunpack.c.l.b16 %v3910
        %v6833 = vunpack.c.h.b16 %v3910
        %v6834 = vunpack.c.l.b16 %v3911
        %v6835 = vunpack.c.h.b16 %v3911
        %v6836 = vunpack.c.l.b16 %v3912
        %v6837 = vunpack.c.h.b16 %v3912
        %v6838 = vunpack.c.l.b16 %v3913
        %v6839 = vunpack.c.h.b16 %v3913
        %v6840 = vunpack.c.l.b16 %v3914
        %v6841 = vunpack.c.h.b16 %v3914
        %v6842 = vunpack.c.l.b16 %v3915
        %v6843 = vunpack.c.h.b16 %v3915
        %v6844 = vunpack.c.l.b16 %v3916
        %v6845 = vunpack.c.h.b16 %v3916
        %v6846 = vunpack.c.l.b16 %v3917
        %v6847 = vunpack.c.h.b16 %v3917
        %v6848 = vunpack.c.l.b16 %v3918
        %v6849 = vunpack.c.h.b16 %v3918
        %v6850 = vunpack.c.l.b16 %v3919
        %v6851 = vunpack.c.h.b16 %v3919
        %v6852 = vunpack.c.l.b16 %v3920
        %v6853 = vunpack.c.h.b16 %v3920
        %v6854 = vunpack.c.l.b16 %v3921
        %v6855 = vunpack.c.h.b16 %v3921
        %v6856 = vunpack.c.l.b16 %v3922
        %v6857 = vunpack.c.h.b16 %v3922
        %v6858 = vunpack.c.l.b16 %v3923
        %v6859 = vunpack.c.h.b16 %v3923
        %v6860 = vunpack.c.l.b16 %v3924
        %v6861 = vunpack.c.h.b16 %v3924
        %v6862 = vunpack.c.l.b16 %v3925
        %v6863 = vunpack.c.h.b16 %v3925
        %v6864 = vunpack.c.l.b16 %v3926
        %v6865 = vunpack.c.h.b16 %v3926
        %v6866 = vunpack.c.l.b16 %v3927
        %v6867 = vunpack.c.h.b16 %v3927
        %v6868 = vunpack.c.l.b16 %v3928
        %v6869 = vunpack.c.h.b16 %v3928
        %v6870 = vunpack.c.l.b16 %v3929
        %v6871 = vunpack.c.h.b16 %v3929
        %v6872 = vunpack.c.l.b16 %v3930
        %v6873 = vunpack.c.h.b16 %v3930
        %v6874 = vunpack.c.l.b16 %v3931
        %v6875 = vunpack.c.h.b16 %v3931
        %v6876 = vunpack.c.l.b16 %v3932
        %v6877 = vunpack.c.h.b16 %v3932
        %v6878 = vunpack.c.l.b16 %v3933
        %v6879 = vunpack.c.h.b16 %v3933
        %v6880 = vunpack.c.l.b16 %v3934
        %v6881 = vunpack.c.h.b16 %v3934
        %v6882 = vunpack.c.l.b16 %v3935
        %v6883 = vunpack.c.h.b16 %v3935
        %v6884 = vunpack.c.l.b16 %v3936
        %v6885 = vunpack.c.h.b16 %v3936
        %v6886 = vunpack.c.l.b16 %v3937
        %v6887 = vunpack.c.h.b16 %v3937
        %v6888 = vunpack.c.l.b16 %v3938
        %v6889 = vunpack.c.h.b16 %v3938
        %v6890 = vunpack.c.l.b16 %v3939
        %v6891 = vunpack.c.h.b16 %v3939
        %v6892 = vunpack.c.l.b16 %v3940
        %v6893 = vunpack.c.h.b16 %v3940
        %v6894 = vunpack.c.l.b16 %v3941
        %v6895 = vunpack.c.h.b16 %v3941
        %v6896 = vunpack.c.l.b16 %v3942
        %v6897 = vunpack.c.h.b16 %v3942
        %v6898 = vunpack.c.l.b16 %v3943
        %v6899 = vunpack.c.h.b16 %v3943
        %v6900 = vunpack.c.l.b16 %v3944
        %v6901 = vunpack.c.h.b16 %v3944
        %v6902 = vunpack.c.l.b16 %v3945
        %v6903 = vunpack.c.h.b16 %v3945
        %v6904 = vunpack.c.l.b16 %v3946
        %v6905 = vunpack.c.h.b16 %v3946
        %v6906 = vunpack.c.l.b16 %v3947
        %v6907 = vunpack.c.h.b16 %v3947
        %v6908 = vunpack.c.l.b16 %v3948
        %v6909 = vunpack.c.h.b16 %v3948
        %v6910 = vunpack.c.l.b16 %v3949
        %v6911 = vunpack.c.h.b16 %v3949
        %v6912 = vunpack.c.l.b16 %v3950
        %v6913 = vunpack.c.h.b16 %v3950
        %v6914 = vpack.c.b16 %v6434, %v6402
        %v6915 = vpack.c.b16 %v6435, %v6403
        %v6916 = vpack.c.b16 %v6436, %v6404
        %v6917 = vpack.c.b16 %v6437, %v6405
        %v6918 = vpack.c.b16 %v6438, %v6406
        %v6919 = vpack.c.b16 %v6439, %v6407
        %v6920 = vpack.c.b16 %v6440, %v6408
        %v6921 = vpack.c.b16 %v6441, %v6409
        %v6922 = vpack.c.b16 %v6442, %v6410
        %v6923 = vpack.c.b16 %v6443, %v6411
        %v6924 = vpack.c.b16 %v6444, %v6412
        %v6925 = vpack.c.b16 %v6445, %v6413
        %v6926 = vpack.c.b16 %v6446, %v6414
        %v6927 = vpack.c.b16 %v6447, %v6415
        %v6928 = vpack.c.b16 %v6448, %v6416
        %v6929 = vpack.c.b16 %v6449, %v6417
        %v6930 = vpack.c.b16 %v6450, %v6418
        %v6931 = vpack.c.b16 %v6451, %v6419
        %v6932 = vpack.c.b16 %v6452, %v6420
        %v6933 = vpack.c.b16 %v6453, %v6421
        %v6934 = vpack.c.b16 %v6454, %v6422
        %v6935 = vpack.c.b16 %v6455, %v6423
        %v6936 = vpack.c.b16 %v6456, %v6424
        %v6937 = vpack.c.b16 %v6457, %v6425
        %v6938 = vpack.c.b16 %v6458, %v6426
        %v6939 = vpack.c.b16 %v6459, %v6427
        %v6940 = vpack.c.b16 %v6460, %v6428
        %v6941 = vpack.c.b16 %v6461, %v6429
        %v6942 = vpack.c.b16 %v6462, %v6430
        %v6943 = vpack.c.b16 %v6463, %v6431
        %v6944 = vpack.c.b16 %v6464, %v6432
        %v6945 = vpack.c.b16 %v6465, %v6433
        %v6946 = vpack.c.b16 %v6498, %v6466
        %v6947 = vpack.c.b16 %v6499, %v6467
        %v6948 = vpack.c.b16 %v6500, %v6468
        %v6949 = vpack.c.b16 %v6501, %v6469
        %v6950 = vpack.c.b16 %v6502, %v6470
        %v6951 = vpack.c.b16 %v6503, %v6471
        %v6952 = vpack.c.b16 %v6504, %v6472
        %v6953 = vpack.c.b16 %v6505, %v6473
        %v6954 = vpack.c.b16 %v6506, %v6474
        %v6955 = vpack.c.b16 %v6507, %v6475
        %v6956 = vpack.c.b16 %v6508, %v6476
        %v6957 = vpack.c.b16 %v6509, %v6477
        %v6958 = vpack.c.b16 %v6510, %v6478
        %v6959 = vpack.c.b16 %v6511, %v6479
        %v6960 = vpack.c.b16 %v6512, %v6480
        %v6961 = vpack.c.b16 %v6513, %v6481
        %v6962 = vpack.c.b16 %v6514, %v6482
        %v6963 = vpack.c.b16 %v6515, %v6483
        %v6964 = vpack.c.b16 %v6516, %v6484
        %v6965 = vpack.c.b16 %v6517, %v6485
        %v6966 = vpack.c.b16 %v6518, %v6486
        %v6967 = vpack.c.b16 %v6519, %v6487
        %v6968 = vpack.c.b16 %v6520, %v6488
        %v6969 = vpack.c.b16 %v6521, %v6489
        %v6970 = vpack.c.b16 %v6522, %v6490
        %v6971 = vpack.c.b16 %v6523, %v6491
        %v6972 = vpack.c.b16 %v6524, %v6492
        %v6973 = vpack.c.b16 %v6525, %v6493
        %v6974 = vpack.c.b16 %v6526, %v6494
        %v6975 = vpack.c.b16 %v6527, %v6495
        %v6976 = vpack.c.b16 %v6528, %v6496
        %v6977 = vpack.c.b16 %v6529, %v6497
        %v6978 = vpack.c.b16 %v6562, %v6530
        %v6979 = vpack.c.b16 %v6563, %v6531
        %v6980 = vpack.c.b16 %v6564, %v6532
        %v6981 = vpack.c.b16 %v6565, %v6533
        %v6982 = vpack.c.b16 %v6566, %v6534
        %v6983 = vpack.c.b16 %v6567, %v6535
        %v6984 = vpack.c.b16 %v6568, %v6536
        %v6985 = vpack.c.b16 %v6569, %v6537
        %v6986 = vpack.c.b16 %v6570, %v6538
        %v6987 = vpack.c.b16 %v6571, %v6539
        %v6988 = vpack.c.b16 %v6572, %v6540
        %v6989 = vpack.c.b16 %v6573, %v6541
        %v6990 = vpack.c.b16 %v6574, %v6542
        %v6991 = vpack.c.b16 %v6575, %v6543
        %v6992 = vpack.c.b16 %v6576, %v6544
        %v6993 = vpack.c.b16 %v6577, %v6545
        %v6994 = vpack.c.b16 %v6578, %v6546
        %v6995 = vpack.c.b16 %v6579, %v6547
        %v6996 = vpack.c.b16 %v6580, %v6548
        %v6997 = vpack.c.b16 %v6581, %v6549
        %v6998 = vpack.c.b16 %v6582, %v6550
        %v6999 = vpack.c.b16 %v6583, %v6551
        %v7000 = vpack.c.b16 %v6584, %v6552
        %v7001 = vpack.c.b16 %v6585, %v6553
        %v7002 = vpack.c.b16 %v6586, %v6554
        %v7003 = vpack.c.b16 %v6587, %v6555
        %v7004 = vpack.c.b16 %v6588, %v6556
        %v7005 = vpack.c.b16 %v6589, %v6557
        %v7006 = vpack.c.b16 %v6590, %v6558
        %v7007 = vpack.c.b16 %v6591, %v6559
        %v7008 = vpack.c.b16 %v6592, %v6560
        %v7009 = vpack.c.b16 %v6593, %v6561
        %v7010 = vpack.c.b16 %v6626, %v6594
        %v7011 = vpack.c.b16 %v6627, %v6595
        %v7012 = vpack.c.b16 %v6628, %v6596
        %v7013 = vpack.c.b16 %v6629, %v6597
        %v7014 = vpack.c.b16 %v6630, %v6598
        %v7015 = vpack.c.b16 %v6631, %v6599
        %v7016 = vpack.c.b16 %v6632, %v6600
        %v7017 = vpack.c.b16 %v6633, %v6601
        %v7018 = vpack.c.b16 %v6634, %v6602
        %v7019 = vpack.c.b16 %v6635, %v6603
        %v7020 = vpack.c.b16 %v6636, %v6604
        %v7021 = vpack.c.b16 %v6637, %v6605
        %v7022 = vpack.c.b16 %v6638, %v6606
        %v7023 = vpack.c.b16 %v6639, %v6607
        %v7024 = vpack.c.b16 %v6640, %v6608
        %v7025 = vpack.c.b16 %v6641, %v6609
        %v7026 = vpack.c.b16 %v6642, %v6610
        %v7027 = vpack.c.b16 %v6643, %v6611
        %v7028 = vpack.c.b16 %v6644, %v6612
        %v7029 = vpack.c.b16 %v6645, %v6613
        %v7030 = vpack.c.b16 %v6646, %v6614
        %v7031 = vpack.c.b16 %v6647, %v6615
        %v7032 = vpack.c.b16 %v6648, %v6616
        %v7033 = vpack.c.b16 %v6649, %v6617
        %v7034 = vpack.c.b16 %v6650, %v6618
        %v7035 = vpack.c.b16 %v6651, %v6619
        %v7036 = vpack.c.b16 %v6652, %v6620
        %v7037 = vpack.c.b16 %v6653, %v6621
        %v7038 = vpack.c.b16 %v6654, %v6622
        %v7039 = vpack.c.b16 %v6655, %v6623
        %v7040 = vpack.c.b16 %v6656, %v6624
        %v7041 = vpack.c.b16 %v6657, %v6625
        %v7042 = vpack.c.b16 %v6690, %v6658
        %v7043 = vpack.c.b16 %v6691, %v6659
        %v7044 = vpack.c.b16 %v6692, %v6660
        %v7045 = vpack.c.b16 %v6693, %v6661
        %v7046 = vpack.c.b16 %v6694, %v6662
        %v7047 = vpack.c.b16 %v6695, %v6663
        %v7048 = vpack.c.b16 %v6696, %v6664
        %v7049 = vpack.c.b16 %v6697, %v6665
        %v7050 = vpack.c.b16 %v6698, %v6666
        %v7051 = vpack.c.b16 %v6699, %v6667
        %v7052 = vpack.c.b16 %v6700, %v6668
        %v7053 = vpack.c.b16 %v6701, %v6669
        %v7054 = vpack.c.b16 %v6702, %v6670
        %v7055 = vpack.c.b16 %v6703, %v6671
        %v7056 = vpack.c.b16 %v6704, %v6672
        %v7057 = vpack.c.b16 %v6705, %v6673
        %v7058 = vpack.c.b16 %v6706, %v6674
        %v7059 = vpack.c.b16 %v6707, %v6675
        %v7060 = vpack.c.b16 %v6708, %v6676
        %v7061 = vpack.c.b16 %v6709, %v6677
        %v7062 = vpack.c.b16 %v6710, %v6678
        %v7063 = vpack.c.b16 %v6711, %v6679
        %v7064 = vpack.c.b16 %v6712, %v6680
        %v7065 = vpack.c.b16 %v6713, %v6681
        %v7066 = vpack.c.b16 %v6714, %v6682
        %v7067 = vpack.c.b16 %v6715, %v6683
        %v7068 = vpack.c.b16 %v6716, %v6684
        %v7069 = vpack.c.b16 %v6717, %v6685
        %v7070 = vpack.c.b16 %v6718, %v6686
        %v7071 = vpack.c.b16 %v6719, %v6687
        %v7072 = vpack.c.b16 %v6720, %v6688
        %v7073 = vpack.c.b16 %v6721, %v6689
        %v7074 = vpack.c.b16 %v6754, %v6722
        %v7075 = vpack.c.b16 %v6755, %v6723
        %v7076 = vpack.c.b16 %v6756, %v6724
        %v7077 = vpack.c.b16 %v6757, %v6725
        %v7078 = vpack.c.b16 %v6758, %v6726
        %v7079 = vpack.c.b16 %v6759, %v6727
        %v7080 = vpack.c.b16 %v6760, %v6728
        %v7081 = vpack.c.b16 %v6761, %v6729
        %v7082 = vpack.c.b16 %v6762, %v6730
        %v7083 = vpack.c.b16 %v6763, %v6731
        %v7084 = vpack.c.b16 %v6764, %v6732
        %v7085 = vpack.c.b16 %v6765, %v6733
        %v7086 = vpack.c.b16 %v6766, %v6734
        %v7087 = vpack.c.b16 %v6767, %v6735
        %v7088 = vpack.c.b16 %v6768, %v6736
        %v7089 = vpack.c.b16 %v6769, %v6737
        %v7090 = vpack.c.b16 %v6770, %v6738
        %v7091 = vpack.c.b16 %v6771, %v6739
        %v7092 = vpack.c.b16 %v6772, %v6740
        %v7093 = vpack.c.b16 %v6773, %v6741
        %v7094 = vpack.c.b16 %v6774, %v6742
        %v7095 = vpack.c.b16 %v6775, %v6743
        %v7096 = vpack.c.b16 %v6776, %v6744
        %v7097 = vpack.c.b16 %v6777, %v6745
        %v7098 = vpack.c.b16 %v6778, %v6746
        %v7099 = vpack.c.b16 %v6779, %v6747
        %v7100 = vpack.c.b16 %v6780, %v6748
        %v7101 = vpack.c.b16 %v6781, %v6749
        %v7102 = vpack.c.b16 %v6782, %v6750
        %v7103 = vpack.c.b16 %v6783, %v6751
        %v7104 = vpack.c.b16 %v6784, %v6752
        %v7105 = vpack.c.b16 %v6785, %v6753
        %v7106 = vpack.c.b16 %v6818, %v6786
        %v7107 = vpack.c.b16 %v6819, %v6787
        %v7108 = vpack.c.b16 %v6820, %v6788
        %v7109 = vpack.c.b16 %v6821, %v6789
        %v7110 = vpack.c.b16 %v6822, %v6790
        %v7111 = vpack.c.b16 %v6823, %v6791
        %v7112 = vpack.c.b16 %v6824, %v6792
        %v7113 = vpack.c.b16 %v6825, %v6793
        %v7114 = vpack.c.b16 %v6826, %v6794
        %v7115 = vpack.c.b16 %v6827, %v6795
        %v7116 = vpack.c.b16 %v6828, %v6796
        %v7117 = vpack.c.b16 %v6829, %v6797
        %v7118 = vpack.c.b16 %v6830, %v6798
        %v7119 = vpack.c.b16 %v6831, %v6799
        %v7120 = vpack.c.b16 %v6832, %v6800
        %v7121 = vpack.c.b16 %v6833, %v6801
        %v7122 = vpack.c.b16 %v6834, %v6802
        %v7123 = vpack.c.b16 %v6835, %v6803
        %v7124 = vpack.c.b16 %v6836, %v6804
        %v7125 = vpack.c.b16 %v6837, %v6805
        %v7126 = vpack.c.b16 %v6838, %v6806
        %v7127 = vpack.c.b16 %v6839, %v6807
        %v7128 = vpack.c.b16 %v6840, %v6808
        %v7129 = vpack.c.b16 %v6841, %v6809
        %v7130 = vpack.c.b16 %v6842, %v6810
        %v7131 = vpack.c.b16 %v6843, %v6811
        %v7132 = vpack.c.b16 %v6844, %v6812
        %v7133 = vpack.c.b16 %v6845, %v6813
        %v7134 = vpack.c.b16 %v6846, %v6814
        %v7135 = vpack.c.b16 %v6847, %v6815
        %v7136 = vpack.c.b16 %v6848, %v6816
        %v7137 = vpack.c.b16 %v6849, %v6817
        %v7138 = vpack.c.b16 %v6882, %v6850
        %v7139 = vpack.c.b16 %v6883, %v6851
        %v7140 = vpack.c.b16 %v6884, %v6852
        %v7141 = vpack.c.b16 %v6885, %v6853
        %v7142 = vpack.c.b16 %v6886, %v6854
        %v7143 = vpack.c.b16 %v6887, %v6855
        %v7144 = vpack.c.b16 %v6888, %v6856
        %v7145 = vpack.c.b16 %v6889, %v6857
        %v7146 = vpack.c.b16 %v6890, %v6858
        %v7147 = vpack.c.b16 %v6891, %v6859
        %v7148 = vpack.c.b16 %v6892, %v6860
        %v7149 = vpack.c.b16 %v6893, %v6861
        %v7150 = vpack.c.b16 %v6894, %v6862
        %v7151 = vpack.c.b16 %v6895, %v6863
        %v7152 = vpack.c.b16 %v6896, %v6864
        %v7153 = vpack.c.b16 %v6897, %v6865
        %v7154 = vpack.c.b16 %v6898, %v6866
        %v7155 = vpack.c.b16 %v6899, %v6867
        %v7156 = vpack.c.b16 %v6900, %v6868
        %v7157 = vpack.c.b16 %v6901, %v6869
        %v7158 = vpack.c.b16 %v6902, %v6870
        %v7159 = vpack.c.b16 %v6903, %v6871
        %v7160 = vpack.c.b16 %v6904, %v6872
        %v7161 = vpack.c.b16 %v6905, %v6873
        %v7162 = vpack.c.b16 %v6906, %v6874
        %v7163 = vpack.c.b16 %v6907, %v6875
        %v7164 = vpack.c.b16 %v6908, %v6876
        %v7165 = vpack.c.b16 %v6909, %v6877
        %v7166 = vpack.c.b16 %v6910, %v6878
        %v7167 = vpack.c.b16 %v6911, %v6879
        %v7168 = vpack.c.b16 %v6912, %v6880
        %v7169 = vpack.c.b16 %v6913, %v6881
        %7426 = vmatprep.subr.bf16.mxu0 %v6915
        %7427 = vmatpush1.bf16.msra.mxu0 %v6914
        %7428 = vmatprep.subr.bf16.mxu0 %v6947
        %7429 = vmatpush1.bf16.msra.mxu0 %v6946
        %7430 = vmatprep.subr.bf16.mxu0 %v6979
        %7431 = vmatpush1.bf16.msra.mxu0 %v6978
        %7432 = vmatprep.subr.bf16.mxu0 %v7011
        %7433 = vmatpush1.bf16.msra.mxu0 %v7010
        %7434 = vmatprep.subr.bf16.mxu0 %v7043
        %7435 = vmatpush1.bf16.msra.mxu0 %v7042
        %7436 = vmatprep.subr.bf16.mxu0 %v7075
        %7437 = vmatpush1.bf16.msra.mxu0 %v7074
        %7438 = vmatprep.subr.bf16.mxu0 %v7107
        %7439 = vmatpush1.bf16.msra.mxu0 %v7106
        %7440 = vmatprep.subr.bf16.mxu0 %v7139
        %7441 = vmatpush1.bf16.msra.mxu0 %v7138
        %7442 = vmatprep.subr.bf16.mxu0 0
        %7443 = vmatpush1.bf16.msra.mxu0 0
        %7444 = vmatprep.subr.bf16.mxu0 0
        %7445 = vmatpush1.bf16.msra.mxu0 0
        %7446 = vmatprep.subr.bf16.mxu0 0
        %7447 = vmatpush1.bf16.msra.mxu0 0
        %7448 = vmatprep.subr.bf16.mxu0 0
        %7449 = vmatpush1.bf16.msra.mxu0 0
        %7450 = vmatprep.subr.bf16.mxu0 0
        %7451 = vmatpush1.bf16.msra.mxu0 0
        %7452 = vmatprep.subr.bf16.mxu0 0
        %7453 = vmatpush1.bf16.msra.mxu0 0
        %7454 = vmatprep.subr.bf16.mxu0 0
        %7455 = vmatpush1.bf16.msra.mxu0 0
        %7456 = vmatprep.subr.bf16.mxu0 0
        %7457 = vmatpush1.bf16.msra.mxu0 0
        %7458 = vmatprep.mubr.bf16.mxu0 0
        %7459 = vmatmul.mubr.bf16.gmra.mrb[0].mxu0 %v3694
        %v7460 = vpop.f32.mrb[0].mxu0
        %v7461 = vadd.f32 %v5525, %v7460
        %v7462 = vpop.f32.mrb[0].mxu0
        %v7463 = vadd.f32 %v5527, %v7462
        %v7464 = vpop.f32.mrb[0].mxu0
        %v7465 = vpop.f32.mrb[0].mxu0
        %7466 = vdwg.mxu0
        %7467 = vmatprep.subr.bf16.mxu0 %v6917
        %7468 = vmatpush1.bf16.msra.mxu0 %v6916
        %7469 = vmatprep.subr.bf16.mxu0 %v6949
        %7470 = vmatpush1.bf16.msra.mxu0 %v6948
        %7471 = vmatprep.subr.bf16.mxu0 %v6981
        %7472 = vmatpush1.bf16.msra.mxu0 %v6980
        %7473 = vmatprep.subr.bf16.mxu0 %v7013
        %7474 = vmatpush1.bf16.msra.mxu0 %v7012
        %7475 = vmatprep.subr.bf16.mxu0 %v7045
        %7476 = vmatpush1.bf16.msra.mxu0 %v7044
        %7477 = vmatprep.subr.bf16.mxu0 %v7077
        %7478 = vmatpush1.bf16.msra.mxu0 %v7076
        %7479 = vmatprep.subr.bf16.mxu0 %v7109
        %7480 = vmatpush1.bf16.msra.mxu0 %v7108
        %7481 = vmatprep.subr.bf16.mxu0 %v7141
        %7482 = vmatpush1.bf16.msra.mxu0 %v7140
        %7483 = vmatprep.subr.bf16.mxu0 0
        %7484 = vmatpush1.bf16.msra.mxu0 0
        %7485 = vmatprep.subr.bf16.mxu0 0
        %7486 = vmatpush1.bf16.msra.mxu0 0
        %7487 = vmatprep.subr.bf16.mxu0 0
        %7488 = vmatpush1.bf16.msra.mxu0 0
        %7489 = vmatprep.subr.bf16.mxu0 0
        %7490 = vmatpush1.bf16.msra.mxu0 0
        %7491 = vmatprep.subr.bf16.mxu0 0
        %7492 = vmatpush1.bf16.msra.mxu0 0
        %7493 = vmatprep.subr.bf16.mxu0 0
        %7494 = vmatpush1.bf16.msra.mxu0 0
        %7495 = vmatprep.subr.bf16.mxu0 0
        %7496 = vmatpush1.bf16.msra.mxu0 0
        %7497 = vmatprep.subr.bf16.mxu0 0
        %7498 = vmatpush1.bf16.msra.mxu0 0
        %7499 = vmatprep.mubr.bf16.mxu0 0
        %7500 = vmatmul.mubr.bf16.gmra.mrb[0].mxu0 %v3694
        %v7501 = vpop.f32.mrb[0].mxu0
        %v7502 = vadd.f32 %v5566, %v7501
        %v7503 = vpop.f32.mrb[0].mxu0
        %v7504 = vadd.f32 %v5568, %v7503
        %v7505 = vpop.f32.mrb[0].mxu0
        %v7506 = vpop.f32.mrb[0].mxu0
        %7507 = vdwg.mxu0
        %7508 = vmatprep.subr.bf16.mxu0 %v6919
        %7509 = vmatpush1.bf16.msra.mxu0 %v6918
        %7510 = vmatprep.subr.bf16.mxu0 %v6951
        %7511 = vmatpush1.bf16.msra.mxu0 %v6950
        %7512 = vmatprep.subr.bf16.mxu0 %v6983
        %7513 = vmatpush1.bf16.msra.mxu0 %v6982
        %7514 = vmatprep.subr.bf16.mxu0 %v7015
        %7515 = vmatpush1.bf16.msra.mxu0 %v7014
        %7516 = vmatprep.subr.bf16.mxu0 %v7047
        %7517 = vmatpush1.bf16.msra.mxu0 %v7046
        %7518 = vmatprep.subr.bf16.mxu0 %v7079
        %7519 = vmatpush1.bf16.msra.mxu0 %v7078
        %7520 = vmatprep.subr.bf16.mxu0 %v7111
        %7521 = vmatpush1.bf16.msra.mxu0 %v7110
        %7522 = vmatprep.subr.bf16.mxu0 %v7143
        %7523 = vmatpush1.bf16.msra.mxu0 %v7142
        %7524 = vmatprep.subr.bf16.mxu0 0
        %7525 = vmatpush1.bf16.msra.mxu0 0
        %7526 = vmatprep.subr.bf16.mxu0 0
        %7527 = vmatpush1.bf16.msra.mxu0 0
        %7528 = vmatprep.subr.bf16.mxu0 0
        %7529 = vmatpush1.bf16.msra.mxu0 0
        %7530 = vmatprep.subr.bf16.mxu0 0
        %7531 = vmatpush1.bf16.msra.mxu0 0
        %7532 = vmatprep.subr.bf16.mxu0 0
        %7533 = vmatpush1.bf16.msra.mxu0 0
        %7534 = vmatprep.subr.bf16.mxu0 0
        %7535 = vmatpush1.bf16.msra.mxu0 0
        %7536 = vmatprep.subr.bf16.mxu0 0
        %7537 = vmatpush1.bf16.msra.mxu0 0
        %7538 = vmatprep.subr.bf16.mxu0 0
        %7539 = vmatpush1.bf16.msra.mxu0 0
        %7540 = vmatprep.mubr.bf16.mxu0 0
        %7541 = vmatmul.mubr.bf16.gmra.mrb[0].mxu0 %v3694
        %v7542 = vpop.f32.mrb[0].mxu0
        %v7543 = vadd.f32 %v5607, %v7542
        %v7544 = vpop.f32.mrb[0].mxu0
        %v7545 = vadd.f32 %v5609, %v7544
        %v7546 = vpop.f32.mrb[0].mxu0
        %v7547 = vpop.f32.mrb[0].mxu0
        %7548 = vdwg.mxu0
        %7549 = vmatprep.subr.bf16.mxu0 %v6921
        %7550 = vmatpush1.bf16.msra.mxu0 %v6920
        %7551 = vmatprep.subr.bf16.mxu0 %v6953
        %7552 = vmatpush1.bf16.msra.mxu0 %v6952
        %7553 = vmatprep.subr.bf16.mxu0 %v6985
        %7554 = vmatpush1.bf16.msra.mxu0 %v6984
        %7555 = vmatprep.subr.bf16.mxu0 %v7017
        %7556 = vmatpush1.bf16.msra.mxu0 %v7016
        %7557 = vmatprep.subr.bf16.mxu0 %v7049
        %7558 = vmatpush1.bf16.msra.mxu0 %v7048
        %7559 = vmatprep.subr.bf16.mxu0 %v7081
        %7560 = vmatpush1.bf16.msra.mxu0 %v7080
        %7561 = vmatprep.subr.bf16.mxu0 %v7113
        %7562 = vmatpush1.bf16.msra.mxu0 %v7112
        %7563 = vmatprep.subr.bf16.mxu0 %v7145
        %7564 = vmatpush1.bf16.msra.mxu0 %v7144
        %7565 = vmatprep.subr.bf16.mxu0 0
        %7566 = vmatpush1.bf16.msra.mxu0 0
        %7567 = vmatprep.subr.bf16.mxu0 0
        %7568 = vmatpush1.bf16.msra.mxu0 0
        %7569 = vmatprep.subr.bf16.mxu0 0
        %7570 = vmatpush1.bf16.msra.mxu0 0
        %7571 = vmatprep.subr.bf16.mxu0 0
        %7572 = vmatpush1.bf16.msra.mxu0 0
        %7573 = vmatprep.subr.bf16.mxu0 0
        %7574 = vmatpush1.bf16.msra.mxu0 0
        %7575 = vmatprep.subr.bf16.mxu0 0
        %7576 = vmatpush1.bf16.msra.mxu0 0
        %7577 = vmatprep.subr.bf16.mxu0 0
        %7578 = vmatpush1.bf16.msra.mxu0 0
        %7579 = vmatprep.subr.bf16.mxu0 0
        %7580 = vmatpush1.bf16.msra.mxu0 0
        %7581 = vmatprep.mubr.bf16.mxu0 0
        %7582 = vmatmul.mubr.bf16.gmra.mrb[0].mxu0 %v3694
        %v7583 = vpop.f32.mrb[0].mxu0
        %v7584 = vadd.f32 %v5648, %v7583
        %v7585 = vpop.f32.mrb[0].mxu0
        %v7586 = vadd.f32 %v5650, %v7585
        %v7587 = vpop.f32.mrb[0].mxu0
        %v7588 = vpop.f32.mrb[0].mxu0
        %7589 = vdwg.mxu0
        %7590 = vmatprep.subr.bf16.mxu0 %v6923
        %7591 = vmatpush1.bf16.msra.mxu0 %v6922
        %7592 = vmatprep.subr.bf16.mxu0 %v6955
        %7593 = vmatpush1.bf16.msra.mxu0 %v6954
        %7594 = vmatprep.subr.bf16.mxu0 %v6987
        %7595 = vmatpush1.bf16.msra.mxu0 %v6986
        %7596 = vmatprep.subr.bf16.mxu0 %v7019
        %7597 = vmatpush1.bf16.msra.mxu0 %v7018
        %7598 = vmatprep.subr.bf16.mxu0 %v7051
        %7599 = vmatpush1.bf16.msra.mxu0 %v7050
        %7600 = vmatprep.subr.bf16.mxu0 %v7083
        %7601 = vmatpush1.bf16.msra.mxu0 %v7082
        %7602 = vmatprep.subr.bf16.mxu0 %v7115
        %7603 = vmatpush1.bf16.msra.mxu0 %v7114
        %7604 = vmatprep.subr.bf16.mxu0 %v7147
        %7605 = vmatpush1.bf16.msra.mxu0 %v7146
        %7606 = vmatprep.subr.bf16.mxu0 0
        %7607 = vmatpush1.bf16.msra.mxu0 0
        %7608 = vmatprep.subr.bf16.mxu0 0
        %7609 = vmatpush1.bf16.msra.mxu0 0
        %7610 = vmatprep.subr.bf16.mxu0 0
        %7611 = vmatpush1.bf16.msra.mxu0 0
        %7612 = vmatprep.subr.bf16.mxu0 0
        %7613 = vmatpush1.bf16.msra.mxu0 0
        %7614 = vmatprep.subr.bf16.mxu0 0
        %7615 = vmatpush1.bf16.msra.mxu0 0
        %7616 = vmatprep.subr.bf16.mxu0 0
        %7617 = vmatpush1.bf16.msra.mxu0 0
        %7618 = vmatprep.subr.bf16.mxu0 0
        %7619 = vmatpush1.bf16.msra.mxu0 0
        %7620 = vmatprep.subr.bf16.mxu0 0
        %7621 = vmatpush1.bf16.msra.mxu0 0
        %7622 = vmatprep.mubr.bf16.mxu0 0
        %7623 = vmatmul.mubr.bf16.gmra.mrb[0].mxu0 %v3694
        %v7624 = vpop.f32.mrb[0].mxu0
        %v7625 = vadd.f32 %v5689, %v7624
        %v7626 = vpop.f32.mrb[0].mxu0
        %v7627 = vadd.f32 %v5691, %v7626
        %v7628 = vpop.f32.mrb[0].mxu0
        %v7629 = vpop.f32.mrb[0].mxu0
        %7630 = vdwg.mxu0
        %7631 = vmatprep.subr.bf16.mxu0 %v6925
        %7632 = vmatpush1.bf16.msra.mxu0 %v6924
        %7633 = vmatprep.subr.bf16.mxu0 %v6957
        %7634 = vmatpush1.bf16.msra.mxu0 %v6956
        %7635 = vmatprep.subr.bf16.mxu0 %v6989
        %7636 = vmatpush1.bf16.msra.mxu0 %v6988
        %7637 = vmatprep.subr.bf16.mxu0 %v7021
        %7638 = vmatpush1.bf16.msra.mxu0 %v7020
        %7639 = vmatprep.subr.bf16.mxu0 %v7053
        %7640 = vmatpush1.bf16.msra.mxu0 %v7052
        %7641 = vmatprep.subr.bf16.mxu0 %v7085
        %7642 = vmatpush1.bf16.msra.mxu0 %v7084
        %7643 = vmatprep.subr.bf16.mxu0 %v7117
        %7644 = vmatpush1.bf16.msra.mxu0 %v7116
        %7645 = vmatprep.subr.bf16.mxu0 %v7149
        %7646 = vmatpush1.bf16.msra.mxu0 %v7148
        %7647 = vmatprep.subr.bf16.mxu0 0
        %7648 = vmatpush1.bf16.msra.mxu0 0
        %7649 = vmatprep.subr.bf16.mxu0 0
        %7650 = vmatpush1.bf16.msra.mxu0 0
        %7651 = vmatprep.subr.bf16.mxu0 0
        %7652 = vmatpush1.bf16.msra.mxu0 0
        %7653 = vmatprep.subr.bf16.mxu0 0
        %7654 = vmatpush1.bf16.msra.mxu0 0
        %7655 = vmatprep.subr.bf16.mxu0 0
        %7656 = vmatpush1.bf16.msra.mxu0 0
        %7657 = vmatprep.subr.bf16.mxu0 0
        %7658 = vmatpush1.bf16.msra.mxu0 0
        %7659 = vmatprep.subr.bf16.mxu0 0
        %7660 = vmatpush1.bf16.msra.mxu0 0
        %7661 = vmatprep.subr.bf16.mxu0 0
        %7662 = vmatpush1.bf16.msra.mxu0 0
        %7663 = vmatprep.mubr.bf16.mxu0 0
        %7664 = vmatmul.mubr.bf16.gmra.mrb[0].mxu0 %v3694
        %v7665 = vpop.f32.mrb[0].mxu0
        %v7666 = vadd.f32 %v5730, %v7665
        %v7667 = vpop.f32.mrb[0].mxu0
        %v7668 = vadd.f32 %v5732, %v7667
        %v7669 = vpop.f32.mrb[0].mxu0
        %v7670 = vpop.f32.mrb[0].mxu0
        %7671 = vdwg.mxu0
        %7672 = vmatprep.subr.bf16.mxu0 %v6927
        %7673 = vmatpush1.bf16.msra.mxu0 %v6926
        %7674 = vmatprep.subr.bf16.mxu0 %v6959
        %7675 = vmatpush1.bf16.msra.mxu0 %v6958
        %7676 = vmatprep.subr.bf16.mxu0 %v6991
        %7677 = vmatpush1.bf16.msra.mxu0 %v6990
        %7678 = vmatprep.subr.bf16.mxu0 %v7023
        %7679 = vmatpush1.bf16.msra.mxu0 %v7022
        %7680 = vmatprep.subr.bf16.mxu0 %v7055
        %7681 = vmatpush1.bf16.msra.mxu0 %v7054
        %7682 = vmatprep.subr.bf16.mxu0 %v7087
        %7683 = vmatpush1.bf16.msra.mxu0 %v7086
        %7684 = vmatprep.subr.bf16.mxu0 %v7119
        %7685 = vmatpush1.bf16.msra.mxu0 %v7118
        %7686 = vmatprep.subr.bf16.mxu0 %v7151
        %7687 = vmatpush1.bf16.msra.mxu0 %v7150
        %7688 = vmatprep.subr.bf16.mxu0 0
        %7689 = vmatpush1.bf16.msra.mxu0 0
        %7690 = vmatprep.subr.bf16.mxu0 0
        %7691 = vmatpush1.bf16.msra.mxu0 0
        %7692 = vmatprep.subr.bf16.mxu0 0
        %7693 = vmatpush1.bf16.msra.mxu0 0
        %7694 = vmatprep.subr.bf16.mxu0 0
        %7695 = vmatpush1.bf16.msra.mxu0 0
        %7696 = vmatprep.subr.bf16.mxu0 0
        %7697 = vmatpush1.bf16.msra.mxu0 0
        %7698 = vmatprep.subr.bf16.mxu0 0
        %7699 = vmatpush1.bf16.msra.mxu0 0
        %7700 = vmatprep.subr.bf16.mxu0 0
        %7701 = vmatpush1.bf16.msra.mxu0 0
        %7702 = vmatprep.subr.bf16.mxu0 0
        %7703 = vmatpush1.bf16.msra.mxu0 0
        %7704 = vmatprep.mubr.bf16.mxu0 0
        %7705 = vmatmul.mubr.bf16.gmra.mrb[0].mxu0 %v3694
        %v7706 = vpop.f32.mrb[0].mxu0
        %v7707 = vadd.f32 %v5771, %v7706
        %v7708 = vpop.f32.mrb[0].mxu0
        %v7709 = vadd.f32 %v5773, %v7708
        %v7710 = vpop.f32.mrb[0].mxu0
        %v7711 = vpop.f32.mrb[0].mxu0
        %7712 = vdwg.mxu0
        %7713 = vmatprep.subr.bf16.mxu0 %v6929
        %7714 = vmatpush1.bf16.msra.mxu0 %v6928
        %7715 = vmatprep.subr.bf16.mxu0 %v6961
        %7716 = vmatpush1.bf16.msra.mxu0 %v6960
        %7717 = vmatprep.subr.bf16.mxu0 %v6993
        %7718 = vmatpush1.bf16.msra.mxu0 %v6992
        %7719 = vmatprep.subr.bf16.mxu0 %v7025
        %7720 = vmatpush1.bf16.msra.mxu0 %v7024
        %7721 = vmatprep.subr.bf16.mxu0 %v7057
        %7722 = vmatpush1.bf16.msra.mxu0 %v7056
        %7723 = vmatprep.subr.bf16.mxu0 %v7089
        %7724 = vmatpush1.bf16.msra.mxu0 %v7088
        %7725 = vmatprep.subr.bf16.mxu0 %v7121
        %7726 = vmatpush1.bf16.msra.mxu0 %v7120
        %7727 = vmatprep.subr.bf16.mxu0 %v7153
        %7728 = vmatpush1.bf16.msra.mxu0 %v7152
        %7729 = vmatprep.subr.bf16.mxu0 0
        %7730 = vmatpush1.bf16.msra.mxu0 0
        %7731 = vmatprep.subr.bf16.mxu0 0
        %7732 = vmatpush1.bf16.msra.mxu0 0
        %7733 = vmatprep.subr.bf16.mxu0 0
        %7734 = vmatpush1.bf16.msra.mxu0 0
        %7735 = vmatprep.subr.bf16.mxu0 0
        %7736 = vmatpush1.bf16.msra.mxu0 0
        %7737 = vmatprep.subr.bf16.mxu0 0
        %7738 = vmatpush1.bf16.msra.mxu0 0
        %7739 = vmatprep.subr.bf16.mxu0 0
        %7740 = vmatpush1.bf16.msra.mxu0 0
        %7741 = vmatprep.subr.bf16.mxu0 0
        %7742 = vmatpush1.bf16.msra.mxu0 0
        %7743 = vmatprep.subr.bf16.mxu0 0
        %7744 = vmatpush1.bf16.msra.mxu0 0
        %7745 = vmatprep.mubr.bf16.mxu0 0
        %7746 = vmatmul.mubr.bf16.gmra.mrb[0].mxu0 %v3694
        %v7747 = vpop.f32.mrb[0].mxu0
        %v7748 = vadd.f32 %v5812, %v7747
        %v7749 = vpop.f32.mrb[0].mxu0
        %v7750 = vadd.f32 %v5814, %v7749
        %v7751 = vpop.f32.mrb[0].mxu0
        %v7752 = vpop.f32.mrb[0].mxu0
        %7753 = vdwg.mxu0
        %7754 = vmatprep.subr.bf16.mxu0 %v6931
        %7755 = vmatpush1.bf16.msra.mxu0 %v6930
        %7756 = vmatprep.subr.bf16.mxu0 %v6963
        %7757 = vmatpush1.bf16.msra.mxu0 %v6962
        %7758 = vmatprep.subr.bf16.mxu0 %v6995
        %7759 = vmatpush1.bf16.msra.mxu0 %v6994
        %7760 = vmatprep.subr.bf16.mxu0 %v7027
        %7761 = vmatpush1.bf16.msra.mxu0 %v7026
        %7762 = vmatprep.subr.bf16.mxu0 %v7059
        %7763 = vmatpush1.bf16.msra.mxu0 %v7058
        %7764 = vmatprep.subr.bf16.mxu0 %v7091
        %7765 = vmatpush1.bf16.msra.mxu0 %v7090
        %7766 = vmatprep.subr.bf16.mxu0 %v7123
        %7767 = vmatpush1.bf16.msra.mxu0 %v7122
        %7768 = vmatprep.subr.bf16.mxu0 %v7155
        %7769 = vmatpush1.bf16.msra.mxu0 %v7154
        %7770 = vmatprep.subr.bf16.mxu0 0
        %7771 = vmatpush1.bf16.msra.mxu0 0
        %7772 = vmatprep.subr.bf16.mxu0 0
        %7773 = vmatpush1.bf16.msra.mxu0 0
        %7774 = vmatprep.subr.bf16.mxu0 0
        %7775 = vmatpush1.bf16.msra.mxu0 0
        %7776 = vmatprep.subr.bf16.mxu0 0
        %7777 = vmatpush1.bf16.msra.mxu0 0
        %7778 = vmatprep.subr.bf16.mxu0 0
        %7779 = vmatpush1.bf16.msra.mxu0 0
        %7780 = vmatprep.subr.bf16.mxu0 0
        %7781 = vmatpush1.bf16.msra.mxu0 0
        %7782 = vmatprep.subr.bf16.mxu0 0
        %7783 = vmatpush1.bf16.msra.mxu0 0
        %7784 = vmatprep.subr.bf16.mxu0 0
        %7785 = vmatpush1.bf16.msra.mxu0 0
        %7786 = vmatprep.mubr.bf16.mxu0 0
        %7787 = vmatmul.mubr.bf16.gmra.mrb[0].mxu0 %v3694
        %v7788 = vpop.f32.mrb[0].mxu0
        %v7789 = vadd.f32 %v5853, %v7788
        %v7790 = vpop.f32.mrb[0].mxu0
        %v7791 = vadd.f32 %v5855, %v7790
        %v7792 = vpop.f32.mrb[0].mxu0
        %v7793 = vpop.f32.mrb[0].mxu0
        %7794 = vdwg.mxu0
        %7795 = vmatprep.subr.bf16.mxu0 %v6933
        %7796 = vmatpush1.bf16.msra.mxu0 %v6932
        %7797 = vmatprep.subr.bf16.mxu0 %v6965
        %7798 = vmatpush1.bf16.msra.mxu0 %v6964
        %7799 = vmatprep.subr.bf16.mxu0 %v6997
        %7800 = vmatpush1.bf16.msra.mxu0 %v6996
        %7801 = vmatprep.subr.bf16.mxu0 %v7029
        %7802 = vmatpush1.bf16.msra.mxu0 %v7028
        %7803 = vmatprep.subr.bf16.mxu0 %v7061
        %7804 = vmatpush1.bf16.msra.mxu0 %v7060
        %7805 = vmatprep.subr.bf16.mxu0 %v7093
        %7806 = vmatpush1.bf16.msra.mxu0 %v7092
        %7807 = vmatprep.subr.bf16.mxu0 %v7125
        %7808 = vmatpush1.bf16.msra.mxu0 %v7124
        %7809 = vmatprep.subr.bf16.mxu0 %v7157
        %7810 = vmatpush1.bf16.msra.mxu0 %v7156
        %7811 = vmatprep.subr.bf16.mxu0 0
        %7812 = vmatpush1.bf16.msra.mxu0 0
        %7813 = vmatprep.subr.bf16.mxu0 0
        %7814 = vmatpush1.bf16.msra.mxu0 0
        %7815 = vmatprep.subr.bf16.mxu0 0
        %7816 = vmatpush1.bf16.msra.mxu0 0
        %7817 = vmatprep.subr.bf16.mxu0 0
        %7818 = vmatpush1.bf16.msra.mxu0 0
        %7819 = vmatprep.subr.bf16.mxu0 0
        %7820 = vmatpush1.bf16.msra.mxu0 0
        %7821 = vmatprep.subr.bf16.mxu0 0
        %7822 = vmatpush1.bf16.msra.mxu0 0
        %7823 = vmatprep.subr.bf16.mxu0 0
        %7824 = vmatpush1.bf16.msra.mxu0 0
        %7825 = vmatprep.subr.bf16.mxu0 0
        %7826 = vmatpush1.bf16.msra.mxu0 0
        %7827 = vmatprep.mubr.bf16.mxu0 0
        %7828 = vmatmul.mubr.bf16.gmra.mrb[0].mxu0 %v3694
        %v7829 = vpop.f32.mrb[0].mxu0
        %v7830 = vadd.f32 %v5894, %v7829
        %v7831 = vpop.f32.mrb[0].mxu0
        %v7832 = vadd.f32 %v5896, %v7831
        %v7833 = vpop.f32.mrb[0].mxu0
        %v7834 = vpop.f32.mrb[0].mxu0
        %7835 = vdwg.mxu0
        %7836 = vmatprep.subr.bf16.mxu0 %v6935
        %7837 = vmatpush1.bf16.msra.mxu0 %v6934
        %7838 = vmatprep.subr.bf16.mxu0 %v6967
        %7839 = vmatpush1.bf16.msra.mxu0 %v6966
        %7840 = vmatprep.subr.bf16.mxu0 %v6999
        %7841 = vmatpush1.bf16.msra.mxu0 %v6998
        %7842 = vmatprep.subr.bf16.mxu0 %v7031
        %7843 = vmatpush1.bf16.msra.mxu0 %v7030
        %7844 = vmatprep.subr.bf16.mxu0 %v7063
        %7845 = vmatpush1.bf16.msra.mxu0 %v7062
        %7846 = vmatprep.subr.bf16.mxu0 %v7095
        %7847 = vmatpush1.bf16.msra.mxu0 %v7094
        %7848 = vmatprep.subr.bf16.mxu0 %v7127
        %7849 = vmatpush1.bf16.msra.mxu0 %v7126
        %7850 = vmatprep.subr.bf16.mxu0 %v7159
        %7851 = vmatpush1.bf16.msra.mxu0 %v7158
        %7852 = vmatprep.subr.bf16.mxu0 0
        %7853 = vmatpush1.bf16.msra.mxu0 0
        %7854 = vmatprep.subr.bf16.mxu0 0
        %7855 = vmatpush1.bf16.msra.mxu0 0
        %7856 = vmatprep.subr.bf16.mxu0 0
        %7857 = vmatpush1.bf16.msra.mxu0 0
        %7858 = vmatprep.subr.bf16.mxu0 0
        %7859 = vmatpush1.bf16.msra.mxu0 0
        %7860 = vmatprep.subr.bf16.mxu0 0
        %7861 = vmatpush1.bf16.msra.mxu0 0
        %7862 = vmatprep.subr.bf16.mxu0 0
        %7863 = vmatpush1.bf16.msra.mxu0 0
        %7864 = vmatprep.subr.bf16.mxu0 0
        %7865 = vmatpush1.bf16.msra.mxu0 0
        %7866 = vmatprep.subr.bf16.mxu0 0
        %7867 = vmatpush1.bf16.msra.mxu0 0
        %7868 = vmatprep.mubr.bf16.mxu0 0
        %7869 = vmatmul.mubr.bf16.gmra.mrb[0].mxu0 %v3694
        %v7870 = vpop.f32.mrb[0].mxu0
        %v7871 = vadd.f32 %v5935, %v7870
        %v7872 = vpop.f32.mrb[0].mxu0
        %v7873 = vadd.f32 %v5937, %v7872
        %v7874 = vpop.f32.mrb[0].mxu0
        %v7875 = vpop.f32.mrb[0].mxu0
        %7876 = vdwg.mxu0
        %7877 = vmatprep.subr.bf16.mxu0 %v6937
        %7878 = vmatpush1.bf16.msra.mxu0 %v6936
        %7879 = vmatprep.subr.bf16.mxu0 %v6969
        %7880 = vmatpush1.bf16.msra.mxu0 %v6968
        %7881 = vmatprep.subr.bf16.mxu0 %v7001
        %7882 = vmatpush1.bf16.msra.mxu0 %v7000
        %7883 = vmatprep.subr.bf16.mxu0 %v7033
        %7884 = vmatpush1.bf16.msra.mxu0 %v7032
        %7885 = vmatprep.subr.bf16.mxu0 %v7065
        %7886 = vmatpush1.bf16.msra.mxu0 %v7064
        %7887 = vmatprep.subr.bf16.mxu0 %v7097
        %7888 = vmatpush1.bf16.msra.mxu0 %v7096
        %7889 = vmatprep.subr.bf16.mxu0 %v7129
        %7890 = vmatpush1.bf16.msra.mxu0 %v7128
        %7891 = vmatprep.subr.bf16.mxu0 %v7161
        %7892 = vmatpush1.bf16.msra.mxu0 %v7160
        %7893 = vmatprep.subr.bf16.mxu0 0
        %7894 = vmatpush1.bf16.msra.mxu0 0
        %7895 = vmatprep.subr.bf16.mxu0 0
        %7896 = vmatpush1.bf16.msra.mxu0 0
        %7897 = vmatprep.subr.bf16.mxu0 0
        %7898 = vmatpush1.bf16.msra.mxu0 0
        %7899 = vmatprep.subr.bf16.mxu0 0
        %7900 = vmatpush1.bf16.msra.mxu0 0
        %7901 = vmatprep.subr.bf16.mxu0 0
        %7902 = vmatpush1.bf16.msra.mxu0 0
        %7903 = vmatprep.subr.bf16.mxu0 0
        %7904 = vmatpush1.bf16.msra.mxu0 0
        %7905 = vmatprep.subr.bf16.mxu0 0
        %7906 = vmatpush1.bf16.msra.mxu0 0
        %7907 = vmatprep.subr.bf16.mxu0 0
        %7908 = vmatpush1.bf16.msra.mxu0 0
        %7909 = vmatprep.mubr.bf16.mxu0 0
        %7910 = vmatmul.mubr.bf16.gmra.mrb[0].mxu0 %v3694
        %v7911 = vpop.f32.mrb[0].mxu0
        %v7912 = vadd.f32 %v5976, %v7911
        %v7913 = vpop.f32.mrb[0].mxu0
        %v7914 = vadd.f32 %v5978, %v7913
        %v7915 = vpop.f32.mrb[0].mxu0
        %v7916 = vpop.f32.mrb[0].mxu0
        %7917 = vdwg.mxu0
        %7918 = vmatprep.subr.bf16.mxu0 %v6939
        %7919 = vmatpush1.bf16.msra.mxu0 %v6938
        %7920 = vmatprep.subr.bf16.mxu0 %v6971
        %7921 = vmatpush1.bf16.msra.mxu0 %v6970
        %7922 = vmatprep.subr.bf16.mxu0 %v7003
        %7923 = vmatpush1.bf16.msra.mxu0 %v7002
        %7924 = vmatprep.subr.bf16.mxu0 %v7035
        %7925 = vmatpush1.bf16.msra.mxu0 %v7034
        %7926 = vmatprep.subr.bf16.mxu0 %v7067
        %7927 = vmatpush1.bf16.msra.mxu0 %v7066
        %7928 = vmatprep.subr.bf16.mxu0 %v7099
        %7929 = vmatpush1.bf16.msra.mxu0 %v7098
        %7930 = vmatprep.subr.bf16.mxu0 %v7131
        %7931 = vmatpush1.bf16.msra.mxu0 %v7130
        %7932 = vmatprep.subr.bf16.mxu0 %v7163
        %7933 = vmatpush1.bf16.msra.mxu0 %v7162
        %7934 = vmatprep.subr.bf16.mxu0 0
        %7935 = vmatpush1.bf16.msra.mxu0 0
        %7936 = vmatprep.subr.bf16.mxu0 0
        %7937 = vmatpush1.bf16.msra.mxu0 0
        %7938 = vmatprep.subr.bf16.mxu0 0
        %7939 = vmatpush1.bf16.msra.mxu0 0
        %7940 = vmatprep.subr.bf16.mxu0 0
        %7941 = vmatpush1.bf16.msra.mxu0 0
        %7942 = vmatprep.subr.bf16.mxu0 0
        %7943 = vmatpush1.bf16.msra.mxu0 0
        %7944 = vmatprep.subr.bf16.mxu0 0
        %7945 = vmatpush1.bf16.msra.mxu0 0
        %7946 = vmatprep.subr.bf16.mxu0 0
        %7947 = vmatpush1.bf16.msra.mxu0 0
        %7948 = vmatprep.subr.bf16.mxu0 0
        %7949 = vmatpush1.bf16.msra.mxu0 0
        %7950 = vmatprep.mubr.bf16.mxu0 0
        %7951 = vmatmul.mubr.bf16.gmra.mrb[0].mxu0 %v3694
        %v7952 = vpop.f32.mrb[0].mxu0
        %v7953 = vadd.f32 %v6017, %v7952
        %v7954 = vpop.f32.mrb[0].mxu0
        %v7955 = vadd.f32 %v6019, %v7954
        %v7956 = vpop.f32.mrb[0].mxu0
        %v7957 = vpop.f32.mrb[0].mxu0
        %7958 = vdwg.mxu0
        %7959 = vmatprep.subr.bf16.mxu0 %v6941
        %7960 = vmatpush1.bf16.msra.mxu0 %v6940
        %7961 = vmatprep.subr.bf16.mxu0 %v6973
        %7962 = vmatpush1.bf16.msra.mxu0 %v6972
        %7963 = vmatprep.subr.bf16.mxu0 %v7005
        %7964 = vmatpush1.bf16.msra.mxu0 %v7004
        %7965 = vmatprep.subr.bf16.mxu0 %v7037
        %7966 = vmatpush1.bf16.msra.mxu0 %v7036
        %7967 = vmatprep.subr.bf16.mxu0 %v7069
        %7968 = vmatpush1.bf16.msra.mxu0 %v7068
        %7969 = vmatprep.subr.bf16.mxu0 %v7101
        %7970 = vmatpush1.bf16.msra.mxu0 %v7100
        %7971 = vmatprep.subr.bf16.mxu0 %v7133
        %7972 = vmatpush1.bf16.msra.mxu0 %v7132
        %7973 = vmatprep.subr.bf16.mxu0 %v7165
        %7974 = vmatpush1.bf16.msra.mxu0 %v7164
        %7975 = vmatprep.subr.bf16.mxu0 0
        %7976 = vmatpush1.bf16.msra.mxu0 0
        %7977 = vmatprep.subr.bf16.mxu0 0
        %7978 = vmatpush1.bf16.msra.mxu0 0
        %7979 = vmatprep.subr.bf16.mxu0 0
        %7980 = vmatpush1.bf16.msra.mxu0 0
        %7981 = vmatprep.subr.bf16.mxu0 0
        %7982 = vmatpush1.bf16.msra.mxu0 0
        %7983 = vmatprep.subr.bf16.mxu0 0
        %7984 = vmatpush1.bf16.msra.mxu0 0
        %7985 = vmatprep.subr.bf16.mxu0 0
        %7986 = vmatpush1.bf16.msra.mxu0 0
        %7987 = vmatprep.subr.bf16.mxu0 0
        %7988 = vmatpush1.bf16.msra.mxu0 0
        %7989 = vmatprep.subr.bf16.mxu0 0
        %7990 = vmatpush1.bf16.msra.mxu0 0
        %7991 = vmatprep.mubr.bf16.mxu0 0
        %7992 = vmatmul.mubr.bf16.gmra.mrb[0].mxu0 %v3694
        %v7993 = vpop.f32.mrb[0].mxu0
        %v7994 = vadd.f32 %v6058, %v7993
        %v7995 = vpop.f32.mrb[0].mxu0
        %v7996 = vadd.f32 %v6060, %v7995
        %v7997 = vpop.f32.mrb[0].mxu0
        %v7998 = vpop.f32.mrb[0].mxu0
        %7999 = vdwg.mxu0
        %8000 = vmatprep.subr.bf16.mxu0 %v6943
        %8001 = vmatpush1.bf16.msra.mxu0 %v6942
        %8002 = vmatprep.subr.bf16.mxu0 %v6975
        %8003 = vmatpush1.bf16.msra.mxu0 %v6974
        %8004 = vmatprep.subr.bf16.mxu0 %v7007
        %8005 = vmatpush1.bf16.msra.mxu0 %v7006
        %8006 = vmatprep.subr.bf16.mxu0 %v7039
        %8007 = vmatpush1.bf16.msra.mxu0 %v7038
        %8008 = vmatprep.subr.bf16.mxu0 %v7071
        %8009 = vmatpush1.bf16.msra.mxu0 %v7070
        %8010 = vmatprep.subr.bf16.mxu0 %v7103
        %8011 = vmatpush1.bf16.msra.mxu0 %v7102
        %8012 = vmatprep.subr.bf16.mxu0 %v7135
        %8013 = vmatpush1.bf16.msra.mxu0 %v7134
        %8014 = vmatprep.subr.bf16.mxu0 %v7167
        %8015 = vmatpush1.bf16.msra.mxu0 %v7166
        %8016 = vmatprep.subr.bf16.mxu0 0
        %8017 = vmatpush1.bf16.msra.mxu0 0
        %8018 = vmatprep.subr.bf16.mxu0 0
        %8019 = vmatpush1.bf16.msra.mxu0 0
        %8020 = vmatprep.subr.bf16.mxu0 0
        %8021 = vmatpush1.bf16.msra.mxu0 0
        %8022 = vmatprep.subr.bf16.mxu0 0
        %8023 = vmatpush1.bf16.msra.mxu0 0
        %8024 = vmatprep.subr.bf16.mxu0 0
        %8025 = vmatpush1.bf16.msra.mxu0 0
        %8026 = vmatprep.subr.bf16.mxu0 0
        %8027 = vmatpush1.bf16.msra.mxu0 0
        %8028 = vmatprep.subr.bf16.mxu0 0
        %8029 = vmatpush1.bf16.msra.mxu0 0
        %8030 = vmatprep.subr.bf16.mxu0 0
        %8031 = vmatpush1.bf16.msra.mxu0 0
        %8032 = vmatprep.mubr.bf16.mxu0 0
        %8033 = vmatmul.mubr.bf16.gmra.mrb[0].mxu0 %v3694
        %v8034 = vpop.f32.mrb[0].mxu0
        %v8035 = vadd.f32 %v6099, %v8034
        %v8036 = vpop.f32.mrb[0].mxu0
        %v8037 = vadd.f32 %v6101, %v8036
        %v8038 = vpop.f32.mrb[0].mxu0
        %v8039 = vpop.f32.mrb[0].mxu0
        %8040 = vdwg.mxu0
        %8041 = vmatprep.subr.bf16.mxu0 %v6945
        %8042 = vmatpush1.bf16.msra.mxu0 %v6944
        %8043 = vmatprep.subr.bf16.mxu0 %v6977
        %8044 = vmatpush1.bf16.msra.mxu0 %v6976
        %8045 = vmatprep.subr.bf16.mxu0 %v7009
        %8046 = vmatpush1.bf16.msra.mxu0 %v7008
        %8047 = vmatprep.subr.bf16.mxu0 %v7041
        %8048 = vmatpush1.bf16.msra.mxu0 %v7040
        %8049 = vmatprep.subr.bf16.mxu0 %v7073
        %8050 = vmatpush1.bf16.msra.mxu0 %v7072
        %8051 = vmatprep.subr.bf16.mxu0 %v7105
        %8052 = vmatpush1.bf16.msra.mxu0 %v7104
        %8053 = vmatprep.subr.bf16.mxu0 %v7137
        %8054 = vmatpush1.bf16.msra.mxu0 %v7136
        %8055 = vmatprep.subr.bf16.mxu0 %v7169
        %8056 = vmatpush1.bf16.msra.mxu0 %v7168
        %8057 = vmatprep.subr.bf16.mxu0 0
        %8058 = vmatpush1.bf16.msra.mxu0 0
        %8059 = vmatprep.subr.bf16.mxu0 0
        %8060 = vmatpush1.bf16.msra.mxu0 0
        %8061 = vmatprep.subr.bf16.mxu0 0
        %8062 = vmatpush1.bf16.msra.mxu0 0
        %8063 = vmatprep.subr.bf16.mxu0 0
        %8064 = vmatpush1.bf16.msra.mxu0 0
        %8065 = vmatprep.subr.bf16.mxu0 0
        %8066 = vmatpush1.bf16.msra.mxu0 0
        %8067 = vmatprep.subr.bf16.mxu0 0
        %8068 = vmatpush1.bf16.msra.mxu0 0
        %8069 = vmatprep.subr.bf16.mxu0 0
        %8070 = vmatpush1.bf16.msra.mxu0 0
        %8071 = vmatprep.subr.bf16.mxu0 0
        %8072 = vmatpush1.bf16.msra.mxu0 0
        %8073 = vmatprep.mubr.bf16.mxu0 0
        %8074 = vmatmul.mubr.bf16.gmra.mrb[0].mxu0 %v3694
        %v8075 = vpop.f32.mrb[0].mxu0
        %v8076 = vadd.f32 %v6140, %v8075
        %v8077 = vpop.f32.mrb[0].mxu0
        %v8078 = vadd.f32 %v6142, %v8077
        %v8079 = vpop.f32.mrb[0].mxu0
        %v8080 = vpop.f32.mrb[0].mxu0
        %8081 = vdwg.mxu0
        %v8082 = vld [vmem:[#allocation2 + $0x2] sm:$0xff]
        %v8083 = vpack.c.bf16 %v8082, %v8082
        %s8084 = scalar_lea.vmem [#allocation10], 4096
        %v8085 = vld [vmem:[%s8084] sm:$0xff]
        %v8086 = vld [vmem:[%s8084 + $0x8] sm:$0xff]
        %v8087 = vld [vmem:[%s8084 + $0x10] sm:$0xff]
        %v8088 = vld [vmem:[%s8084 + $0x18] sm:$0xff]
        %v8089 = vld [vmem:[%s8084 + $0x20] sm:$0xff]
        %v8090 = vld [vmem:[%s8084 + $0x28] sm:$0xff]
        %v8091 = vld [vmem:[%s8084 + $0x30] sm:$0xff]
        %v8092 = vld [vmem:[%s8084 + $0x38] sm:$0xff]
        %v8093 = vld [vmem:[%s8084 + $0x40] sm:$0xff]
        %v8094 = vld [vmem:[%s8084 + $0x48] sm:$0xff]
        %v8095 = vld [vmem:[%s8084 + $0x50] sm:$0xff]
        %v8096 = vld [vmem:[%s8084 + $0x58] sm:$0xff]
        %v8097 = vld [vmem:[%s8084 + $0x60] sm:$0xff]
        %v8098 = vld [vmem:[%s8084 + $0x68] sm:$0xff]
        %v8099 = vld [vmem:[%s8084 + $0x70] sm:$0xff]
        %v8100 = vld [vmem:[%s8084 + $0x78] sm:$0xff]
        %v8101 = vld [vmem:[%s8084 + $0x80] sm:$0xff]
        %v8102 = vld [vmem:[%s8084 + $0x88] sm:$0xff]
        %v8103 = vld [vmem:[%s8084 + $0x90] sm:$0xff]
        %v8104 = vld [vmem:[%s8084 + $0x98] sm:$0xff]
        %v8105 = vld [vmem:[%s8084 + $0xa0] sm:$0xff]
        %v8106 = vld [vmem:[%s8084 + $0xa8] sm:$0xff]
        %v8107 = vld [vmem:[%s8084 + $0xb0] sm:$0xff]
        %v8108 = vld [vmem:[%s8084 + $0xb8] sm:$0xff]
        %v8109 = vld [vmem:[%s8084 + $0xc0] sm:$0xff]
        %v8110 = vld [vmem:[%s8084 + $0xc8] sm:$0xff]
        %v8111 = vld [vmem:[%s8084 + $0xd0] sm:$0xff]
        %v8112 = vld [vmem:[%s8084 + $0xd8] sm:$0xff]
        %v8113 = vld [vmem:[%s8084 + $0xe0] sm:$0xff]
        %v8114 = vld [vmem:[%s8084 + $0xe8] sm:$0xff]
        %v8115 = vld [vmem:[%s8084 + $0xf0] sm:$0xff]
        %v8116 = vld [vmem:[%s8084 + $0xf8] sm:$0xff]
        %v8117 = vld [vmem:[%s8084 + $0x100] sm:$0xff]
        %v8118 = vld [vmem:[%s8084 + $0x108] sm:$0xff]
        %v8119 = vld [vmem:[%s8084 + $0x110] sm:$0xff]
        %v8120 = vld [vmem:[%s8084 + $0x118] sm:$0xff]
        %v8121 = vld [vmem:[%s8084 + $0x120] sm:$0xff]
        %v8122 = vld [vmem:[%s8084 + $0x128] sm:$0xff]
        %v8123 = vld [vmem:[%s8084 + $0x130] sm:$0xff]
        %v8124 = vld [vmem:[%s8084 + $0x138] sm:$0xff]
        %v8125 = vld [vmem:[%s8084 + $0x140] sm:$0xff]
        %v8126 = vld [vmem:[%s8084 + $0x148] sm:$0xff]
        %v8127 = vld [vmem:[%s8084 + $0x150] sm:$0xff]
        %v8128 = vld [vmem:[%s8084 + $0x158] sm:$0xff]
        %v8129 = vld [vmem:[%s8084 + $0x160] sm:$0xff]
        %v8130 = vld [vmem:[%s8084 + $0x168] sm:$0xff]
        %v8131 = vld [vmem:[%s8084 + $0x170] sm:$0xff]
        %v8132 = vld [vmem:[%s8084 + $0x178] sm:$0xff]
        %v8133 = vld [vmem:[%s8084 + $0x180] sm:$0xff]
        %v8134 = vld [vmem:[%s8084 + $0x188] sm:$0xff]
        %v8135 = vld [vmem:[%s8084 + $0x190] sm:$0xff]
        %v8136 = vld [vmem:[%s8084 + $0x198] sm:$0xff]
        %v8137 = vld [vmem:[%s8084 + $0x1a0] sm:$0xff]
        %v8138 = vld [vmem:[%s8084 + $0x1a8] sm:$0xff]
        %v8139 = vld [vmem:[%s8084 + $0x1b0] sm:$0xff]
        %v8140 = vld [vmem:[%s8084 + $0x1b8] sm:$0xff]
        %v8141 = vld [vmem:[%s8084 + $0x1c0] sm:$0xff]
        %v8142 = vld [vmem:[%s8084 + $0x1c8] sm:$0xff]
        %v8143 = vld [vmem:[%s8084 + $0x1d0] sm:$0xff]
        %v8144 = vld [vmem:[%s8084 + $0x1d8] sm:$0xff]
        %v8145 = vld [vmem:[%s8084 + $0x1e0] sm:$0xff]
        %v8146 = vld [vmem:[%s8084 + $0x1e8] sm:$0xff]
        %v8147 = vld [vmem:[%s8084 + $0x1f0] sm:$0xff]
        %v8148 = vld [vmem:[%s8084 + $0x1f8] sm:$0xff]
        %v8149 = vld [vmem:[%s8084 + $0x200] sm:$0xff]
        %v8150 = vld [vmem:[%s8084 + $0x208] sm:$0xff]
        %v8151 = vld [vmem:[%s8084 + $0x210] sm:$0xff]
        %v8152 = vld [vmem:[%s8084 + $0x218] sm:$0xff]
        %v8153 = vld [vmem:[%s8084 + $0x220] sm:$0xff]
        %v8154 = vld [vmem:[%s8084 + $0x228] sm:$0xff]
        %v8155 = vld [vmem:[%s8084 + $0x230] sm:$0xff]
        %v8156 = vld [vmem:[%s8084 + $0x238] sm:$0xff]
        %v8157 = vld [vmem:[%s8084 + $0x240] sm:$0xff]
        %v8158 = vld [vmem:[%s8084 + $0x248] sm:$0xff]
        %v8159 = vld [vmem:[%s8084 + $0x250] sm:$0xff]
        %v8160 = vld [vmem:[%s8084 + $0x258] sm:$0xff]
        %v8161 = vld [vmem:[%s8084 + $0x260] sm:$0xff]
        %v8162 = vld [vmem:[%s8084 + $0x268] sm:$0xff]
        %v8163 = vld [vmem:[%s8084 + $0x270] sm:$0xff]
        %v8164 = vld [vmem:[%s8084 + $0x278] sm:$0xff]
        %v8165 = vld [vmem:[%s8084 + $0x280] sm:$0xff]
        %v8166 = vld [vmem:[%s8084 + $0x288] sm:$0xff]
        %v8167 = vld [vmem:[%s8084 + $0x290] sm:$0xff]
        %v8168 = vld [vmem:[%s8084 + $0x298] sm:$0xff]
        %v8169 = vld [vmem:[%s8084 + $0x2a0] sm:$0xff]
        %v8170 = vld [vmem:[%s8084 + $0x2a8] sm:$0xff]
        %v8171 = vld [vmem:[%s8084 + $0x2b0] sm:$0xff]
        %v8172 = vld [vmem:[%s8084 + $0x2b8] sm:$0xff]
        %v8173 = vld [vmem:[%s8084 + $0x2c0] sm:$0xff]
        %v8174 = vld [vmem:[%s8084 + $0x2c8] sm:$0xff]
        %v8175 = vld [vmem:[%s8084 + $0x2d0] sm:$0xff]
        %v8176 = vld [vmem:[%s8084 + $0x2d8] sm:$0xff]
        %v8177 = vld [vmem:[%s8084 + $0x2e0] sm:$0xff]
        %v8178 = vld [vmem:[%s8084 + $0x2e8] sm:$0xff]
        %v8179 = vld [vmem:[%s8084 + $0x2f0] sm:$0xff]
        %v8180 = vld [vmem:[%s8084 + $0x2f8] sm:$0xff]
        %v8181 = vld [vmem:[%s8084 + $0x300] sm:$0xff]
        %v8182 = vld [vmem:[%s8084 + $0x308] sm:$0xff]
        %v8183 = vld [vmem:[%s8084 + $0x310] sm:$0xff]
        %v8184 = vld [vmem:[%s8084 + $0x318] sm:$0xff]
        %v8185 = vld [vmem:[%s8084 + $0x320] sm:$0xff]
        %v8186 = vld [vmem:[%s8084 + $0x328] sm:$0xff]
        %v8187 = vld [vmem:[%s8084 + $0x330] sm:$0xff]
        %v8188 = vld [vmem:[%s8084 + $0x338] sm:$0xff]
        %v8189 = vld [vmem:[%s8084 + $0x340] sm:$0xff]
        %v8190 = vld [vmem:[%s8084 + $0x348] sm:$0xff]
        %v8191 = vld [vmem:[%s8084 + $0x350] sm:$0xff]
        %v8192 = vld [vmem:[%s8084 + $0x358] sm:$0xff]
        %v8193 = vld [vmem:[%s8084 + $0x360] sm:$0xff]
        %v8194 = vld [vmem:[%s8084 + $0x368] sm:$0xff]
        %v8195 = vld [vmem:[%s8084 + $0x370] sm:$0xff]
        %v8196 = vld [vmem:[%s8084 + $0x378] sm:$0xff]
        %v8197 = vld [vmem:[%s8084 + $0x380] sm:$0xff]
        %v8198 = vld [vmem:[%s8084 + $0x388] sm:$0xff]
        %v8199 = vld [vmem:[%s8084 + $0x390] sm:$0xff]
        %v8200 = vld [vmem:[%s8084 + $0x398] sm:$0xff]
        %v8201 = vld [vmem:[%s8084 + $0x3a0] sm:$0xff]
        %v8202 = vld [vmem:[%s8084 + $0x3a8] sm:$0xff]
        %v8203 = vld [vmem:[%s8084 + $0x3b0] sm:$0xff]
        %v8204 = vld [vmem:[%s8084 + $0x3b8] sm:$0xff]
        %v8205 = vld [vmem:[%s8084 + $0x3c0] sm:$0xff]
        %v8206 = vld [vmem:[%s8084 + $0x3c8] sm:$0xff]
        %v8207 = vld [vmem:[%s8084 + $0x3d0] sm:$0xff]
        %v8208 = vld [vmem:[%s8084 + $0x3d8] sm:$0xff]
        %v8209 = vld [vmem:[%s8084 + $0x3e0] sm:$0xff]
        %v8210 = vld [vmem:[%s8084 + $0x3e8] sm:$0xff]
        %v8211 = vld [vmem:[%s8084 + $0x3f0] sm:$0xff]
        %v8212 = vld [vmem:[%s8084 + $0x3f8] sm:$0xff]
        %v8213 = vld [vmem:[%s8084 + $0x400] sm:$0xff]
        %v8214 = vld [vmem:[%s8084 + $0x408] sm:$0xff]
        %v8215 = vld [vmem:[%s8084 + $0x410] sm:$0xff]
        %v8216 = vld [vmem:[%s8084 + $0x418] sm:$0xff]
        %v8217 = vld [vmem:[%s8084 + $0x420] sm:$0xff]
        %v8218 = vld [vmem:[%s8084 + $0x428] sm:$0xff]
        %v8219 = vld [vmem:[%s8084 + $0x430] sm:$0xff]
        %v8220 = vld [vmem:[%s8084 + $0x438] sm:$0xff]
        %v8221 = vld [vmem:[%s8084 + $0x440] sm:$0xff]
        %v8222 = vld [vmem:[%s8084 + $0x448] sm:$0xff]
        %v8223 = vld [vmem:[%s8084 + $0x450] sm:$0xff]
        %v8224 = vld [vmem:[%s8084 + $0x458] sm:$0xff]
        %v8225 = vld [vmem:[%s8084 + $0x460] sm:$0xff]
        %v8226 = vld [vmem:[%s8084 + $0x468] sm:$0xff]
        %v8227 = vld [vmem:[%s8084 + $0x470] sm:$0xff]
        %v8228 = vld [vmem:[%s8084 + $0x478] sm:$0xff]
        %v8229 = vld [vmem:[%s8084 + $0x480] sm:$0xff]
        %v8230 = vld [vmem:[%s8084 + $0x488] sm:$0xff]
        %v8231 = vld [vmem:[%s8084 + $0x490] sm:$0xff]
        %v8232 = vld [vmem:[%s8084 + $0x498] sm:$0xff]
        %v8233 = vld [vmem:[%s8084 + $0x4a0] sm:$0xff]
        %v8234 = vld [vmem:[%s8084 + $0x4a8] sm:$0xff]
        %v8235 = vld [vmem:[%s8084 + $0x4b0] sm:$0xff]
        %v8236 = vld [vmem:[%s8084 + $0x4b8] sm:$0xff]
        %v8237 = vld [vmem:[%s8084 + $0x4c0] sm:$0xff]
        %v8238 = vld [vmem:[%s8084 + $0x4c8] sm:$0xff]
        %v8239 = vld [vmem:[%s8084 + $0x4d0] sm:$0xff]
        %v8240 = vld [vmem:[%s8084 + $0x4d8] sm:$0xff]
        %v8241 = vld [vmem:[%s8084 + $0x4e0] sm:$0xff]
        %v8242 = vld [vmem:[%s8084 + $0x4e8] sm:$0xff]
        %v8243 = vld [vmem:[%s8084 + $0x4f0] sm:$0xff]
        %v8244 = vld [vmem:[%s8084 + $0x4f8] sm:$0xff]
        %v8245 = vld [vmem:[%s8084 + $0x500] sm:$0xff]
        %v8246 = vld [vmem:[%s8084 + $0x508] sm:$0xff]
        %v8247 = vld [vmem:[%s8084 + $0x510] sm:$0xff]
        %v8248 = vld [vmem:[%s8084 + $0x518] sm:$0xff]
        %v8249 = vld [vmem:[%s8084 + $0x520] sm:$0xff]
        %v8250 = vld [vmem:[%s8084 + $0x528] sm:$0xff]
        %v8251 = vld [vmem:[%s8084 + $0x530] sm:$0xff]
        %v8252 = vld [vmem:[%s8084 + $0x538] sm:$0xff]
        %v8253 = vld [vmem:[%s8084 + $0x540] sm:$0xff]
        %v8254 = vld [vmem:[%s8084 + $0x548] sm:$0xff]
        %v8255 = vld [vmem:[%s8084 + $0x550] sm:$0xff]
        %v8256 = vld [vmem:[%s8084 + $0x558] sm:$0xff]
        %v8257 = vld [vmem:[%s8084 + $0x560] sm:$0xff]
        %v8258 = vld [vmem:[%s8084 + $0x568] sm:$0xff]
        %v8259 = vld [vmem:[%s8084 + $0x570] sm:$0xff]
        %v8260 = vld [vmem:[%s8084 + $0x578] sm:$0xff]
        %v8261 = vld [vmem:[%s8084 + $0x580] sm:$0xff]
        %v8262 = vld [vmem:[%s8084 + $0x588] sm:$0xff]
        %v8263 = vld [vmem:[%s8084 + $0x590] sm:$0xff]
        %v8264 = vld [vmem:[%s8084 + $0x598] sm:$0xff]
        %v8265 = vld [vmem:[%s8084 + $0x5a0] sm:$0xff]
        %v8266 = vld [vmem:[%s8084 + $0x5a8] sm:$0xff]
        %v8267 = vld [vmem:[%s8084 + $0x5b0] sm:$0xff]
        %v8268 = vld [vmem:[%s8084 + $0x5b8] sm:$0xff]
        %v8269 = vld [vmem:[%s8084 + $0x5c0] sm:$0xff]
        %v8270 = vld [vmem:[%s8084 + $0x5c8] sm:$0xff]
        %v8271 = vld [vmem:[%s8084 + $0x5d0] sm:$0xff]
        %v8272 = vld [vmem:[%s8084 + $0x5d8] sm:$0xff]
        %v8273 = vld [vmem:[%s8084 + $0x5e0] sm:$0xff]
        %v8274 = vld [vmem:[%s8084 + $0x5e8] sm:$0xff]
        %v8275 = vld [vmem:[%s8084 + $0x5f0] sm:$0xff]
        %v8276 = vld [vmem:[%s8084 + $0x5f8] sm:$0xff]
        %v8277 = vld [vmem:[%s8084 + $0x600] sm:$0xff]
        %v8278 = vld [vmem:[%s8084 + $0x608] sm:$0xff]
        %v8279 = vld [vmem:[%s8084 + $0x610] sm:$0xff]
        %v8280 = vld [vmem:[%s8084 + $0x618] sm:$0xff]
        %v8281 = vld [vmem:[%s8084 + $0x620] sm:$0xff]
        %v8282 = vld [vmem:[%s8084 + $0x628] sm:$0xff]
        %v8283 = vld [vmem:[%s8084 + $0x630] sm:$0xff]
        %v8284 = vld [vmem:[%s8084 + $0x638] sm:$0xff]
        %v8285 = vld [vmem:[%s8084 + $0x640] sm:$0xff]
        %v8286 = vld [vmem:[%s8084 + $0x648] sm:$0xff]
        %v8287 = vld [vmem:[%s8084 + $0x650] sm:$0xff]
        %v8288 = vld [vmem:[%s8084 + $0x658] sm:$0xff]
        %v8289 = vld [vmem:[%s8084 + $0x660] sm:$0xff]
        %v8290 = vld [vmem:[%s8084 + $0x668] sm:$0xff]
        %v8291 = vld [vmem:[%s8084 + $0x670] sm:$0xff]
        %v8292 = vld [vmem:[%s8084 + $0x678] sm:$0xff]
        %v8293 = vld [vmem:[%s8084 + $0x680] sm:$0xff]
        %v8294 = vld [vmem:[%s8084 + $0x688] sm:$0xff]
        %v8295 = vld [vmem:[%s8084 + $0x690] sm:$0xff]
        %v8296 = vld [vmem:[%s8084 + $0x698] sm:$0xff]
        %v8297 = vld [vmem:[%s8084 + $0x6a0] sm:$0xff]
        %v8298 = vld [vmem:[%s8084 + $0x6a8] sm:$0xff]
        %v8299 = vld [vmem:[%s8084 + $0x6b0] sm:$0xff]
        %v8300 = vld [vmem:[%s8084 + $0x6b8] sm:$0xff]
        %v8301 = vld [vmem:[%s8084 + $0x6c0] sm:$0xff]
        %v8302 = vld [vmem:[%s8084 + $0x6c8] sm:$0xff]
        %v8303 = vld [vmem:[%s8084 + $0x6d0] sm:$0xff]
        %v8304 = vld [vmem:[%s8084 + $0x6d8] sm:$0xff]
        %v8305 = vld [vmem:[%s8084 + $0x6e0] sm:$0xff]
        %v8306 = vld [vmem:[%s8084 + $0x6e8] sm:$0xff]
        %v8307 = vld [vmem:[%s8084 + $0x6f0] sm:$0xff]
        %v8308 = vld [vmem:[%s8084 + $0x6f8] sm:$0xff]
        %v8309 = vld [vmem:[%s8084 + $0x700] sm:$0xff]
        %v8310 = vld [vmem:[%s8084 + $0x708] sm:$0xff]
        %v8311 = vld [vmem:[%s8084 + $0x710] sm:$0xff]
        %v8312 = vld [vmem:[%s8084 + $0x718] sm:$0xff]
        %v8313 = vld [vmem:[%s8084 + $0x720] sm:$0xff]
        %v8314 = vld [vmem:[%s8084 + $0x728] sm:$0xff]
        %v8315 = vld [vmem:[%s8084 + $0x730] sm:$0xff]
        %v8316 = vld [vmem:[%s8084 + $0x738] sm:$0xff]
        %v8317 = vld [vmem:[%s8084 + $0x740] sm:$0xff]
        %v8318 = vld [vmem:[%s8084 + $0x748] sm:$0xff]
        %v8319 = vld [vmem:[%s8084 + $0x750] sm:$0xff]
        %v8320 = vld [vmem:[%s8084 + $0x758] sm:$0xff]
        %v8321 = vld [vmem:[%s8084 + $0x760] sm:$0xff]
        %v8322 = vld [vmem:[%s8084 + $0x768] sm:$0xff]
        %v8323 = vld [vmem:[%s8084 + $0x770] sm:$0xff]
        %v8324 = vld [vmem:[%s8084 + $0x778] sm:$0xff]
        %v8325 = vld [vmem:[%s8084 + $0x780] sm:$0xff]
        %v8326 = vld [vmem:[%s8084 + $0x788] sm:$0xff]
        %v8327 = vld [vmem:[%s8084 + $0x790] sm:$0xff]
        %v8328 = vld [vmem:[%s8084 + $0x798] sm:$0xff]
        %v8329 = vld [vmem:[%s8084 + $0x7a0] sm:$0xff]
        %v8330 = vld [vmem:[%s8084 + $0x7a8] sm:$0xff]
        %v8331 = vld [vmem:[%s8084 + $0x7b0] sm:$0xff]
        %v8332 = vld [vmem:[%s8084 + $0x7b8] sm:$0xff]
        %v8333 = vld [vmem:[%s8084 + $0x7c0] sm:$0xff]
        %v8334 = vld [vmem:[%s8084 + $0x7c8] sm:$0xff]
        %v8335 = vld [vmem:[%s8084 + $0x7d0] sm:$0xff]
        %v8336 = vld [vmem:[%s8084 + $0x7d8] sm:$0xff]
        %v8337 = vld [vmem:[%s8084 + $0x7e0] sm:$0xff]
        %v8338 = vld [vmem:[%s8084 + $0x7e8] sm:$0xff]
        %v8339 = vld [vmem:[%s8084 + $0x7f0] sm:$0xff]
        %v8340 = vld [vmem:[%s8084 + $0x7f8] sm:$0xff]
        %v8597 = vunpack.c.l.b16 %v8085
        %v8598 = vunpack.c.h.b16 %v8085
        %v8599 = vunpack.c.l.b16 %v8086
        %v8600 = vunpack.c.h.b16 %v8086
        %v8601 = vunpack.c.l.b16 %v8087
        %v8602 = vunpack.c.h.b16 %v8087
        %v8603 = vunpack.c.l.b16 %v8088
        %v8604 = vunpack.c.h.b16 %v8088
        %v8605 = vunpack.c.l.b16 %v8089
        %v8606 = vunpack.c.h.b16 %v8089
        %v8607 = vunpack.c.l.b16 %v8090
        %v8608 = vunpack.c.h.b16 %v8090
        %v8609 = vunpack.c.l.b16 %v8091
        %v8610 = vunpack.c.h.b16 %v8091
        %v8611 = vunpack.c.l.b16 %v8092
        %v8612 = vunpack.c.h.b16 %v8092
        %v8613 = vunpack.c.l.b16 %v8093
        %v8614 = vunpack.c.h.b16 %v8093
        %v8615 = vunpack.c.l.b16 %v8094
        %v8616 = vunpack.c.h.b16 %v8094
        %v8617 = vunpack.c.l.b16 %v8095
        %v8618 = vunpack.c.h.b16 %v8095
        %v8619 = vunpack.c.l.b16 %v8096
        %v8620 = vunpack.c.h.b16 %v8096
        %v8621 = vunpack.c.l.b16 %v8097
        %v8622 = vunpack.c.h.b16 %v8097
        %v8623 = vunpack.c.l.b16 %v8098
        %v8624 = vunpack.c.h.b16 %v8098
        %v8625 = vunpack.c.l.b16 %v8099
        %v8626 = vunpack.c.h.b16 %v8099
        %v8627 = vunpack.c.l.b16 %v8100
        %v8628 = vunpack.c.h.b16 %v8100
        %v8629 = vunpack.c.l.b16 %v8101
        %v8630 = vunpack.c.h.b16 %v8101
        %v8631 = vunpack.c.l.b16 %v8102
        %v8632 = vunpack.c.h.b16 %v8102
        %v8633 = vunpack.c.l.b16 %v8103
        %v8634 = vunpack.c.h.b16 %v8103
        %v8635 = vunpack.c.l.b16 %v8104
        %v8636 = vunpack.c.h.b16 %v8104
        %v8637 = vunpack.c.l.b16 %v8105
        %v8638 = vunpack.c.h.b16 %v8105
        %v8639 = vunpack.c.l.b16 %v8106
        %v8640 = vunpack.c.h.b16 %v8106
        %v8641 = vunpack.c.l.b16 %v8107
        %v8642 = vunpack.c.h.b16 %v8107
        %v8643 = vunpack.c.l.b16 %v8108
        %v8644 = vunpack.c.h.b16 %v8108
        %v8645 = vunpack.c.l.b16 %v8109
        %v8646 = vunpack.c.h.b16 %v8109
        %v8647 = vunpack.c.l.b16 %v8110
        %v8648 = vunpack.c.h.b16 %v8110
        %v8649 = vunpack.c.l.b16 %v8111
        %v8650 = vunpack.c.h.b16 %v8111
        %v8651 = vunpack.c.l.b16 %v8112
        %v8652 = vunpack.c.h.b16 %v8112
        %v8653 = vunpack.c.l.b16 %v8113
        %v8654 = vunpack.c.h.b16 %v8113
        %v8655 = vunpack.c.l.b16 %v8114
        %v8656 = vunpack.c.h.b16 %v8114
        %v8657 = vunpack.c.l.b16 %v8115
        %v8658 = vunpack.c.h.b16 %v8115
        %v8659 = vunpack.c.l.b16 %v8116
        %v8660 = vunpack.c.h.b16 %v8116
        %v8661 = vunpack.c.l.b16 %v8117
        %v8662 = vunpack.c.h.b16 %v8117
        %v8663 = vunpack.c.l.b16 %v8118
        %v8664 = vunpack.c.h.b16 %v8118
        %v8665 = vunpack.c.l.b16 %v8119
        %v8666 = vunpack.c.h.b16 %v8119
        %v8667 = vunpack.c.l.b16 %v8120
        %v8668 = vunpack.c.h.b16 %v8120
        %v8669 = vunpack.c.l.b16 %v8121
        %v8670 = vunpack.c.h.b16 %v8121
        %v8671 = vunpack.c.l.b16 %v8122
        %v8672 = vunpack.c.h.b16 %v8122
        %v8673 = vunpack.c.l.b16 %v8123
        %v8674 = vunpack.c.h.b16 %v8123
        %v8675 = vunpack.c.l.b16 %v8124
        %v8676 = vunpack.c.h.b16 %v8124
        %v8677 = vunpack.c.l.b16 %v8125
        %v8678 = vunpack.c.h.b16 %v8125
        %v8679 = vunpack.c.l.b16 %v8126
        %v8680 = vunpack.c.h.b16 %v8126
        %v8681 = vunpack.c.l.b16 %v8127
        %v8682 = vunpack.c.h.b16 %v8127
        %v8683 = vunpack.c.l.b16 %v8128
        %v8684 = vunpack.c.h.b16 %v8128
        %v8685 = vunpack.c.l.b16 %v8129
        %v8686 = vunpack.c.h.b16 %v8129
        %v8687 = vunpack.c.l.b16 %v8130
        %v8688 = vunpack.c.h.b16 %v8130
        %v8689 = vunpack.c.l.b16 %v8131
        %v8690 = vunpack.c.h.b16 %v8131
        %v8691 = vunpack.c.l.b16 %v8132
        %v8692 = vunpack.c.h.b16 %v8132
        %v8693 = vunpack.c.l.b16 %v8133
        %v8694 = vunpack.c.h.b16 %v8133
        %v8695 = vunpack.c.l.b16 %v8134
        %v8696 = vunpack.c.h.b16 %v8134
        %v8697 = vunpack.c.l.b16 %v8135
        %v8698 = vunpack.c.h.b16 %v8135
        %v8699 = vunpack.c.l.b16 %v8136
        %v8700 = vunpack.c.h.b16 %v8136
        %v8701 = vunpack.c.l.b16 %v8137
        %v8702 = vunpack.c.h.b16 %v8137
        %v8703 = vunpack.c.l.b16 %v8138
        %v8704 = vunpack.c.h.b16 %v8138
        %v8705 = vunpack.c.l.b16 %v8139
        %v8706 = vunpack.c.h.b16 %v8139
        %v8707 = vunpack.c.l.b16 %v8140
        %v8708 = vunpack.c.h.b16 %v8140
        %v8709 = vunpack.c.l.b16 %v8141
        %v8710 = vunpack.c.h.b16 %v8141
        %v8711 = vunpack.c.l.b16 %v8142
        %v8712 = vunpack.c.h.b16 %v8142
        %v8713 = vunpack.c.l.b16 %v8143
        %v8714 = vunpack.c.h.b16 %v8143
        %v8715 = vunpack.c.l.b16 %v8144
        %v8716 = vunpack.c.h.b16 %v8144
        %v8717 = vunpack.c.l.b16 %v8145
        %v8718 = vunpack.c.h.b16 %v8145
        %v8719 = vunpack.c.l.b16 %v8146
        %v8720 = vunpack.c.h.b16 %v8146
        %v8721 = vunpack.c.l.b16 %v8147
        %v8722 = vunpack.c.h.b16 %v8147
        %v8723 = vunpack.c.l.b16 %v8148
        %v8724 = vunpack.c.h.b16 %v8148
        %v8725 = vunpack.c.l.b16 %v8149
        %v8726 = vunpack.c.h.b16 %v8149
        %v8727 = vunpack.c.l.b16 %v8150
        %v8728 = vunpack.c.h.b16 %v8150
        %v8729 = vunpack.c.l.b16 %v8151
        %v8730 = vunpack.c.h.b16 %v8151
        %v8731 = vunpack.c.l.b16 %v8152
        %v8732 = vunpack.c.h.b16 %v8152
        %v8733 = vunpack.c.l.b16 %v8153
        %v8734 = vunpack.c.h.b16 %v8153
        %v8735 = vunpack.c.l.b16 %v8154
        %v8736 = vunpack.c.h.b16 %v8154
        %v8737 = vunpack.c.l.b16 %v8155
        %v8738 = vunpack.c.h.b16 %v8155
        %v8739 = vunpack.c.l.b16 %v8156
        %v8740 = vunpack.c.h.b16 %v8156
        %v8741 = vunpack.c.l.b16 %v8157
        %v8742 = vunpack.c.h.b16 %v8157
        %v8743 = vunpack.c.l.b16 %v8158
        %v8744 = vunpack.c.h.b16 %v8158
        %v8745 = vunpack.c.l.b16 %v8159
        %v8746 = vunpack.c.h.b16 %v8159
        %v8747 = vunpack.c.l.b16 %v8160
        %v8748 = vunpack.c.h.b16 %v8160
        %v8749 = vunpack.c.l.b16 %v8161
        %v8750 = vunpack.c.h.b16 %v8161
        %v8751 = vunpack.c.l.b16 %v8162
        %v8752 = vunpack.c.h.b16 %v8162
        %v8753 = vunpack.c.l.b16 %v8163
        %v8754 = vunpack.c.h.b16 %v8163
        %v8755 = vunpack.c.l.b16 %v8164
        %v8756 = vunpack.c.h.b16 %v8164
        %v8757 = vunpack.c.l.b16 %v8165
        %v8758 = vunpack.c.h.b16 %v8165
        %v8759 = vunpack.c.l.b16 %v8166
        %v8760 = vunpack.c.h.b16 %v8166
        %v8761 = vunpack.c.l.b16 %v8167
        %v8762 = vunpack.c.h.b16 %v8167
        %v8763 = vunpack.c.l.b16 %v8168
        %v8764 = vunpack.c.h.b16 %v8168
        %v8765 = vunpack.c.l.b16 %v8169
        %v8766 = vunpack.c.h.b16 %v8169
        %v8767 = vunpack.c.l.b16 %v8170
        %v8768 = vunpack.c.h.b16 %v8170
        %v8769 = vunpack.c.l.b16 %v8171
        %v8770 = vunpack.c.h.b16 %v8171
        %v8771 = vunpack.c.l.b16 %v8172
        %v8772 = vunpack.c.h.b16 %v8172
        %v8773 = vunpack.c.l.b16 %v8173
        %v8774 = vunpack.c.h.b16 %v8173
        %v8775 = vunpack.c.l.b16 %v8174
        %v8776 = vunpack.c.h.b16 %v8174
        %v8777 = vunpack.c.l.b16 %v8175
        %v8778 = vunpack.c.h.b16 %v8175
        %v8779 = vunpack.c.l.b16 %v8176
        %v8780 = vunpack.c.h.b16 %v8176
        %v8781 = vunpack.c.l.b16 %v8177
        %v8782 = vunpack.c.h.b16 %v8177
        %v8783 = vunpack.c.l.b16 %v8178
        %v8784 = vunpack.c.h.b16 %v8178
        %v8785 = vunpack.c.l.b16 %v8179
        %v8786 = vunpack.c.h.b16 %v8179
        %v8787 = vunpack.c.l.b16 %v8180
        %v8788 = vunpack.c.h.b16 %v8180
        %v8789 = vunpack.c.l.b16 %v8181
        %v8790 = vunpack.c.h.b16 %v8181
        %v8791 = vunpack.c.l.b16 %v8182
        %v8792 = vunpack.c.h.b16 %v8182
        %v8793 = vunpack.c.l.b16 %v8183
        %v8794 = vunpack.c.h.b16 %v8183
        %v8795 = vunpack.c.l.b16 %v8184
        %v8796 = vunpack.c.h.b16 %v8184
        %v8797 = vunpack.c.l.b16 %v8185
        %v8798 = vunpack.c.h.b16 %v8185
        %v8799 = vunpack.c.l.b16 %v8186
        %v8800 = vunpack.c.h.b16 %v8186
        %v8801 = vunpack.c.l.b16 %v8187
        %v8802 = vunpack.c.h.b16 %v8187
        %v8803 = vunpack.c.l.b16 %v8188
        %v8804 = vunpack.c.h.b16 %v8188
        %v8805 = vunpack.c.l.b16 %v8189
        %v8806 = vunpack.c.h.b16 %v8189
        %v8807 = vunpack.c.l.b16 %v8190
        %v8808 = vunpack.c.h.b16 %v8190
        %v8809 = vunpack.c.l.b16 %v8191
        %v8810 = vunpack.c.h.b16 %v8191
        %v8811 = vunpack.c.l.b16 %v8192
        %v8812 = vunpack.c.h.b16 %v8192
        %v8813 = vunpack.c.l.b16 %v8193
        %v8814 = vunpack.c.h.b16 %v8193
        %v8815 = vunpack.c.l.b16 %v8194
        %v8816 = vunpack.c.h.b16 %v8194
        %v8817 = vunpack.c.l.b16 %v8195
        %v8818 = vunpack.c.h.b16 %v8195
        %v8819 = vunpack.c.l.b16 %v8196
        %v8820 = vunpack.c.h.b16 %v8196
        %v8821 = vunpack.c.l.b16 %v8197
        %v8822 = vunpack.c.h.b16 %v8197
        %v8823 = vunpack.c.l.b16 %v8198
        %v8824 = vunpack.c.h.b16 %v8198
        %v8825 = vunpack.c.l.b16 %v8199
        %v8826 = vunpack.c.h.b16 %v8199
        %v8827 = vunpack.c.l.b16 %v8200
        %v8828 = vunpack.c.h.b16 %v8200
        %v8829 = vunpack.c.l.b16 %v8201
        %v8830 = vunpack.c.h.b16 %v8201
        %v8831 = vunpack.c.l.b16 %v8202
        %v8832 = vunpack.c.h.b16 %v8202
        %v8833 = vunpack.c.l.b16 %v8203
        %v8834 = vunpack.c.h.b16 %v8203
        %v8835 = vunpack.c.l.b16 %v8204
        %v8836 = vunpack.c.h.b16 %v8204
        %v8837 = vunpack.c.l.b16 %v8205
        %v8838 = vunpack.c.h.b16 %v8205
        %v8839 = vunpack.c.l.b16 %v8206
        %v8840 = vunpack.c.h.b16 %v8206
        %v8841 = vunpack.c.l.b16 %v8207
        %v8842 = vunpack.c.h.b16 %v8207
        %v8843 = vunpack.c.l.b16 %v8208
        %v8844 = vunpack.c.h.b16 %v8208
        %v8845 = vunpack.c.l.b16 %v8209
        %v8846 = vunpack.c.h.b16 %v8209
        %v8847 = vunpack.c.l.b16 %v8210
        %v8848 = vunpack.c.h.b16 %v8210
        %v8849 = vunpack.c.l.b16 %v8211
        %v8850 = vunpack.c.h.b16 %v8211
        %v8851 = vunpack.c.l.b16 %v8212
        %v8852 = vunpack.c.h.b16 %v8212
        %v8853 = vunpack.c.l.b16 %v8213
        %v8854 = vunpack.c.h.b16 %v8213
        %v8855 = vunpack.c.l.b16 %v8214
        %v8856 = vunpack.c.h.b16 %v8214
        %v8857 = vunpack.c.l.b16 %v8215
        %v8858 = vunpack.c.h.b16 %v8215
        %v8859 = vunpack.c.l.b16 %v8216
        %v8860 = vunpack.c.h.b16 %v8216
        %v8861 = vunpack.c.l.b16 %v8217
        %v8862 = vunpack.c.h.b16 %v8217
        %v8863 = vunpack.c.l.b16 %v8218
        %v8864 = vunpack.c.h.b16 %v8218
        %v8865 = vunpack.c.l.b16 %v8219
        %v8866 = vunpack.c.h.b16 %v8219
        %v8867 = vunpack.c.l.b16 %v8220
        %v8868 = vunpack.c.h.b16 %v8220
        %v8869 = vunpack.c.l.b16 %v8221
        %v8870 = vunpack.c.h.b16 %v8221
        %v8871 = vunpack.c.l.b16 %v8222
        %v8872 = vunpack.c.h.b16 %v8222
        %v8873 = vunpack.c.l.b16 %v8223
        %v8874 = vunpack.c.h.b16 %v8223
        %v8875 = vunpack.c.l.b16 %v8224
        %v8876 = vunpack.c.h.b16 %v8224
        %v8877 = vunpack.c.l.b16 %v8225
        %v8878 = vunpack.c.h.b16 %v8225
        %v8879 = vunpack.c.l.b16 %v8226
        %v8880 = vunpack.c.h.b16 %v8226
        %v8881 = vunpack.c.l.b16 %v8227
        %v8882 = vunpack.c.h.b16 %v8227
        %v8883 = vunpack.c.l.b16 %v8228
        %v8884 = vunpack.c.h.b16 %v8228
        %v8885 = vunpack.c.l.b16 %v8229
        %v8886 = vunpack.c.h.b16 %v8229
        %v8887 = vunpack.c.l.b16 %v8230
        %v8888 = vunpack.c.h.b16 %v8230
        %v8889 = vunpack.c.l.b16 %v8231
        %v8890 = vunpack.c.h.b16 %v8231
        %v8891 = vunpack.c.l.b16 %v8232
        %v8892 = vunpack.c.h.b16 %v8232
        %v8893 = vunpack.c.l.b16 %v8233
        %v8894 = vunpack.c.h.b16 %v8233
        %v8895 = vunpack.c.l.b16 %v8234
        %v8896 = vunpack.c.h.b16 %v8234
        %v8897 = vunpack.c.l.b16 %v8235
        %v8898 = vunpack.c.h.b16 %v8235
        %v8899 = vunpack.c.l.b16 %v8236
        %v8900 = vunpack.c.h.b16 %v8236
        %v8901 = vunpack.c.l.b16 %v8237
        %v8902 = vunpack.c.h.b16 %v8237
        %v8903 = vunpack.c.l.b16 %v8238
        %v8904 = vunpack.c.h.b16 %v8238
        %v8905 = vunpack.c.l.b16 %v8239
        %v8906 = vunpack.c.h.b16 %v8239
        %v8907 = vunpack.c.l.b16 %v8240
        %v8908 = vunpack.c.h.b16 %v8240
        %v8909 = vunpack.c.l.b16 %v8241
        %v8910 = vunpack.c.h.b16 %v8241
        %v8911 = vunpack.c.l.b16 %v8242
        %v8912 = vunpack.c.h.b16 %v8242
        %v8913 = vunpack.c.l.b16 %v8243
        %v8914 = vunpack.c.h.b16 %v8243
        %v8915 = vunpack.c.l.b16 %v8244
        %v8916 = vunpack.c.h.b16 %v8244
        %v8917 = vunpack.c.l.b16 %v8245
        %v8918 = vunpack.c.h.b16 %v8245
        %v8919 = vunpack.c.l.b16 %v8246
        %v8920 = vunpack.c.h.b16 %v8246
        %v8921 = vunpack.c.l.b16 %v8247
        %v8922 = vunpack.c.h.b16 %v8247
        %v8923 = vunpack.c.l.b16 %v8248
        %v8924 = vunpack.c.h.b16 %v8248
        %v8925 = vunpack.c.l.b16 %v8249
        %v8926 = vunpack.c.h.b16 %v8249
        %v8927 = vunpack.c.l.b16 %v8250
        %v8928 = vunpack.c.h.b16 %v8250
        %v8929 = vunpack.c.l.b16 %v8251
        %v8930 = vunpack.c.h.b16 %v8251
        %v8931 = vunpack.c.l.b16 %v8252
        %v8932 = vunpack.c.h.b16 %v8252
        %v8933 = vunpack.c.l.b16 %v8253
        %v8934 = vunpack.c.h.b16 %v8253
        %v8935 = vunpack.c.l.b16 %v8254
        %v8936 = vunpack.c.h.b16 %v8254
        %v8937 = vunpack.c.l.b16 %v8255
        %v8938 = vunpack.c.h.b16 %v8255
        %v8939 = vunpack.c.l.b16 %v8256
        %v8940 = vunpack.c.h.b16 %v8256
        %v8941 = vunpack.c.l.b16 %v8257
        %v8942 = vunpack.c.h.b16 %v8257
        %v8943 = vunpack.c.l.b16 %v8258
        %v8944 = vunpack.c.h.b16 %v8258
        %v8945 = vunpack.c.l.b16 %v8259
        %v8946 = vunpack.c.h.b16 %v8259
        %v8947 = vunpack.c.l.b16 %v8260
        %v8948 = vunpack.c.h.b16 %v8260
        %v8949 = vunpack.c.l.b16 %v8261
        %v8950 = vunpack.c.h.b16 %v8261
        %v8951 = vunpack.c.l.b16 %v8262
        %v8952 = vunpack.c.h.b16 %v8262
        %v8953 = vunpack.c.l.b16 %v8263
        %v8954 = vunpack.c.h.b16 %v8263
        %v8955 = vunpack.c.l.b16 %v8264
        %v8956 = vunpack.c.h.b16 %v8264
        %v8957 = vunpack.c.l.b16 %v8265
        %v8958 = vunpack.c.h.b16 %v8265
        %v8959 = vunpack.c.l.b16 %v8266
        %v8960 = vunpack.c.h.b16 %v8266
        %v8961 = vunpack.c.l.b16 %v8267
        %v8962 = vunpack.c.h.b16 %v8267
        %v8963 = vunpack.c.l.b16 %v8268
        %v8964 = vunpack.c.h.b16 %v8268
        %v8965 = vunpack.c.l.b16 %v8269
        %v8966 = vunpack.c.h.b16 %v8269
        %v8967 = vunpack.c.l.b16 %v8270
        %v8968 = vunpack.c.h.b16 %v8270
        %v8969 = vunpack.c.l.b16 %v8271
        %v8970 = vunpack.c.h.b16 %v8271
        %v8971 = vunpack.c.l.b16 %v8272
        %v8972 = vunpack.c.h.b16 %v8272
        %v8973 = vunpack.c.l.b16 %v8273
        %v8974 = vunpack.c.h.b16 %v8273
        %v8975 = vunpack.c.l.b16 %v8274
        %v8976 = vunpack.c.h.b16 %v8274
        %v8977 = vunpack.c.l.b16 %v8275
        %v8978 = vunpack.c.h.b16 %v8275
        %v8979 = vunpack.c.l.b16 %v8276
        %v8980 = vunpack.c.h.b16 %v8276
        %v8981 = vunpack.c.l.b16 %v8277
        %v8982 = vunpack.c.h.b16 %v8277
        %v8983 = vunpack.c.l.b16 %v8278
        %v8984 = vunpack.c.h.b16 %v8278
        %v8985 = vunpack.c.l.b16 %v8279
        %v8986 = vunpack.c.h.b16 %v8279
        %v8987 = vunpack.c.l.b16 %v8280
        %v8988 = vunpack.c.h.b16 %v8280
        %v8989 = vunpack.c.l.b16 %v8281
        %v8990 = vunpack.c.h.b16 %v8281
        %v8991 = vunpack.c.l.b16 %v8282
        %v8992 = vunpack.c.h.b16 %v8282
        %v8993 = vunpack.c.l.b16 %v8283
        %v8994 = vunpack.c.h.b16 %v8283
        %v8995 = vunpack.c.l.b16 %v8284
        %v8996 = vunpack.c.h.b16 %v8284
        %v8997 = vunpack.c.l.b16 %v8285
        %v8998 = vunpack.c.h.b16 %v8285
        %v8999 = vunpack.c.l.b16 %v8286
        %v9000 = vunpack.c.h.b16 %v8286
        %v9001 = vunpack.c.l.b16 %v8287
        %v9002 = vunpack.c.h.b16 %v8287
        %v9003 = vunpack.c.l.b16 %v8288
        %v9004 = vunpack.c.h.b16 %v8288
        %v9005 = vunpack.c.l.b16 %v8289
        %v9006 = vunpack.c.h.b16 %v8289
        %v9007 = vunpack.c.l.b16 %v8290
        %v9008 = vunpack.c.h.b16 %v8290
        %v9009 = vunpack.c.l.b16 %v8291
        %v9010 = vunpack.c.h.b16 %v8291
        %v9011 = vunpack.c.l.b16 %v8292
        %v9012 = vunpack.c.h.b16 %v8292
        %v9013 = vunpack.c.l.b16 %v8293
        %v9014 = vunpack.c.h.b16 %v8293
        %v9015 = vunpack.c.l.b16 %v8294
        %v9016 = vunpack.c.h.b16 %v8294
        %v9017 = vunpack.c.l.b16 %v8295
        %v9018 = vunpack.c.h.b16 %v8295
        %v9019 = vunpack.c.l.b16 %v8296
        %v9020 = vunpack.c.h.b16 %v8296
        %v9021 = vunpack.c.l.b16 %v8297
        %v9022 = vunpack.c.h.b16 %v8297
        %v9023 = vunpack.c.l.b16 %v8298
        %v9024 = vunpack.c.h.b16 %v8298
        %v9025 = vunpack.c.l.b16 %v8299
        %v9026 = vunpack.c.h.b16 %v8299
        %v9027 = vunpack.c.l.b16 %v8300
        %v9028 = vunpack.c.h.b16 %v8300
        %v9029 = vunpack.c.l.b16 %v8301
        %v9030 = vunpack.c.h.b16 %v8301
        %v9031 = vunpack.c.l.b16 %v8302
        %v9032 = vunpack.c.h.b16 %v8302
        %v9033 = vunpack.c.l.b16 %v8303
        %v9034 = vunpack.c.h.b16 %v8303
        %v9035 = vunpack.c.l.b16 %v8304
        %v9036 = vunpack.c.h.b16 %v8304
        %v9037 = vunpack.c.l.b16 %v8305
        %v9038 = vunpack.c.h.b16 %v8305
        %v9039 = vunpack.c.l.b16 %v8306
        %v9040 = vunpack.c.h.b16 %v8306
        %v9041 = vunpack.c.l.b16 %v8307
        %v9042 = vunpack.c.h.b16 %v8307
        %v9043 = vunpack.c.l.b16 %v8308
        %v9044 = vunpack.c.h.b16 %v8308
        %v9045 = vunpack.c.l.b16 %v8309
        %v9046 = vunpack.c.h.b16 %v8309
        %v9047 = vunpack.c.l.b16 %v8310
        %v9048 = vunpack.c.h.b16 %v8310
        %v9049 = vunpack.c.l.b16 %v8311
        %v9050 = vunpack.c.h.b16 %v8311
        %v9051 = vunpack.c.l.b16 %v8312
        %v9052 = vunpack.c.h.b16 %v8312
        %v9053 = vunpack.c.l.b16 %v8313
        %v9054 = vunpack.c.h.b16 %v8313
        %v9055 = vunpack.c.l.b16 %v8314
        %v9056 = vunpack.c.h.b16 %v8314
        %v9057 = vunpack.c.l.b16 %v8315
        %v9058 = vunpack.c.h.b16 %v8315
        %v9059 = vunpack.c.l.b16 %v8316
        %v9060 = vunpack.c.h.b16 %v8316
        %v9061 = vunpack.c.l.b16 %v8317
        %v9062 = vunpack.c.h.b16 %v8317
        %v9063 = vunpack.c.l.b16 %v8318
        %v9064 = vunpack.c.h.b16 %v8318
        %v9065 = vunpack.c.l.b16 %v8319
        %v9066 = vunpack.c.h.b16 %v8319
        %v9067 = vunpack.c.l.b16 %v8320
        %v9068 = vunpack.c.h.b16 %v8320
        %v9069 = vunpack.c.l.b16 %v8321
        %v9070 = vunpack.c.h.b16 %v8321
        %v9071 = vunpack.c.l.b16 %v8322
        %v9072 = vunpack.c.h.b16 %v8322
        %v9073 = vunpack.c.l.b16 %v8323
        %v9074 = vunpack.c.h.b16 %v8323
        %v9075 = vunpack.c.l.b16 %v8324
        %v9076 = vunpack.c.h.b16 %v8324
        %v9077 = vunpack.c.l.b16 %v8325
        %v9078 = vunpack.c.h.b16 %v8325
        %v9079 = vunpack.c.l.b16 %v8326
        %v9080 = vunpack.c.h.b16 %v8326
        %v9081 = vunpack.c.l.b16 %v8327
        %v9082 = vunpack.c.h.b16 %v8327
        %v9083 = vunpack.c.l.b16 %v8328
        %v9084 = vunpack.c.h.b16 %v8328
        %v9085 = vunpack.c.l.b16 %v8329
        %v9086 = vunpack.c.h.b16 %v8329
        %v9087 = vunpack.c.l.b16 %v8330
        %v9088 = vunpack.c.h.b16 %v8330
        %v9089 = vunpack.c.l.b16 %v8331
        %v9090 = vunpack.c.h.b16 %v8331
        %v9091 = vunpack.c.l.b16 %v8332
        %v9092 = vunpack.c.h.b16 %v8332
        %v9093 = vunpack.c.l.b16 %v8333
        %v9094 = vunpack.c.h.b16 %v8333
        %v9095 = vunpack.c.l.b16 %v8334
        %v9096 = vunpack.c.h.b16 %v8334
        %v9097 = vunpack.c.l.b16 %v8335
        %v9098 = vunpack.c.h.b16 %v8335
        %v9099 = vunpack.c.l.b16 %v8336
        %v9100 = vunpack.c.h.b16 %v8336
        %v9101 = vunpack.c.l.b16 %v8337
        %v9102 = vunpack.c.h.b16 %v8337
        %v9103 = vunpack.c.l.b16 %v8338
        %v9104 = vunpack.c.h.b16 %v8338
        %v9105 = vunpack.c.l.b16 %v8339
        %v9106 = vunpack.c.h.b16 %v8339
        %v9107 = vunpack.c.l.b16 %v8340
        %v9108 = vunpack.c.h.b16 %v8340
        %v9109 = vpack.c.b16 %v8629, %v8597
        %v9110 = vpack.c.b16 %v8630, %v8598
        %v9111 = vpack.c.b16 %v8631, %v8599
        %v9112 = vpack.c.b16 %v8632, %v8600
        %v9113 = vpack.c.b16 %v8633, %v8601
        %v9114 = vpack.c.b16 %v8634, %v8602
        %v9115 = vpack.c.b16 %v8635, %v8603
        %v9116 = vpack.c.b16 %v8636, %v8604
        %v9117 = vpack.c.b16 %v8637, %v8605
        %v9118 = vpack.c.b16 %v8638, %v8606
        %v9119 = vpack.c.b16 %v8639, %v8607
        %v9120 = vpack.c.b16 %v8640, %v8608
        %v9121 = vpack.c.b16 %v8641, %v8609
        %v9122 = vpack.c.b16 %v8642, %v8610
        %v9123 = vpack.c.b16 %v8643, %v8611
        %v9124 = vpack.c.b16 %v8644, %v8612
        %v9125 = vpack.c.b16 %v8645, %v8613
        %v9126 = vpack.c.b16 %v8646, %v8614
        %v9127 = vpack.c.b16 %v8647, %v8615
        %v9128 = vpack.c.b16 %v8648, %v8616
        %v9129 = vpack.c.b16 %v8649, %v8617
        %v9130 = vpack.c.b16 %v8650, %v8618
        %v9131 = vpack.c.b16 %v8651, %v8619
        %v9132 = vpack.c.b16 %v8652, %v8620
        %v9133 = vpack.c.b16 %v8653, %v8621
        %v9134 = vpack.c.b16 %v8654, %v8622
        %v9135 = vpack.c.b16 %v8655, %v8623
        %v9136 = vpack.c.b16 %v8656, %v8624
        %v9137 = vpack.c.b16 %v8657, %v8625
        %v9138 = vpack.c.b16 %v8658, %v8626
        %v9139 = vpack.c.b16 %v8659, %v8627
        %v9140 = vpack.c.b16 %v8660, %v8628
        %v9141 = vpack.c.b16 %v8693, %v8661
        %v9142 = vpack.c.b16 %v8694, %v8662
        %v9143 = vpack.c.b16 %v8695, %v8663
        %v9144 = vpack.c.b16 %v8696, %v8664
        %v9145 = vpack.c.b16 %v8697, %v8665
        %v9146 = vpack.c.b16 %v8698, %v8666
        %v9147 = vpack.c.b16 %v8699, %v8667
        %v9148 = vpack.c.b16 %v8700, %v8668
        %v9149 = vpack.c.b16 %v8701, %v8669
        %v9150 = vpack.c.b16 %v8702, %v8670
        %v9151 = vpack.c.b16 %v8703, %v8671
        %v9152 = vpack.c.b16 %v8704, %v8672
        %v9153 = vpack.c.b16 %v8705, %v8673
        %v9154 = vpack.c.b16 %v8706, %v8674
        %v9155 = vpack.c.b16 %v8707, %v8675
        %v9156 = vpack.c.b16 %v8708, %v8676
        %v9157 = vpack.c.b16 %v8709, %v8677
        %v9158 = vpack.c.b16 %v8710, %v8678
        %v9159 = vpack.c.b16 %v8711, %v8679
        %v9160 = vpack.c.b16 %v8712, %v8680
        %v9161 = vpack.c.b16 %v8713, %v8681
        %v9162 = vpack.c.b16 %v8714, %v8682
        %v9163 = vpack.c.b16 %v8715, %v8683
        %v9164 = vpack.c.b16 %v8716, %v8684
        %v9165 = vpack.c.b16 %v8717, %v8685
        %v9166 = vpack.c.b16 %v8718, %v8686
        %v9167 = vpack.c.b16 %v8719, %v8687
        %v9168 = vpack.c.b16 %v8720, %v8688
        %v9169 = vpack.c.b16 %v8721, %v8689
        %v9170 = vpack.c.b16 %v8722, %v8690
        %v9171 = vpack.c.b16 %v8723, %v8691
        %v9172 = vpack.c.b16 %v8724, %v8692
        %v9173 = vpack.c.b16 %v8757, %v8725
        %v9174 = vpack.c.b16 %v8758, %v8726
        %v9175 = vpack.c.b16 %v8759, %v8727
        %v9176 = vpack.c.b16 %v8760, %v8728
        %v9177 = vpack.c.b16 %v8761, %v8729
        %v9178 = vpack.c.b16 %v8762, %v8730
        %v9179 = vpack.c.b16 %v8763, %v8731
        %v9180 = vpack.c.b16 %v8764, %v8732
        %v9181 = vpack.c.b16 %v8765, %v8733
        %v9182 = vpack.c.b16 %v8766, %v8734
        %v9183 = vpack.c.b16 %v8767, %v8735
        %v9184 = vpack.c.b16 %v8768, %v8736
        %v9185 = vpack.c.b16 %v8769, %v8737
        %v9186 = vpack.c.b16 %v8770, %v8738
        %v9187 = vpack.c.b16 %v8771, %v8739
        %v9188 = vpack.c.b16 %v8772, %v8740
        %v9189 = vpack.c.b16 %v8773, %v8741
        %v9190 = vpack.c.b16 %v8774, %v8742
        %v9191 = vpack.c.b16 %v8775, %v8743
        %v9192 = vpack.c.b16 %v8776, %v8744
        %v9193 = vpack.c.b16 %v8777, %v8745
        %v9194 = vpack.c.b16 %v8778, %v8746
        %v9195 = vpack.c.b16 %v8779, %v8747
        %v9196 = vpack.c.b16 %v8780, %v8748
        %v9197 = vpack.c.b16 %v8781, %v8749
        %v9198 = vpack.c.b16 %v8782, %v8750
        %v9199 = vpack.c.b16 %v8783, %v8751
        %v9200 = vpack.c.b16 %v8784, %v8752
        %v9201 = vpack.c.b16 %v8785, %v8753
        %v9202 = vpack.c.b16 %v8786, %v8754
        %v9203 = vpack.c.b16 %v8787, %v8755
        %v9204 = vpack.c.b16 %v8788, %v8756
        %v9205 = vpack.c.b16 %v8821, %v8789
        %v9206 = vpack.c.b16 %v8822, %v8790
        %v9207 = vpack.c.b16 %v8823, %v8791
        %v9208 = vpack.c.b16 %v8824, %v8792
        %v9209 = vpack.c.b16 %v8825, %v8793
        %v9210 = vpack.c.b16 %v8826, %v8794
        %v9211 = vpack.c.b16 %v8827, %v8795
        %v9212 = vpack.c.b16 %v8828, %v8796
        %v9213 = vpack.c.b16 %v8829, %v8797
        %v9214 = vpack.c.b16 %v8830, %v8798
        %v9215 = vpack.c.b16 %v8831, %v8799
        %v9216 = vpack.c.b16 %v8832, %v8800
        %v9217 = vpack.c.b16 %v8833, %v8801
        %v9218 = vpack.c.b16 %v8834, %v8802
        %v9219 = vpack.c.b16 %v8835, %v8803
        %v9220 = vpack.c.b16 %v8836, %v8804
        %v9221 = vpack.c.b16 %v8837, %v8805
        %v9222 = vpack.c.b16 %v8838, %v8806
        %v9223 = vpack.c.b16 %v8839, %v8807
        %v9224 = vpack.c.b16 %v8840, %v8808
        %v9225 = vpack.c.b16 %v8841, %v8809
        %v9226 = vpack.c.b16 %v8842, %v8810
        %v9227 = vpack.c.b16 %v8843, %v8811
        %v9228 = vpack.c.b16 %v8844, %v8812
        %v9229 = vpack.c.b16 %v8845, %v8813
        %v9230 = vpack.c.b16 %v8846, %v8814
        %v9231 = vpack.c.b16 %v8847, %v8815
        %v9232 = vpack.c.b16 %v8848, %v8816
        %v9233 = vpack.c.b16 %v8849, %v8817
        %v9234 = vpack.c.b16 %v8850, %v8818
        %v9235 = vpack.c.b16 %v8851, %v8819
        %v9236 = vpack.c.b16 %v8852, %v8820
        %v9237 = vpack.c.b16 %v8885, %v8853
        %v9238 = vpack.c.b16 %v8886, %v8854
        %v9239 = vpack.c.b16 %v8887, %v8855
        %v9240 = vpack.c.b16 %v8888, %v8856
        %v9241 = vpack.c.b16 %v8889, %v8857
        %v9242 = vpack.c.b16 %v8890, %v8858
        %v9243 = vpack.c.b16 %v8891, %v8859
        %v9244 = vpack.c.b16 %v8892, %v8860
        %v9245 = vpack.c.b16 %v8893, %v8861
        %v9246 = vpack.c.b16 %v8894, %v8862
        %v9247 = vpack.c.b16 %v8895, %v8863
        %v9248 = vpack.c.b16 %v8896, %v8864
        %v9249 = vpack.c.b16 %v8897, %v8865
        %v9250 = vpack.c.b16 %v8898, %v8866
        %v9251 = vpack.c.b16 %v8899, %v8867
        %v9252 = vpack.c.b16 %v8900, %v8868
        %v9253 = vpack.c.b16 %v8901, %v8869
        %v9254 = vpack.c.b16 %v8902, %v8870
        %v9255 = vpack.c.b16 %v8903, %v8871
        %v9256 = vpack.c.b16 %v8904, %v8872
        %v9257 = vpack.c.b16 %v8905, %v8873
        %v9258 = vpack.c.b16 %v8906, %v8874
        %v9259 = vpack.c.b16 %v8907, %v8875
        %v9260 = vpack.c.b16 %v8908, %v8876
        %v9261 = vpack.c.b16 %v8909, %v8877
        %v9262 = vpack.c.b16 %v8910, %v8878
        %v9263 = vpack.c.b16 %v8911, %v8879
        %v9264 = vpack.c.b16 %v8912, %v8880
        %v9265 = vpack.c.b16 %v8913, %v8881
        %v9266 = vpack.c.b16 %v8914, %v8882
        %v9267 = vpack.c.b16 %v8915, %v8883
        %v9268 = vpack.c.b16 %v8916, %v8884
        %v9269 = vpack.c.b16 %v8949, %v8917
        %v9270 = vpack.c.b16 %v8950, %v8918
        %v9271 = vpack.c.b16 %v8951, %v8919
        %v9272 = vpack.c.b16 %v8952, %v8920
        %v9273 = vpack.c.b16 %v8953, %v8921
        %v9274 = vpack.c.b16 %v8954, %v8922
        %v9275 = vpack.c.b16 %v8955, %v8923
        %v9276 = vpack.c.b16 %v8956, %v8924
        %v9277 = vpack.c.b16 %v8957, %v8925
        %v9278 = vpack.c.b16 %v8958, %v8926
        %v9279 = vpack.c.b16 %v8959, %v8927
        %v9280 = vpack.c.b16 %v8960, %v8928
        %v9281 = vpack.c.b16 %v8961, %v8929
        %v9282 = vpack.c.b16 %v8962, %v8930
        %v9283 = vpack.c.b16 %v8963, %v8931
        %v9284 = vpack.c.b16 %v8964, %v8932
        %v9285 = vpack.c.b16 %v8965, %v8933
        %v9286 = vpack.c.b16 %v8966, %v8934
        %v9287 = vpack.c.b16 %v8967, %v8935
        %v9288 = vpack.c.b16 %v8968, %v8936
        %v9289 = vpack.c.b16 %v8969, %v8937
        %v9290 = vpack.c.b16 %v8970, %v8938
        %v9291 = vpack.c.b16 %v8971, %v8939
        %v9292 = vpack.c.b16 %v8972, %v8940
        %v9293 = vpack.c.b16 %v8973, %v8941
        %v9294 = vpack.c.b16 %v8974, %v8942
        %v9295 = vpack.c.b16 %v8975, %v8943
        %v9296 = vpack.c.b16 %v8976, %v8944
        %v9297 = vpack.c.b16 %v8977, %v8945
        %v9298 = vpack.c.b16 %v8978, %v8946
        %v9299 = vpack.c.b16 %v8979, %v8947
        %v9300 = vpack.c.b16 %v8980, %v8948
        %v9301 = vpack.c.b16 %v9013, %v8981
        %v9302 = vpack.c.b16 %v9014, %v8982
        %v9303 = vpack.c.b16 %v9015, %v8983
        %v9304 = vpack.c.b16 %v9016, %v8984
        %v9305 = vpack.c.b16 %v9017, %v8985
        %v9306 = vpack.c.b16 %v9018, %v8986
        %v9307 = vpack.c.b16 %v9019, %v8987
        %v9308 = vpack.c.b16 %v9020, %v8988
        %v9309 = vpack.c.b16 %v9021, %v8989
        %v9310 = vpack.c.b16 %v9022, %v8990
        %v9311 = vpack.c.b16 %v9023, %v8991
        %v9312 = vpack.c.b16 %v9024, %v8992
        %v9313 = vpack.c.b16 %v9025, %v8993
        %v9314 = vpack.c.b16 %v9026, %v8994
        %v9315 = vpack.c.b16 %v9027, %v8995
        %v9316 = vpack.c.b16 %v9028, %v8996
        %v9317 = vpack.c.b16 %v9029, %v8997
        %v9318 = vpack.c.b16 %v9030, %v8998
        %v9319 = vpack.c.b16 %v9031, %v8999
        %v9320 = vpack.c.b16 %v9032, %v9000
        %v9321 = vpack.c.b16 %v9033, %v9001
        %v9322 = vpack.c.b16 %v9034, %v9002
        %v9323 = vpack.c.b16 %v9035, %v9003
        %v9324 = vpack.c.b16 %v9036, %v9004
        %v9325 = vpack.c.b16 %v9037, %v9005
        %v9326 = vpack.c.b16 %v9038, %v9006
        %v9327 = vpack.c.b16 %v9039, %v9007
        %v9328 = vpack.c.b16 %v9040, %v9008
        %v9329 = vpack.c.b16 %v9041, %v9009
        %v9330 = vpack.c.b16 %v9042, %v9010
        %v9331 = vpack.c.b16 %v9043, %v9011
        %v9332 = vpack.c.b16 %v9044, %v9012
        %v9333 = vpack.c.b16 %v9077, %v9045
        %v9334 = vpack.c.b16 %v9078, %v9046
        %v9335 = vpack.c.b16 %v9079, %v9047
        %v9336 = vpack.c.b16 %v9080, %v9048
        %v9337 = vpack.c.b16 %v9081, %v9049
        %v9338 = vpack.c.b16 %v9082, %v9050
        %v9339 = vpack.c.b16 %v9083, %v9051
        %v9340 = vpack.c.b16 %v9084, %v9052
        %v9341 = vpack.c.b16 %v9085, %v9053
        %v9342 = vpack.c.b16 %v9086, %v9054
        %v9343 = vpack.c.b16 %v9087, %v9055
        %v9344 = vpack.c.b16 %v9088, %v9056
        %v9345 = vpack.c.b16 %v9089, %v9057
        %v9346 = vpack.c.b16 %v9090, %v9058
        %v9347 = vpack.c.b16 %v9091, %v9059
        %v9348 = vpack.c.b16 %v9092, %v9060
        %v9349 = vpack.c.b16 %v9093, %v9061
        %v9350 = vpack.c.b16 %v9094, %v9062
        %v9351 = vpack.c.b16 %v9095, %v9063
        %v9352 = vpack.c.b16 %v9096, %v9064
        %v9353 = vpack.c.b16 %v9097, %v9065
        %v9354 = vpack.c.b16 %v9098, %v9066
        %v9355 = vpack.c.b16 %v9099, %v9067
        %v9356 = vpack.c.b16 %v9100, %v9068
        %v9357 = vpack.c.b16 %v9101, %v9069
        %v9358 = vpack.c.b16 %v9102, %v9070
        %v9359 = vpack.c.b16 %v9103, %v9071
        %v9360 = vpack.c.b16 %v9104, %v9072
        %v9361 = vpack.c.b16 %v9105, %v9073
        %v9362 = vpack.c.b16 %v9106, %v9074
        %v9363 = vpack.c.b16 %v9107, %v9075
        %v9364 = vpack.c.b16 %v9108, %v9076
        %9621 = vmatprep.subr.bf16.mxu0 %v9110
        %9622 = vmatpush1.bf16.msra.mxu0 %v9109
        %9623 = vmatprep.subr.bf16.mxu0 %v9142
        %9624 = vmatpush1.bf16.msra.mxu0 %v9141
        %9625 = vmatprep.subr.bf16.mxu0 %v9174
        %9626 = vmatpush1.bf16.msra.mxu0 %v9173
        %9627 = vmatprep.subr.bf16.mxu0 %v9206
        %9628 = vmatpush1.bf16.msra.mxu0 %v9205
        %9629 = vmatprep.subr.bf16.mxu0 %v9238
        %9630 = vmatpush1.bf16.msra.mxu0 %v9237
        %9631 = vmatprep.subr.bf16.mxu0 %v9270
        %9632 = vmatpush1.bf16.msra.mxu0 %v9269
        %9633 = vmatprep.subr.bf16.mxu0 %v9302
        %9634 = vmatpush1.bf16.msra.mxu0 %v9301
        %9635 = vmatprep.subr.bf16.mxu0 %v9334
        %9636 = vmatpush1.bf16.msra.mxu0 %v9333
        %9637 = vmatprep.subr.bf16.mxu0 0
        %9638 = vmatpush1.bf16.msra.mxu0 0
        %9639 = vmatprep.subr.bf16.mxu0 0
        %9640 = vmatpush1.bf16.msra.mxu0 0
        %9641 = vmatprep.subr.bf16.mxu0 0
        %9642 = vmatpush1.bf16.msra.mxu0 0
        %9643 = vmatprep.subr.bf16.mxu0 0
        %9644 = vmatpush1.bf16.msra.mxu0 0
        %9645 = vmatprep.subr.bf16.mxu0 0
        %9646 = vmatpush1.bf16.msra.mxu0 0
        %9647 = vmatprep.subr.bf16.mxu0 0
        %9648 = vmatpush1.bf16.msra.mxu0 0
        %9649 = vmatprep.subr.bf16.mxu0 0
        %9650 = vmatpush1.bf16.msra.mxu0 0
        %9651 = vmatprep.subr.bf16.mxu0 0
        %9652 = vmatpush1.bf16.msra.mxu0 0
        %9653 = vmatprep.mubr.bf16.mxu0 0
        %9654 = vmatmul.mubr.bf16.gmra.mrb[0].mxu0 %v8083
        %v9655 = vpop.f32.mrb[0].mxu0
        %v9656 = vadd.f32 0.0, %v9655
        %v9657 = vpop.f32.mrb[0].mxu0
        %v9658 = vadd.f32 0.0, %v9657
        %v9659 = vpop.f32.mrb[0].mxu0
        %v9660 = vpop.f32.mrb[0].mxu0
        %9661 = vdwg.mxu0
        %9662 = vmatprep.subr.bf16.mxu0 %v9112
        %9663 = vmatpush1.bf16.msra.mxu0 %v9111
        %9664 = vmatprep.subr.bf16.mxu0 %v9144
        %9665 = vmatpush1.bf16.msra.mxu0 %v9143
        %9666 = vmatprep.subr.bf16.mxu0 %v9176
        %9667 = vmatpush1.bf16.msra.mxu0 %v9175
        %9668 = vmatprep.subr.bf16.mxu0 %v9208
        %9669 = vmatpush1.bf16.msra.mxu0 %v9207
        %9670 = vmatprep.subr.bf16.mxu0 %v9240
        %9671 = vmatpush1.bf16.msra.mxu0 %v9239
        %9672 = vmatprep.subr.bf16.mxu0 %v9272
        %9673 = vmatpush1.bf16.msra.mxu0 %v9271
        %9674 = vmatprep.subr.bf16.mxu0 %v9304
        %9675 = vmatpush1.bf16.msra.mxu0 %v9303
        %9676 = vmatprep.subr.bf16.mxu0 %v9336
        %9677 = vmatpush1.bf16.msra.mxu0 %v9335
        %9678 = vmatprep.subr.bf16.mxu0 0
        %9679 = vmatpush1.bf16.msra.mxu0 0
        %9680 = vmatprep.subr.bf16.mxu0 0
        %9681 = vmatpush1.bf16.msra.mxu0 0
        %9682 = vmatprep.subr.bf16.mxu0 0
        %9683 = vmatpush1.bf16.msra.mxu0 0
        %9684 = vmatprep.subr.bf16.mxu0 0
        %9685 = vmatpush1.bf16.msra.mxu0 0
        %9686 = vmatprep.subr.bf16.mxu0 0
        %9687 = vmatpush1.bf16.msra.mxu0 0
        %9688 = vmatprep.subr.bf16.mxu0 0
        %9689 = vmatpush1.bf16.msra.mxu0 0
        %9690 = vmatprep.subr.bf16.mxu0 0
        %9691 = vmatpush1.bf16.msra.mxu0 0
        %9692 = vmatprep.subr.bf16.mxu0 0
        %9693 = vmatpush1.bf16.msra.mxu0 0
        %9694 = vmatprep.mubr.bf16.mxu0 0
        %9695 = vmatmul.mubr.bf16.gmra.mrb[0].mxu0 %v8083
        %v9696 = vpop.f32.mrb[0].mxu0
        %v9697 = vadd.f32 0.0, %v9696
        %v9698 = vpop.f32.mrb[0].mxu0
        %v9699 = vadd.f32 0.0, %v9698
        %v9700 = vpop.f32.mrb[0].mxu0
        %v9701 = vpop.f32.mrb[0].mxu0
        %9702 = vdwg.mxu0
        %9703 = vmatprep.subr.bf16.mxu0 %v9114
        %9704 = vmatpush1.bf16.msra.mxu0 %v9113
        %9705 = vmatprep.subr.bf16.mxu0 %v9146
        %9706 = vmatpush1.bf16.msra.mxu0 %v9145
        %9707 = vmatprep.subr.bf16.mxu0 %v9178
        %9708 = vmatpush1.bf16.msra.mxu0 %v9177
        %9709 = vmatprep.subr.bf16.mxu0 %v9210
        %9710 = vmatpush1.bf16.msra.mxu0 %v9209
        %9711 = vmatprep.subr.bf16.mxu0 %v9242
        %9712 = vmatpush1.bf16.msra.mxu0 %v9241
        %9713 = vmatprep.subr.bf16.mxu0 %v9274
        %9714 = vmatpush1.bf16.msra.mxu0 %v9273
        %9715 = vmatprep.subr.bf16.mxu0 %v9306
        %9716 = vmatpush1.bf16.msra.mxu0 %v9305
        %9717 = vmatprep.subr.bf16.mxu0 %v9338
        %9718 = vmatpush1.bf16.msra.mxu0 %v9337
        %9719 = vmatprep.subr.bf16.mxu0 0
        %9720 = vmatpush1.bf16.msra.mxu0 0
        %9721 = vmatprep.subr.bf16.mxu0 0
        %9722 = vmatpush1.bf16.msra.mxu0 0
        %9723 = vmatprep.subr.bf16.mxu0 0
        %9724 = vmatpush1.bf16.msra.mxu0 0
        %9725 = vmatprep.subr.bf16.mxu0 0
        %9726 = vmatpush1.bf16.msra.mxu0 0
        %9727 = vmatprep.subr.bf16.mxu0 0
        %9728 = vmatpush1.bf16.msra.mxu0 0
        %9729 = vmatprep.subr.bf16.mxu0 0
        %9730 = vmatpush1.bf16.msra.mxu0 0
        %9731 = vmatprep.subr.bf16.mxu0 0
        %9732 = vmatpush1.bf16.msra.mxu0 0
        %9733 = vmatprep.subr.bf16.mxu0 0
        %9734 = vmatpush1.bf16.msra.mxu0 0
        %9735 = vmatprep.mubr.bf16.mxu0 0
        %9736 = vmatmul.mubr.bf16.gmra.mrb[0].mxu0 %v8083
        %v9737 = vpop.f32.mrb[0].mxu0
        %v9738 = vadd.f32 0.0, %v9737
        %v9739 = vpop.f32.mrb[0].mxu0
        %v9740 = vadd.f32 0.0, %v9739
        %v9741 = vpop.f32.mrb[0].mxu0
        %v9742 = vpop.f32.mrb[0].mxu0
        %9743 = vdwg.mxu0
        %9744 = vmatprep.subr.bf16.mxu0 %v9116
        %9745 = vmatpush1.bf16.msra.mxu0 %v9115
        %9746 = vmatprep.subr.bf16.mxu0 %v9148
        %9747 = vmatpush1.bf16.msra.mxu0 %v9147
        %9748 = vmatprep.subr.bf16.mxu0 %v9180
        %9749 = vmatpush1.bf16.msra.mxu0 %v9179
        %9750 = vmatprep.subr.bf16.mxu0 %v9212
        %9751 = vmatpush1.bf16.msra.mxu0 %v9211
        %9752 = vmatprep.subr.bf16.mxu0 %v9244
        %9753 = vmatpush1.bf16.msra.mxu0 %v9243
        %9754 = vmatprep.subr.bf16.mxu0 %v9276
        %9755 = vmatpush1.bf16.msra.mxu0 %v9275
        %9756 = vmatprep.subr.bf16.mxu0 %v9308
        %9757 = vmatpush1.bf16.msra.mxu0 %v9307
        %9758 = vmatprep.subr.bf16.mxu0 %v9340
        %9759 = vmatpush1.bf16.msra.mxu0 %v9339
        %9760 = vmatprep.subr.bf16.mxu0 0
        %9761 = vmatpush1.bf16.msra.mxu0 0
        %9762 = vmatprep.subr.bf16.mxu0 0
        %9763 = vmatpush1.bf16.msra.mxu0 0
        %9764 = vmatprep.subr.bf16.mxu0 0
        %9765 = vmatpush1.bf16.msra.mxu0 0
        %9766 = vmatprep.subr.bf16.mxu0 0
        %9767 = vmatpush1.bf16.msra.mxu0 0
        %9768 = vmatprep.subr.bf16.mxu0 0
        %9769 = vmatpush1.bf16.msra.mxu0 0
        %9770 = vmatprep.subr.bf16.mxu0 0
        %9771 = vmatpush1.bf16.msra.mxu0 0
        %9772 = vmatprep.subr.bf16.mxu0 0
        %9773 = vmatpush1.bf16.msra.mxu0 0
        %9774 = vmatprep.subr.bf16.mxu0 0
        %9775 = vmatpush1.bf16.msra.mxu0 0
        %9776 = vmatprep.mubr.bf16.mxu0 0
        %9777 = vmatmul.mubr.bf16.gmra.mrb[0].mxu0 %v8083
        %v9778 = vpop.f32.mrb[0].mxu0
        %v9779 = vadd.f32 0.0, %v9778
        %v9780 = vpop.f32.mrb[0].mxu0
        %v9781 = vadd.f32 0.0, %v9780
        %v9782 = vpop.f32.mrb[0].mxu0
        %v9783 = vpop.f32.mrb[0].mxu0
        %9784 = vdwg.mxu0
        %9785 = vmatprep.subr.bf16.mxu0 %v9118
        %9786 = vmatpush1.bf16.msra.mxu0 %v9117
        %9787 = vmatprep.subr.bf16.mxu0 %v9150
        %9788 = vmatpush1.bf16.msra.mxu0 %v9149
        %9789 = vmatprep.subr.bf16.mxu0 %v9182
        %9790 = vmatpush1.bf16.msra.mxu0 %v9181
        %9791 = vmatprep.subr.bf16.mxu0 %v9214
        %9792 = vmatpush1.bf16.msra.mxu0 %v9213
        %9793 = vmatprep.subr.bf16.mxu0 %v9246
        %9794 = vmatpush1.bf16.msra.mxu0 %v9245
        %9795 = vmatprep.subr.bf16.mxu0 %v9278
        %9796 = vmatpush1.bf16.msra.mxu0 %v9277
        %9797 = vmatprep.subr.bf16.mxu0 %v9310
        %9798 = vmatpush1.bf16.msra.mxu0 %v9309
        %9799 = vmatprep.subr.bf16.mxu0 %v9342
        %9800 = vmatpush1.bf16.msra.mxu0 %v9341
        %9801 = vmatprep.subr.bf16.mxu0 0
        %9802 = vmatpush1.bf16.msra.mxu0 0
        %9803 = vmatprep.subr.bf16.mxu0 0
        %9804 = vmatpush1.bf16.msra.mxu0 0
        %9805 = vmatprep.subr.bf16.mxu0 0
        %9806 = vmatpush1.bf16.msra.mxu0 0
        %9807 = vmatprep.subr.bf16.mxu0 0
        %9808 = vmatpush1.bf16.msra.mxu0 0
        %9809 = vmatprep.subr.bf16.mxu0 0
        %9810 = vmatpush1.bf16.msra.mxu0 0
        %9811 = vmatprep.subr.bf16.mxu0 0
        %9812 = vmatpush1.bf16.msra.mxu0 0
        %9813 = vmatprep.subr.bf16.mxu0 0
        %9814 = vmatpush1.bf16.msra.mxu0 0
        %9815 = vmatprep.subr.bf16.mxu0 0
        %9816 = vmatpush1.bf16.msra.mxu0 0
        %9817 = vmatprep.mubr.bf16.mxu0 0
        %9818 = vmatmul.mubr.bf16.gmra.mrb[0].mxu0 %v8083
        %v9819 = vpop.f32.mrb[0].mxu0
        %v9820 = vadd.f32 0.0, %v9819
        %v9821 = vpop.f32.mrb[0].mxu0
        %v9822 = vadd.f32 0.0, %v9821
        %v9823 = vpop.f32.mrb[0].mxu0
        %v9824 = vpop.f32.mrb[0].mxu0
        %9825 = vdwg.mxu0
        %9826 = vmatprep.subr.bf16.mxu0 %v9120
        %9827 = vmatpush1.bf16.msra.mxu0 %v9119
        %9828 = vmatprep.subr.bf16.mxu0 %v9152
        %9829 = vmatpush1.bf16.msra.mxu0 %v9151
        %9830 = vmatprep.subr.bf16.mxu0 %v9184
        %9831 = vmatpush1.bf16.msra.mxu0 %v9183
        %9832 = vmatprep.subr.bf16.mxu0 %v9216
        %9833 = vmatpush1.bf16.msra.mxu0 %v9215
        %9834 = vmatprep.subr.bf16.mxu0 %v9248
        %9835 = vmatpush1.bf16.msra.mxu0 %v9247
        %9836 = vmatprep.subr.bf16.mxu0 %v9280
        %9837 = vmatpush1.bf16.msra.mxu0 %v9279
        %9838 = vmatprep.subr.bf16.mxu0 %v9312
        %9839 = vmatpush1.bf16.msra.mxu0 %v9311
        %9840 = vmatprep.subr.bf16.mxu0 %v9344
        %9841 = vmatpush1.bf16.msra.mxu0 %v9343
        %9842 = vmatprep.subr.bf16.mxu0 0
        %9843 = vmatpush1.bf16.msra.mxu0 0
        %9844 = vmatprep.subr.bf16.mxu0 0
        %9845 = vmatpush1.bf16.msra.mxu0 0
        %9846 = vmatprep.subr.bf16.mxu0 0
        %9847 = vmatpush1.bf16.msra.mxu0 0
        %9848 = vmatprep.subr.bf16.mxu0 0
        %9849 = vmatpush1.bf16.msra.mxu0 0
        %9850 = vmatprep.subr.bf16.mxu0 0
        %9851 = vmatpush1.bf16.msra.mxu0 0
        %9852 = vmatprep.subr.bf16.mxu0 0
        %9853 = vmatpush1.bf16.msra.mxu0 0
        %9854 = vmatprep.subr.bf16.mxu0 0
        %9855 = vmatpush1.bf16.msra.mxu0 0
        %9856 = vmatprep.subr.bf16.mxu0 0
        %9857 = vmatpush1.bf16.msra.mxu0 0
        %9858 = vmatprep.mubr.bf16.mxu0 0
        %9859 = vmatmul.mubr.bf16.gmra.mrb[0].mxu0 %v8083
        %v9860 = vpop.f32.mrb[0].mxu0
        %v9861 = vadd.f32 0.0, %v9860
        %v9862 = vpop.f32.mrb[0].mxu0
        %v9863 = vadd.f32 0.0, %v9862
        %v9864 = vpop.f32.mrb[0].mxu0
        %v9865 = vpop.f32.mrb[0].mxu0
        %9866 = vdwg.mxu0
        %9867 = vmatprep.subr.bf16.mxu0 %v9122
        %9868 = vmatpush1.bf16.msra.mxu0 %v9121
        %9869 = vmatprep.subr.bf16.mxu0 %v9154
        %9870 = vmatpush1.bf16.msra.mxu0 %v9153
        %9871 = vmatprep.subr.bf16.mxu0 %v9186
        %9872 = vmatpush1.bf16.msra.mxu0 %v9185
        %9873 = vmatprep.subr.bf16.mxu0 %v9218
        %9874 = vmatpush1.bf16.msra.mxu0 %v9217
        %9875 = vmatprep.subr.bf16.mxu0 %v9250
        %9876 = vmatpush1.bf16.msra.mxu0 %v9249
        %9877 = vmatprep.subr.bf16.mxu0 %v9282
        %9878 = vmatpush1.bf16.msra.mxu0 %v9281
        %9879 = vmatprep.subr.bf16.mxu0 %v9314
        %9880 = vmatpush1.bf16.msra.mxu0 %v9313
        %9881 = vmatprep.subr.bf16.mxu0 %v9346
        %9882 = vmatpush1.bf16.msra.mxu0 %v9345
        %9883 = vmatprep.subr.bf16.mxu0 0
        %9884 = vmatpush1.bf16.msra.mxu0 0
        %9885 = vmatprep.subr.bf16.mxu0 0
        %9886 = vmatpush1.bf16.msra.mxu0 0
        %9887 = vmatprep.subr.bf16.mxu0 0
        %9888 = vmatpush1.bf16.msra.mxu0 0
        %9889 = vmatprep.subr.bf16.mxu0 0
        %9890 = vmatpush1.bf16.msra.mxu0 0
        %9891 = vmatprep.subr.bf16.mxu0 0
        %9892 = vmatpush1.bf16.msra.mxu0 0
        %9893 = vmatprep.subr.bf16.mxu0 0
        %9894 = vmatpush1.bf16.msra.mxu0 0
        %9895 = vmatprep.subr.bf16.mxu0 0
        %9896 = vmatpush1.bf16.msra.mxu0 0
        %9897 = vmatprep.subr.bf16.mxu0 0
        %9898 = vmatpush1.bf16.msra.mxu0 0
        %9899 = vmatprep.mubr.bf16.mxu0 0
        %9900 = vmatmul.mubr.bf16.gmra.mrb[0].mxu0 %v8083
        %v9901 = vpop.f32.mrb[0].mxu0
        %v9902 = vadd.f32 0.0, %v9901
        %v9903 = vpop.f32.mrb[0].mxu0
        %v9904 = vadd.f32 0.0, %v9903
        %v9905 = vpop.f32.mrb[0].mxu0
        %v9906 = vpop.f32.mrb[0].mxu0
        %9907 = vdwg.mxu0
        %9908 = vmatprep.subr.bf16.mxu0 %v9124
        %9909 = vmatpush1.bf16.msra.mxu0 %v9123
        %9910 = vmatprep.subr.bf16.mxu0 %v9156
        %9911 = vmatpush1.bf16.msra.mxu0 %v9155
        %9912 = vmatprep.subr.bf16.mxu0 %v9188
        %9913 = vmatpush1.bf16.msra.mxu0 %v9187
        %9914 = vmatprep.subr.bf16.mxu0 %v9220
        %9915 = vmatpush1.bf16.msra.mxu0 %v9219
        %9916 = vmatprep.subr.bf16.mxu0 %v9252
        %9917 = vmatpush1.bf16.msra.mxu0 %v9251
        %9918 = vmatprep.subr.bf16.mxu0 %v9284
        %9919 = vmatpush1.bf16.msra.mxu0 %v9283
        %9920 = vmatprep.subr.bf16.mxu0 %v9316
        %9921 = vmatpush1.bf16.msra.mxu0 %v9315
        %9922 = vmatprep.subr.bf16.mxu0 %v9348
        %9923 = vmatpush1.bf16.msra.mxu0 %v9347
        %9924 = vmatprep.subr.bf16.mxu0 0
        %9925 = vmatpush1.bf16.msra.mxu0 0
        %9926 = vmatprep.subr.bf16.mxu0 0
        %9927 = vmatpush1.bf16.msra.mxu0 0
        %9928 = vmatprep.subr.bf16.mxu0 0
        %9929 = vmatpush1.bf16.msra.mxu0 0
        %9930 = vmatprep.subr.bf16.mxu0 0
        %9931 = vmatpush1.bf16.msra.mxu0 0
        %9932 = vmatprep.subr.bf16.mxu0 0
        %9933 = vmatpush1.bf16.msra.mxu0 0
        %9934 = vmatprep.subr.bf16.mxu0 0
        %9935 = vmatpush1.bf16.msra.mxu0 0
        %9936 = vmatprep.subr.bf16.mxu0 0
        %9937 = vmatpush1.bf16.msra.mxu0 0
        %9938 = vmatprep.subr.bf16.mxu0 0
        %9939 = vmatpush1.bf16.msra.mxu0 0
        %9940 = vmatprep.mubr.bf16.mxu0 0
        %9941 = vmatmul.mubr.bf16.gmra.mrb[0].mxu0 %v8083
        %v9942 = vpop.f32.mrb[0].mxu0
        %v9943 = vadd.f32 0.0, %v9942
        %v9944 = vpop.f32.mrb[0].mxu0
        %v9945 = vadd.f32 0.0, %v9944
        %v9946 = vpop.f32.mrb[0].mxu0
        %v9947 = vpop.f32.mrb[0].mxu0
        %9948 = vdwg.mxu0
        %9949 = vmatprep.subr.bf16.mxu0 %v9126
        %9950 = vmatpush1.bf16.msra.mxu0 %v9125
        %9951 = vmatprep.subr.bf16.mxu0 %v9158
        %9952 = vmatpush1.bf16.msra.mxu0 %v9157
        %9953 = vmatprep.subr.bf16.mxu0 %v9190
        %9954 = vmatpush1.bf16.msra.mxu0 %v9189
        %9955 = vmatprep.subr.bf16.mxu0 %v9222
        %9956 = vmatpush1.bf16.msra.mxu0 %v9221
        %9957 = vmatprep.subr.bf16.mxu0 %v9254
        %9958 = vmatpush1.bf16.msra.mxu0 %v9253
        %9959 = vmatprep.subr.bf16.mxu0 %v9286
        %9960 = vmatpush1.bf16.msra.mxu0 %v9285
        %9961 = vmatprep.subr.bf16.mxu0 %v9318
        %9962 = vmatpush1.bf16.msra.mxu0 %v9317
        %9963 = vmatprep.subr.bf16.mxu0 %v9350
        %9964 = vmatpush1.bf16.msra.mxu0 %v9349
        %9965 = vmatprep.subr.bf16.mxu0 0
        %9966 = vmatpush1.bf16.msra.mxu0 0
        %9967 = vmatprep.subr.bf16.mxu0 0
        %9968 = vmatpush1.bf16.msra.mxu0 0
        %9969 = vmatprep.subr.bf16.mxu0 0
        %9970 = vmatpush1.bf16.msra.mxu0 0
        %9971 = vmatprep.subr.bf16.mxu0 0
        %9972 = vmatpush1.bf16.msra.mxu0 0
        %9973 = vmatprep.subr.bf16.mxu0 0
        %9974 = vmatpush1.bf16.msra.mxu0 0
        %9975 = vmatprep.subr.bf16.mxu0 0
        %9976 = vmatpush1.bf16.msra.mxu0 0
        %9977 = vmatprep.subr.bf16.mxu0 0
        %9978 = vmatpush1.bf16.msra.mxu0 0
        %9979 = vmatprep.subr.bf16.mxu0 0
        %9980 = vmatpush1.bf16.msra.mxu0 0
        %9981 = vmatprep.mubr.bf16.mxu0 0
        %9982 = vmatmul.mubr.bf16.gmra.mrb[0].mxu0 %v8083
        %v9983 = vpop.f32.mrb[0].mxu0
        %v9984 = vadd.f32 0.0, %v9983
        %v9985 = vpop.f32.mrb[0].mxu0
        %v9986 = vadd.f32 0.0, %v9985
        %v9987 = vpop.f32.mrb[0].mxu0
        %v9988 = vpop.f32.mrb[0].mxu0
        %9989 = vdwg.mxu0
        %9990 = vmatprep.subr.bf16.mxu0 %v9128
        %9991 = vmatpush1.bf16.msra.mxu0 %v9127
        %9992 = vmatprep.subr.bf16.mxu0 %v9160
        %9993 = vmatpush1.bf16.msra.mxu0 %v9159
        %9994 = vmatprep.subr.bf16.mxu0 %v9192
        %9995 = vmatpush1.bf16.msra.mxu0 %v9191
        %9996 = vmatprep.subr.bf16.mxu0 %v9224
        %9997 = vmatpush1.bf16.msra.mxu0 %v9223
        %9998 = vmatprep.subr.bf16.mxu0 %v9256
        %9999 = vmatpush1.bf16.msra.mxu0 %v9255
        %10000 = vmatprep.subr.bf16.mxu0 %v9288
        %10001 = vmatpush1.bf16.msra.mxu0 %v9287
        %10002 = vmatprep.subr.bf16.mxu0 %v9320
        %10003 = vmatpush1.bf16.msra.mxu0 %v9319
        %10004 = vmatprep.subr.bf16.mxu0 %v9352
        %10005 = vmatpush1.bf16.msra.mxu0 %v9351
        %10006 = vmatprep.subr.bf16.mxu0 0
        %10007 = vmatpush1.bf16.msra.mxu0 0
        %10008 = vmatprep.subr.bf16.mxu0 0
        %10009 = vmatpush1.bf16.msra.mxu0 0
        %10010 = vmatprep.subr.bf16.mxu0 0
        %10011 = vmatpush1.bf16.msra.mxu0 0
        %10012 = vmatprep.subr.bf16.mxu0 0
        %10013 = vmatpush1.bf16.msra.mxu0 0
        %10014 = vmatprep.subr.bf16.mxu0 0
        %10015 = vmatpush1.bf16.msra.mxu0 0
        %10016 = vmatprep.subr.bf16.mxu0 0
        %10017 = vmatpush1.bf16.msra.mxu0 0
        %10018 = vmatprep.subr.bf16.mxu0 0
        %10019 = vmatpush1.bf16.msra.mxu0 0
        %10020 = vmatprep.subr.bf16.mxu0 0
        %10021 = vmatpush1.bf16.msra.mxu0 0
        %10022 = vmatprep.mubr.bf16.mxu0 0
        %10023 = vmatmul.mubr.bf16.gmra.mrb[0].mxu0 %v8083
        %v10024 = vpop.f32.mrb[0].mxu0
        %v10025 = vadd.f32 0.0, %v10024
        %v10026 = vpop.f32.mrb[0].mxu0
        %v10027 = vadd.f32 0.0, %v10026
        %v10028 = vpop.f32.mrb[0].mxu0
        %v10029 = vpop.f32.mrb[0].mxu0
        %10030 = vdwg.mxu0
        %10031 = vmatprep.subr.bf16.mxu0 %v9130
        %10032 = vmatpush1.bf16.msra.mxu0 %v9129
        %10033 = vmatprep.subr.bf16.mxu0 %v9162
        %10034 = vmatpush1.bf16.msra.mxu0 %v9161
        %10035 = vmatprep.subr.bf16.mxu0 %v9194
        %10036 = vmatpush1.bf16.msra.mxu0 %v9193
        %10037 = vmatprep.subr.bf16.mxu0 %v9226
        %10038 = vmatpush1.bf16.msra.mxu0 %v9225
        %10039 = vmatprep.subr.bf16.mxu0 %v9258
        %10040 = vmatpush1.bf16.msra.mxu0 %v9257
        %10041 = vmatprep.subr.bf16.mxu0 %v9290
        %10042 = vmatpush1.bf16.msra.mxu0 %v9289
        %10043 = vmatprep.subr.bf16.mxu0 %v9322
        %10044 = vmatpush1.bf16.msra.mxu0 %v9321
        %10045 = vmatprep.subr.bf16.mxu0 %v9354
        %10046 = vmatpush1.bf16.msra.mxu0 %v9353
        %10047 = vmatprep.subr.bf16.mxu0 0
        %10048 = vmatpush1.bf16.msra.mxu0 0
        %10049 = vmatprep.subr.bf16.mxu0 0
        %10050 = vmatpush1.bf16.msra.mxu0 0
        %10051 = vmatprep.subr.bf16.mxu0 0
        %10052 = vmatpush1.bf16.msra.mxu0 0
        %10053 = vmatprep.subr.bf16.mxu0 0
        %10054 = vmatpush1.bf16.msra.mxu0 0
        %10055 = vmatprep.subr.bf16.mxu0 0
        %10056 = vmatpush1.bf16.msra.mxu0 0
        %10057 = vmatprep.subr.bf16.mxu0 0
        %10058 = vmatpush1.bf16.msra.mxu0 0
        %10059 = vmatprep.subr.bf16.mxu0 0
        %10060 = vmatpush1.bf16.msra.mxu0 0
        %10061 = vmatprep.subr.bf16.mxu0 0
        %10062 = vmatpush1.bf16.msra.mxu0 0
        %10063 = vmatprep.mubr.bf16.mxu0 0
        %10064 = vmatmul.mubr.bf16.gmra.mrb[0].mxu0 %v8083
        %v10065 = vpop.f32.mrb[0].mxu0
        %v10066 = vadd.f32 0.0, %v10065
        %v10067 = vpop.f32.mrb[0].mxu0
        %v10068 = vadd.f32 0.0, %v10067
        %v10069 = vpop.f32.mrb[0].mxu0
        %v10070 = vpop.f32.mrb[0].mxu0
        %10071 = vdwg.mxu0
        %10072 = vmatprep.subr.bf16.mxu0 %v9132
        %10073 = vmatpush1.bf16.msra.mxu0 %v9131
        %10074 = vmatprep.subr.bf16.mxu0 %v9164
        %10075 = vmatpush1.bf16.msra.mxu0 %v9163
        %10076 = vmatprep.subr.bf16.mxu0 %v9196
        %10077 = vmatpush1.bf16.msra.mxu0 %v9195
        %10078 = vmatprep.subr.bf16.mxu0 %v9228
        %10079 = vmatpush1.bf16.msra.mxu0 %v9227
        %10080 = vmatprep.subr.bf16.mxu0 %v9260
        %10081 = vmatpush1.bf16.msra.mxu0 %v9259
        %10082 = vmatprep.subr.bf16.mxu0 %v9292
        %10083 = vmatpush1.bf16.msra.mxu0 %v9291
        %10084 = vmatprep.subr.bf16.mxu0 %v9324
        %10085 = vmatpush1.bf16.msra.mxu0 %v9323
        %10086 = vmatprep.subr.bf16.mxu0 %v9356
        %10087 = vmatpush1.bf16.msra.mxu0 %v9355
        %10088 = vmatprep.subr.bf16.mxu0 0
        %10089 = vmatpush1.bf16.msra.mxu0 0
        %10090 = vmatprep.subr.bf16.mxu0 0
        %10091 = vmatpush1.bf16.msra.mxu0 0
        %10092 = vmatprep.subr.bf16.mxu0 0
        %10093 = vmatpush1.bf16.msra.mxu0 0
        %10094 = vmatprep.subr.bf16.mxu0 0
        %10095 = vmatpush1.bf16.msra.mxu0 0
        %10096 = vmatprep.subr.bf16.mxu0 0
        %10097 = vmatpush1.bf16.msra.mxu0 0
        %10098 = vmatprep.subr.bf16.mxu0 0
        %10099 = vmatpush1.bf16.msra.mxu0 0
        %10100 = vmatprep.subr.bf16.mxu0 0
        %10101 = vmatpush1.bf16.msra.mxu0 0
        %10102 = vmatprep.subr.bf16.mxu0 0
        %10103 = vmatpush1.bf16.msra.mxu0 0
        %10104 = vmatprep.mubr.bf16.mxu0 0
        %10105 = vmatmul.mubr.bf16.gmra.mrb[0].mxu0 %v8083
        %v10106 = vpop.f32.mrb[0].mxu0
        %v10107 = vadd.f32 0.0, %v10106
        %v10108 = vpop.f32.mrb[0].mxu0
        %v10109 = vadd.f32 0.0, %v10108
        %v10110 = vpop.f32.mrb[0].mxu0
        %v10111 = vpop.f32.mrb[0].mxu0
        %10112 = vdwg.mxu0
        %10113 = vmatprep.subr.bf16.mxu0 %v9134
        %10114 = vmatpush1.bf16.msra.mxu0 %v9133
        %10115 = vmatprep.subr.bf16.mxu0 %v9166
        %10116 = vmatpush1.bf16.msra.mxu0 %v9165
        %10117 = vmatprep.subr.bf16.mxu0 %v9198
        %10118 = vmatpush1.bf16.msra.mxu0 %v9197
        %10119 = vmatprep.subr.bf16.mxu0 %v9230
        %10120 = vmatpush1.bf16.msra.mxu0 %v9229
        %10121 = vmatprep.subr.bf16.mxu0 %v9262
        %10122 = vmatpush1.bf16.msra.mxu0 %v9261
        %10123 = vmatprep.subr.bf16.mxu0 %v9294
        %10124 = vmatpush1.bf16.msra.mxu0 %v9293
        %10125 = vmatprep.subr.bf16.mxu0 %v9326
        %10126 = vmatpush1.bf16.msra.mxu0 %v9325
        %10127 = vmatprep.subr.bf16.mxu0 %v9358
        %10128 = vmatpush1.bf16.msra.mxu0 %v9357
        %10129 = vmatprep.subr.bf16.mxu0 0
        %10130 = vmatpush1.bf16.msra.mxu0 0
        %10131 = vmatprep.subr.bf16.mxu0 0
        %10132 = vmatpush1.bf16.msra.mxu0 0
        %10133 = vmatprep.subr.bf16.mxu0 0
        %10134 = vmatpush1.bf16.msra.mxu0 0
        %10135 = vmatprep.subr.bf16.mxu0 0
        %10136 = vmatpush1.bf16.msra.mxu0 0
        %10137 = vmatprep.subr.bf16.mxu0 0
        %10138 = vmatpush1.bf16.msra.mxu0 0
        %10139 = vmatprep.subr.bf16.mxu0 0
        %10140 = vmatpush1.bf16.msra.mxu0 0
        %10141 = vmatprep.subr.bf16.mxu0 0
        %10142 = vmatpush1.bf16.msra.mxu0 0
        %10143 = vmatprep.subr.bf16.mxu0 0
        %10144 = vmatpush1.bf16.msra.mxu0 0
        %10145 = vmatprep.mubr.bf16.mxu0 0
        %10146 = vmatmul.mubr.bf16.gmra.mrb[0].mxu0 %v8083
        %v10147 = vpop.f32.mrb[0].mxu0
        %v10148 = vadd.f32 0.0, %v10147
        %v10149 = vpop.f32.mrb[0].mxu0
        %v10150 = vadd.f32 0.0, %v10149
        %v10151 = vpop.f32.mrb[0].mxu0
        %v10152 = vpop.f32.mrb[0].mxu0
        %10153 = vdwg.mxu0
        %10154 = vmatprep.subr.bf16.mxu0 %v9136
        %10155 = vmatpush1.bf16.msra.mxu0 %v9135
        %10156 = vmatprep.subr.bf16.mxu0 %v9168
        %10157 = vmatpush1.bf16.msra.mxu0 %v9167
        %10158 = vmatprep.subr.bf16.mxu0 %v9200
        %10159 = vmatpush1.bf16.msra.mxu0 %v9199
        %10160 = vmatprep.subr.bf16.mxu0 %v9232
        %10161 = vmatpush1.bf16.msra.mxu0 %v9231
        %10162 = vmatprep.subr.bf16.mxu0 %v9264
        %10163 = vmatpush1.bf16.msra.mxu0 %v9263
        %10164 = vmatprep.subr.bf16.mxu0 %v9296
        %10165 = vmatpush1.bf16.msra.mxu0 %v9295
        %10166 = vmatprep.subr.bf16.mxu0 %v9328
        %10167 = vmatpush1.bf16.msra.mxu0 %v9327
        %10168 = vmatprep.subr.bf16.mxu0 %v9360
        %10169 = vmatpush1.bf16.msra.mxu0 %v9359
        %10170 = vmatprep.subr.bf16.mxu0 0
        %10171 = vmatpush1.bf16.msra.mxu0 0
        %10172 = vmatprep.subr.bf16.mxu0 0
        %10173 = vmatpush1.bf16.msra.mxu0 0
        %10174 = vmatprep.subr.bf16.mxu0 0
        %10175 = vmatpush1.bf16.msra.mxu0 0
        %10176 = vmatprep.subr.bf16.mxu0 0
        %10177 = vmatpush1.bf16.msra.mxu0 0
        %10178 = vmatprep.subr.bf16.mxu0 0
        %10179 = vmatpush1.bf16.msra.mxu0 0
        %10180 = vmatprep.subr.bf16.mxu0 0
        %10181 = vmatpush1.bf16.msra.mxu0 0
        %10182 = vmatprep.subr.bf16.mxu0 0
        %10183 = vmatpush1.bf16.msra.mxu0 0
        %10184 = vmatprep.subr.bf16.mxu0 0
        %10185 = vmatpush1.bf16.msra.mxu0 0
        %10186 = vmatprep.mubr.bf16.mxu0 0
        %10187 = vmatmul.mubr.bf16.gmra.mrb[0].mxu0 %v8083
        %v10188 = vpop.f32.mrb[0].mxu0
        %v10189 = vadd.f32 0.0, %v10188
        %v10190 = vpop.f32.mrb[0].mxu0
        %v10191 = vadd.f32 0.0, %v10190
        %v10192 = vpop.f32.mrb[0].mxu0
        %v10193 = vpop.f32.mrb[0].mxu0
        %10194 = vdwg.mxu0
        %10195 = vmatprep.subr.bf16.mxu0 %v9138
        %10196 = vmatpush1.bf16.msra.mxu0 %v9137
        %10197 = vmatprep.subr.bf16.mxu0 %v9170
        %10198 = vmatpush1.bf16.msra.mxu0 %v9169
        %10199 = vmatprep.subr.bf16.mxu0 %v9202
        %10200 = vmatpush1.bf16.msra.mxu0 %v9201
        %10201 = vmatprep.subr.bf16.mxu0 %v9234
        %10202 = vmatpush1.bf16.msra.mxu0 %v9233
        %10203 = vmatprep.subr.bf16.mxu0 %v9266
        %10204 = vmatpush1.bf16.msra.mxu0 %v9265
        %10205 = vmatprep.subr.bf16.mxu0 %v9298
        %10206 = vmatpush1.bf16.msra.mxu0 %v9297
        %10207 = vmatprep.subr.bf16.mxu0 %v9330
        %10208 = vmatpush1.bf16.msra.mxu0 %v9329
        %10209 = vmatprep.subr.bf16.mxu0 %v9362
        %10210 = vmatpush1.bf16.msra.mxu0 %v9361
        %10211 = vmatprep.subr.bf16.mxu0 0
        %10212 = vmatpush1.bf16.msra.mxu0 0
        %10213 = vmatprep.subr.bf16.mxu0 0
        %10214 = vmatpush1.bf16.msra.mxu0 0
        %10215 = vmatprep.subr.bf16.mxu0 0
        %10216 = vmatpush1.bf16.msra.mxu0 0
        %10217 = vmatprep.subr.bf16.mxu0 0
        %10218 = vmatpush1.bf16.msra.mxu0 0
        %10219 = vmatprep.subr.bf16.mxu0 0
        %10220 = vmatpush1.bf16.msra.mxu0 0
        %10221 = vmatprep.subr.bf16.mxu0 0
        %10222 = vmatpush1.bf16.msra.mxu0 0
        %10223 = vmatprep.subr.bf16.mxu0 0
        %10224 = vmatpush1.bf16.msra.mxu0 0
        %10225 = vmatprep.subr.bf16.mxu0 0
        %10226 = vmatpush1.bf16.msra.mxu0 0
        %10227 = vmatprep.mubr.bf16.mxu0 0
        %10228 = vmatmul.mubr.bf16.gmra.mrb[0].mxu0 %v8083
        %v10229 = vpop.f32.mrb[0].mxu0
        %v10230 = vadd.f32 0.0, %v10229
        %v10231 = vpop.f32.mrb[0].mxu0
        %v10232 = vadd.f32 0.0, %v10231
        %v10233 = vpop.f32.mrb[0].mxu0
        %v10234 = vpop.f32.mrb[0].mxu0
        %10235 = vdwg.mxu0
        %10236 = vmatprep.subr.bf16.mxu0 %v9140
        %10237 = vmatpush1.bf16.msra.mxu0 %v9139
        %10238 = vmatprep.subr.bf16.mxu0 %v9172
        %10239 = vmatpush1.bf16.msra.mxu0 %v9171
        %10240 = vmatprep.subr.bf16.mxu0 %v9204
        %10241 = vmatpush1.bf16.msra.mxu0 %v9203
        %10242 = vmatprep.subr.bf16.mxu0 %v9236
        %10243 = vmatpush1.bf16.msra.mxu0 %v9235
        %10244 = vmatprep.subr.bf16.mxu0 %v9268
        %10245 = vmatpush1.bf16.msra.mxu0 %v9267
        %10246 = vmatprep.subr.bf16.mxu0 %v9300
        %10247 = vmatpush1.bf16.msra.mxu0 %v9299
        %10248 = vmatprep.subr.bf16.mxu0 %v9332
        %10249 = vmatpush1.bf16.msra.mxu0 %v9331
        %10250 = vmatprep.subr.bf16.mxu0 %v9364
        %10251 = vmatpush1.bf16.msra.mxu0 %v9363
        %10252 = vmatprep.subr.bf16.mxu0 0
        %10253 = vmatpush1.bf16.msra.mxu0 0
        %10254 = vmatprep.subr.bf16.mxu0 0
        %10255 = vmatpush1.bf16.msra.mxu0 0
        %10256 = vmatprep.subr.bf16.mxu0 0
        %10257 = vmatpush1.bf16.msra.mxu0 0
        %10258 = vmatprep.subr.bf16.mxu0 0
        %10259 = vmatpush1.bf16.msra.mxu0 0
        %10260 = vmatprep.subr.bf16.mxu0 0
        %10261 = vmatpush1.bf16.msra.mxu0 0
        %10262 = vmatprep.subr.bf16.mxu0 0
        %10263 = vmatpush1.bf16.msra.mxu0 0
        %10264 = vmatprep.subr.bf16.mxu0 0
        %10265 = vmatpush1.bf16.msra.mxu0 0
        %10266 = vmatprep.subr.bf16.mxu0 0
        %10267 = vmatpush1.bf16.msra.mxu0 0
        %10268 = vmatprep.mubr.bf16.mxu0 0
        %10269 = vmatmul.mubr.bf16.gmra.mrb[0].mxu0 %v8083
        %v10270 = vpop.f32.mrb[0].mxu0
        %v10271 = vadd.f32 0.0, %v10270
        %v10272 = vpop.f32.mrb[0].mxu0
        %v10273 = vadd.f32 0.0, %v10272
        %v10274 = vpop.f32.mrb[0].mxu0
        %v10275 = vpop.f32.mrb[0].mxu0
        %10276 = vdwg.mxu0
        %v10277 = vadd.f32 %v7461, %v9656
        %v10278 = vadd.f32 %v7463, %v9658
        %v10279 = vadd.f32 %v7502, %v9697
        %v10280 = vadd.f32 %v7504, %v9699
        %v10281 = vadd.f32 %v7543, %v9738
        %v10282 = vadd.f32 %v7545, %v9740
        %v10283 = vadd.f32 %v7584, %v9779
        %v10284 = vadd.f32 %v7586, %v9781
        %v10285 = vadd.f32 %v7625, %v9820
        %v10286 = vadd.f32 %v7627, %v9822
        %v10287 = vadd.f32 %v7666, %v9861
        %v10288 = vadd.f32 %v7668, %v9863
        %v10289 = vadd.f32 %v7707, %v9902
        %v10290 = vadd.f32 %v7709, %v9904
        %v10291 = vadd.f32 %v7748, %v9943
        %v10292 = vadd.f32 %v7750, %v9945
        %v10293 = vadd.f32 %v7789, %v9984
        %v10294 = vadd.f32 %v7791, %v9986
        %v10295 = vadd.f32 %v7830, %v10025
        %v10296 = vadd.f32 %v7832, %v10027
        %v10297 = vadd.f32 %v7871, %v10066
        %v10298 = vadd.f32 %v7873, %v10068
        %v10299 = vadd.f32 %v7912, %v10107
        %v10300 = vadd.f32 %v7914, %v10109
        %v10301 = vadd.f32 %v7953, %v10148
        %v10302 = vadd.f32 %v7955, %v10150
        %v10303 = vadd.f32 %v7994, %v10189
        %v10304 = vadd.f32 %v7996, %v10191
        %v10305 = vadd.f32 %v8035, %v10230
        %v10306 = vadd.f32 %v8037, %v10232
        %v10307 = vadd.f32 %v8076, %v10271
        %v10308 = vadd.f32 %v8078, %v10273
        %v10309 = vld [vmem:[#allocation11] sm:$0xff]
        %v10310 = vld [vmem:[#allocation11 + $0x8] sm:$0xff]
        %v10311 = vld [vmem:[#allocation11 + $0x10] sm:$0xff]
        %v10312 = vld [vmem:[#allocation11 + $0x18] sm:$0xff]
        %v10317 = vlaneseq
        %v10318 = vshrl.u32 %v10317, 7
        %v10319 = vsub.s32 0, %v10318
        %v10320 = vrot.slane %v10309, %v10319
        %v10321 = vlaneseq
        %v10322 = vshrl.u32 %v10321, 7
        %v10323 = vsub.s32 1, %v10322
        %v10324 = vrot.slane %v10309, %v10323
        %v10325 = vlaneseq
        %v10326 = vshrl.u32 %v10325, 7
        %v10327 = vsub.s32 2, %v10326
        %v10328 = vrot.slane %v10309, %v10327
        %v10329 = vlaneseq
        %v10330 = vshrl.u32 %v10329, 7
        %v10331 = vsub.s32 3, %v10330
        %v10332 = vrot.slane %v10309, %v10331
        %v10333 = vlaneseq
        %v10334 = vshrl.u32 %v10333, 7
        %v10335 = vsub.s32 4, %v10334
        %v10336 = vrot.slane %v10309, %v10335
        %v10337 = vlaneseq
        %v10338 = vshrl.u32 %v10337, 7
        %v10339 = vsub.s32 5, %v10338
        %v10340 = vrot.slane %v10309, %v10339
        %v10341 = vlaneseq
        %v10342 = vshrl.u32 %v10341, 7
        %v10343 = vsub.s32 6, %v10342
        %v10344 = vrot.slane %v10309, %v10343
        %v10345 = vlaneseq
        %v10346 = vshrl.u32 %v10345, 7
        %v10347 = vsub.s32 7, %v10346
        %v10348 = vrot.slane %v10309, %v10347
        %v10349 = vlaneseq
        %v10350 = vshrl.u32 %v10349, 7
        %v10351 = vsub.s32 0, %v10350
        %v10352 = vrot.slane %v10310, %v10351
        %v10353 = vlaneseq
        %v10354 = vshrl.u32 %v10353, 7
        %v10355 = vsub.s32 1, %v10354
        %v10356 = vrot.slane %v10310, %v10355
        %v10357 = vlaneseq
        %v10358 = vshrl.u32 %v10357, 7
        %v10359 = vsub.s32 2, %v10358
        %v10360 = vrot.slane %v10310, %v10359
        %v10361 = vlaneseq
        %v10362 = vshrl.u32 %v10361, 7
        %v10363 = vsub.s32 3, %v10362
        %v10364 = vrot.slane %v10310, %v10363
        %v10365 = vlaneseq
        %v10366 = vshrl.u32 %v10365, 7
        %v10367 = vsub.s32 4, %v10366
        %v10368 = vrot.slane %v10310, %v10367
        %v10369 = vlaneseq
        %v10370 = vshrl.u32 %v10369, 7
        %v10371 = vsub.s32 5, %v10370
        %v10372 = vrot.slane %v10310, %v10371
        %v10373 = vlaneseq
        %v10374 = vshrl.u32 %v10373, 7
        %v10375 = vsub.s32 6, %v10374
        %v10376 = vrot.slane %v10310, %v10375
        %v10377 = vlaneseq
        %v10378 = vshrl.u32 %v10377, 7
        %v10379 = vsub.s32 7, %v10378
        %v10380 = vrot.slane %v10310, %v10379
        %v10381 = vlaneseq
        %v10382 = vshrl.u32 %v10381, 7
        %v10383 = vsub.s32 0, %v10382
        %v10384 = vrot.slane %v10311, %v10383
        %v10385 = vlaneseq
        %v10386 = vshrl.u32 %v10385, 7
        %v10387 = vsub.s32 1, %v10386
        %v10388 = vrot.slane %v10311, %v10387
        %v10389 = vlaneseq
        %v10390 = vshrl.u32 %v10389, 7
        %v10391 = vsub.s32 2, %v10390
        %v10392 = vrot.slane %v10311, %v10391
        %v10393 = vlaneseq
        %v10394 = vshrl.u32 %v10393, 7
        %v10395 = vsub.s32 3, %v10394
        %v10396 = vrot.slane %v10311, %v10395
        %v10397 = vlaneseq
        %v10398 = vshrl.u32 %v10397, 7
        %v10399 = vsub.s32 4, %v10398
        %v10400 = vrot.slane %v10311, %v10399
        %v10401 = vlaneseq
        %v10402 = vshrl.u32 %v10401, 7
        %v10403 = vsub.s32 5, %v10402
        %v10404 = vrot.slane %v10311, %v10403
        %v10405 = vlaneseq
        %v10406 = vshrl.u32 %v10405, 7
        %v10407 = vsub.s32 6, %v10406
        %v10408 = vrot.slane %v10311, %v10407
        %v10409 = vlaneseq
        %v10410 = vshrl.u32 %v10409, 7
        %v10411 = vsub.s32 7, %v10410
        %v10412 = vrot.slane %v10311, %v10411
        %v10413 = vlaneseq
        %v10414 = vshrl.u32 %v10413, 7
        %v10415 = vsub.s32 0, %v10414
        %v10416 = vrot.slane %v10312, %v10415
        %v10417 = vlaneseq
        %v10418 = vshrl.u32 %v10417, 7
        %v10419 = vsub.s32 1, %v10418
        %v10420 = vrot.slane %v10312, %v10419
        %v10421 = vlaneseq
        %v10422 = vshrl.u32 %v10421, 7
        %v10423 = vsub.s32 2, %v10422
        %v10424 = vrot.slane %v10312, %v10423
        %v10425 = vlaneseq
        %v10426 = vshrl.u32 %v10425, 7
        %v10427 = vsub.s32 3, %v10426
        %v10428 = vrot.slane %v10312, %v10427
        %v10429 = vlaneseq
        %v10430 = vshrl.u32 %v10429, 7
        %v10431 = vsub.s32 4, %v10430
        %v10432 = vrot.slane %v10312, %v10431
        %v10433 = vlaneseq
        %v10434 = vshrl.u32 %v10433, 7
        %v10435 = vsub.s32 5, %v10434
        %v10436 = vrot.slane %v10312, %v10435
        %v10437 = vlaneseq
        %v10438 = vshrl.u32 %v10437, 7
        %v10439 = vsub.s32 6, %v10438
        %v10440 = vrot.slane %v10312, %v10439
        %v10441 = vlaneseq
        %v10442 = vshrl.u32 %v10441, 7
        %v10443 = vsub.s32 7, %v10442
        %v10444 = vrot.slane %v10312, %v10443
        %v10477 = vadd.f32 %v10277, %v10320
        %v10478 = vadd.f32 %v10278, %v10324
        %v10479 = vadd.f32 %v10279, %v10328
        %v10480 = vadd.f32 %v10280, %v10332
        %v10481 = vadd.f32 %v10281, %v10336
        %v10482 = vadd.f32 %v10282, %v10340
        %v10483 = vadd.f32 %v10283, %v10344
        %v10484 = vadd.f32 %v10284, %v10348
        %v10485 = vadd.f32 %v10285, %v10352
        %v10486 = vadd.f32 %v10286, %v10356
        %v10487 = vadd.f32 %v10287, %v10360
        %v10488 = vadd.f32 %v10288, %v10364
        %v10489 = vadd.f32 %v10289, %v10368
        %v10490 = vadd.f32 %v10290, %v10372
        %v10491 = vadd.f32 %v10291, %v10376
        %v10492 = vadd.f32 %v10292, %v10380
        %v10493 = vadd.f32 %v10293, %v10384
        %v10494 = vadd.f32 %v10294, %v10388
        %v10495 = vadd.f32 %v10295, %v10392
        %v10496 = vadd.f32 %v10296, %v10396
        %v10497 = vadd.f32 %v10297, %v10400
        %v10498 = vadd.f32 %v10298, %v10404
        %v10499 = vadd.f32 %v10299, %v10408
        %v10500 = vadd.f32 %v10300, %v10412
        %v10501 = vadd.f32 %v10301, %v10416
        %v10502 = vadd.f32 %v10302, %v10420
        %v10503 = vadd.f32 %v10303, %v10424
        %v10504 = vadd.f32 %v10304, %v10428
        %v10505 = vadd.f32 %v10305, %v10432
        %v10506 = vadd.f32 %v10306, %v10436
        %v10507 = vadd.f32 %v10307, %v10440
        %v10508 = vadd.f32 %v10308, %v10444
        %s10509 = sld [smem:[#allocation9 + $0x5]]
        %vm10510 = vcmp.ge.f32.partialorder %v10477, 0.0
        %vm10511 = vcmp.ge.f32.partialorder %v10478, 0.0
        %vm10512 = vcmp.ge.f32.partialorder %v10479, 0.0
        %vm10513 = vcmp.ge.f32.partialorder %v10480, 0.0
        %vm10514 = vcmp.ge.f32.partialorder %v10481, 0.0
        %vm10515 = vcmp.ge.f32.partialorder %v10482, 0.0
        %vm10516 = vcmp.ge.f32.partialorder %v10483, 0.0
        %vm10517 = vcmp.ge.f32.partialorder %v10484, 0.0
        %vm10518 = vcmp.ge.f32.partialorder %v10485, 0.0
        %vm10519 = vcmp.ge.f32.partialorder %v10486, 0.0
        %vm10520 = vcmp.ge.f32.partialorder %v10487, 0.0
        %vm10521 = vcmp.ge.f32.partialorder %v10488, 0.0
        %vm10522 = vcmp.ge.f32.partialorder %v10489, 0.0
        %vm10523 = vcmp.ge.f32.partialorder %v10490, 0.0
        %vm10524 = vcmp.ge.f32.partialorder %v10491, 0.0
        %vm10525 = vcmp.ge.f32.partialorder %v10492, 0.0
        %vm10526 = vcmp.ge.f32.partialorder %v10493, 0.0
        %vm10527 = vcmp.ge.f32.partialorder %v10494, 0.0
        %vm10528 = vcmp.ge.f32.partialorder %v10495, 0.0
        %vm10529 = vcmp.ge.f32.partialorder %v10496, 0.0
        %vm10530 = vcmp.ge.f32.partialorder %v10497, 0.0
        %vm10531 = vcmp.ge.f32.partialorder %v10498, 0.0
        %vm10532 = vcmp.ge.f32.partialorder %v10499, 0.0
        %vm10533 = vcmp.ge.f32.partialorder %v10500, 0.0
        %vm10534 = vcmp.ge.f32.partialorder %v10501, 0.0
        %vm10535 = vcmp.ge.f32.partialorder %v10502, 0.0
        %vm10536 = vcmp.ge.f32.partialorder %v10503, 0.0
        %vm10537 = vcmp.ge.f32.partialorder %v10504, 0.0
        %vm10538 = vcmp.ge.f32.partialorder %v10505, 0.0
        %vm10539 = vcmp.ge.f32.partialorder %v10506, 0.0
        %vm10540 = vcmp.ge.f32.partialorder %v10507, 0.0
        %vm10541 = vcmp.ge.f32.partialorder %v10508, 0.0
        %v10542 = vstv %s10509
        %v10543 = vmul.f32 %v10542, %v10477
        %v10544 = vmul.f32 %v10542, %v10478
        %v10545 = vmul.f32 %v10542, %v10479
        %v10546 = vmul.f32 %v10542, %v10480
        %v10547 = vmul.f32 %v10542, %v10481
        %v10548 = vmul.f32 %v10542, %v10482
        %v10549 = vmul.f32 %v10542, %v10483
        %v10550 = vmul.f32 %v10542, %v10484
        %v10551 = vmul.f32 %v10542, %v10485
        %v10552 = vmul.f32 %v10542, %v10486
        %v10553 = vmul.f32 %v10542, %v10487
        %v10554 = vmul.f32 %v10542, %v10488
        %v10555 = vmul.f32 %v10542, %v10489
        %v10556 = vmul.f32 %v10542, %v10490
        %v10557 = vmul.f32 %v10542, %v10491
        %v10558 = vmul.f32 %v10542, %v10492
        %v10559 = vmul.f32 %v10542, %v10493
        %v10560 = vmul.f32 %v10542, %v10494
        %v10561 = vmul.f32 %v10542, %v10495
        %v10562 = vmul.f32 %v10542, %v10496
        %v10563 = vmul.f32 %v10542, %v10497
        %v10564 = vmul.f32 %v10542, %v10498
        %v10565 = vmul.f32 %v10542, %v10499
        %v10566 = vmul.f32 %v10542, %v10500
        %v10567 = vmul.f32 %v10542, %v10501
        %v10568 = vmul.f32 %v10542, %v10502
        %v10569 = vmul.f32 %v10542, %v10503
        %v10570 = vmul.f32 %v10542, %v10504
        %v10571 = vmul.f32 %v10542, %v10505
        %v10572 = vmul.f32 %v10542, %v10506
        %v10573 = vmul.f32 %v10542, %v10507
        %v10574 = vmul.f32 %v10542, %v10508
        %v10575 = vsel %vm10510, %v10477, %v10543
        %v10576 = vsel %vm10511, %v10478, %v10544
        %v10577 = vsel %vm10512, %v10479, %v10545
        %v10578 = vsel %vm10513, %v10480, %v10546
        %v10579 = vsel %vm10514, %v10481, %v10547
        %v10580 = vsel %vm10515, %v10482, %v10548
        %v10581 = vsel %vm10516, %v10483, %v10549
        %v10582 = vsel %vm10517, %v10484, %v10550
        %v10583 = vsel %vm10518, %v10485, %v10551
        %v10584 = vsel %vm10519, %v10486, %v10552
        %v10585 = vsel %vm10520, %v10487, %v10553
        %v10586 = vsel %vm10521, %v10488, %v10554
        %v10587 = vsel %vm10522, %v10489, %v10555
        %v10588 = vsel %vm10523, %v10490, %v10556
        %v10589 = vsel %vm10524, %v10491, %v10557
        %v10590 = vsel %vm10525, %v10492, %v10558
        %v10591 = vsel %vm10526, %v10493, %v10559
        %v10592 = vsel %vm10527, %v10494, %v10560
        %v10593 = vsel %vm10528, %v10495, %v10561
        %v10594 = vsel %vm10529, %v10496, %v10562
        %v10595 = vsel %vm10530, %v10497, %v10563
        %v10596 = vsel %vm10531, %v10498, %v10564
        %v10597 = vsel %vm10532, %v10499, %v10565
        %v10598 = vsel %vm10533, %v10500, %v10566
        %v10599 = vsel %vm10534, %v10501, %v10567
        %v10600 = vsel %vm10535, %v10502, %v10568
        %v10601 = vsel %vm10536, %v10503, %v10569
        %v10602 = vsel %vm10537, %v10504, %v10570
        %v10603 = vsel %vm10538, %v10505, %v10571
        %v10604 = vsel %vm10539, %v10506, %v10572
        %v10605 = vsel %vm10540, %v10507, %v10573
        %v10606 = vsel %vm10541, %v10508, %v10574
        %10607 = vst [vmem:[%s317] sm:$0xff] %v10575
        %10608 = vst [vmem:[%s317 + $0x8] sm:$0xff] %v10576
        %10609 = vst [vmem:[%s317 + $0x10] sm:$0xff] %v10577
        %10610 = vst [vmem:[%s317 + $0x18] sm:$0xff] %v10578
        %10611 = vst [vmem:[%s317 + $0x20] sm:$0xff] %v10579
        %10612 = vst [vmem:[%s317 + $0x28] sm:$0xff] %v10580
        %10613 = vst [vmem:[%s317 + $0x30] sm:$0xff] %v10581
        %10614 = vst [vmem:[%s317 + $0x38] sm:$0xff] %v10582
        %10615 = vst [vmem:[%s317 + $0x40] sm:$0xff] %v10583
        %10616 = vst [vmem:[%s317 + $0x48] sm:$0xff] %v10584
        %10617 = vst [vmem:[%s317 + $0x50] sm:$0xff] %v10585
        %10618 = vst [vmem:[%s317 + $0x58] sm:$0xff] %v10586
        %10619 = vst [vmem:[%s317 + $0x60] sm:$0xff] %v10587
        %10620 = vst [vmem:[%s317 + $0x68] sm:$0xff] %v10588
        %10621 = vst [vmem:[%s317 + $0x70] sm:$0xff] %v10589
        %10622 = vst [vmem:[%s317 + $0x78] sm:$0xff] %v10590
        %10623 = vst [vmem:[%s317 + $0x80] sm:$0xff] %v10591
        %10624 = vst [vmem:[%s317 + $0x88] sm:$0xff] %v10592
        %10625 = vst [vmem:[%s317 + $0x90] sm:$0xff] %v10593
        %10626 = vst [vmem:[%s317 + $0x98] sm:$0xff] %v10594
        %10627 = vst [vmem:[%s317 + $0xa0] sm:$0xff] %v10595
        %10628 = vst [vmem:[%s317 + $0xa8] sm:$0xff] %v10596
        %10629 = vst [vmem:[%s317 + $0xb0] sm:$0xff] %v10597
        %10630 = vst [vmem:[%s317 + $0xb8] sm:$0xff] %v10598
        %10631 = vst [vmem:[%s317 + $0xc0] sm:$0xff] %v10599
        %10632 = vst [vmem:[%s317 + $0xc8] sm:$0xff] %v10600
        %10633 = vst [vmem:[%s317 + $0xd0] sm:$0xff] %v10601
        %10634 = vst [vmem:[%s317 + $0xd8] sm:$0xff] %v10602
        %10635 = vst [vmem:[%s317 + $0xe0] sm:$0xff] %v10603
        %10636 = vst [vmem:[%s317 + $0xe8] sm:$0xff] %v10604
        %10637 = vst [vmem:[%s317 + $0xf0] sm:$0xff] %v10605
        %10638 = vst [vmem:[%s317 + $0xf8] sm:$0xff] %v10606
        %p10639 = scmp.lt.s32.totalorder %s21, 1
        %s10640 = scalar_select %p10639, %s21, 1
        %s10641 = smul.addr %s10640, 32
        %s10642 = smul.addr %s10641, 8
        %s10643 = scalar_lea.vmem %s6, %s10642
        // Predicated region
        $region65: #{_forward_packed.1} parent=43 // pred_check
          %p10644 = pneg %p170
        $region66: #{_forward_packed.1} parent=43 // pred_check_branch
          %10646 = sbr.rel (%p10644) target = $region68
        $region67: #{_forward_packed.1} parent=43 // pred_region
          _
        $region68: #{_forward_packed.1} parent=43 // pred_fallthru
          _
      $region44: #{_forward_packed.1} parent=5 // pred_fallthru
        _
      %p10647 = scmp.le.s32.totalorder 2, %s16
      // Predicated region
      $region69: #{_forward_packed.1} parent=5 // pred_check
        %p10648 = pneg %p10647
      $region70: #{_forward_packed.1} parent=5 // pred_check_branch
        %10650 = sbr.rel (%p10648) target = $region72
      $region71: #{_forward_packed.1} parent=5 // pred_region
        %s10651 = ssub.s32 %s16, 2
        // Predicated region
        $region73: #{_forward_packed.1} parent=71 // pred_check
          %p10652 = pneg %p176
        $region74: #{_forward_packed.1} parent=71 // pred_check_branch
          %10654 = sbr.rel (%p10652) target = $region76
        $region75: #{_forward_packed.1} parent=71 // pred_region
          %p10655 = scmp.lt.s32.totalorder %s22, 1
          %s10656 = scalar_select %p10655, %s22, 1
          %s10657 = smul.addr %s10656, 32
          %s10658 = smul.addr %s10657, 8
          %s10659 = scalar_lea.vmem %s6, %s10658
        $region76: #{_forward_packed.1} parent=71 // pred_fallthru
          _
      $region72: #{_forward_packed.1} parent=5 // pred_fallthru
        _
    $region6: #{_forward_packed.1} parent=1 // loop_footer
      %s20 = sadd.s32 1, %s16
    $region7: #{_forward_packed.1} parent=1 // loop_footer_branch
      %15 = sbr.rel target = $region3
    $region8: #{_forward_packed.1} parent=1 // loop_exit
      _
    %10660 = vsyncpa [#allocation5], 1
    %s10661 = scalar_lea.sflag [#allocation5], 1
    %10662 = vsyncpa %s10661, 1
    %10663 = vsyncpa [#allocation8], 1
    %10664 = vsyncpa [#allocation12], 1
    %10665 = vsyncpa [#allocation6], 1
    %s10666 = scalar_lea.sflag [#allocation6], 1
    %10667 = vsyncpa %s10666, 1

</llo_original>
